<compile_context>
chip_gen: v7x
topology: tpu7x:2x2x1
jax: 0.10.0
libtpu: 0.0.40
codegen_flags: <defaults>
</compile_context>

<pallas_src>
import math

import jax
import jax.numpy as jnp
from jax.experimental import pallas as pl
from jax.experimental.pallas import tpu as pltpu


def transformer_block_kernel(
    x_ref, lat_ref, mlat_ref, mkv_ref,
    lnx_g_ref, lnx_b_ref, lnl_g_ref, lnl_b_ref,
    wqkv_ref, wkv_ref, gq_ref, gk_ref, wproj_ref,
    ffln_g_ref, ffln_b_ref, w1_ref, b1_ref, w2_ref, b2_ref,
    out_ref, y_sc):
  eps_ln = 1e-5
  eps_rms = 1e-8
  neg = -1e30                               # additive mask (absorbs O(10) scores)

  tb, sx, E = x_ref.shape
  _, sl, _ = lat_ref.shape
  Hs = wproj_ref.shape[0]
  dh = gq_ref.shape[1]
  n_heads = Hs // dh
  rq = tb * sl                              # fused latent (query) rows
  rkx = tb * sx                             # fused x rows
  w_dt = wqkv_ref.dtype                     # MXU storage dtype (bf16 / f32)

  # Fused-row activations.  Cast to f32 BEFORE the reshape so the
  # (TB, S, E) -> (TB*S, E) fold is a layout no-op regardless of storage dtype.
  x2 = x_ref[...].astype(jnp.float32).reshape(rkx, E)
  l2 = lat_ref[...].astype(jnp.float32).reshape(rq, E)   # f32 residual stream

  def layernorm(v, g, b):
    mu = jnp.mean(v, axis=-1, keepdims=True)
    var = jnp.mean((v - mu) ** 2, axis=-1, keepdims=True)
    return (v - mu) * jax.lax.rsqrt(var + eps_ln) * g + b

  ln_x = layernorm(x2, lnx_g_ref[...], lnx_b_ref[...]).astype(w_dt)
  ln_l = layernorm(l2, lnl_g_ref[...], lnl_b_ref[...]).astype(w_dt)

  # ---- fused projections: one wide dot per input stream ---------------------
  qkv_l = jnp.dot(ln_l, wqkv_ref[...], preferred_element_type=jnp.float32)  # (rq, 3Hs)
  kv_x = jnp.dot(ln_x, wkv_ref[...], preferred_element_type=jnp.float32)    # (rkx, 2Hs)

  gq = gq_ref[...]        # (1, dh): gamma * dh**-0.5 (score scale folded in)
  gk = gk_ref[...]        # (1, dh): gamma

  def rms_head(t, g):     # t: (rows, dh); plain lane reduction, no Hs^2 table
    nrm = jnp.sqrt(jnp.sum(t * t, axis=-1, keepdims=True)) * (dh ** -0.5)
    return t / jnp.maximum(nrm, eps_rms) * g

  mlat_t = mlat_ref[0]    # (sl, tb)  latent mask, transposed (per-batch column)
  mkv = mkv_ref[0]        # (tb, skv) kv mask (per-batch row)

  nt = (((1,), (1,)), ((), ()))     # q @ k^T: contract lane dims, no transpose

  # ---- attention per batch inside the folded chunk ---------------------------
  # (Sl, Skv) scores per batch: no cross-batch score/exp work, plain mask.
  # TODO(synk): switch the static b/h loops to lax.fori_loop with dynamic
  #             slices when TB * n_heads is large, to bound vreg live ranges.
  for b in range(tb):
    qs = slice(b * sl, (b + 1) * sl)
    xs = slice(b * sx, (b + 1) * sx)
    q_b = qkv_l[qs, 0:Hs]                                              # (sl, Hs)
    k_b = jnp.concatenate([kv_x[xs, 0:Hs], qkv_l[qs, Hs:2 * Hs]], axis=0)
    v_b = jnp.concatenate([kv_x[xs, Hs:2 * Hs], qkv_l[qs, 2 * Hs:3 * Hs]], axis=0)
    add_mask = (1.0 - mlat_t[:, b:b + 1] * mkv[b:b + 1, :]) * neg      # (sl, skv)
    for h in range(n_heads):
      hsl = slice(h * dh, (h + 1) * dh)
      qh = rms_head(q_b[:, hsl], gq)
      kh = rms_head(k_b[:, hsl], gk)
      s = jax.lax.dot_general(qh, kh, nt, preferred_element_type=jnp.float32)
      s = s + add_mask
      s = s - jnp.max(s, axis=-1, keepdims=True)
      p = jnp.exp(s)
      p = p * pl.reciprocal(jnp.sum(p, axis=-1, keepdims=True), approx=True)
      y_sc[qs, hsl] = jnp.dot(p.astype(w_dt), v_b[:, hsl].astype(w_dt),
                              preferred_element_type=jnp.float32)

  # One full-depth (K = Hs) output projection instead of n_heads K=dh dots.
  attn = jnp.dot(y_sc[...].astype(w_dt), wproj_ref[...],
                 preferred_element_type=jnp.float32)

  # residual 1 (f32 latents)
  lat1 = l2 + attn

  # ---- feed-forward: LN -> Linear -> GELU(exact erf) -> Linear ---------------
  ln_ff = layernorm(lat1, ffln_g_ref[...], ffln_b_ref[...]).astype(w_dt)
  hmid = jnp.dot(ln_ff, w1_ref[...], preferred_element_type=jnp.float32) + b1_ref[...]
  # Exact-erf GELU to match nn.GELU(); jax.nn.gelu(approximate=True) would ride
  # the otherwise-idle EUP slot if the accuracy budget allows.
  hmid = 0.5 * hmid * (1.0 + jax.lax.erf(hmid * (1.0 / math.sqrt(2.0))))
  ffn = jnp.dot(hmid.astype(w_dt), w2_ref[...],
                preferred_element_type=jnp.float32) + b2_ref[...]

  # residual 2
  out_ref[...] = (lat1 + ffn).reshape(tb, sl, E).astype(out_ref.dtype)


def _vmem_budget_bytes():
  """Per-generation VMEM request with headroom (v7x: 64 MiB, v5e/v6e: 128 MiB)."""
  try:
    cap = pltpu.get_tpu_info().vmem_capacity_bytes
  except Exception:
    return 48 * 1024 * 1024                      # conservative: fits every gen
  if cap >= 128 * 1024 * 1024:
    return 100 * 1024 * 1024                     # v5e / v6e
  return min(cap - 8 * 1024 * 1024, 56 * 1024 * 1024)   # v7x headroom


def _block_vmem_bytes(tb, sx, sl, e, hs, ff, dh, w_bytes):
  """Rough VMEM residency: pipeline buffers + weights + scratch + live temps."""
  rq, rkx, skv = tb * sl, tb * sx, sx + sl
  chunk = 2 * (rkx * e * w_bytes            # x block       (double-buffered)
               + rq * e * 4                 # latents block (f32 residual)
               + rq * e * 4                 # output block
               + (sl * tb + tb * skv) * 4)  # mask blocks
  weights = (6 * hs * e + e * ff + ff * e) * w_bytes + (7 * e + ff + 2 * dh) * 4
  scratch = rq * hs * 4                     # per-head attention outputs
  live = rq * (2 * e + 3 * hs + ff) * 4 + rkx * (2 * e + 2 * hs) * 4
  return chunk + weights + scratch + live


def _pick_batch_tile(B, Sl, Sx, E, Hs, FF, dh, w_bytes, budget, target_rows):
  """Fold batches so fused rows ~ target_rows, subject to layout alignment,
  the VMEM budget, >= 2 grid steps, and an even step count (v7x dual-TC)."""
  x_align = 16 if w_bytes < 4 else 8        # bf16 packs 16 rows per sublane tile
  if Sl % 8 or Sx % x_align:
    return 1                                # row fusion would force a relayout
  cap_rows = max(1, target_rows // max(Sl, 1))
  cands = [d for d in range(1, B + 1)
           if B % d == 0 and d <= cap_rows
           and _block_vmem_bytes(d, Sx, Sl, E, Hs, FF, dh, w_bytes) <= 0.7 * budget]
  if not cands:
    return 1
  pool = [d for d in cands if B // d >= 2] or cands   # keep both TCs busy
  even = [d for d in pool if (B // d) % 2 == 0]       # even grid length (v7x)
  return max(even or pool)


def transformer_block(x, latents, mask_x, mask_latent, params, n_heads,
                      *, dtype=jnp.bfloat16, batch_tile=None):
  """bf16 storage by default (bf16-native MXU); LN/RMS/softmax and all dot
  accumulation stay f32, and the latents residual stream stays f32.  Pass
  dtype=jnp.float32 for an all-f32 path."""
  B, Sx, E = x.shape
  _, Sl, El = latents.shape
  assert El == E, "embedding_dim == latent_dim required (no latent_proj branch)"
  Hs = params['wq'].shape[1]
  dh = Hs // n_heads
  FF = params['w1'].shape[1]
  Skv = Sx + Sl
  f32 = jnp.float32
  w_bytes = jnp.dtype(dtype).itemsize

  budget = _vmem_budget_bytes()
  target_rows = 256 if budget > 64 * 1024 * 1024 else 128
  TB = batch_tile if batch_tile is not None else _pick_batch_tile(
      B, Sl, Sx, E, Hs, FF, dh, w_bytes, budget, target_rows)
  assert B % TB == 0
  nb = B // TB

  # ---- one-off wrapper-side parameter prep (plain XLA) ----------------------
  wq = params['wq']
  wk = params['wkv'][:, :Hs]
  wv = params['wkv'][:, Hs:]
  w_qkv = jnp.concatenate([wq, wk, wv], axis=1).astype(dtype)   # (E, 3Hs) latents
  w_kv = jnp.concatenate([wk, wv], axis=1).astype(dtype)        # (E, 2Hs) x
  wproj = params['wproj'].astype(dtype)                         # (Hs, E)
  w1 = params['w1'].astype(dtype)
  w2 = params['w2'].astype(dtype)
  gq = params['qn_g'].reshape(1, dh).astype(f32) * (dh ** -0.5)  # fold 1/sqrt(dh)
  gk = params['qn_g'].reshape(1, dh).astype(f32)

  # Per-chunk masks: latent mask transposed to (Sl, TB) so a per-batch column
  # is a lane slice; kv mask (TB, Skv) for a per-batch row.
  mlat_t = mask_latent.astype(f32).reshape(nb, TB, Sl).transpose(0, 2, 1)
  mkv = jnp.concatenate([mask_x, mask_latent], axis=1).astype(f32)
  mkv = mkv.reshape(nb, TB, Skv)

  xd = x.astype(dtype)
  ld = latents.astype(f32)    # residual stream stays f32 even in bf16 mode

  operands = (xd, ld, mlat_t, mkv,
              params['lnx_g'].astype(f32), params['lnx_b'].astype(f32),
              params['lnl_g'].astype(f32), params['lnl_b'].astype(f32),
              w_qkv, w_kv, gq, gk, wproj,
              params['ffln_g'].astype(f32), params['ffln_b'].astype(f32),
              w1, params['b1'].astype(f32), w2, params['b2'].astype(f32))

  def build_call(single_buffer_invariants):
    def chunk(shape):
      n = len(shape)
      return pl.BlockSpec(shape, lambda c, n=n: (c,) + (0,) * (n - 1))

    def whole(shape):
      n = len(shape)
      idx = lambda c, n=n: (0,) * n
      if single_buffer_invariants:
        # Grid-invariant blocks: single-buffer them (halves weight VMEM).
        return pl.BlockSpec(shape, idx, pipeline_mode=pl.Buffered(1))
      return pl.BlockSpec(shape, idx)

    in_specs = [
        chunk((TB, Sx, E)), chunk((TB, Sl, E)),                 # x, latents
        chunk((1, Sl, TB)), chunk((1, TB, Skv)),                # masks
        whole((1, E)), whole((1, E)), whole((1, E)), whole((1, E)),  # ln_x/ln_lat
        whole((E, 3 * Hs)), whole((E, 2 * Hs)),                 # fused W_qkv, W_kv
        whole((1, dh)), whole((1, dh)),                         # gq, gk
        whole((Hs, E)),                                         # W_proj
        whole((1, E)), whole((1, E)),                           # ffn LN
        whole((E, FF)), whole((1, FF)), whole((FF, E)), whole((1, E)),  # ffn
    ]
    return pl.pallas_call(
        transformer_block_kernel,
        grid=(nb,),
        in_specs=in_specs,
        # NOTE: keep E a multiple of 128 at production sizes for lane-dense
        # (unmasked) output stores; demo E=32 uses the natural layout.
        out_specs=pl.BlockSpec((TB, Sl, E), lambda c: (c, 0, 0)),
        out_shape=jax.ShapeDtypeStruct((B, Sl, E), latents.dtype),
        scratch_shapes=[pltpu.VMEM((TB * Sl, Hs), jnp.float32)],
        compiler_params=pltpu.CompilerParams(
            dimension_semantics=("parallel",),
            vmem_limit_bytes=budget),
    )

  try:
    return build_call(True)(*operands)
  except Exception:
    # pl.Buffered(1) unsupported on this jax/libtpu build: fall back to the
    # default double-buffered invariant blocks (identical semantics).
    return build_call(False)(*operands)


def reference(x, latents, mask_x, mask_latent, params, n_heads):
  """Pure-JAX mirror of the PyTorch forward (eval mode)."""
  Hs = params['wq'].shape[1]
  dh = Hs // n_heads
  B, Sl, _ = latents.shape

  def ln(v, g, b):
    mu = v.mean(-1, keepdims=True)
    var = ((v - mu) ** 2).mean(-1, keepdims=True)
    return (v - mu) / jnp.sqrt(var + 1e-5) * g[0] + b[0]

  ln_x = ln(x, params['lnx_g'], params['lnx_b'])
  ln_l = ln(latents, params['lnl_g'], params['lnl_b'])
  q = ln_l @ params['wq']
  kv_in = jnp.concatenate([ln_x, ln_l], axis=1)
  kv = kv_in @ params['wkv']
  k, v = kv[..., :Hs], kv[..., Hs:]

  def heads(t):
    return t.reshape(B, -1, n_heads, dh).transpose(0, 2, 1, 3)

  qh, kh, vh = heads(q), heads(k), heads(v)

  def rms(t):
    n = jnp.sqrt(jnp.sum(t * t, axis=-1, keepdims=True)) * dh ** (-0.5)
    return t / jnp.maximum(n, 1e-8) * params['qn_g'][0]

  qh, kh = rms(qh), rms(kh)
  s = qh @ kh.transpose(0, 1, 3, 2) / math.sqrt(dh)
  kv_mask = jnp.concatenate([mask_x, mask_latent], axis=1)
  m = mask_latent[:, :, None] * kv_mask[:, None, :]
  s = s + ((1.0 - m) * jnp.finfo(jnp.float32).min)[:, None, :, :]
  p = jax.nn.softmax(s, axis=-1)
  y = (p @ vh).transpose(0, 2, 1, 3).reshape(B, Sl, Hs)
  lat1 = latents + y @ params['wproj']
  h = ln(lat1, params['ffln_g'], params['ffln_b']) @ params['w1'] + params['b1'][0]
  h = 0.5 * h * (1.0 + jax.lax.erf(h / math.sqrt(2.0)))
  return lat1 + h @ params['w2'] + params['b2'][0]


if __name__ == "__main__":
  B, Sx, Sl = 4, 16, 8
  E = 32          # embedding_dim == latent_dim
  Hs = 32         # hidden_size
  H = 4           # n_heads -> dim_head = 8
  FF = E * 4      # ffn hidden

  key = jax.random.PRNGKey(0)
  ks = jax.random.split(key, 12)

  params = {
      'lnx_g': jnp.ones((1, E), jnp.float32),
      'lnx_b': jnp.zeros((1, E), jnp.float32),
      'lnl_g': jnp.ones((1, E), jnp.float32),
      'lnl_b': jnp.zeros((1, E), jnp.float32),
      'wq': 0.05 * jax.random.normal(ks[0], (E, Hs), jnp.float32),
      'wkv': 0.05 * jax.random.normal(ks[1], (E, 2 * Hs), jnp.float32),
      'qn_g': jnp.ones((1, Hs // H), jnp.float32),
      'wproj': 0.05 * jax.random.normal(ks[2], (Hs, E), jnp.float32),
      'ffln_g': jnp.ones((1, E), jnp.float32),
      'ffln_b': jnp.zeros((1, E), jnp.float32),
      'w1': 0.05 * jax.random.normal(ks[3], (E, FF), jnp.float32),
      'b1': 0.05 * jax.random.normal(ks[4], (1, FF), jnp.float32),
      'w2': 0.05 * jax.random.normal(ks[5], (FF, E), jnp.float32),
      'b2': 0.05 * jax.random.normal(ks[6], (1, E), jnp.float32),
  }

  x = jax.random.normal(ks[7], (B, Sx, E), jnp.float32)
  latents = jax.random.normal(ks[8], (B, Sl, E), jnp.float32)
  mask_x = (jax.random.uniform(ks[9], (B, Sx)) > 0.25).astype(jnp.float32)
  mask_latent = (jax.random.uniform(ks[10], (B, Sl)) > 0.2).astype(jnp.float32)

  ref = reference(x, latents, mask_x, mask_latent, params, n_heads=H)

  # Default bf16 storage path (recommended on v6e / v7x; f32 LN/softmax/accum,
  # f32 residual stream).
  out = transformer_block(x, latents, mask_x, mask_latent, params, n_heads=H)
  out = jax.block_until_ready(out)
  assert out.shape == (B, Sl, E)
  assert jnp.allclose(out, ref, atol=1e-1, rtol=1e-1)

  # All-f32 path: tighter numerics check.
  out_f32 = transformer_block(x, latents, mask_x, mask_latent, params,
                              n_heads=H, dtype=jnp.float32)
  out_f32 = jax.block_until_ready(out_f32)
  assert jnp.allclose(out_f32, ref, atol=2e-2, rtol=2e-2)

  print("KERNEL_OK")
</pallas_src>

<mosaic_0001>
module attributes {stable_mosaic.version = 11 : i64} {
  func.func @transformer_block_kernel(%arg0: i32, %arg1: memref<2x16x32xbf16, #tpu.memory_space<vmem>>, %arg2: memref<2x8x32xf32, #tpu.memory_space<vmem>>, %arg3: memref<1x8x2xf32, #tpu.memory_space<vmem>>, %arg4: memref<1x2x24xf32, #tpu.memory_space<vmem>>, %arg5: memref<1x32xf32, #tpu.memory_space<vmem>>, %arg6: memref<1x32xf32, #tpu.memory_space<vmem>>, %arg7: memref<1x32xf32, #tpu.memory_space<vmem>>, %arg8: memref<1x32xf32, #tpu.memory_space<vmem>>, %arg9: memref<32x96xbf16, #tpu.memory_space<vmem>>, %arg10: memref<32x64xbf16, #tpu.memory_space<vmem>>, %arg11: memref<1x8xf32, #tpu.memory_space<vmem>>, %arg12: memref<1x8xf32, #tpu.memory_space<vmem>>, %arg13: memref<32x32xbf16, #tpu.memory_space<vmem>>, %arg14: memref<1x32xf32, #tpu.memory_space<vmem>>, %arg15: memref<1x32xf32, #tpu.memory_space<vmem>>, %arg16: memref<32x128xbf16, #tpu.memory_space<vmem>>, %arg17: memref<1x128xf32, #tpu.memory_space<vmem>>, %arg18: memref<128x32xbf16, #tpu.memory_space<vmem>>, %arg19: memref<1x32xf32, #tpu.memory_space<vmem>>, %arg20: memref<2x8x32xf32, #tpu.memory_space<vmem>>, %arg21: memref<16x32xf32, #tpu.memory_space<vmem>>) attributes {dimension_semantics = [#tpu.dimension_semantics<parallel>], iteration_bounds = array<i64: 2>, scalar_prefetch = 0 : i64, scratch_operands = 1 : i64, tpu.core_type = #tpu.core_type<tc>, window_params = [{transform_indices = @transform_0, window_bounds = array<i64: 2, 16, 32>}, {transform_indices = @transform_1, window_bounds = array<i64: 2, 8, 32>}, {transform_indices = @transform_2, window_bounds = array<i64: 1, 8, 2>}, {transform_indices = @transform_3, window_bounds = array<i64: 1, 2, 24>}, {pipeline_mode = #tpu.pipeline_mode<synchronous>, transform_indices = @transform_4, window_bounds = array<i64: 1, 32>}, {pipeline_mode = #tpu.pipeline_mode<synchronous>, transform_indices = @transform_5, window_bounds = array<i64: 1, 32>}, {pipeline_mode = #tpu.pipeline_mode<synchronous>, transform_indices = @transform_6, window_bounds = array<i64: 1, 32>}, {pipeline_mode = #tpu.pipeline_mode<synchronous>, transform_indices = @transform_7, window_bounds = array<i64: 1, 32>}, {pipeline_mode = #tpu.pipeline_mode<synchronous>, transform_indices = @transform_8, window_bounds = array<i64: 32, 96>}, {pipeline_mode = #tpu.pipeline_mode<synchronous>, transform_indices = @transform_9, window_bounds = array<i64: 32, 64>}, {pipeline_mode = #tpu.pipeline_mode<synchronous>, transform_indices = @transform_10, window_bounds = array<i64: 1, 8>}, {pipeline_mode = #tpu.pipeline_mode<synchronous>, transform_indices = @transform_11, window_bounds = array<i64: 1, 8>}, {pipeline_mode = #tpu.pipeline_mode<synchronous>, transform_indices = @transform_12, window_bounds = array<i64: 32, 32>}, {pipeline_mode = #tpu.pipeline_mode<synchronous>, transform_indices = @transform_13, window_bounds = array<i64: 1, 32>}, {pipeline_mode = #tpu.pipeline_mode<synchronous>, transform_indices = @transform_14, window_bounds = array<i64: 1, 32>}, {pipeline_mode = #tpu.pipeline_mode<synchronous>, transform_indices = @transform_15, window_bounds = array<i64: 32, 128>}, {pipeline_mode = #tpu.pipeline_mode<synchronous>, transform_indices = @transform_16, window_bounds = array<i64: 1, 128>}, {pipeline_mode = #tpu.pipeline_mode<synchronous>, transform_indices = @transform_17, window_bounds = array<i64: 128, 32>}, {pipeline_mode = #tpu.pipeline_mode<synchronous>, transform_indices = @transform_18, window_bounds = array<i64: 1, 32>}, {transform_indices = @transform_19, window_bounds = array<i64: 2, 8, 32>}]} {
    %c0 = arith.constant 0 : index
    %c0_0 = arith.constant 0 : index
    %c0_1 = arith.constant 0 : index
    %0 = vector.load %arg1[%c0, %c0_0, %c0_1] : memref<2x16x32xbf16, #tpu.memory_space<vmem>>, vector<2x16x32xbf16>
    %1 = arith.extf %0 : vector<2x16x32xbf16> to vector<2x16x32xf32>
    %2 = vector.shape_cast %1 : vector<2x16x32xf32> to vector<32x32xf32>
    %c0_2 = arith.constant 0 : index
    %c0_3 = arith.constant 0 : index
    %c0_4 = arith.constant 0 : index
    %3 = vector.load %arg2[%c0_2, %c0_3, %c0_4] : memref<2x8x32xf32, #tpu.memory_space<vmem>>, vector<2x8x32xf32>
    %4 = vector.shape_cast %3 : vector<2x8x32xf32> to vector<16x32xf32>
    %c0_5 = arith.constant 0 : index
    %c0_6 = arith.constant 0 : index
    %5 = vector.load %arg5[%c0_5, %c0_6] : memref<1x32xf32, #tpu.memory_space<vmem>>, vector<1x32xf32>
    %c0_7 = arith.constant 0 : index
    %c0_8 = arith.constant 0 : index
    %6 = vector.load %arg6[%c0_7, %c0_8] : memref<1x32xf32, #tpu.memory_space<vmem>>, vector<1x32xf32>
    %cst = arith.constant dense<0.000000e+00> : vector<32xf32>
    %7 = vector.multi_reduction <add>, %2, %cst [1] : vector<32x32xf32> to vector<32xf32>
    %8 = vector.shape_cast %7 : vector<32xf32> to vector<32x1xf32>
    %cst_9 = arith.constant 3.200000e+01 : f32
    %9 = vector.broadcast %cst_9 : f32 to vector<32x1xf32>
    %10 = arith.divf %8, %9 : vector<32x1xf32>
    %11 = vector.broadcast %10 : vector<32x1xf32> to vector<32x32xf32>
    %12 = arith.subf %2, %11 : vector<32x32xf32>
    %13 = arith.mulf %12, %12 : vector<32x32xf32>
    %cst_10 = arith.constant dense<0.000000e+00> : vector<32xf32>
    %14 = vector.multi_reduction <add>, %13, %cst_10 [1] : vector<32x32xf32> to vector<32xf32>
    %15 = vector.shape_cast %14 : vector<32xf32> to vector<32x1xf32>
    %cst_11 = arith.constant 3.200000e+01 : f32
    %16 = vector.broadcast %cst_11 : f32 to vector<32x1xf32>
    %17 = arith.divf %15, %16 : vector<32x1xf32>
    %18 = vector.broadcast %10 : vector<32x1xf32> to vector<32x32xf32>
    %19 = arith.subf %2, %18 : vector<32x32xf32>
    %cst_12 = arith.constant 9.99999974E-6 : f32
    %20 = vector.broadcast %cst_12 : f32 to vector<32x1xf32>
    %21 = arith.addf %17, %20 : vector<32x1xf32>
    %22 = math.rsqrt %21 : vector<32x1xf32>
    %23 = vector.broadcast %22 : vector<32x1xf32> to vector<32x32xf32>
    %24 = arith.mulf %19, %23 : vector<32x32xf32>
    %25 = vector.broadcast %5 : vector<1x32xf32> to vector<32x32xf32>
    %26 = arith.mulf %24, %25 : vector<32x32xf32>
    %27 = vector.broadcast %6 : vector<1x32xf32> to vector<32x32xf32>
    %28 = arith.addf %26, %27 : vector<32x32xf32>
    %29 = arith.truncf %28 : vector<32x32xf32> to vector<32x32xbf16>
    %c0_13 = arith.constant 0 : index
    %c0_14 = arith.constant 0 : index
    %30 = vector.load %arg7[%c0_13, %c0_14] : memref<1x32xf32, #tpu.memory_space<vmem>>, vector<1x32xf32>
    %c0_15 = arith.constant 0 : index
    %c0_16 = arith.constant 0 : index
    %31 = vector.load %arg8[%c0_15, %c0_16] : memref<1x32xf32, #tpu.memory_space<vmem>>, vector<1x32xf32>
    %cst_17 = arith.constant dense<0.000000e+00> : vector<16xf32>
    %32 = vector.multi_reduction <add>, %4, %cst_17 [1] : vector<16x32xf32> to vector<16xf32>
    %33 = vector.shape_cast %32 : vector<16xf32> to vector<16x1xf32>
    %cst_18 = arith.constant 3.200000e+01 : f32
    %34 = vector.broadcast %cst_18 : f32 to vector<16x1xf32>
    %35 = arith.divf %33, %34 : vector<16x1xf32>
    %36 = vector.broadcast %35 : vector<16x1xf32> to vector<16x32xf32>
    %37 = arith.subf %4, %36 : vector<16x32xf32>
    %38 = arith.mulf %37, %37 : vector<16x32xf32>
    %cst_19 = arith.constant dense<0.000000e+00> : vector<16xf32>
    %39 = vector.multi_reduction <add>, %38, %cst_19 [1] : vector<16x32xf32> to vector<16xf32>
    %40 = vector.shape_cast %39 : vector<16xf32> to vector<16x1xf32>
    %cst_20 = arith.constant 3.200000e+01 : f32
    %41 = vector.broadcast %cst_20 : f32 to vector<16x1xf32>
    %42 = arith.divf %40, %41 : vector<16x1xf32>
    %43 = vector.broadcast %35 : vector<16x1xf32> to vector<16x32xf32>
    %44 = arith.subf %4, %43 : vector<16x32xf32>
    %cst_21 = arith.constant 9.99999974E-6 : f32
    %45 = vector.broadcast %cst_21 : f32 to vector<16x1xf32>
    %46 = arith.addf %42, %45 : vector<16x1xf32>
    %47 = math.rsqrt %46 : vector<16x1xf32>
    %48 = vector.broadcast %47 : vector<16x1xf32> to vector<16x32xf32>
    %49 = arith.mulf %44, %48 : vector<16x32xf32>
    %50 = vector.broadcast %30 : vector<1x32xf32> to vector<16x32xf32>
    %51 = arith.mulf %49, %50 : vector<16x32xf32>
    %52 = vector.broadcast %31 : vector<1x32xf32> to vector<16x32xf32>
    %53 = arith.addf %51, %52 : vector<16x32xf32>
    %54 = arith.truncf %53 : vector<16x32xf32> to vector<16x32xbf16>
    %c0_22 = arith.constant 0 : index
    %c0_23 = arith.constant 0 : index
    %55 = vector.load %arg9[%c0_22, %c0_23] : memref<32x96xbf16, #tpu.memory_space<vmem>>, vector<32x96xbf16>
    %cst_24 = arith.constant dense<0.000000e+00> : vector<16x96xf32>
    %56 = tpu.matmul %54, %55, %cst_24 {dimension_numbers = #tpu.dot_dimension_numbers<[1], [0], [0], [1], [0, 0, 1, 1], [], []>} : vector<16x32xbf16>, vector<32x96xbf16>, vector<16x96xf32> -> vector<16x96xf32>
    %c0_25 = arith.constant 0 : index
    %c0_26 = arith.constant 0 : index
    %57 = vector.load %arg10[%c0_25, %c0_26] : memref<32x64xbf16, #tpu.memory_space<vmem>>, vector<32x64xbf16>
    %cst_27 = arith.constant dense<0.000000e+00> : vector<32x64xf32>
    %58 = tpu.matmul %29, %57, %cst_27 {dimension_numbers = #tpu.dot_dimension_numbers<[1], [0], [0], [1], [0, 0, 1, 1], [], []>} : vector<32x32xbf16>, vector<32x64xbf16>, vector<32x64xf32> -> vector<32x64xf32>
    %c0_28 = arith.constant 0 : index
    %c0_29 = arith.constant 0 : index
    %59 = vector.load %arg11[%c0_28, %c0_29] : memref<1x8xf32, #tpu.memory_space<vmem>>, vector<1x8xf32>
    %c0_30 = arith.constant 0 : index
    %c0_31 = arith.constant 0 : index
    %60 = vector.load %arg12[%c0_30, %c0_31] : memref<1x8xf32, #tpu.memory_space<vmem>>, vector<1x8xf32>
    %c0_32 = arith.constant 0 : index
    %c0_33 = arith.constant 0 : index
    %c0_34 = arith.constant 0 : index
    %61 = vector.load %arg3[%c0_32, %c0_33, %c0_34] : memref<1x8x2xf32, #tpu.memory_space<vmem>>, vector<1x8x2xf32>
    %62 = vector.shape_cast %61 : vector<1x8x2xf32> to vector<8x2xf32>
    %c0_35 = arith.constant 0 : index
    %c0_36 = arith.constant 0 : index
    %c0_37 = arith.constant 0 : index
    %63 = vector.load %arg4[%c0_35, %c0_36, %c0_37] : memref<1x2x24xf32, #tpu.memory_space<vmem>>, vector<1x2x24xf32>
    %64 = vector.shape_cast %63 : vector<1x2x24xf32> to vector<2x24xf32>
    %65 = vector.extract_strided_slice %56 {offsets = [0, 0], sizes = [8, 32], strides = [1, 1]} : vector<16x96xf32> to vector<8x32xf32>
    %66 = vector.extract_strided_slice %58 {offsets = [0, 0], sizes = [16, 32], strides = [1, 1]} : vector<32x64xf32> to vector<16x32xf32>
    %67 = vector.extract_strided_slice %56 {offsets = [0, 32], sizes = [8, 32], strides = [1, 1]} : vector<16x96xf32> to vector<8x32xf32>
    %68 = tpu.concatenate %66, %67 in 0 : vector<16x32xf32>, vector<8x32xf32> -> vector<24x32xf32>
    %69 = vector.extract_strided_slice %58 {offsets = [0, 32], sizes = [16, 32], strides = [1, 1]} : vector<32x64xf32> to vector<16x32xf32>
    %70 = vector.extract_strided_slice %56 {offsets = [0, 64], sizes = [8, 32], strides = [1, 1]} : vector<16x96xf32> to vector<8x32xf32>
    %71 = tpu.concatenate %69, %70 in 0 : vector<16x32xf32>, vector<8x32xf32> -> vector<24x32xf32>
    %72 = vector.extract_strided_slice %62 {offsets = [0, 0], sizes = [8, 1], strides = [1, 1]} : vector<8x2xf32> to vector<8x1xf32>
    %73 = vector.extract_strided_slice %64 {offsets = [0, 0], sizes = [1, 24], strides = [1, 1]} : vector<2x24xf32> to vector<1x24xf32>
    %74 = vector.broadcast %72 : vector<8x1xf32> to vector<8x24xf32>
    %75 = vector.broadcast %73 : vector<1x24xf32> to vector<8x24xf32>
    %76 = arith.mulf %74, %75 : vector<8x24xf32>
    %cst_38 = arith.constant 1.000000e+00 : f32
    %77 = vector.broadcast %cst_38 : f32 to vector<8x24xf32>
    %78 = arith.subf %77, %76 : vector<8x24xf32>
    %cst_39 = arith.constant -1.000000e+30 : f32
    %79 = vector.broadcast %cst_39 : f32 to vector<8x24xf32>
    %80 = arith.mulf %78, %79 : vector<8x24xf32>
    %81 = vector.extract_strided_slice %65 {offsets = [0, 0], sizes = [8, 8], strides = [1, 1]} : vector<8x32xf32> to vector<8x8xf32>
    %82 = arith.mulf %81, %81 : vector<8x8xf32>
    %cst_40 = arith.constant dense<0.000000e+00> : vector<8xf32>
    %83 = vector.multi_reduction <add>, %82, %cst_40 [1] : vector<8x8xf32> to vector<8xf32>
    %84 = vector.shape_cast %83 : vector<8xf32> to vector<8x1xf32>
    %85 = math.sqrt %84 : vector<8x1xf32>
    %cst_41 = arith.constant 0.353553385 : f32
    %86 = vector.broadcast %cst_41 : f32 to vector<8x1xf32>
    %87 = arith.mulf %85, %86 : vector<8x1xf32>
    %cst_42 = arith.constant 9.99999993E-9 : f32
    %88 = vector.broadcast %cst_42 : f32 to vector<8x1xf32>
    %89 = arith.maximumf %87, %88 : vector<8x1xf32>
    %90 = vector.broadcast %89 : vector<8x1xf32> to vector<8x8xf32>
    %91 = arith.divf %81, %90 : vector<8x8xf32>
    %92 = vector.broadcast %59 : vector<1x8xf32> to vector<8x8xf32>
    %93 = arith.mulf %91, %92 : vector<8x8xf32>
    %94 = vector.extract_strided_slice %68 {offsets = [0, 0], sizes = [24, 8], strides = [1, 1]} : vector<24x32xf32> to vector<24x8xf32>
    %95 = arith.mulf %94, %94 : vector<24x8xf32>
    %cst_43 = arith.constant dense<0.000000e+00> : vector<24xf32>
    %96 = vector.multi_reduction <add>, %95, %cst_43 [1] : vector<24x8xf32> to vector<24xf32>
    %97 = vector.shape_cast %96 : vector<24xf32> to vector<24x1xf32>
    %98 = math.sqrt %97 : vector<24x1xf32>
    %cst_44 = arith.constant 0.353553385 : f32
    %99 = vector.broadcast %cst_44 : f32 to vector<24x1xf32>
    %100 = arith.mulf %98, %99 : vector<24x1xf32>
    %cst_45 = arith.constant 9.99999993E-9 : f32
    %101 = vector.broadcast %cst_45 : f32 to vector<24x1xf32>
    %102 = arith.maximumf %100, %101 : vector<24x1xf32>
    %103 = vector.broadcast %102 : vector<24x1xf32> to vector<24x8xf32>
    %104 = arith.divf %94, %103 : vector<24x8xf32>
    %105 = vector.broadcast %60 : vector<1x8xf32> to vector<24x8xf32>
    %106 = arith.mulf %104, %105 : vector<24x8xf32>
    %cst_46 = arith.constant dense<0.000000e+00> : vector<8x24xf32>
    %107 = tpu.matmul %93, %106, %cst_46 {dimension_numbers = #tpu.dot_dimension_numbers<[1], [1], [0], [0], [0, 0, 1, 0], [], []>} : vector<8x8xf32>, vector<24x8xf32>, vector<8x24xf32> -> vector<8x24xf32>
    %108 = arith.addf %107, %80 : vector<8x24xf32>
    %cst_47 = arith.constant dense<0xFF800000> : vector<8xf32>
    %109 = vector.multi_reduction <maximumf>, %108, %cst_47 [1] : vector<8x24xf32> to vector<8xf32>
    %110 = vector.shape_cast %109 : vector<8xf32> to vector<8x1xf32>
    %111 = vector.broadcast %110 : vector<8x1xf32> to vector<8x24xf32>
    %112 = arith.subf %108, %111 : vector<8x24xf32>
    %113 = math.exp %112 : vector<8x24xf32>
    %cst_48 = arith.constant dense<0.000000e+00> : vector<8xf32>
    %114 = vector.multi_reduction <add>, %113, %cst_48 [1] : vector<8x24xf32> to vector<8xf32>
    %115 = vector.shape_cast %114 : vector<8xf32> to vector<8x1xf32>
    %116 = tpu.reciprocal %115 {approx = true} : vector<8x1xf32> -> vector<8x1xf32>
    %117 = vector.broadcast %116 : vector<8x1xf32> to vector<8x24xf32>
    %118 = arith.mulf %113, %117 : vector<8x24xf32>
    %119 = arith.truncf %118 : vector<8x24xf32> to vector<8x24xbf16>
    %120 = vector.extract_strided_slice %71 {offsets = [0, 0], sizes = [24, 8], strides = [1, 1]} : vector<24x32xf32> to vector<24x8xf32>
    %121 = arith.truncf %120 : vector<24x8xf32> to vector<24x8xbf16>
    %cst_49 = arith.constant dense<0.000000e+00> : vector<8x8xf32>
    %122 = tpu.matmul %119, %121, %cst_49 {dimension_numbers = #tpu.dot_dimension_numbers<[1], [0], [0], [1], [0, 0, 1, 1], [], []>} : vector<8x24xbf16>, vector<24x8xbf16>, vector<8x8xf32> -> vector<8x8xf32>
    %c0_50 = arith.constant 0 : index
    %c0_51 = arith.constant 0 : index
    %123 = vector.load %arg21[%c0_50, %c0_51] : memref<16x32xf32, #tpu.memory_space<vmem>>, vector<8x8xf32>
    tpu.vector_store %arg21[%c0_50, %c0_51], %122 {strides = array<i32>} : memref<16x32xf32, #tpu.memory_space<vmem>>, vector<8x8xf32>,
    %124 = vector.extract_strided_slice %65 {offsets = [0, 8], sizes = [8, 8], strides = [1, 1]} : vector<8x32xf32> to vector<8x8xf32>
    %125 = arith.mulf %124, %124 : vector<8x8xf32>
    %cst_52 = arith.constant dense<0.000000e+00> : vector<8xf32>
    %126 = vector.multi_reduction <add>, %125, %cst_52 [1] : vector<8x8xf32> to vector<8xf32>
    %127 = vector.shape_cast %126 : vector<8xf32> to vector<8x1xf32>
    %128 = math.sqrt %127 : vector<8x1xf32>
    %cst_53 = arith.constant 0.353553385 : f32
    %129 = vector.broadcast %cst_53 : f32 to vector<8x1xf32>
    %130 = arith.mulf %128, %129 : vector<8x1xf32>
    %cst_54 = arith.constant 9.99999993E-9 : f32
    %131 = vector.broadcast %cst_54 : f32 to vector<8x1xf32>
    %132 = arith.maximumf %130, %131 : vector<8x1xf32>
    %133 = vector.broadcast %132 : vector<8x1xf32> to vector<8x8xf32>
    %134 = arith.divf %124, %133 : vector<8x8xf32>
    %135 = vector.broadcast %59 : vector<1x8xf32> to vector<8x8xf32>
    %136 = arith.mulf %134, %135 : vector<8x8xf32>
    %137 = vector.extract_strided_slice %68 {offsets = [0, 8], sizes = [24, 8], strides = [1, 1]} : vector<24x32xf32> to vector<24x8xf32>
    %138 = arith.mulf %137, %137 : vector<24x8xf32>
    %cst_55 = arith.constant dense<0.000000e+00> : vector<24xf32>
    %139 = vector.multi_reduction <add>, %138, %cst_55 [1] : vector<24x8xf32> to vector<24xf32>
    %140 = vector.shape_cast %139 : vector<24xf32> to vector<24x1xf32>
    %141 = math.sqrt %140 : vector<24x1xf32>
    %cst_56 = arith.constant 0.353553385 : f32
    %142 = vector.broadcast %cst_56 : f32 to vector<24x1xf32>
    %143 = arith.mulf %141, %142 : vector<24x1xf32>
    %cst_57 = arith.constant 9.99999993E-9 : f32
    %144 = vector.broadcast %cst_57 : f32 to vector<24x1xf32>
    %145 = arith.maximumf %143, %144 : vector<24x1xf32>
    %146 = vector.broadcast %145 : vector<24x1xf32> to vector<24x8xf32>
    %147 = arith.divf %137, %146 : vector<24x8xf32>
    %148 = vector.broadcast %60 : vector<1x8xf32> to vector<24x8xf32>
    %149 = arith.mulf %147, %148 : vector<24x8xf32>
    %cst_58 = arith.constant dense<0.000000e+00> : vector<8x24xf32>
    %150 = tpu.matmul %136, %149, %cst_58 {dimension_numbers = #tpu.dot_dimension_numbers<[1], [1], [0], [0], [0, 0, 1, 0], [], []>} : vector<8x8xf32>, vector<24x8xf32>, vector<8x24xf32> -> vector<8x24xf32>
    %151 = arith.addf %150, %80 : vector<8x24xf32>
    %cst_59 = arith.constant dense<0xFF800000> : vector<8xf32>
    %152 = vector.multi_reduction <maximumf>, %151, %cst_59 [1] : vector<8x24xf32> to vector<8xf32>
    %153 = vector.shape_cast %152 : vector<8xf32> to vector<8x1xf32>
    %154 = vector.broadcast %153 : vector<8x1xf32> to vector<8x24xf32>
    %155 = arith.subf %151, %154 : vector<8x24xf32>
    %156 = math.exp %155 : vector<8x24xf32>
    %cst_60 = arith.constant dense<0.000000e+00> : vector<8xf32>
    %157 = vector.multi_reduction <add>, %156, %cst_60 [1] : vector<8x24xf32> to vector<8xf32>
    %158 = vector.shape_cast %157 : vector<8xf32> to vector<8x1xf32>
    %159 = tpu.reciprocal %158 {approx = true} : vector<8x1xf32> -> vector<8x1xf32>
    %160 = vector.broadcast %159 : vector<8x1xf32> to vector<8x24xf32>
    %161 = arith.mulf %156, %160 : vector<8x24xf32>
    %162 = arith.truncf %161 : vector<8x24xf32> to vector<8x24xbf16>
    %163 = vector.extract_strided_slice %71 {offsets = [0, 8], sizes = [24, 8], strides = [1, 1]} : vector<24x32xf32> to vector<24x8xf32>
    %164 = arith.truncf %163 : vector<24x8xf32> to vector<24x8xbf16>
    %cst_61 = arith.constant dense<0.000000e+00> : vector<8x8xf32>
    %165 = tpu.matmul %162, %164, %cst_61 {dimension_numbers = #tpu.dot_dimension_numbers<[1], [0], [0], [1], [0, 0, 1, 1], [], []>} : vector<8x24xbf16>, vector<24x8xbf16>, vector<8x8xf32> -> vector<8x8xf32>
    %c0_62 = arith.constant 0 : index
    %c8 = arith.constant 8 : index
    %166 = vector.load %arg21[%c0_62, %c8] : memref<16x32xf32, #tpu.memory_space<vmem>>, vector<8x8xf32>
    tpu.vector_store %arg21[%c0_62, %c8], %165 {strides = array<i32>} : memref<16x32xf32, #tpu.memory_space<vmem>>, vector<8x8xf32>,
    %167 = vector.extract_strided_slice %65 {offsets = [0, 16], sizes = [8, 8], strides = [1, 1]} : vector<8x32xf32> to vector<8x8xf32>
    %168 = arith.mulf %167, %167 : vector<8x8xf32>
    %cst_63 = arith.constant dense<0.000000e+00> : vector<8xf32>
    %169 = vector.multi_reduction <add>, %168, %cst_63 [1] : vector<8x8xf32> to vector<8xf32>
    %170 = vector.shape_cast %169 : vector<8xf32> to vector<8x1xf32>
    %171 = math.sqrt %170 : vector<8x1xf32>
    %cst_64 = arith.constant 0.353553385 : f32
    %172 = vector.broadcast %cst_64 : f32 to vector<8x1xf32>
    %173 = arith.mulf %171, %172 : vector<8x1xf32>
    %cst_65 = arith.constant 9.99999993E-9 : f32
    %174 = vector.broadcast %cst_65 : f32 to vector<8x1xf32>
    %175 = arith.maximumf %173, %174 : vector<8x1xf32>
    %176 = vector.broadcast %175 : vector<8x1xf32> to vector<8x8xf32>
    %177 = arith.divf %167, %176 : vector<8x8xf32>
    %178 = vector.broadcast %59 : vector<1x8xf32> to vector<8x8xf32>
    %179 = arith.mulf %177, %178 : vector<8x8xf32>
    %180 = vector.extract_strided_slice %68 {offsets = [0, 16], sizes = [24, 8], strides = [1, 1]} : vector<24x32xf32> to vector<24x8xf32>
    %181 = arith.mulf %180, %180 : vector<24x8xf32>
    %cst_66 = arith.constant dense<0.000000e+00> : vector<24xf32>
    %182 = vector.multi_reduction <add>, %181, %cst_66 [1] : vector<24x8xf32> to vector<24xf32>
    %183 = vector.shape_cast %182 : vector<24xf32> to vector<24x1xf32>
    %184 = math.sqrt %183 : vector<24x1xf32>
    %cst_67 = arith.constant 0.353553385 : f32
    %185 = vector.broadcast %cst_67 : f32 to vector<24x1xf32>
    %186 = arith.mulf %184, %185 : vector<24x1xf32>
    %cst_68 = arith.constant 9.99999993E-9 : f32
    %187 = vector.broadcast %cst_68 : f32 to vector<24x1xf32>
    %188 = arith.maximumf %186, %187 : vector<24x1xf32>
    %189 = vector.broadcast %188 : vector<24x1xf32> to vector<24x8xf32>
    %190 = arith.divf %180, %189 : vector<24x8xf32>
    %191 = vector.broadcast %60 : vector<1x8xf32> to vector<24x8xf32>
    %192 = arith.mulf %190, %191 : vector<24x8xf32>
    %cst_69 = arith.constant dense<0.000000e+00> : vector<8x24xf32>
    %193 = tpu.matmul %179, %192, %cst_69 {dimension_numbers = #tpu.dot_dimension_numbers<[1], [1], [0], [0], [0, 0, 1, 0], [], []>} : vector<8x8xf32>, vector<24x8xf32>, vector<8x24xf32> -> vector<8x24xf32>
    %194 = arith.addf %193, %80 : vector<8x24xf32>
    %cst_70 = arith.constant dense<0xFF800000> : vector<8xf32>
    %195 = vector.multi_reduction <maximumf>, %194, %cst_70 [1] : vector<8x24xf32> to vector<8xf32>
    %196 = vector.shape_cast %195 : vector<8xf32> to vector<8x1xf32>
    %197 = vector.broadcast %196 : vector<8x1xf32> to vector<8x24xf32>
    %198 = arith.subf %194, %197 : vector<8x24xf32>
    %199 = math.exp %198 : vector<8x24xf32>
    %cst_71 = arith.constant dense<0.000000e+00> : vector<8xf32>
    %200 = vector.multi_reduction <add>, %199, %cst_71 [1] : vector<8x24xf32> to vector<8xf32>
    %201 = vector.shape_cast %200 : vector<8xf32> to vector<8x1xf32>
    %202 = tpu.reciprocal %201 {approx = true} : vector<8x1xf32> -> vector<8x1xf32>
    %203 = vector.broadcast %202 : vector<8x1xf32> to vector<8x24xf32>
    %204 = arith.mulf %199, %203 : vector<8x24xf32>
    %205 = arith.truncf %204 : vector<8x24xf32> to vector<8x24xbf16>
    %206 = vector.extract_strided_slice %71 {offsets = [0, 16], sizes = [24, 8], strides = [1, 1]} : vector<24x32xf32> to vector<24x8xf32>
    %207 = arith.truncf %206 : vector<24x8xf32> to vector<24x8xbf16>
    %cst_72 = arith.constant dense<0.000000e+00> : vector<8x8xf32>
    %208 = tpu.matmul %205, %207, %cst_72 {dimension_numbers = #tpu.dot_dimension_numbers<[1], [0], [0], [1], [0, 0, 1, 1], [], []>} : vector<8x24xbf16>, vector<24x8xbf16>, vector<8x8xf32> -> vector<8x8xf32>
    %c0_73 = arith.constant 0 : index
    %c16 = arith.constant 16 : index
    %209 = vector.load %arg21[%c0_73, %c16] : memref<16x32xf32, #tpu.memory_space<vmem>>, vector<8x8xf32>
    tpu.vector_store %arg21[%c0_73, %c16], %208 {strides = array<i32>} : memref<16x32xf32, #tpu.memory_space<vmem>>, vector<8x8xf32>,
    %210 = vector.extract_strided_slice %65 {offsets = [0, 24], sizes = [8, 8], strides = [1, 1]} : vector<8x32xf32> to vector<8x8xf32>
    %211 = arith.mulf %210, %210 : vector<8x8xf32>
    %cst_74 = arith.constant dense<0.000000e+00> : vector<8xf32>
    %212 = vector.multi_reduction <add>, %211, %cst_74 [1] : vector<8x8xf32> to vector<8xf32>
    %213 = vector.shape_cast %212 : vector<8xf32> to vector<8x1xf32>
    %214 = math.sqrt %213 : vector<8x1xf32>
    %cst_75 = arith.constant 0.353553385 : f32
    %215 = vector.broadcast %cst_75 : f32 to vector<8x1xf32>
    %216 = arith.mulf %214, %215 : vector<8x1xf32>
    %cst_76 = arith.constant 9.99999993E-9 : f32
    %217 = vector.broadcast %cst_76 : f32 to vector<8x1xf32>
    %218 = arith.maximumf %216, %217 : vector<8x1xf32>
    %219 = vector.broadcast %218 : vector<8x1xf32> to vector<8x8xf32>
    %220 = arith.divf %210, %219 : vector<8x8xf32>
    %221 = vector.broadcast %59 : vector<1x8xf32> to vector<8x8xf32>
    %222 = arith.mulf %220, %221 : vector<8x8xf32>
    %223 = vector.extract_strided_slice %68 {offsets = [0, 24], sizes = [24, 8], strides = [1, 1]} : vector<24x32xf32> to vector<24x8xf32>
    %224 = arith.mulf %223, %223 : vector<24x8xf32>
    %cst_77 = arith.constant dense<0.000000e+00> : vector<24xf32>
    %225 = vector.multi_reduction <add>, %224, %cst_77 [1] : vector<24x8xf32> to vector<24xf32>
    %226 = vector.shape_cast %225 : vector<24xf32> to vector<24x1xf32>
    %227 = math.sqrt %226 : vector<24x1xf32>
    %cst_78 = arith.constant 0.353553385 : f32
    %228 = vector.broadcast %cst_78 : f32 to vector<24x1xf32>
    %229 = arith.mulf %227, %228 : vector<24x1xf32>
    %cst_79 = arith.constant 9.99999993E-9 : f32
    %230 = vector.broadcast %cst_79 : f32 to vector<24x1xf32>
    %231 = arith.maximumf %229, %230 : vector<24x1xf32>
    %232 = vector.broadcast %231 : vector<24x1xf32> to vector<24x8xf32>
    %233 = arith.divf %223, %232 : vector<24x8xf32>
    %234 = vector.broadcast %60 : vector<1x8xf32> to vector<24x8xf32>
    %235 = arith.mulf %233, %234 : vector<24x8xf32>
    %cst_80 = arith.constant dense<0.000000e+00> : vector<8x24xf32>
    %236 = tpu.matmul %222, %235, %cst_80 {dimension_numbers = #tpu.dot_dimension_numbers<[1], [1], [0], [0], [0, 0, 1, 0], [], []>} : vector<8x8xf32>, vector<24x8xf32>, vector<8x24xf32> -> vector<8x24xf32>
    %237 = arith.addf %236, %80 : vector<8x24xf32>
    %cst_81 = arith.constant dense<0xFF800000> : vector<8xf32>
    %238 = vector.multi_reduction <maximumf>, %237, %cst_81 [1] : vector<8x24xf32> to vector<8xf32>
    %239 = vector.shape_cast %238 : vector<8xf32> to vector<8x1xf32>
    %240 = vector.broadcast %239 : vector<8x1xf32> to vector<8x24xf32>
    %241 = arith.subf %237, %240 : vector<8x24xf32>
    %242 = math.exp %241 : vector<8x24xf32>
    %cst_82 = arith.constant dense<0.000000e+00> : vector<8xf32>
    %243 = vector.multi_reduction <add>, %242, %cst_82 [1] : vector<8x24xf32> to vector<8xf32>
    %244 = vector.shape_cast %243 : vector<8xf32> to vector<8x1xf32>
    %245 = tpu.reciprocal %244 {approx = true} : vector<8x1xf32> -> vector<8x1xf32>
    %246 = vector.broadcast %245 : vector<8x1xf32> to vector<8x24xf32>
    %247 = arith.mulf %242, %246 : vector<8x24xf32>
    %248 = arith.truncf %247 : vector<8x24xf32> to vector<8x24xbf16>
    %249 = vector.extract_strided_slice %71 {offsets = [0, 24], sizes = [24, 8], strides = [1, 1]} : vector<24x32xf32> to vector<24x8xf32>
    %250 = arith.truncf %249 : vector<24x8xf32> to vector<24x8xbf16>
    %cst_83 = arith.constant dense<0.000000e+00> : vector<8x8xf32>
    %251 = tpu.matmul %248, %250, %cst_83 {dimension_numbers = #tpu.dot_dimension_numbers<[1], [0], [0], [1], [0, 0, 1, 1], [], []>} : vector<8x24xbf16>, vector<24x8xbf16>, vector<8x8xf32> -> vector<8x8xf32>
    %c0_84 = arith.constant 0 : index
    %c24 = arith.constant 24 : index
    %252 = vector.load %arg21[%c0_84, %c24] : memref<16x32xf32, #tpu.memory_space<vmem>>, vector<8x8xf32>
    tpu.vector_store %arg21[%c0_84, %c24], %251 {strides = array<i32>} : memref<16x32xf32, #tpu.memory_space<vmem>>, vector<8x8xf32>,
    %253 = vector.extract_strided_slice %56 {offsets = [8, 0], sizes = [8, 32], strides = [1, 1]} : vector<16x96xf32> to vector<8x32xf32>
    %254 = vector.extract_strided_slice %58 {offsets = [16, 0], sizes = [16, 32], strides = [1, 1]} : vector<32x64xf32> to vector<16x32xf32>
    %255 = vector.extract_strided_slice %56 {offsets = [8, 32], sizes = [8, 32], strides = [1, 1]} : vector<16x96xf32> to vector<8x32xf32>
    %256 = tpu.concatenate %254, %255 in 0 : vector<16x32xf32>, vector<8x32xf32> -> vector<24x32xf32>
    %257 = vector.extract_strided_slice %58 {offsets = [16, 32], sizes = [16, 32], strides = [1, 1]} : vector<32x64xf32> to vector<16x32xf32>
    %258 = vector.extract_strided_slice %56 {offsets = [8, 64], sizes = [8, 32], strides = [1, 1]} : vector<16x96xf32> to vector<8x32xf32>
    %259 = tpu.concatenate %257, %258 in 0 : vector<16x32xf32>, vector<8x32xf32> -> vector<24x32xf32>
    %260 = vector.extract_strided_slice %62 {offsets = [0, 1], sizes = [8, 1], strides = [1, 1]} : vector<8x2xf32> to vector<8x1xf32>
    %261 = vector.extract_strided_slice %64 {offsets = [1, 0], sizes = [1, 24], strides = [1, 1]} : vector<2x24xf32> to vector<1x24xf32>
    %262 = vector.broadcast %260 : vector<8x1xf32> to vector<8x24xf32>
    %263 = vector.broadcast %261 : vector<1x24xf32> to vector<8x24xf32>
    %264 = arith.mulf %262, %263 : vector<8x24xf32>
    %cst_85 = arith.constant 1.000000e+00 : f32
    %265 = vector.broadcast %cst_85 : f32 to vector<8x24xf32>
    %266 = arith.subf %265, %264 : vector<8x24xf32>
    %cst_86 = arith.constant -1.000000e+30 : f32
    %267 = vector.broadcast %cst_86 : f32 to vector<8x24xf32>
    %268 = arith.mulf %266, %267 : vector<8x24xf32>
    %269 = vector.extract_strided_slice %253 {offsets = [0, 0], sizes = [8, 8], strides = [1, 1]} : vector<8x32xf32> to vector<8x8xf32>
    %270 = arith.mulf %269, %269 : vector<8x8xf32>
    %cst_87 = arith.constant dense<0.000000e+00> : vector<8xf32>
    %271 = vector.multi_reduction <add>, %270, %cst_87 [1] : vector<8x8xf32> to vector<8xf32>
    %272 = vector.shape_cast %271 : vector<8xf32> to vector<8x1xf32>
    %273 = math.sqrt %272 : vector<8x1xf32>
    %cst_88 = arith.constant 0.353553385 : f32
    %274 = vector.broadcast %cst_88 : f32 to vector<8x1xf32>
    %275 = arith.mulf %273, %274 : vector<8x1xf32>
    %cst_89 = arith.constant 9.99999993E-9 : f32
    %276 = vector.broadcast %cst_89 : f32 to vector<8x1xf32>
    %277 = arith.maximumf %275, %276 : vector<8x1xf32>
    %278 = vector.broadcast %277 : vector<8x1xf32> to vector<8x8xf32>
    %279 = arith.divf %269, %278 : vector<8x8xf32>
    %280 = vector.broadcast %59 : vector<1x8xf32> to vector<8x8xf32>
    %281 = arith.mulf %279, %280 : vector<8x8xf32>
    %282 = vector.extract_strided_slice %256 {offsets = [0, 0], sizes = [24, 8], strides = [1, 1]} : vector<24x32xf32> to vector<24x8xf32>
    %283 = arith.mulf %282, %282 : vector<24x8xf32>
    %cst_90 = arith.constant dense<0.000000e+00> : vector<24xf32>
    %284 = vector.multi_reduction <add>, %283, %cst_90 [1] : vector<24x8xf32> to vector<24xf32>
    %285 = vector.shape_cast %284 : vector<24xf32> to vector<24x1xf32>
    %286 = math.sqrt %285 : vector<24x1xf32>
    %cst_91 = arith.constant 0.353553385 : f32
    %287 = vector.broadcast %cst_91 : f32 to vector<24x1xf32>
    %288 = arith.mulf %286, %287 : vector<24x1xf32>
    %cst_92 = arith.constant 9.99999993E-9 : f32
    %289 = vector.broadcast %cst_92 : f32 to vector<24x1xf32>
    %290 = arith.maximumf %288, %289 : vector<24x1xf32>
    %291 = vector.broadcast %290 : vector<24x1xf32> to vector<24x8xf32>
    %292 = arith.divf %282, %291 : vector<24x8xf32>
    %293 = vector.broadcast %60 : vector<1x8xf32> to vector<24x8xf32>
    %294 = arith.mulf %292, %293 : vector<24x8xf32>
    %cst_93 = arith.constant dense<0.000000e+00> : vector<8x24xf32>
    %295 = tpu.matmul %281, %294, %cst_93 {dimension_numbers = #tpu.dot_dimension_numbers<[1], [1], [0], [0], [0, 0, 1, 0], [], []>} : vector<8x8xf32>, vector<24x8xf32>, vector<8x24xf32> -> vector<8x24xf32>
    %296 = arith.addf %295, %268 : vector<8x24xf32>
    %cst_94 = arith.constant dense<0xFF800000> : vector<8xf32>
    %297 = vector.multi_reduction <maximumf>, %296, %cst_94 [1] : vector<8x24xf32> to vector<8xf32>
    %298 = vector.shape_cast %297 : vector<8xf32> to vector<8x1xf32>
    %299 = vector.broadcast %298 : vector<8x1xf32> to vector<8x24xf32>
    %300 = arith.subf %296, %299 : vector<8x24xf32>
    %301 = math.exp %300 : vector<8x24xf32>
    %cst_95 = arith.constant dense<0.000000e+00> : vector<8xf32>
    %302 = vector.multi_reduction <add>, %301, %cst_95 [1] : vector<8x24xf32> to vector<8xf32>
    %303 = vector.shape_cast %302 : vector<8xf32> to vector<8x1xf32>
    %304 = tpu.reciprocal %303 {approx = true} : vector<8x1xf32> -> vector<8x1xf32>
    %305 = vector.broadcast %304 : vector<8x1xf32> to vector<8x24xf32>
    %306 = arith.mulf %301, %305 : vector<8x24xf32>
    %307 = arith.truncf %306 : vector<8x24xf32> to vector<8x24xbf16>
    %308 = vector.extract_strided_slice %259 {offsets = [0, 0], sizes = [24, 8], strides = [1, 1]} : vector<24x32xf32> to vector<24x8xf32>
    %309 = arith.truncf %308 : vector<24x8xf32> to vector<24x8xbf16>
    %cst_96 = arith.constant dense<0.000000e+00> : vector<8x8xf32>
    %310 = tpu.matmul %307, %309, %cst_96 {dimension_numbers = #tpu.dot_dimension_numbers<[1], [0], [0], [1], [0, 0, 1, 1], [], []>} : vector<8x24xbf16>, vector<24x8xbf16>, vector<8x8xf32> -> vector<8x8xf32>
    %c8_97 = arith.constant 8 : index
    %c0_98 = arith.constant 0 : index
    %311 = vector.load %arg21[%c8_97, %c0_98] : memref<16x32xf32, #tpu.memory_space<vmem>>, vector<8x8xf32>
    tpu.vector_store %arg21[%c8_97, %c0_98], %310 {strides = array<i32>} : memref<16x32xf32, #tpu.memory_space<vmem>>, vector<8x8xf32>,
    %312 = vector.extract_strided_slice %253 {offsets = [0, 8], sizes = [8, 8], strides = [1, 1]} : vector<8x32xf32> to vector<8x8xf32>
    %313 = arith.mulf %312, %312 : vector<8x8xf32>
    %cst_99 = arith.constant dense<0.000000e+00> : vector<8xf32>
    %314 = vector.multi_reduction <add>, %313, %cst_99 [1] : vector<8x8xf32> to vector<8xf32>
    %315 = vector.shape_cast %314 : vector<8xf32> to vector<8x1xf32>
    %316 = math.sqrt %315 : vector<8x1xf32>
    %cst_100 = arith.constant 0.353553385 : f32
    %317 = vector.broadcast %cst_100 : f32 to vector<8x1xf32>
    %318 = arith.mulf %316, %317 : vector<8x1xf32>
    %cst_101 = arith.constant 9.99999993E-9 : f32
    %319 = vector.broadcast %cst_101 : f32 to vector<8x1xf32>
    %320 = arith.maximumf %318, %319 : vector<8x1xf32>
    %321 = vector.broadcast %320 : vector<8x1xf32> to vector<8x8xf32>
    %322 = arith.divf %312, %321 : vector<8x8xf32>
    %323 = vector.broadcast %59 : vector<1x8xf32> to vector<8x8xf32>
    %324 = arith.mulf %322, %323 : vector<8x8xf32>
    %325 = vector.extract_strided_slice %256 {offsets = [0, 8], sizes = [24, 8], strides = [1, 1]} : vector<24x32xf32> to vector<24x8xf32>
    %326 = arith.mulf %325, %325 : vector<24x8xf32>
    %cst_102 = arith.constant dense<0.000000e+00> : vector<24xf32>
    %327 = vector.multi_reduction <add>, %326, %cst_102 [1] : vector<24x8xf32> to vector<24xf32>
    %328 = vector.shape_cast %327 : vector<24xf32> to vector<24x1xf32>
    %329 = math.sqrt %328 : vector<24x1xf32>
    %cst_103 = arith.constant 0.353553385 : f32
    %330 = vector.broadcast %cst_103 : f32 to vector<24x1xf32>
    %331 = arith.mulf %329, %330 : vector<24x1xf32>
    %cst_104 = arith.constant 9.99999993E-9 : f32
    %332 = vector.broadcast %cst_104 : f32 to vector<24x1xf32>
    %333 = arith.maximumf %331, %332 : vector<24x1xf32>
    %334 = vector.broadcast %333 : vector<24x1xf32> to vector<24x8xf32>
    %335 = arith.divf %325, %334 : vector<24x8xf32>
    %336 = vector.broadcast %60 : vector<1x8xf32> to vector<24x8xf32>
    %337 = arith.mulf %335, %336 : vector<24x8xf32>
    %cst_105 = arith.constant dense<0.000000e+00> : vector<8x24xf32>
    %338 = tpu.matmul %324, %337, %cst_105 {dimension_numbers = #tpu.dot_dimension_numbers<[1], [1], [0], [0], [0, 0, 1, 0], [], []>} : vector<8x8xf32>, vector<24x8xf32>, vector<8x24xf32> -> vector<8x24xf32>
    %339 = arith.addf %338, %268 : vector<8x24xf32>
    %cst_106 = arith.constant dense<0xFF800000> : vector<8xf32>
    %340 = vector.multi_reduction <maximumf>, %339, %cst_106 [1] : vector<8x24xf32> to vector<8xf32>
    %341 = vector.shape_cast %340 : vector<8xf32> to vector<8x1xf32>
    %342 = vector.broadcast %341 : vector<8x1xf32> to vector<8x24xf32>
    %343 = arith.subf %339, %342 : vector<8x24xf32>
    %344 = math.exp %343 : vector<8x24xf32>
    %cst_107 = arith.constant dense<0.000000e+00> : vector<8xf32>
    %345 = vector.multi_reduction <add>, %344, %cst_107 [1] : vector<8x24xf32> to vector<8xf32>
    %346 = vector.shape_cast %345 : vector<8xf32> to vector<8x1xf32>
    %347 = tpu.reciprocal %346 {approx = true} : vector<8x1xf32> -> vector<8x1xf32>
    %348 = vector.broadcast %347 : vector<8x1xf32> to vector<8x24xf32>
    %349 = arith.mulf %344, %348 : vector<8x24xf32>
    %350 = arith.truncf %349 : vector<8x24xf32> to vector<8x24xbf16>
    %351 = vector.extract_strided_slice %259 {offsets = [0, 8], sizes = [24, 8], strides = [1, 1]} : vector<24x32xf32> to vector<24x8xf32>
    %352 = arith.truncf %351 : vector<24x8xf32> to vector<24x8xbf16>
    %cst_108 = arith.constant dense<0.000000e+00> : vector<8x8xf32>
    %353 = tpu.matmul %350, %352, %cst_108 {dimension_numbers = #tpu.dot_dimension_numbers<[1], [0], [0], [1], [0, 0, 1, 1], [], []>} : vector<8x24xbf16>, vector<24x8xbf16>, vector<8x8xf32> -> vector<8x8xf32>
    %c8_109 = arith.constant 8 : index
    %c8_110 = arith.constant 8 : index
    %354 = vector.load %arg21[%c8_109, %c8_110] : memref<16x32xf32, #tpu.memory_space<vmem>>, vector<8x8xf32>
    tpu.vector_store %arg21[%c8_109, %c8_110], %353 {strides = array<i32>} : memref<16x32xf32, #tpu.memory_space<vmem>>, vector<8x8xf32>,
    %355 = vector.extract_strided_slice %253 {offsets = [0, 16], sizes = [8, 8], strides = [1, 1]} : vector<8x32xf32> to vector<8x8xf32>
    %356 = arith.mulf %355, %355 : vector<8x8xf32>
    %cst_111 = arith.constant dense<0.000000e+00> : vector<8xf32>
    %357 = vector.multi_reduction <add>, %356, %cst_111 [1] : vector<8x8xf32> to vector<8xf32>
    %358 = vector.shape_cast %357 : vector<8xf32> to vector<8x1xf32>
    %359 = math.sqrt %358 : vector<8x1xf32>
    %cst_112 = arith.constant 0.353553385 : f32
    %360 = vector.broadcast %cst_112 : f32 to vector<8x1xf32>
    %361 = arith.mulf %359, %360 : vector<8x1xf32>
    %cst_113 = arith.constant 9.99999993E-9 : f32
    %362 = vector.broadcast %cst_113 : f32 to vector<8x1xf32>
    %363 = arith.maximumf %361, %362 : vector<8x1xf32>
    %364 = vector.broadcast %363 : vector<8x1xf32> to vector<8x8xf32>
    %365 = arith.divf %355, %364 : vector<8x8xf32>
    %366 = vector.broadcast %59 : vector<1x8xf32> to vector<8x8xf32>
    %367 = arith.mulf %365, %366 : vector<8x8xf32>
    %368 = vector.extract_strided_slice %256 {offsets = [0, 16], sizes = [24, 8], strides = [1, 1]} : vector<24x32xf32> to vector<24x8xf32>
    %369 = arith.mulf %368, %368 : vector<24x8xf32>
    %cst_114 = arith.constant dense<0.000000e+00> : vector<24xf32>
    %370 = vector.multi_reduction <add>, %369, %cst_114 [1] : vector<24x8xf32> to vector<24xf32>
    %371 = vector.shape_cast %370 : vector<24xf32> to vector<24x1xf32>
    %372 = math.sqrt %371 : vector<24x1xf32>
    %cst_115 = arith.constant 0.353553385 : f32
    %373 = vector.broadcast %cst_115 : f32 to vector<24x1xf32>
    %374 = arith.mulf %372, %373 : vector<24x1xf32>
    %cst_116 = arith.constant 9.99999993E-9 : f32
    %375 = vector.broadcast %cst_116 : f32 to vector<24x1xf32>
    %376 = arith.maximumf %374, %375 : vector<24x1xf32>
    %377 = vector.broadcast %376 : vector<24x1xf32> to vector<24x8xf32>
    %378 = arith.divf %368, %377 : vector<24x8xf32>
    %379 = vector.broadcast %60 : vector<1x8xf32> to vector<24x8xf32>
    %380 = arith.mulf %378, %379 : vector<24x8xf32>
    %cst_117 = arith.constant dense<0.000000e+00> : vector<8x24xf32>
    %381 = tpu.matmul %367, %380, %cst_117 {dimension_numbers = #tpu.dot_dimension_numbers<[1], [1], [0], [0], [0, 0, 1, 0], [], []>} : vector<8x8xf32>, vector<24x8xf32>, vector<8x24xf32> -> vector<8x24xf32>
    %382 = arith.addf %381, %268 : vector<8x24xf32>
    %cst_118 = arith.constant dense<0xFF800000> : vector<8xf32>
    %383 = vector.multi_reduction <maximumf>, %382, %cst_118 [1] : vector<8x24xf32> to vector<8xf32>
    %384 = vector.shape_cast %383 : vector<8xf32> to vector<8x1xf32>
    %385 = vector.broadcast %384 : vector<8x1xf32> to vector<8x24xf32>
    %386 = arith.subf %382, %385 : vector<8x24xf32>
    %387 = math.exp %386 : vector<8x24xf32>
    %cst_119 = arith.constant dense<0.000000e+00> : vector<8xf32>
    %388 = vector.multi_reduction <add>, %387, %cst_119 [1] : vector<8x24xf32> to vector<8xf32>
    %389 = vector.shape_cast %388 : vector<8xf32> to vector<8x1xf32>
    %390 = tpu.reciprocal %389 {approx = true} : vector<8x1xf32> -> vector<8x1xf32>
    %391 = vector.broadcast %390 : vector<8x1xf32> to vector<8x24xf32>
    %392 = arith.mulf %387, %391 : vector<8x24xf32>
    %393 = arith.truncf %392 : vector<8x24xf32> to vector<8x24xbf16>
    %394 = vector.extract_strided_slice %259 {offsets = [0, 16], sizes = [24, 8], strides = [1, 1]} : vector<24x32xf32> to vector<24x8xf32>
    %395 = arith.truncf %394 : vector<24x8xf32> to vector<24x8xbf16>
    %cst_120 = arith.constant dense<0.000000e+00> : vector<8x8xf32>
    %396 = tpu.matmul %393, %395, %cst_120 {dimension_numbers = #tpu.dot_dimension_numbers<[1], [0], [0], [1], [0, 0, 1, 1], [], []>} : vector<8x24xbf16>, vector<24x8xbf16>, vector<8x8xf32> -> vector<8x8xf32>
    %c8_121 = arith.constant 8 : index
    %c16_122 = arith.constant 16 : index
    %397 = vector.load %arg21[%c8_121, %c16_122] : memref<16x32xf32, #tpu.memory_space<vmem>>, vector<8x8xf32>
    tpu.vector_store %arg21[%c8_121, %c16_122], %396 {strides = array<i32>} : memref<16x32xf32, #tpu.memory_space<vmem>>, vector<8x8xf32>,
    %398 = vector.extract_strided_slice %253 {offsets = [0, 24], sizes = [8, 8], strides = [1, 1]} : vector<8x32xf32> to vector<8x8xf32>
    %399 = arith.mulf %398, %398 : vector<8x8xf32>
    %cst_123 = arith.constant dense<0.000000e+00> : vector<8xf32>
    %400 = vector.multi_reduction <add>, %399, %cst_123 [1] : vector<8x8xf32> to vector<8xf32>
    %401 = vector.shape_cast %400 : vector<8xf32> to vector<8x1xf32>
    %402 = math.sqrt %401 : vector<8x1xf32>
    %cst_124 = arith.constant 0.353553385 : f32
    %403 = vector.broadcast %cst_124 : f32 to vector<8x1xf32>
    %404 = arith.mulf %402, %403 : vector<8x1xf32>
    %cst_125 = arith.constant 9.99999993E-9 : f32
    %405 = vector.broadcast %cst_125 : f32 to vector<8x1xf32>
    %406 = arith.maximumf %404, %405 : vector<8x1xf32>
    %407 = vector.broadcast %406 : vector<8x1xf32> to vector<8x8xf32>
    %408 = arith.divf %398, %407 : vector<8x8xf32>
    %409 = vector.broadcast %59 : vector<1x8xf32> to vector<8x8xf32>
    %410 = arith.mulf %408, %409 : vector<8x8xf32>
    %411 = vector.extract_strided_slice %256 {offsets = [0, 24], sizes = [24, 8], strides = [1, 1]} : vector<24x32xf32> to vector<24x8xf32>
    %412 = arith.mulf %411, %411 : vector<24x8xf32>
    %cst_126 = arith.constant dense<0.000000e+00> : vector<24xf32>
    %413 = vector.multi_reduction <add>, %412, %cst_126 [1] : vector<24x8xf32> to vector<24xf32>
    %414 = vector.shape_cast %413 : vector<24xf32> to vector<24x1xf32>
    %415 = math.sqrt %414 : vector<24x1xf32>
    %cst_127 = arith.constant 0.353553385 : f32
    %416 = vector.broadcast %cst_127 : f32 to vector<24x1xf32>
    %417 = arith.mulf %415, %416 : vector<24x1xf32>
    %cst_128 = arith.constant 9.99999993E-9 : f32
    %418 = vector.broadcast %cst_128 : f32 to vector<24x1xf32>
    %419 = arith.maximumf %417, %418 : vector<24x1xf32>
    %420 = vector.broadcast %419 : vector<24x1xf32> to vector<24x8xf32>
    %421 = arith.divf %411, %420 : vector<24x8xf32>
    %422 = vector.broadcast %60 : vector<1x8xf32> to vector<24x8xf32>
    %423 = arith.mulf %421, %422 : vector<24x8xf32>
    %cst_129 = arith.constant dense<0.000000e+00> : vector<8x24xf32>
    %424 = tpu.matmul %410, %423, %cst_129 {dimension_numbers = #tpu.dot_dimension_numbers<[1], [1], [0], [0], [0, 0, 1, 0], [], []>} : vector<8x8xf32>, vector<24x8xf32>, vector<8x24xf32> -> vector<8x24xf32>
    %425 = arith.addf %424, %268 : vector<8x24xf32>
    %cst_130 = arith.constant dense<0xFF800000> : vector<8xf32>
    %426 = vector.multi_reduction <maximumf>, %425, %cst_130 [1] : vector<8x24xf32> to vector<8xf32>
    %427 = vector.shape_cast %426 : vector<8xf32> to vector<8x1xf32>
    %428 = vector.broadcast %427 : vector<8x1xf32> to vector<8x24xf32>
    %429 = arith.subf %425, %428 : vector<8x24xf32>
    %430 = math.exp %429 : vector<8x24xf32>
    %cst_131 = arith.constant dense<0.000000e+00> : vector<8xf32>
    %431 = vector.multi_reduction <add>, %430, %cst_131 [1] : vector<8x24xf32> to vector<8xf32>
    %432 = vector.shape_cast %431 : vector<8xf32> to vector<8x1xf32>
    %433 = tpu.reciprocal %432 {approx = true} : vector<8x1xf32> -> vector<8x1xf32>
    %434 = vector.broadcast %433 : vector<8x1xf32> to vector<8x24xf32>
    %435 = arith.mulf %430, %434 : vector<8x24xf32>
    %436 = arith.truncf %435 : vector<8x24xf32> to vector<8x24xbf16>
    %437 = vector.extract_strided_slice %259 {offsets = [0, 24], sizes = [24, 8], strides = [1, 1]} : vector<24x32xf32> to vector<24x8xf32>
    %438 = arith.truncf %437 : vector<24x8xf32> to vector<24x8xbf16>
    %cst_132 = arith.constant dense<0.000000e+00> : vector<8x8xf32>
    %439 = tpu.matmul %436, %438, %cst_132 {dimension_numbers = #tpu.dot_dimension_numbers<[1], [0], [0], [1], [0, 0, 1, 1], [], []>} : vector<8x24xbf16>, vector<24x8xbf16>, vector<8x8xf32> -> vector<8x8xf32>
    %c8_133 = arith.constant 8 : index
    %c24_134 = arith.constant 24 : index
    %440 = vector.load %arg21[%c8_133, %c24_134] : memref<16x32xf32, #tpu.memory_space<vmem>>, vector<8x8xf32>
    tpu.vector_store %arg21[%c8_133, %c24_134], %439 {strides = array<i32>} : memref<16x32xf32, #tpu.memory_space<vmem>>, vector<8x8xf32>,
    %c0_135 = arith.constant 0 : index
    %c0_136 = arith.constant 0 : index
    %441 = vector.load %arg21[%c0_135, %c0_136] : memref<16x32xf32, #tpu.memory_space<vmem>>, vector<16x32xf32>
    %442 = arith.truncf %441 : vector<16x32xf32> to vector<16x32xbf16>
    %c0_137 = arith.constant 0 : index
    %c0_138 = arith.constant 0 : index
    %443 = vector.load %arg13[%c0_137, %c0_138] : memref<32x32xbf16, #tpu.memory_space<vmem>>, vector<32x32xbf16>
    %cst_139 = arith.constant dense<0.000000e+00> : vector<16x32xf32>
    %444 = tpu.matmul %442, %443, %cst_139 {dimension_numbers = #tpu.dot_dimension_numbers<[1], [0], [0], [1], [0, 0, 1, 1], [], []>} : vector<16x32xbf16>, vector<32x32xbf16>, vector<16x32xf32> -> vector<16x32xf32>
    %445 = arith.addf %4, %444 : vector<16x32xf32>
    %c0_140 = arith.constant 0 : index
    %c0_141 = arith.constant 0 : index
    %446 = vector.load %arg14[%c0_140, %c0_141] : memref<1x32xf32, #tpu.memory_space<vmem>>, vector<1x32xf32>
    %c0_142 = arith.constant 0 : index
    %c0_143 = arith.constant 0 : index
    %447 = vector.load %arg15[%c0_142, %c0_143] : memref<1x32xf32, #tpu.memory_space<vmem>>, vector<1x32xf32>
    %cst_144 = arith.constant dense<0.000000e+00> : vector<16xf32>
    %448 = vector.multi_reduction <add>, %445, %cst_144 [1] : vector<16x32xf32> to vector<16xf32>
    %449 = vector.shape_cast %448 : vector<16xf32> to vector<16x1xf32>
    %cst_145 = arith.constant 3.200000e+01 : f32
    %450 = vector.broadcast %cst_145 : f32 to vector<16x1xf32>
    %451 = arith.divf %449, %450 : vector<16x1xf32>
    %452 = vector.broadcast %451 : vector<16x1xf32> to vector<16x32xf32>
    %453 = arith.subf %445, %452 : vector<16x32xf32>
    %454 = arith.mulf %453, %453 : vector<16x32xf32>
    %cst_146 = arith.constant dense<0.000000e+00> : vector<16xf32>
    %455 = vector.multi_reduction <add>, %454, %cst_146 [1] : vector<16x32xf32> to vector<16xf32>
    %456 = vector.shape_cast %455 : vector<16xf32> to vector<16x1xf32>
    %cst_147 = arith.constant 3.200000e+01 : f32
    %457 = vector.broadcast %cst_147 : f32 to vector<16x1xf32>
    %458 = arith.divf %456, %457 : vector<16x1xf32>
    %459 = vector.broadcast %451 : vector<16x1xf32> to vector<16x32xf32>
    %460 = arith.subf %445, %459 : vector<16x32xf32>
    %cst_148 = arith.constant 9.99999974E-6 : f32
    %461 = vector.broadcast %cst_148 : f32 to vector<16x1xf32>
    %462 = arith.addf %458, %461 : vector<16x1xf32>
    %463 = math.rsqrt %462 : vector<16x1xf32>
    %464 = vector.broadcast %463 : vector<16x1xf32> to vector<16x32xf32>
    %465 = arith.mulf %460, %464 : vector<16x32xf32>
    %466 = vector.broadcast %446 : vector<1x32xf32> to vector<16x32xf32>
    %467 = arith.mulf %465, %466 : vector<16x32xf32>
    %468 = vector.broadcast %447 : vector<1x32xf32> to vector<16x32xf32>
    %469 = arith.addf %467, %468 : vector<16x32xf32>
    %470 = arith.truncf %469 : vector<16x32xf32> to vector<16x32xbf16>
    %c0_149 = arith.constant 0 : index
    %c0_150 = arith.constant 0 : index
    %471 = vector.load %arg16[%c0_149, %c0_150] : memref<32x128xbf16, #tpu.memory_space<vmem>>, vector<32x128xbf16>
    %cst_151 = arith.constant dense<0.000000e+00> : vector<16x128xf32>
    %472 = tpu.matmul %470, %471, %cst_151 {dimension_numbers = #tpu.dot_dimension_numbers<[1], [0], [0], [1], [0, 0, 1, 1], [], []>} : vector<16x32xbf16>, vector<32x128xbf16>, vector<16x128xf32> -> vector<16x128xf32>
    %c0_152 = arith.constant 0 : index
    %c0_153 = arith.constant 0 : index
    %473 = vector.load %arg17[%c0_152, %c0_153] : memref<1x128xf32, #tpu.memory_space<vmem>>, vector<1x128xf32>
    %474 = vector.broadcast %473 : vector<1x128xf32> to vector<16x128xf32>
    %475 = arith.addf %472, %474 : vector<16x128xf32>
    %cst_154 = arith.constant 5.000000e-01 : f32
    %476 = vector.broadcast %cst_154 : f32 to vector<16x128xf32>
    %477 = arith.mulf %476, %475 : vector<16x128xf32>
    %cst_155 = arith.constant 0.707106769 : f32
    %478 = vector.broadcast %cst_155 : f32 to vector<16x128xf32>
    %479 = arith.mulf %475, %478 : vector<16x128xf32>
    %480 = math.erf %479 : vector<16x128xf32>
    %cst_156 = arith.constant 1.000000e+00 : f32
    %481 = vector.broadcast %cst_156 : f32 to vector<16x128xf32>
    %482 = arith.addf %481, %480 : vector<16x128xf32>
    %483 = arith.mulf %477, %482 : vector<16x128xf32>
    %484 = arith.truncf %483 : vector<16x128xf32> to vector<16x128xbf16>
    %c0_157 = arith.constant 0 : index
    %c0_158 = arith.constant 0 : index
    %485 = vector.load %arg18[%c0_157, %c0_158] : memref<128x32xbf16, #tpu.memory_space<vmem>>, vector<128x32xbf16>
    %cst_159 = arith.constant dense<0.000000e+00> : vector<16x32xf32>
    %486 = tpu.matmul %484, %485, %cst_159 {dimension_numbers = #tpu.dot_dimension_numbers<[1], [0], [0], [1], [0, 0, 1, 1], [], []>} : vector<16x128xbf16>, vector<128x32xbf16>, vector<16x32xf32> -> vector<16x32xf32>
    %c0_160 = arith.constant 0 : index
    %c0_161 = arith.constant 0 : index
    %487 = vector.load %arg19[%c0_160, %c0_161] : memref<1x32xf32, #tpu.memory_space<vmem>>, vector<1x32xf32>
    %488 = vector.broadcast %487 : vector<1x32xf32> to vector<16x32xf32>
    %489 = arith.addf %486, %488 : vector<16x32xf32>
    %490 = arith.addf %445, %489 : vector<16x32xf32>
    %491 = vector.shape_cast %490 : vector<16x32xf32> to vector<2x8x32xf32>
    %c0_162 = arith.constant 0 : index
    %c0_163 = arith.constant 0 : index
    %c0_164 = arith.constant 0 : index
    %492 = vector.load %arg20[%c0_162, %c0_163, %c0_164] : memref<2x8x32xf32, #tpu.memory_space<vmem>>, vector<2x8x32xf32>
    tpu.vector_store %arg20[%c0_162, %c0_163, %c0_164], %491 {strides = array<i32>} : memref<2x8x32xf32, #tpu.memory_space<vmem>>, vector<2x8x32xf32>,
    return
  }
  func.func @transform_0(%arg0: i32) -> (i32, i32, i32) {
    %c0_i32 = arith.constant 0 : i32
    %c0_i32_0 = arith.constant 0 : i32
    %c0_i32_1 = arith.constant 0 : i32
    return %arg0, %c0_i32, %c0_i32_0 : i32, i32, i32
  }
  func.func @transform_1(%arg0: i32) -> (i32, i32, i32) {
    %c0_i32 = arith.constant 0 : i32
    %c0_i32_0 = arith.constant 0 : i32
    %c0_i32_1 = arith.constant 0 : i32
    return %arg0, %c0_i32, %c0_i32_0 : i32, i32, i32
  }
  func.func @transform_2(%arg0: i32) -> (i32, i32, i32) {
    %c0_i32 = arith.constant 0 : i32
    %c0_i32_0 = arith.constant 0 : i32
    %c0_i32_1 = arith.constant 0 : i32
    return %arg0, %c0_i32, %c0_i32_0 : i32, i32, i32
  }
  func.func @transform_3(%arg0: i32) -> (i32, i32, i32) {
    %c0_i32 = arith.constant 0 : i32
    %c0_i32_0 = arith.constant 0 : i32
    %c0_i32_1 = arith.constant 0 : i32
    return %arg0, %c0_i32, %c0_i32_0 : i32, i32, i32
  }
  func.func @transform_4(%arg0: i32) -> (i32, i32) {
    %c0_i32 = arith.constant 0 : i32
    %c0_i32_0 = arith.constant 0 : i32
    %c0_i32_1 = arith.constant 0 : i32
    return %c0_i32, %c0_i32_0 : i32, i32
  }
  func.func @transform_5(%arg0: i32) -> (i32, i32) {
    %c0_i32 = arith.constant 0 : i32
    %c0_i32_0 = arith.constant 0 : i32
    %c0_i32_1 = arith.constant 0 : i32
    return %c0_i32, %c0_i32_0 : i32, i32
  }
  func.func @transform_6(%arg0: i32) -> (i32, i32) {
    %c0_i32 = arith.constant 0 : i32
    %c0_i32_0 = arith.constant 0 : i32
    %c0_i32_1 = arith.constant 0 : i32
    return %c0_i32, %c0_i32_0 : i32, i32
  }
  func.func @transform_7(%arg0: i32) -> (i32, i32) {
    %c0_i32 = arith.constant 0 : i32
    %c0_i32_0 = arith.constant 0 : i32
    %c0_i32_1 = arith.constant 0 : i32
    return %c0_i32, %c0_i32_0 : i32, i32
  }
  func.func @transform_8(%arg0: i32) -> (i32, i32) {
    %c0_i32 = arith.constant 0 : i32
    %c0_i32_0 = arith.constant 0 : i32
    %c0_i32_1 = arith.constant 0 : i32
    return %c0_i32, %c0_i32_0 : i32, i32
  }
  func.func @transform_9(%arg0: i32) -> (i32, i32) {
    %c0_i32 = arith.constant 0 : i32
    %c0_i32_0 = arith.constant 0 : i32
    %c0_i32_1 = arith.constant 0 : i32
    return %c0_i32, %c0_i32_0 : i32, i32
  }
  func.func @transform_10(%arg0: i32) -> (i32, i32) {
    %c0_i32 = arith.constant 0 : i32
    %c0_i32_0 = arith.constant 0 : i32
    %c0_i32_1 = arith.constant 0 : i32
    return %c0_i32, %c0_i32_0 : i32, i32
  }
  func.func @transform_11(%arg0: i32) -> (i32, i32) {
    %c0_i32 = arith.constant 0 : i32
    %c0_i32_0 = arith.constant 0 : i32
    %c0_i32_1 = arith.constant 0 : i32
    return %c0_i32, %c0_i32_0 : i32, i32
  }
  func.func @transform_12(%arg0: i32) -> (i32, i32) {
    %c0_i32 = arith.constant 0 : i32
    %c0_i32_0 = arith.constant 0 : i32
    %c0_i32_1 = arith.constant 0 : i32
    return %c0_i32, %c0_i32_0 : i32, i32
  }
  func.func @transform_13(%arg0: i32) -> (i32, i32) {
    %c0_i32 = arith.constant 0 : i32
    %c0_i32_0 = arith.constant 0 : i32
    %c0_i32_1 = arith.constant 0 : i32
    return %c0_i32, %c0_i32_0 : i32, i32
  }
  func.func @transform_14(%arg0: i32) -> (i32, i32) {
    %c0_i32 = arith.constant 0 : i32
    %c0_i32_0 = arith.constant 0 : i32
    %c0_i32_1 = arith.constant 0 : i32
    return %c0_i32, %c0_i32_0 : i32, i32
  }
  func.func @transform_15(%arg0: i32) -> (i32, i32) {
    %c0_i32 = arith.constant 0 : i32
    %c0_i32_0 = arith.constant 0 : i32
    %c0_i32_1 = arith.constant 0 : i32
    return %c0_i32, %c0_i32_0 : i32, i32
  }
  func.func @transform_16(%arg0: i32) -> (i32, i32) {
    %c0_i32 = arith.constant 0 : i32
    %c0_i32_0 = arith.constant 0 : i32
    %c0_i32_1 = arith.constant 0 : i32
    return %c0_i32, %c0_i32_0 : i32, i32
  }
  func.func @transform_17(%arg0: i32) -> (i32, i32) {
    %c0_i32 = arith.constant 0 : i32
    %c0_i32_0 = arith.constant 0 : i32
    %c0_i32_1 = arith.constant 0 : i32
    return %c0_i32, %c0_i32_0 : i32, i32
  }
  func.func @transform_18(%arg0: i32) -> (i32, i32) {
    %c0_i32 = arith.constant 0 : i32
    %c0_i32_0 = arith.constant 0 : i32
    %c0_i32_1 = arith.constant 0 : i32
    return %c0_i32, %c0_i32_0 : i32, i32
  }
  func.func @transform_19(%arg0: i32) -> (i32, i32, i32) {
    %c0_i32 = arith.constant 0 : i32
    %c0_i32_0 = arith.constant 0 : i32
    %c0_i32_1 = arith.constant 0 : i32
    return %arg0, %c0_i32, %c0_i32_0 : i32, i32, i32
  }
}

module attributes {stable_mosaic.version = 11 : i64} {
  func.func @transformer_block_kernel(%arg0: i32, %arg1: memref<2x16x32xbf16, #tpu.memory_space<vmem>>, %arg2: memref<2x8x32xf32, #tpu.memory_space<vmem>>, %arg3: memref<1x8x2xf32, #tpu.memory_space<vmem>>, %arg4: memref<1x2x24xf32, #tpu.memory_space<vmem>>, %arg5: memref<1x32xf32, #tpu.memory_space<vmem>>, %arg6: memref<1x32xf32, #tpu.memory_space<vmem>>, %arg7: memref<1x32xf32, #tpu.memory_space<vmem>>, %arg8: memref<1x32xf32, #tpu.memory_space<vmem>>, %arg9: memref<32x96xbf16, #tpu.memory_space<vmem>>, %arg10: memref<32x64xbf16, #tpu.memory_space<vmem>>, %arg11: memref<1x8xf32, #tpu.memory_space<vmem>>, %arg12: memref<1x8xf32, #tpu.memory_space<vmem>>, %arg13: memref<32x32xbf16, #tpu.memory_space<vmem>>, %arg14: memref<1x32xf32, #tpu.memory_space<vmem>>, %arg15: memref<1x32xf32, #tpu.memory_space<vmem>>, %arg16: memref<32x128xbf16, #tpu.memory_space<vmem>>, %arg17: memref<1x128xf32, #tpu.memory_space<vmem>>, %arg18: memref<128x32xbf16, #tpu.memory_space<vmem>>, %arg19: memref<1x32xf32, #tpu.memory_space<vmem>>, %arg20: memref<2x8x32xf32, #tpu.memory_space<vmem>>, %arg21: memref<16x32xf32, #tpu.memory_space<vmem>>) attributes {dimension_semantics = [#tpu.dimension_semantics<parallel>], iteration_bounds = array<i64: 2>, scalar_prefetch = 0 : i64, scratch_operands = 1 : i64, tpu.core_type = #tpu.core_type<tc>, window_params = [{transform_indices = @transform_0, window_bounds = array<i64: 2, 16, 32>}, {transform_indices = @transform_1, window_bounds = array<i64: 2, 8, 32>}, {transform_indices = @transform_2, window_bounds = array<i64: 1, 8, 2>}, {transform_indices = @transform_3, window_bounds = array<i64: 1, 2, 24>}, {pipeline_mode = #tpu.pipeline_mode<synchronous>, transform_indices = @transform_4, window_bounds = array<i64: 1, 32>}, {pipeline_mode = #tpu.pipeline_mode<synchronous>, transform_indices = @transform_5, window_bounds = array<i64: 1, 32>}, {pipeline_mode = #tpu.pipeline_mode<synchronous>, transform_indices = @transform_6, window_bounds = array<i64: 1, 32>}, {pipeline_mode = #tpu.pipeline_mode<synchronous>, transform_indices = @transform_7, window_bounds = array<i64: 1, 32>}, {pipeline_mode = #tpu.pipeline_mode<synchronous>, transform_indices = @transform_8, window_bounds = array<i64: 32, 96>}, {pipeline_mode = #tpu.pipeline_mode<synchronous>, transform_indices = @transform_9, window_bounds = array<i64: 32, 64>}, {pipeline_mode = #tpu.pipeline_mode<synchronous>, transform_indices = @transform_10, window_bounds = array<i64: 1, 8>}, {pipeline_mode = #tpu.pipeline_mode<synchronous>, transform_indices = @transform_11, window_bounds = array<i64: 1, 8>}, {pipeline_mode = #tpu.pipeline_mode<synchronous>, transform_indices = @transform_12, window_bounds = array<i64: 32, 32>}, {pipeline_mode = #tpu.pipeline_mode<synchronous>, transform_indices = @transform_13, window_bounds = array<i64: 1, 32>}, {pipeline_mode = #tpu.pipeline_mode<synchronous>, transform_indices = @transform_14, window_bounds = array<i64: 1, 32>}, {pipeline_mode = #tpu.pipeline_mode<synchronous>, transform_indices = @transform_15, window_bounds = array<i64: 32, 128>}, {pipeline_mode = #tpu.pipeline_mode<synchronous>, transform_indices = @transform_16, window_bounds = array<i64: 1, 128>}, {pipeline_mode = #tpu.pipeline_mode<synchronous>, transform_indices = @transform_17, window_bounds = array<i64: 128, 32>}, {pipeline_mode = #tpu.pipeline_mode<synchronous>, transform_indices = @transform_18, window_bounds = array<i64: 1, 32>}, {transform_indices = @transform_19, window_bounds = array<i64: 2, 8, 32>}]} {
    %c0 = arith.constant 0 : index
    %c0_0 = arith.constant 0 : index
    %c0_1 = arith.constant 0 : index
    %0 = vector.load %arg1[%c0, %c0_0, %c0_1] : memref<2x16x32xbf16, #tpu.memory_space<vmem>>, vector<2x16x32xbf16>
    %1 = arith.extf %0 : vector<2x16x32xbf16> to vector<2x16x32xf32>
    %2 = vector.shape_cast %1 : vector<2x16x32xf32> to vector<32x32xf32>
    %c0_2 = arith.constant 0 : index
    %c0_3 = arith.constant 0 : index
    %c0_4 = arith.constant 0 : index
    %3 = vector.load %arg2[%c0_2, %c0_3, %c0_4] : memref<2x8x32xf32, #tpu.memory_space<vmem>>, vector<2x8x32xf32>
    %4 = vector.shape_cast %3 : vector<2x8x32xf32> to vector<16x32xf32>
    %c0_5 = arith.constant 0 : index
    %c0_6 = arith.constant 0 : index
    %5 = vector.load %arg5[%c0_5, %c0_6] : memref<1x32xf32, #tpu.memory_space<vmem>>, vector<1x32xf32>
    %c0_7 = arith.constant 0 : index
    %c0_8 = arith.constant 0 : index
    %6 = vector.load %arg6[%c0_7, %c0_8] : memref<1x32xf32, #tpu.memory_space<vmem>>, vector<1x32xf32>
    %cst = arith.constant dense<0.000000e+00> : vector<32xf32>
    %7 = vector.multi_reduction <add>, %2, %cst [1] : vector<32x32xf32> to vector<32xf32>
    %8 = vector.shape_cast %7 : vector<32xf32> to vector<32x1xf32>
    %cst_9 = arith.constant 3.200000e+01 : f32
    %9 = vector.broadcast %cst_9 : f32 to vector<32x1xf32>
    %10 = arith.divf %8, %9 : vector<32x1xf32>
    %11 = vector.broadcast %10 : vector<32x1xf32> to vector<32x32xf32>
    %12 = arith.subf %2, %11 : vector<32x32xf32>
    %13 = arith.mulf %12, %12 : vector<32x32xf32>
    %cst_10 = arith.constant dense<0.000000e+00> : vector<32xf32>
    %14 = vector.multi_reduction <add>, %13, %cst_10 [1] : vector<32x32xf32> to vector<32xf32>
    %15 = vector.shape_cast %14 : vector<32xf32> to vector<32x1xf32>
    %cst_11 = arith.constant 3.200000e+01 : f32
    %16 = vector.broadcast %cst_11 : f32 to vector<32x1xf32>
    %17 = arith.divf %15, %16 : vector<32x1xf32>
    %18 = vector.broadcast %10 : vector<32x1xf32> to vector<32x32xf32>
    %19 = arith.subf %2, %18 : vector<32x32xf32>
    %cst_12 = arith.constant 9.99999974E-6 : f32
    %20 = vector.broadcast %cst_12 : f32 to vector<32x1xf32>
    %21 = arith.addf %17, %20 : vector<32x1xf32>
    %22 = math.rsqrt %21 : vector<32x1xf32>
    %23 = vector.broadcast %22 : vector<32x1xf32> to vector<32x32xf32>
    %24 = arith.mulf %19, %23 : vector<32x32xf32>
    %25 = vector.broadcast %5 : vector<1x32xf32> to vector<32x32xf32>
    %26 = arith.mulf %24, %25 : vector<32x32xf32>
    %27 = vector.broadcast %6 : vector<1x32xf32> to vector<32x32xf32>
    %28 = arith.addf %26, %27 : vector<32x32xf32>
    %29 = arith.truncf %28 : vector<32x32xf32> to vector<32x32xbf16>
    %c0_13 = arith.constant 0 : index
    %c0_14 = arith.constant 0 : index
    %30 = vector.load %arg7[%c0_13, %c0_14] : memref<1x32xf32, #tpu.memory_space<vmem>>, vector<1x32xf32>
    %c0_15 = arith.constant 0 : index
    %c0_16 = arith.constant 0 : index
    %31 = vector.load %arg8[%c0_15, %c0_16] : memref<1x32xf32, #tpu.memory_space<vmem>>, vector<1x32xf32>
    %cst_17 = arith.constant dense<0.000000e+00> : vector<16xf32>
    %32 = vector.multi_reduction <add>, %4, %cst_17 [1] : vector<16x32xf32> to vector<16xf32>
    %33 = vector.shape_cast %32 : vector<16xf32> to vector<16x1xf32>
    %cst_18 = arith.constant 3.200000e+01 : f32
    %34 = vector.broadcast %cst_18 : f32 to vector<16x1xf32>
    %35 = arith.divf %33, %34 : vector<16x1xf32>
    %36 = vector.broadcast %35 : vector<16x1xf32> to vector<16x32xf32>
    %37 = arith.subf %4, %36 : vector<16x32xf32>
    %38 = arith.mulf %37, %37 : vector<16x32xf32>
    %cst_19 = arith.constant dense<0.000000e+00> : vector<16xf32>
    %39 = vector.multi_reduction <add>, %38, %cst_19 [1] : vector<16x32xf32> to vector<16xf32>
    %40 = vector.shape_cast %39 : vector<16xf32> to vector<16x1xf32>
    %cst_20 = arith.constant 3.200000e+01 : f32
    %41 = vector.broadcast %cst_20 : f32 to vector<16x1xf32>
    %42 = arith.divf %40, %41 : vector<16x1xf32>
    %43 = vector.broadcast %35 : vector<16x1xf32> to vector<16x32xf32>
    %44 = arith.subf %4, %43 : vector<16x32xf32>
    %cst_21 = arith.constant 9.99999974E-6 : f32
    %45 = vector.broadcast %cst_21 : f32 to vector<16x1xf32>
    %46 = arith.addf %42, %45 : vector<16x1xf32>
    %47 = math.rsqrt %46 : vector<16x1xf32>
    %48 = vector.broadcast %47 : vector<16x1xf32> to vector<16x32xf32>
    %49 = arith.mulf %44, %48 : vector<16x32xf32>
    %50 = vector.broadcast %30 : vector<1x32xf32> to vector<16x32xf32>
    %51 = arith.mulf %49, %50 : vector<16x32xf32>
    %52 = vector.broadcast %31 : vector<1x32xf32> to vector<16x32xf32>
    %53 = arith.addf %51, %52 : vector<16x32xf32>
    %54 = arith.truncf %53 : vector<16x32xf32> to vector<16x32xbf16>
    %c0_22 = arith.constant 0 : index
    %c0_23 = arith.constant 0 : index
    %55 = vector.load %arg9[%c0_22, %c0_23] : memref<32x96xbf16, #tpu.memory_space<vmem>>, vector<32x96xbf16>
    %cst_24 = arith.constant dense<0.000000e+00> : vector<16x96xf32>
    %56 = tpu.matmul %54, %55, %cst_24 {dimension_numbers = #tpu.dot_dimension_numbers<[1], [0], [0], [1], [0, 0, 1, 1], [], []>} : vector<16x32xbf16>, vector<32x96xbf16>, vector<16x96xf32> -> vector<16x96xf32>
    %c0_25 = arith.constant 0 : index
    %c0_26 = arith.constant 0 : index
    %57 = vector.load %arg10[%c0_25, %c0_26] : memref<32x64xbf16, #tpu.memory_space<vmem>>, vector<32x64xbf16>
    %cst_27 = arith.constant dense<0.000000e+00> : vector<32x64xf32>
    %58 = tpu.matmul %29, %57, %cst_27 {dimension_numbers = #tpu.dot_dimension_numbers<[1], [0], [0], [1], [0, 0, 1, 1], [], []>} : vector<32x32xbf16>, vector<32x64xbf16>, vector<32x64xf32> -> vector<32x64xf32>
    %c0_28 = arith.constant 0 : index
    %c0_29 = arith.constant 0 : index
    %59 = vector.load %arg11[%c0_28, %c0_29] : memref<1x8xf32, #tpu.memory_space<vmem>>, vector<1x8xf32>
    %c0_30 = arith.constant 0 : index
    %c0_31 = arith.constant 0 : index
    %60 = vector.load %arg12[%c0_30, %c0_31] : memref<1x8xf32, #tpu.memory_space<vmem>>, vector<1x8xf32>
    %c0_32 = arith.constant 0 : index
    %c0_33 = arith.constant 0 : index
    %c0_34 = arith.constant 0 : index
    %61 = vector.load %arg3[%c0_32, %c0_33, %c0_34] : memref<1x8x2xf32, #tpu.memory_space<vmem>>, vector<1x8x2xf32>
    %62 = vector.shape_cast %61 : vector<1x8x2xf32> to vector<8x2xf32>
    %c0_35 = arith.constant 0 : index
    %c0_36 = arith.constant 0 : index
    %c0_37 = arith.constant 0 : index
    %63 = vector.load %arg4[%c0_35, %c0_36, %c0_37] : memref<1x2x24xf32, #tpu.memory_space<vmem>>, vector<1x2x24xf32>
    %64 = vector.shape_cast %63 : vector<1x2x24xf32> to vector<2x24xf32>
    %65 = vector.extract_strided_slice %56 {offsets = [0, 0], sizes = [8, 32], strides = [1, 1]} : vector<16x96xf32> to vector<8x32xf32>
    %66 = vector.extract_strided_slice %58 {offsets = [0, 0], sizes = [16, 32], strides = [1, 1]} : vector<32x64xf32> to vector<16x32xf32>
    %67 = vector.extract_strided_slice %56 {offsets = [0, 32], sizes = [8, 32], strides = [1, 1]} : vector<16x96xf32> to vector<8x32xf32>
    %68 = tpu.concatenate %66, %67 in 0 : vector<16x32xf32>, vector<8x32xf32> -> vector<24x32xf32>
    %69 = vector.extract_strided_slice %58 {offsets = [0, 32], sizes = [16, 32], strides = [1, 1]} : vector<32x64xf32> to vector<16x32xf32>
    %70 = vector.extract_strided_slice %56 {offsets = [0, 64], sizes = [8, 32], strides = [1, 1]} : vector<16x96xf32> to vector<8x32xf32>
    %71 = tpu.concatenate %69, %70 in 0 : vector<16x32xf32>, vector<8x32xf32> -> vector<24x32xf32>
    %72 = vector.extract_strided_slice %62 {offsets = [0, 0], sizes = [8, 1], strides = [1, 1]} : vector<8x2xf32> to vector<8x1xf32>
    %73 = vector.extract_strided_slice %64 {offsets = [0, 0], sizes = [1, 24], strides = [1, 1]} : vector<2x24xf32> to vector<1x24xf32>
    %74 = vector.broadcast %72 : vector<8x1xf32> to vector<8x24xf32>
    %75 = vector.broadcast %73 : vector<1x24xf32> to vector<8x24xf32>
    %76 = arith.mulf %74, %75 : vector<8x24xf32>
    %cst_38 = arith.constant 1.000000e+00 : f32
    %77 = vector.broadcast %cst_38 : f32 to vector<8x24xf32>
    %78 = arith.subf %77, %76 : vector<8x24xf32>
    %cst_39 = arith.constant -1.000000e+30 : f32
    %79 = vector.broadcast %cst_39 : f32 to vector<8x24xf32>
    %80 = arith.mulf %78, %79 : vector<8x24xf32>
    %81 = vector.extract_strided_slice %65 {offsets = [0, 0], sizes = [8, 8], strides = [1, 1]} : vector<8x32xf32> to vector<8x8xf32>
    %82 = arith.mulf %81, %81 : vector<8x8xf32>
    %cst_40 = arith.constant dense<0.000000e+00> : vector<8xf32>
    %83 = vector.multi_reduction <add>, %82, %cst_40 [1] : vector<8x8xf32> to vector<8xf32>
    %84 = vector.shape_cast %83 : vector<8xf32> to vector<8x1xf32>
    %85 = math.sqrt %84 : vector<8x1xf32>
    %cst_41 = arith.constant 0.353553385 : f32
    %86 = vector.broadcast %cst_41 : f32 to vector<8x1xf32>
    %87 = arith.mulf %85, %86 : vector<8x1xf32>
    %cst_42 = arith.constant 9.99999993E-9 : f32
    %88 = vector.broadcast %cst_42 : f32 to vector<8x1xf32>
    %89 = arith.maximumf %87, %88 : vector<8x1xf32>
    %90 = vector.broadcast %89 : vector<8x1xf32> to vector<8x8xf32>
    %91 = arith.divf %81, %90 : vector<8x8xf32>
    %92 = vector.broadcast %59 : vector<1x8xf32> to vector<8x8xf32>
    %93 = arith.mulf %91, %92 : vector<8x8xf32>
    %94 = vector.extract_strided_slice %68 {offsets = [0, 0], sizes = [24, 8], strides = [1, 1]} : vector<24x32xf32> to vector<24x8xf32>
    %95 = arith.mulf %94, %94 : vector<24x8xf32>
    %cst_43 = arith.constant dense<0.000000e+00> : vector<24xf32>
    %96 = vector.multi_reduction <add>, %95, %cst_43 [1] : vector<24x8xf32> to vector<24xf32>
    %97 = vector.shape_cast %96 : vector<24xf32> to vector<24x1xf32>
    %98 = math.sqrt %97 : vector<24x1xf32>
    %cst_44 = arith.constant 0.353553385 : f32
    %99 = vector.broadcast %cst_44 : f32 to vector<24x1xf32>
    %100 = arith.mulf %98, %99 : vector<24x1xf32>
    %cst_45 = arith.constant 9.99999993E-9 : f32
    %101 = vector.broadcast %cst_45 : f32 to vector<24x1xf32>
    %102 = arith.maximumf %100, %101 : vector<24x1xf32>
    %103 = vector.broadcast %102 : vector<24x1xf32> to vector<24x8xf32>
    %104 = arith.divf %94, %103 : vector<24x8xf32>
    %105 = vector.broadcast %60 : vector<1x8xf32> to vector<24x8xf32>
    %106 = arith.mulf %104, %105 : vector<24x8xf32>
    %cst_46 = arith.constant dense<0.000000e+00> : vector<8x24xf32>
    %107 = tpu.matmul %93, %106, %cst_46 {dimension_numbers = #tpu.dot_dimension_numbers<[1], [1], [0], [0], [0, 0, 1, 0], [], []>} : vector<8x8xf32>, vector<24x8xf32>, vector<8x24xf32> -> vector<8x24xf32>
    %108 = arith.addf %107, %80 : vector<8x24xf32>
    %cst_47 = arith.constant dense<0xFF800000> : vector<8xf32>
    %109 = vector.multi_reduction <maximumf>, %108, %cst_47 [1] : vector<8x24xf32> to vector<8xf32>
    %110 = vector.shape_cast %109 : vector<8xf32> to vector<8x1xf32>
    %111 = vector.broadcast %110 : vector<8x1xf32> to vector<8x24xf32>
    %112 = arith.subf %108, %111 : vector<8x24xf32>
    %113 = math.exp %112 : vector<8x24xf32>
    %cst_48 = arith.constant dense<0.000000e+00> : vector<8xf32>
    %114 = vector.multi_reduction <add>, %113, %cst_48 [1] : vector<8x24xf32> to vector<8xf32>
    %115 = vector.shape_cast %114 : vector<8xf32> to vector<8x1xf32>
    %116 = tpu.reciprocal %115 {approx = true} : vector<8x1xf32> -> vector<8x1xf32>
    %117 = vector.broadcast %116 : vector<8x1xf32> to vector<8x24xf32>
    %118 = arith.mulf %113, %117 : vector<8x24xf32>
    %119 = arith.truncf %118 : vector<8x24xf32> to vector<8x24xbf16>
    %120 = vector.extract_strided_slice %71 {offsets = [0, 0], sizes = [24, 8], strides = [1, 1]} : vector<24x32xf32> to vector<24x8xf32>
    %121 = arith.truncf %120 : vector<24x8xf32> to vector<24x8xbf16>
    %cst_49 = arith.constant dense<0.000000e+00> : vector<8x8xf32>
    %122 = tpu.matmul %119, %121, %cst_49 {dimension_numbers = #tpu.dot_dimension_numbers<[1], [0], [0], [1], [0, 0, 1, 1], [], []>} : vector<8x24xbf16>, vector<24x8xbf16>, vector<8x8xf32> -> vector<8x8xf32>
    %c0_50 = arith.constant 0 : index
    %c0_51 = arith.constant 0 : index
    %123 = vector.load %arg21[%c0_50, %c0_51] : memref<16x32xf32, #tpu.memory_space<vmem>>, vector<8x8xf32>
    tpu.vector_store %arg21[%c0_50, %c0_51], %122 {strides = array<i32>} : memref<16x32xf32, #tpu.memory_space<vmem>>, vector<8x8xf32>,
    %124 = vector.extract_strided_slice %65 {offsets = [0, 8], sizes = [8, 8], strides = [1, 1]} : vector<8x32xf32> to vector<8x8xf32>
    %125 = arith.mulf %124, %124 : vector<8x8xf32>
    %cst_52 = arith.constant dense<0.000000e+00> : vector<8xf32>
    %126 = vector.multi_reduction <add>, %125, %cst_52 [1] : vector<8x8xf32> to vector<8xf32>
    %127 = vector.shape_cast %126 : vector<8xf32> to vector<8x1xf32>
    %128 = math.sqrt %127 : vector<8x1xf32>
    %cst_53 = arith.constant 0.353553385 : f32
    %129 = vector.broadcast %cst_53 : f32 to vector<8x1xf32>
    %130 = arith.mulf %128, %129 : vector<8x1xf32>
    %cst_54 = arith.constant 9.99999993E-9 : f32
    %131 = vector.broadcast %cst_54 : f32 to vector<8x1xf32>
    %132 = arith.maximumf %130, %131 : vector<8x1xf32>
    %133 = vector.broadcast %132 : vector<8x1xf32> to vector<8x8xf32>
    %134 = arith.divf %124, %133 : vector<8x8xf32>
    %135 = vector.broadcast %59 : vector<1x8xf32> to vector<8x8xf32>
    %136 = arith.mulf %134, %135 : vector<8x8xf32>
    %137 = vector.extract_strided_slice %68 {offsets = [0, 8], sizes = [24, 8], strides = [1, 1]} : vector<24x32xf32> to vector<24x8xf32>
    %138 = arith.mulf %137, %137 : vector<24x8xf32>
    %cst_55 = arith.constant dense<0.000000e+00> : vector<24xf32>
    %139 = vector.multi_reduction <add>, %138, %cst_55 [1] : vector<24x8xf32> to vector<24xf32>
    %140 = vector.shape_cast %139 : vector<24xf32> to vector<24x1xf32>
    %141 = math.sqrt %140 : vector<24x1xf32>
    %cst_56 = arith.constant 0.353553385 : f32
    %142 = vector.broadcast %cst_56 : f32 to vector<24x1xf32>
    %143 = arith.mulf %141, %142 : vector<24x1xf32>
    %cst_57 = arith.constant 9.99999993E-9 : f32
    %144 = vector.broadcast %cst_57 : f32 to vector<24x1xf32>
    %145 = arith.maximumf %143, %144 : vector<24x1xf32>
    %146 = vector.broadcast %145 : vector<24x1xf32> to vector<24x8xf32>
    %147 = arith.divf %137, %146 : vector<24x8xf32>
    %148 = vector.broadcast %60 : vector<1x8xf32> to vector<24x8xf32>
    %149 = arith.mulf %147, %148 : vector<24x8xf32>
    %cst_58 = arith.constant dense<0.000000e+00> : vector<8x24xf32>
    %150 = tpu.matmul %136, %149, %cst_58 {dimension_numbers = #tpu.dot_dimension_numbers<[1], [1], [0], [0], [0, 0, 1, 0], [], []>} : vector<8x8xf32>, vector<24x8xf32>, vector<8x24xf32> -> vector<8x24xf32>
    %151 = arith.addf %150, %80 : vector<8x24xf32>
    %cst_59 = arith.constant dense<0xFF800000> : vector<8xf32>
    %152 = vector.multi_reduction <maximumf>, %151, %cst_59 [1] : vector<8x24xf32> to vector<8xf32>
    %153 = vector.shape_cast %152 : vector<8xf32> to vector<8x1xf32>
    %154 = vector.broadcast %153 : vector<8x1xf32> to vector<8x24xf32>
    %155 = arith.subf %151, %154 : vector<8x24xf32>
    %156 = math.exp %155 : vector<8x24xf32>
    %cst_60 = arith.constant dense<0.000000e+00> : vector<8xf32>
    %157 = vector.multi_reduction <add>, %156, %cst_60 [1] : vector<8x24xf32> to vector<8xf32>
    %158 = vector.shape_cast %157 : vector<8xf32> to vector<8x1xf32>
    %159 = tpu.reciprocal %158 {approx = true} : vector<8x1xf32> -> vector<8x1xf32>
    %160 = vector.broadcast %159 : vector<8x1xf32> to vector<8x24xf32>
    %161 = arith.mulf %156, %160 : vector<8x24xf32>
    %162 = arith.truncf %161 : vector<8x24xf32> to vector<8x24xbf16>
    %163 = vector.extract_strided_slice %71 {offsets = [0, 8], sizes = [24, 8], strides = [1, 1]} : vector<24x32xf32> to vector<24x8xf32>
    %164 = arith.truncf %163 : vector<24x8xf32> to vector<24x8xbf16>
    %cst_61 = arith.constant dense<0.000000e+00> : vector<8x8xf32>
    %165 = tpu.matmul %162, %164, %cst_61 {dimension_numbers = #tpu.dot_dimension_numbers<[1], [0], [0], [1], [0, 0, 1, 1], [], []>} : vector<8x24xbf16>, vector<24x8xbf16>, vector<8x8xf32> -> vector<8x8xf32>
    %c0_62 = arith.constant 0 : index
    %c8 = arith.constant 8 : index
    %166 = vector.load %arg21[%c0_62, %c8] : memref<16x32xf32, #tpu.memory_space<vmem>>, vector<8x8xf32>
    tpu.vector_store %arg21[%c0_62, %c8], %165 {strides = array<i32>} : memref<16x32xf32, #tpu.memory_space<vmem>>, vector<8x8xf32>,
    %167 = vector.extract_strided_slice %65 {offsets = [0, 16], sizes = [8, 8], strides = [1, 1]} : vector<8x32xf32> to vector<8x8xf32>
    %168 = arith.mulf %167, %167 : vector<8x8xf32>
    %cst_63 = arith.constant dense<0.000000e+00> : vector<8xf32>
    %169 = vector.multi_reduction <add>, %168, %cst_63 [1] : vector<8x8xf32> to vector<8xf32>
    %170 = vector.shape_cast %169 : vector<8xf32> to vector<8x1xf32>
    %171 = math.sqrt %170 : vector<8x1xf32>
    %cst_64 = arith.constant 0.353553385 : f32
    %172 = vector.broadcast %cst_64 : f32 to vector<8x1xf32>
    %173 = arith.mulf %171, %172 : vector<8x1xf32>
    %cst_65 = arith.constant 9.99999993E-9 : f32
    %174 = vector.broadcast %cst_65 : f32 to vector<8x1xf32>
    %175 = arith.maximumf %173, %174 : vector<8x1xf32>
    %176 = vector.broadcast %175 : vector<8x1xf32> to vector<8x8xf32>
    %177 = arith.divf %167, %176 : vector<8x8xf32>
    %178 = vector.broadcast %59 : vector<1x8xf32> to vector<8x8xf32>
    %179 = arith.mulf %177, %178 : vector<8x8xf32>
    %180 = vector.extract_strided_slice %68 {offsets = [0, 16], sizes = [24, 8], strides = [1, 1]} : vector<24x32xf32> to vector<24x8xf32>
    %181 = arith.mulf %180, %180 : vector<24x8xf32>
    %cst_66 = arith.constant dense<0.000000e+00> : vector<24xf32>
    %182 = vector.multi_reduction <add>, %181, %cst_66 [1] : vector<24x8xf32> to vector<24xf32>
    %183 = vector.shape_cast %182 : vector<24xf32> to vector<24x1xf32>
    %184 = math.sqrt %183 : vector<24x1xf32>
    %cst_67 = arith.constant 0.353553385 : f32
    %185 = vector.broadcast %cst_67 : f32 to vector<24x1xf32>
    %186 = arith.mulf %184, %185 : vector<24x1xf32>
    %cst_68 = arith.constant 9.99999993E-9 : f32
    %187 = vector.broadcast %cst_68 : f32 to vector<24x1xf32>
    %188 = arith.maximumf %186, %187 : vector<24x1xf32>
    %189 = vector.broadcast %188 : vector<24x1xf32> to vector<24x8xf32>
    %190 = arith.divf %180, %189 : vector<24x8xf32>
    %191 = vector.broadcast %60 : vector<1x8xf32> to vector<24x8xf32>
    %192 = arith.mulf %190, %191 : vector<24x8xf32>
    %cst_69 = arith.constant dense<0.000000e+00> : vector<8x24xf32>
    %193 = tpu.matmul %179, %192, %cst_69 {dimension_numbers = #tpu.dot_dimension_numbers<[1], [1], [0], [0], [0, 0, 1, 0], [], []>} : vector<8x8xf32>, vector<24x8xf32>, vector<8x24xf32> -> vector<8x24xf32>
    %194 = arith.addf %193, %80 : vector<8x24xf32>
    %cst_70 = arith.constant dense<0xFF800000> : vector<8xf32>
    %195 = vector.multi_reduction <maximumf>, %194, %cst_70 [1] : vector<8x24xf32> to vector<8xf32>
    %196 = vector.shape_cast %195 : vector<8xf32> to vector<8x1xf32>
    %197 = vector.broadcast %196 : vector<8x1xf32> to vector<8x24xf32>
    %198 = arith.subf %194, %197 : vector<8x24xf32>
    %199 = math.exp %198 : vector<8x24xf32>
    %cst_71 = arith.constant dense<0.000000e+00> : vector<8xf32>
    %200 = vector.multi_reduction <add>, %199, %cst_71 [1] : vector<8x24xf32> to vector<8xf32>
    %201 = vector.shape_cast %200 : vector<8xf32> to vector<8x1xf32>
    %202 = tpu.reciprocal %201 {approx = true} : vector<8x1xf32> -> vector<8x1xf32>
    %203 = vector.broadcast %202 : vector<8x1xf32> to vector<8x24xf32>
    %204 = arith.mulf %199, %203 : vector<8x24xf32>
    %205 = arith.truncf %204 : vector<8x24xf32> to vector<8x24xbf16>
    %206 = vector.extract_strided_slice %71 {offsets = [0, 16], sizes = [24, 8], strides = [1, 1]} : vector<24x32xf32> to vector<24x8xf32>
    %207 = arith.truncf %206 : vector<24x8xf32> to vector<24x8xbf16>
    %cst_72 = arith.constant dense<0.000000e+00> : vector<8x8xf32>
    %208 = tpu.matmul %205, %207, %cst_72 {dimension_numbers = #tpu.dot_dimension_numbers<[1], [0], [0], [1], [0, 0, 1, 1], [], []>} : vector<8x24xbf16>, vector<24x8xbf16>, vector<8x8xf32> -> vector<8x8xf32>
    %c0_73 = arith.constant 0 : index
    %c16 = arith.constant 16 : index
    %209 = vector.load %arg21[%c0_73, %c16] : memref<16x32xf32, #tpu.memory_space<vmem>>, vector<8x8xf32>
    tpu.vector_store %arg21[%c0_73, %c16], %208 {strides = array<i32>} : memref<16x32xf32, #tpu.memory_space<vmem>>, vector<8x8xf32>,
    %210 = vector.extract_strided_slice %65 {offsets = [0, 24], sizes = [8, 8], strides = [1, 1]} : vector<8x32xf32> to vector<8x8xf32>
    %211 = arith.mulf %210, %210 : vector<8x8xf32>
    %cst_74 = arith.constant dense<0.000000e+00> : vector<8xf32>
    %212 = vector.multi_reduction <add>, %211, %cst_74 [1] : vector<8x8xf32> to vector<8xf32>
    %213 = vector.shape_cast %212 : vector<8xf32> to vector<8x1xf32>
    %214 = math.sqrt %213 : vector<8x1xf32>
    %cst_75 = arith.constant 0.353553385 : f32
    %215 = vector.broadcast %cst_75 : f32 to vector<8x1xf32>
    %216 = arith.mulf %214, %215 : vector<8x1xf32>
    %cst_76 = arith.constant 9.99999993E-9 : f32
    %217 = vector.broadcast %cst_76 : f32 to vector<8x1xf32>
    %218 = arith.maximumf %216, %217 : vector<8x1xf32>
    %219 = vector.broadcast %218 : vector<8x1xf32> to vector<8x8xf32>
    %220 = arith.divf %210, %219 : vector<8x8xf32>
    %221 = vector.broadcast %59 : vector<1x8xf32> to vector<8x8xf32>
    %222 = arith.mulf %220, %221 : vector<8x8xf32>
    %223 = vector.extract_strided_slice %68 {offsets = [0, 24], sizes = [24, 8], strides = [1, 1]} : vector<24x32xf32> to vector<24x8xf32>
    %224 = arith.mulf %223, %223 : vector<24x8xf32>
    %cst_77 = arith.constant dense<0.000000e+00> : vector<24xf32>
    %225 = vector.multi_reduction <add>, %224, %cst_77 [1] : vector<24x8xf32> to vector<24xf32>
    %226 = vector.shape_cast %225 : vector<24xf32> to vector<24x1xf32>
    %227 = math.sqrt %226 : vector<24x1xf32>
    %cst_78 = arith.constant 0.353553385 : f32
    %228 = vector.broadcast %cst_78 : f32 to vector<24x1xf32>
    %229 = arith.mulf %227, %228 : vector<24x1xf32>
    %cst_79 = arith.constant 9.99999993E-9 : f32
    %230 = vector.broadcast %cst_79 : f32 to vector<24x1xf32>
    %231 = arith.maximumf %229, %230 : vector<24x1xf32>
    %232 = vector.broadcast %231 : vector<24x1xf32> to vector<24x8xf32>
    %233 = arith.divf %223, %232 : vector<24x8xf32>
    %234 = vector.broadcast %60 : vector<1x8xf32> to vector<24x8xf32>
    %235 = arith.mulf %233, %234 : vector<24x8xf32>
    %cst_80 = arith.constant dense<0.000000e+00> : vector<8x24xf32>
    %236 = tpu.matmul %222, %235, %cst_80 {dimension_numbers = #tpu.dot_dimension_numbers<[1], [1], [0], [0], [0, 0, 1, 0], [], []>} : vector<8x8xf32>, vector<24x8xf32>, vector<8x24xf32> -> vector<8x24xf32>
    %237 = arith.addf %236, %80 : vector<8x24xf32>
    %cst_81 = arith.constant dense<0xFF800000> : vector<8xf32>
    %238 = vector.multi_reduction <maximumf>, %237, %cst_81 [1] : vector<8x24xf32> to vector<8xf32>
    %239 = vector.shape_cast %238 : vector<8xf32> to vector<8x1xf32>
    %240 = vector.broadcast %239 : vector<8x1xf32> to vector<8x24xf32>
    %241 = arith.subf %237, %240 : vector<8x24xf32>
    %242 = math.exp %241 : vector<8x24xf32>
    %cst_82 = arith.constant dense<0.000000e+00> : vector<8xf32>
    %243 = vector.multi_reduction <add>, %242, %cst_82 [1] : vector<8x24xf32> to vector<8xf32>
    %244 = vector.shape_cast %243 : vector<8xf32> to vector<8x1xf32>
    %245 = tpu.reciprocal %244 {approx = true} : vector<8x1xf32> -> vector<8x1xf32>
    %246 = vector.broadcast %245 : vector<8x1xf32> to vector<8x24xf32>
    %247 = arith.mulf %242, %246 : vector<8x24xf32>
    %248 = arith.truncf %247 : vector<8x24xf32> to vector<8x24xbf16>
    %249 = vector.extract_strided_slice %71 {offsets = [0, 24], sizes = [24, 8], strides = [1, 1]} : vector<24x32xf32> to vector<24x8xf32>
    %250 = arith.truncf %249 : vector<24x8xf32> to vector<24x8xbf16>
    %cst_83 = arith.constant dense<0.000000e+00> : vector<8x8xf32>
    %251 = tpu.matmul %248, %250, %cst_83 {dimension_numbers = #tpu.dot_dimension_numbers<[1], [0], [0], [1], [0, 0, 1, 1], [], []>} : vector<8x24xbf16>, vector<24x8xbf16>, vector<8x8xf32> -> vector<8x8xf32>
    %c0_84 = arith.constant 0 : index
    %c24 = arith.constant 24 : index
    %252 = vector.load %arg21[%c0_84, %c24] : memref<16x32xf32, #tpu.memory_space<vmem>>, vector<8x8xf32>
    tpu.vector_store %arg21[%c0_84, %c24], %251 {strides = array<i32>} : memref<16x32xf32, #tpu.memory_space<vmem>>, vector<8x8xf32>,
    %253 = vector.extract_strided_slice %56 {offsets = [8, 0], sizes = [8, 32], strides = [1, 1]} : vector<16x96xf32> to vector<8x32xf32>
    %254 = vector.extract_strided_slice %58 {offsets = [16, 0], sizes = [16, 32], strides = [1, 1]} : vector<32x64xf32> to vector<16x32xf32>
    %255 = vector.extract_strided_slice %56 {offsets = [8, 32], sizes = [8, 32], strides = [1, 1]} : vector<16x96xf32> to vector<8x32xf32>
    %256 = tpu.concatenate %254, %255 in 0 : vector<16x32xf32>, vector<8x32xf32> -> vector<24x32xf32>
    %257 = vector.extract_strided_slice %58 {offsets = [16, 32], sizes = [16, 32], strides = [1, 1]} : vector<32x64xf32> to vector<16x32xf32>
    %258 = vector.extract_strided_slice %56 {offsets = [8, 64], sizes = [8, 32], strides = [1, 1]} : vector<16x96xf32> to vector<8x32xf32>
    %259 = tpu.concatenate %257, %258 in 0 : vector<16x32xf32>, vector<8x32xf32> -> vector<24x32xf32>
    %260 = vector.extract_strided_slice %62 {offsets = [0, 1], sizes = [8, 1], strides = [1, 1]} : vector<8x2xf32> to vector<8x1xf32>
    %261 = vector.extract_strided_slice %64 {offsets = [1, 0], sizes = [1, 24], strides = [1, 1]} : vector<2x24xf32> to vector<1x24xf32>
    %262 = vector.broadcast %260 : vector<8x1xf32> to vector<8x24xf32>
    %263 = vector.broadcast %261 : vector<1x24xf32> to vector<8x24xf32>
    %264 = arith.mulf %262, %263 : vector<8x24xf32>
    %cst_85 = arith.constant 1.000000e+00 : f32
    %265 = vector.broadcast %cst_85 : f32 to vector<8x24xf32>
    %266 = arith.subf %265, %264 : vector<8x24xf32>
    %cst_86 = arith.constant -1.000000e+30 : f32
    %267 = vector.broadcast %cst_86 : f32 to vector<8x24xf32>
    %268 = arith.mulf %266, %267 : vector<8x24xf32>
    %269 = vector.extract_strided_slice %253 {offsets = [0, 0], sizes = [8, 8], strides = [1, 1]} : vector<8x32xf32> to vector<8x8xf32>
    %270 = arith.mulf %269, %269 : vector<8x8xf32>
    %cst_87 = arith.constant dense<0.000000e+00> : vector<8xf32>
    %271 = vector.multi_reduction <add>, %270, %cst_87 [1] : vector<8x8xf32> to vector<8xf32>
    %272 = vector.shape_cast %271 : vector<8xf32> to vector<8x1xf32>
    %273 = math.sqrt %272 : vector<8x1xf32>
    %cst_88 = arith.constant 0.353553385 : f32
    %274 = vector.broadcast %cst_88 : f32 to vector<8x1xf32>
    %275 = arith.mulf %273, %274 : vector<8x1xf32>
    %cst_89 = arith.constant 9.99999993E-9 : f32
    %276 = vector.broadcast %cst_89 : f32 to vector<8x1xf32>
    %277 = arith.maximumf %275, %276 : vector<8x1xf32>
    %278 = vector.broadcast %277 : vector<8x1xf32> to vector<8x8xf32>
    %279 = arith.divf %269, %278 : vector<8x8xf32>
    %280 = vector.broadcast %59 : vector<1x8xf32> to vector<8x8xf32>
    %281 = arith.mulf %279, %280 : vector<8x8xf32>
    %282 = vector.extract_strided_slice %256 {offsets = [0, 0], sizes = [24, 8], strides = [1, 1]} : vector<24x32xf32> to vector<24x8xf32>
    %283 = arith.mulf %282, %282 : vector<24x8xf32>
    %cst_90 = arith.constant dense<0.000000e+00> : vector<24xf32>
    %284 = vector.multi_reduction <add>, %283, %cst_90 [1] : vector<24x8xf32> to vector<24xf32>
    %285 = vector.shape_cast %284 : vector<24xf32> to vector<24x1xf32>
    %286 = math.sqrt %285 : vector<24x1xf32>
    %cst_91 = arith.constant 0.353553385 : f32
    %287 = vector.broadcast %cst_91 : f32 to vector<24x1xf32>
    %288 = arith.mulf %286, %287 : vector<24x1xf32>
    %cst_92 = arith.constant 9.99999993E-9 : f32
    %289 = vector.broadcast %cst_92 : f32 to vector<24x1xf32>
    %290 = arith.maximumf %288, %289 : vector<24x1xf32>
    %291 = vector.broadcast %290 : vector<24x1xf32> to vector<24x8xf32>
    %292 = arith.divf %282, %291 : vector<24x8xf32>
    %293 = vector.broadcast %60 : vector<1x8xf32> to vector<24x8xf32>
    %294 = arith.mulf %292, %293 : vector<24x8xf32>
    %cst_93 = arith.constant dense<0.000000e+00> : vector<8x24xf32>
    %295 = tpu.matmul %281, %294, %cst_93 {dimension_numbers = #tpu.dot_dimension_numbers<[1], [1], [0], [0], [0, 0, 1, 0], [], []>} : vector<8x8xf32>, vector<24x8xf32>, vector<8x24xf32> -> vector<8x24xf32>
    %296 = arith.addf %295, %268 : vector<8x24xf32>
    %cst_94 = arith.constant dense<0xFF800000> : vector<8xf32>
    %297 = vector.multi_reduction <maximumf>, %296, %cst_94 [1] : vector<8x24xf32> to vector<8xf32>
    %298 = vector.shape_cast %297 : vector<8xf32> to vector<8x1xf32>
    %299 = vector.broadcast %298 : vector<8x1xf32> to vector<8x24xf32>
    %300 = arith.subf %296, %299 : vector<8x24xf32>
    %301 = math.exp %300 : vector<8x24xf32>
    %cst_95 = arith.constant dense<0.000000e+00> : vector<8xf32>
    %302 = vector.multi_reduction <add>, %301, %cst_95 [1] : vector<8x24xf32> to vector<8xf32>
    %303 = vector.shape_cast %302 : vector<8xf32> to vector<8x1xf32>
    %304 = tpu.reciprocal %303 {approx = true} : vector<8x1xf32> -> vector<8x1xf32>
    %305 = vector.broadcast %304 : vector<8x1xf32> to vector<8x24xf32>
    %306 = arith.mulf %301, %305 : vector<8x24xf32>
    %307 = arith.truncf %306 : vector<8x24xf32> to vector<8x24xbf16>
    %308 = vector.extract_strided_slice %259 {offsets = [0, 0], sizes = [24, 8], strides = [1, 1]} : vector<24x32xf32> to vector<24x8xf32>
    %309 = arith.truncf %308 : vector<24x8xf32> to vector<24x8xbf16>
    %cst_96 = arith.constant dense<0.000000e+00> : vector<8x8xf32>
    %310 = tpu.matmul %307, %309, %cst_96 {dimension_numbers = #tpu.dot_dimension_numbers<[1], [0], [0], [1], [0, 0, 1, 1], [], []>} : vector<8x24xbf16>, vector<24x8xbf16>, vector<8x8xf32> -> vector<8x8xf32>
    %c8_97 = arith.constant 8 : index
    %c0_98 = arith.constant 0 : index
    %311 = vector.load %arg21[%c8_97, %c0_98] : memref<16x32xf32, #tpu.memory_space<vmem>>, vector<8x8xf32>
    tpu.vector_store %arg21[%c8_97, %c0_98], %310 {strides = array<i32>} : memref<16x32xf32, #tpu.memory_space<vmem>>, vector<8x8xf32>,
    %312 = vector.extract_strided_slice %253 {offsets = [0, 8], sizes = [8, 8], strides = [1, 1]} : vector<8x32xf32> to vector<8x8xf32>
    %313 = arith.mulf %312, %312 : vector<8x8xf32>
    %cst_99 = arith.constant dense<0.000000e+00> : vector<8xf32>
    %314 = vector.multi_reduction <add>, %313, %cst_99 [1] : vector<8x8xf32> to vector<8xf32>
    %315 = vector.shape_cast %314 : vector<8xf32> to vector<8x1xf32>
    %316 = math.sqrt %315 : vector<8x1xf32>
    %cst_100 = arith.constant 0.353553385 : f32
    %317 = vector.broadcast %cst_100 : f32 to vector<8x1xf32>
    %318 = arith.mulf %316, %317 : vector<8x1xf32>
    %cst_101 = arith.constant 9.99999993E-9 : f32
    %319 = vector.broadcast %cst_101 : f32 to vector<8x1xf32>
    %320 = arith.maximumf %318, %319 : vector<8x1xf32>
    %321 = vector.broadcast %320 : vector<8x1xf32> to vector<8x8xf32>
    %322 = arith.divf %312, %321 : vector<8x8xf32>
    %323 = vector.broadcast %59 : vector<1x8xf32> to vector<8x8xf32>
    %324 = arith.mulf %322, %323 : vector<8x8xf32>
    %325 = vector.extract_strided_slice %256 {offsets = [0, 8], sizes = [24, 8], strides = [1, 1]} : vector<24x32xf32> to vector<24x8xf32>
    %326 = arith.mulf %325, %325 : vector<24x8xf32>
    %cst_102 = arith.constant dense<0.000000e+00> : vector<24xf32>
    %327 = vector.multi_reduction <add>, %326, %cst_102 [1] : vector<24x8xf32> to vector<24xf32>
    %328 = vector.shape_cast %327 : vector<24xf32> to vector<24x1xf32>
    %329 = math.sqrt %328 : vector<24x1xf32>
    %cst_103 = arith.constant 0.353553385 : f32
    %330 = vector.broadcast %cst_103 : f32 to vector<24x1xf32>
    %331 = arith.mulf %329, %330 : vector<24x1xf32>
    %cst_104 = arith.constant 9.99999993E-9 : f32
    %332 = vector.broadcast %cst_104 : f32 to vector<24x1xf32>
    %333 = arith.maximumf %331, %332 : vector<24x1xf32>
    %334 = vector.broadcast %333 : vector<24x1xf32> to vector<24x8xf32>
    %335 = arith.divf %325, %334 : vector<24x8xf32>
    %336 = vector.broadcast %60 : vector<1x8xf32> to vector<24x8xf32>
    %337 = arith.mulf %335, %336 : vector<24x8xf32>
    %cst_105 = arith.constant dense<0.000000e+00> : vector<8x24xf32>
    %338 = tpu.matmul %324, %337, %cst_105 {dimension_numbers = #tpu.dot_dimension_numbers<[1], [1], [0], [0], [0, 0, 1, 0], [], []>} : vector<8x8xf32>, vector<24x8xf32>, vector<8x24xf32> -> vector<8x24xf32>
    %339 = arith.addf %338, %268 : vector<8x24xf32>
    %cst_106 = arith.constant dense<0xFF800000> : vector<8xf32>
    %340 = vector.multi_reduction <maximumf>, %339, %cst_106 [1] : vector<8x24xf32> to vector<8xf32>
    %341 = vector.shape_cast %340 : vector<8xf32> to vector<8x1xf32>
    %342 = vector.broadcast %341 : vector<8x1xf32> to vector<8x24xf32>
    %343 = arith.subf %339, %342 : vector<8x24xf32>
    %344 = math.exp %343 : vector<8x24xf32>
    %cst_107 = arith.constant dense<0.000000e+00> : vector<8xf32>
    %345 = vector.multi_reduction <add>, %344, %cst_107 [1] : vector<8x24xf32> to vector<8xf32>
    %346 = vector.shape_cast %345 : vector<8xf32> to vector<8x1xf32>
    %347 = tpu.reciprocal %346 {approx = true} : vector<8x1xf32> -> vector<8x1xf32>
    %348 = vector.broadcast %347 : vector<8x1xf32> to vector<8x24xf32>
    %349 = arith.mulf %344, %348 : vector<8x24xf32>
    %350 = arith.truncf %349 : vector<8x24xf32> to vector<8x24xbf16>
    %351 = vector.extract_strided_slice %259 {offsets = [0, 8], sizes = [24, 8], strides = [1, 1]} : vector<24x32xf32> to vector<24x8xf32>
    %352 = arith.truncf %351 : vector<24x8xf32> to vector<24x8xbf16>
    %cst_108 = arith.constant dense<0.000000e+00> : vector<8x8xf32>
    %353 = tpu.matmul %350, %352, %cst_108 {dimension_numbers = #tpu.dot_dimension_numbers<[1], [0], [0], [1], [0, 0, 1, 1], [], []>} : vector<8x24xbf16>, vector<24x8xbf16>, vector<8x8xf32> -> vector<8x8xf32>
    %c8_109 = arith.constant 8 : index
    %c8_110 = arith.constant 8 : index
    %354 = vector.load %arg21[%c8_109, %c8_110] : memref<16x32xf32, #tpu.memory_space<vmem>>, vector<8x8xf32>
    tpu.vector_store %arg21[%c8_109, %c8_110], %353 {strides = array<i32>} : memref<16x32xf32, #tpu.memory_space<vmem>>, vector<8x8xf32>,
    %355 = vector.extract_strided_slice %253 {offsets = [0, 16], sizes = [8, 8], strides = [1, 1]} : vector<8x32xf32> to vector<8x8xf32>
    %356 = arith.mulf %355, %355 : vector<8x8xf32>
    %cst_111 = arith.constant dense<0.000000e+00> : vector<8xf32>
    %357 = vector.multi_reduction <add>, %356, %cst_111 [1] : vector<8x8xf32> to vector<8xf32>
    %358 = vector.shape_cast %357 : vector<8xf32> to vector<8x1xf32>
    %359 = math.sqrt %358 : vector<8x1xf32>
    %cst_112 = arith.constant 0.353553385 : f32
    %360 = vector.broadcast %cst_112 : f32 to vector<8x1xf32>
    %361 = arith.mulf %359, %360 : vector<8x1xf32>
    %cst_113 = arith.constant 9.99999993E-9 : f32
    %362 = vector.broadcast %cst_113 : f32 to vector<8x1xf32>
    %363 = arith.maximumf %361, %362 : vector<8x1xf32>
    %364 = vector.broadcast %363 : vector<8x1xf32> to vector<8x8xf32>
    %365 = arith.divf %355, %364 : vector<8x8xf32>
    %366 = vector.broadcast %59 : vector<1x8xf32> to vector<8x8xf32>
    %367 = arith.mulf %365, %366 : vector<8x8xf32>
    %368 = vector.extract_strided_slice %256 {offsets = [0, 16], sizes = [24, 8], strides = [1, 1]} : vector<24x32xf32> to vector<24x8xf32>
    %369 = arith.mulf %368, %368 : vector<24x8xf32>
    %cst_114 = arith.constant dense<0.000000e+00> : vector<24xf32>
    %370 = vector.multi_reduction <add>, %369, %cst_114 [1] : vector<24x8xf32> to vector<24xf32>
    %371 = vector.shape_cast %370 : vector<24xf32> to vector<24x1xf32>
    %372 = math.sqrt %371 : vector<24x1xf32>
    %cst_115 = arith.constant 0.353553385 : f32
    %373 = vector.broadcast %cst_115 : f32 to vector<24x1xf32>
    %374 = arith.mulf %372, %373 : vector<24x1xf32>
    %cst_116 = arith.constant 9.99999993E-9 : f32
    %375 = vector.broadcast %cst_116 : f32 to vector<24x1xf32>
    %376 = arith.maximumf %374, %375 : vector<24x1xf32>
    %377 = vector.broadcast %376 : vector<24x1xf32> to vector<24x8xf32>
    %378 = arith.divf %368, %377 : vector<24x8xf32>
    %379 = vector.broadcast %60 : vector<1x8xf32> to vector<24x8xf32>
    %380 = arith.mulf %378, %379 : vector<24x8xf32>
    %cst_117 = arith.constant dense<0.000000e+00> : vector<8x24xf32>
    %381 = tpu.matmul %367, %380, %cst_117 {dimension_numbers = #tpu.dot_dimension_numbers<[1], [1], [0], [0], [0, 0, 1, 0], [], []>} : vector<8x8xf32>, vector<24x8xf32>, vector<8x24xf32> -> vector<8x24xf32>
    %382 = arith.addf %381, %268 : vector<8x24xf32>
    %cst_118 = arith.constant dense<0xFF800000> : vector<8xf32>
    %383 = vector.multi_reduction <maximumf>, %382, %cst_118 [1] : vector<8x24xf32> to vector<8xf32>
    %384 = vector.shape_cast %383 : vector<8xf32> to vector<8x1xf32>
    %385 = vector.broadcast %384 : vector<8x1xf32> to vector<8x24xf32>
    %386 = arith.subf %382, %385 : vector<8x24xf32>
    %387 = math.exp %386 : vector<8x24xf32>
    %cst_119 = arith.constant dense<0.000000e+00> : vector<8xf32>
    %388 = vector.multi_reduction <add>, %387, %cst_119 [1] : vector<8x24xf32> to vector<8xf32>
    %389 = vector.shape_cast %388 : vector<8xf32> to vector<8x1xf32>
    %390 = tpu.reciprocal %389 {approx = true} : vector<8x1xf32> -> vector<8x1xf32>
    %391 = vector.broadcast %390 : vector<8x1xf32> to vector<8x24xf32>
    %392 = arith.mulf %387, %391 : vector<8x24xf32>
    %393 = arith.truncf %392 : vector<8x24xf32> to vector<8x24xbf16>
    %394 = vector.extract_strided_slice %259 {offsets = [0, 16], sizes = [24, 8], strides = [1, 1]} : vector<24x32xf32> to vector<24x8xf32>
    %395 = arith.truncf %394 : vector<24x8xf32> to vector<24x8xbf16>
    %cst_120 = arith.constant dense<0.000000e+00> : vector<8x8xf32>
    %396 = tpu.matmul %393, %395, %cst_120 {dimension_numbers = #tpu.dot_dimension_numbers<[1], [0], [0], [1], [0, 0, 1, 1], [], []>} : vector<8x24xbf16>, vector<24x8xbf16>, vector<8x8xf32> -> vector<8x8xf32>
    %c8_121 = arith.constant 8 : index
    %c16_122 = arith.constant 16 : index
    %397 = vector.load %arg21[%c8_121, %c16_122] : memref<16x32xf32, #tpu.memory_space<vmem>>, vector<8x8xf32>
    tpu.vector_store %arg21[%c8_121, %c16_122], %396 {strides = array<i32>} : memref<16x32xf32, #tpu.memory_space<vmem>>, vector<8x8xf32>,
    %398 = vector.extract_strided_slice %253 {offsets = [0, 24], sizes = [8, 8], strides = [1, 1]} : vector<8x32xf32> to vector<8x8xf32>
    %399 = arith.mulf %398, %398 : vector<8x8xf32>
    %cst_123 = arith.constant dense<0.000000e+00> : vector<8xf32>
    %400 = vector.multi_reduction <add>, %399, %cst_123 [1] : vector<8x8xf32> to vector<8xf32>
    %401 = vector.shape_cast %400 : vector<8xf32> to vector<8x1xf32>
    %402 = math.sqrt %401 : vector<8x1xf32>
    %cst_124 = arith.constant 0.353553385 : f32
    %403 = vector.broadcast %cst_124 : f32 to vector<8x1xf32>
    %404 = arith.mulf %402, %403 : vector<8x1xf32>
    %cst_125 = arith.constant 9.99999993E-9 : f32
    %405 = vector.broadcast %cst_125 : f32 to vector<8x1xf32>
    %406 = arith.maximumf %404, %405 : vector<8x1xf32>
    %407 = vector.broadcast %406 : vector<8x1xf32> to vector<8x8xf32>
    %408 = arith.divf %398, %407 : vector<8x8xf32>
    %409 = vector.broadcast %59 : vector<1x8xf32> to vector<8x8xf32>
    %410 = arith.mulf %408, %409 : vector<8x8xf32>
    %411 = vector.extract_strided_slice %256 {offsets = [0, 24], sizes = [24, 8], strides = [1, 1]} : vector<24x32xf32> to vector<24x8xf32>
    %412 = arith.mulf %411, %411 : vector<24x8xf32>
    %cst_126 = arith.constant dense<0.000000e+00> : vector<24xf32>
    %413 = vector.multi_reduction <add>, %412, %cst_126 [1] : vector<24x8xf32> to vector<24xf32>
    %414 = vector.shape_cast %413 : vector<24xf32> to vector<24x1xf32>
    %415 = math.sqrt %414 : vector<24x1xf32>
    %cst_127 = arith.constant 0.353553385 : f32
    %416 = vector.broadcast %cst_127 : f32 to vector<24x1xf32>
    %417 = arith.mulf %415, %416 : vector<24x1xf32>
    %cst_128 = arith.constant 9.99999993E-9 : f32
    %418 = vector.broadcast %cst_128 : f32 to vector<24x1xf32>
    %419 = arith.maximumf %417, %418 : vector<24x1xf32>
    %420 = vector.broadcast %419 : vector<24x1xf32> to vector<24x8xf32>
    %421 = arith.divf %411, %420 : vector<24x8xf32>
    %422 = vector.broadcast %60 : vector<1x8xf32> to vector<24x8xf32>
    %423 = arith.mulf %421, %422 : vector<24x8xf32>
    %cst_129 = arith.constant dense<0.000000e+00> : vector<8x24xf32>
    %424 = tpu.matmul %410, %423, %cst_129 {dimension_numbers = #tpu.dot_dimension_numbers<[1], [1], [0], [0], [0, 0, 1, 0], [], []>} : vector<8x8xf32>, vector<24x8xf32>, vector<8x24xf32> -> vector<8x24xf32>
    %425 = arith.addf %424, %268 : vector<8x24xf32>
    %cst_130 = arith.constant dense<0xFF800000> : vector<8xf32>
    %426 = vector.multi_reduction <maximumf>, %425, %cst_130 [1] : vector<8x24xf32> to vector<8xf32>
    %427 = vector.shape_cast %426 : vector<8xf32> to vector<8x1xf32>
    %428 = vector.broadcast %427 : vector<8x1xf32> to vector<8x24xf32>
    %429 = arith.subf %425, %428 : vector<8x24xf32>
    %430 = math.exp %429 : vector<8x24xf32>
    %cst_131 = arith.constant dense<0.000000e+00> : vector<8xf32>
    %431 = vector.multi_reduction <add>, %430, %cst_131 [1] : vector<8x24xf32> to vector<8xf32>
    %432 = vector.shape_cast %431 : vector<8xf32> to vector<8x1xf32>
    %433 = tpu.reciprocal %432 {approx = true} : vector<8x1xf32> -> vector<8x1xf32>
    %434 = vector.broadcast %433 : vector<8x1xf32> to vector<8x24xf32>
    %435 = arith.mulf %430, %434 : vector<8x24xf32>
    %436 = arith.truncf %435 : vector<8x24xf32> to vector<8x24xbf16>
    %437 = vector.extract_strided_slice %259 {offsets = [0, 24], sizes = [24, 8], strides = [1, 1]} : vector<24x32xf32> to vector<24x8xf32>
    %438 = arith.truncf %437 : vector<24x8xf32> to vector<24x8xbf16>
    %cst_132 = arith.constant dense<0.000000e+00> : vector<8x8xf32>
    %439 = tpu.matmul %436, %438, %cst_132 {dimension_numbers = #tpu.dot_dimension_numbers<[1], [0], [0], [1], [0, 0, 1, 1], [], []>} : vector<8x24xbf16>, vector<24x8xbf16>, vector<8x8xf32> -> vector<8x8xf32>
    %c8_133 = arith.constant 8 : index
    %c24_134 = arith.constant 24 : index
    %440 = vector.load %arg21[%c8_133, %c24_134] : memref<16x32xf32, #tpu.memory_space<vmem>>, vector<8x8xf32>
    tpu.vector_store %arg21[%c8_133, %c24_134], %439 {strides = array<i32>} : memref<16x32xf32, #tpu.memory_space<vmem>>, vector<8x8xf32>,
    %c0_135 = arith.constant 0 : index
    %c0_136 = arith.constant 0 : index
    %441 = vector.load %arg21[%c0_135, %c0_136] : memref<16x32xf32, #tpu.memory_space<vmem>>, vector<16x32xf32>
    %442 = arith.truncf %441 : vector<16x32xf32> to vector<16x32xbf16>
    %c0_137 = arith.constant 0 : index
    %c0_138 = arith.constant 0 : index
    %443 = vector.load %arg13[%c0_137, %c0_138] : memref<32x32xbf16, #tpu.memory_space<vmem>>, vector<32x32xbf16>
    %cst_139 = arith.constant dense<0.000000e+00> : vector<16x32xf32>
    %444 = tpu.matmul %442, %443, %cst_139 {dimension_numbers = #tpu.dot_dimension_numbers<[1], [0], [0], [1], [0, 0, 1, 1], [], []>} : vector<16x32xbf16>, vector<32x32xbf16>, vector<16x32xf32> -> vector<16x32xf32>
    %445 = arith.addf %4, %444 : vector<16x32xf32>
    %c0_140 = arith.constant 0 : index
    %c0_141 = arith.constant 0 : index
    %446 = vector.load %arg14[%c0_140, %c0_141] : memref<1x32xf32, #tpu.memory_space<vmem>>, vector<1x32xf32>
    %c0_142 = arith.constant 0 : index
    %c0_143 = arith.constant 0 : index
    %447 = vector.load %arg15[%c0_142, %c0_143] : memref<1x32xf32, #tpu.memory_space<vmem>>, vector<1x32xf32>
    %cst_144 = arith.constant dense<0.000000e+00> : vector<16xf32>
    %448 = vector.multi_reduction <add>, %445, %cst_144 [1] : vector<16x32xf32> to vector<16xf32>
    %449 = vector.shape_cast %448 : vector<16xf32> to vector<16x1xf32>
    %cst_145 = arith.constant 3.200000e+01 : f32
    %450 = vector.broadcast %cst_145 : f32 to vector<16x1xf32>
    %451 = arith.divf %449, %450 : vector<16x1xf32>
    %452 = vector.broadcast %451 : vector<16x1xf32> to vector<16x32xf32>
    %453 = arith.subf %445, %452 : vector<16x32xf32>
    %454 = arith.mulf %453, %453 : vector<16x32xf32>
    %cst_146 = arith.constant dense<0.000000e+00> : vector<16xf32>
    %455 = vector.multi_reduction <add>, %454, %cst_146 [1] : vector<16x32xf32> to vector<16xf32>
    %456 = vector.shape_cast %455 : vector<16xf32> to vector<16x1xf32>
    %cst_147 = arith.constant 3.200000e+01 : f32
    %457 = vector.broadcast %cst_147 : f32 to vector<16x1xf32>
    %458 = arith.divf %456, %457 : vector<16x1xf32>
    %459 = vector.broadcast %451 : vector<16x1xf32> to vector<16x32xf32>
    %460 = arith.subf %445, %459 : vector<16x32xf32>
    %cst_148 = arith.constant 9.99999974E-6 : f32
    %461 = vector.broadcast %cst_148 : f32 to vector<16x1xf32>
    %462 = arith.addf %458, %461 : vector<16x1xf32>
    %463 = math.rsqrt %462 : vector<16x1xf32>
    %464 = vector.broadcast %463 : vector<16x1xf32> to vector<16x32xf32>
    %465 = arith.mulf %460, %464 : vector<16x32xf32>
    %466 = vector.broadcast %446 : vector<1x32xf32> to vector<16x32xf32>
    %467 = arith.mulf %465, %466 : vector<16x32xf32>
    %468 = vector.broadcast %447 : vector<1x32xf32> to vector<16x32xf32>
    %469 = arith.addf %467, %468 : vector<16x32xf32>
    %470 = arith.truncf %469 : vector<16x32xf32> to vector<16x32xbf16>
    %c0_149 = arith.constant 0 : index
    %c0_150 = arith.constant 0 : index
    %471 = vector.load %arg16[%c0_149, %c0_150] : memref<32x128xbf16, #tpu.memory_space<vmem>>, vector<32x128xbf16>
    %cst_151 = arith.constant dense<0.000000e+00> : vector<16x128xf32>
    %472 = tpu.matmul %470, %471, %cst_151 {dimension_numbers = #tpu.dot_dimension_numbers<[1], [0], [0], [1], [0, 0, 1, 1], [], []>} : vector<16x32xbf16>, vector<32x128xbf16>, vector<16x128xf32> -> vector<16x128xf32>
    %c0_152 = arith.constant 0 : index
    %c0_153 = arith.constant 0 : index
    %473 = vector.load %arg17[%c0_152, %c0_153] : memref<1x128xf32, #tpu.memory_space<vmem>>, vector<1x128xf32>
    %474 = vector.broadcast %473 : vector<1x128xf32> to vector<16x128xf32>
    %475 = arith.addf %472, %474 : vector<16x128xf32>
    %cst_154 = arith.constant 5.000000e-01 : f32
    %476 = vector.broadcast %cst_154 : f32 to vector<16x128xf32>
    %477 = arith.mulf %476, %475 : vector<16x128xf32>
    %cst_155 = arith.constant 0.707106769 : f32
    %478 = vector.broadcast %cst_155 : f32 to vector<16x128xf32>
    %479 = arith.mulf %475, %478 : vector<16x128xf32>
    %480 = math.erf %479 : vector<16x128xf32>
    %cst_156 = arith.constant 1.000000e+00 : f32
    %481 = vector.broadcast %cst_156 : f32 to vector<16x128xf32>
    %482 = arith.addf %481, %480 : vector<16x128xf32>
    %483 = arith.mulf %477, %482 : vector<16x128xf32>
    %484 = arith.truncf %483 : vector<16x128xf32> to vector<16x128xbf16>
    %c0_157 = arith.constant 0 : index
    %c0_158 = arith.constant 0 : index
    %485 = vector.load %arg18[%c0_157, %c0_158] : memref<128x32xbf16, #tpu.memory_space<vmem>>, vector<128x32xbf16>
    %cst_159 = arith.constant dense<0.000000e+00> : vector<16x32xf32>
    %486 = tpu.matmul %484, %485, %cst_159 {dimension_numbers = #tpu.dot_dimension_numbers<[1], [0], [0], [1], [0, 0, 1, 1], [], []>} : vector<16x128xbf16>, vector<128x32xbf16>, vector<16x32xf32> -> vector<16x32xf32>
    %c0_160 = arith.constant 0 : index
    %c0_161 = arith.constant 0 : index
    %487 = vector.load %arg19[%c0_160, %c0_161] : memref<1x32xf32, #tpu.memory_space<vmem>>, vector<1x32xf32>
    %488 = vector.broadcast %487 : vector<1x32xf32> to vector<16x32xf32>
    %489 = arith.addf %486, %488 : vector<16x32xf32>
    %490 = arith.addf %445, %489 : vector<16x32xf32>
    %491 = vector.shape_cast %490 : vector<16x32xf32> to vector<2x8x32xf32>
    %c0_162 = arith.constant 0 : index
    %c0_163 = arith.constant 0 : index
    %c0_164 = arith.constant 0 : index
    %492 = vector.load %arg20[%c0_162, %c0_163, %c0_164] : memref<2x8x32xf32, #tpu.memory_space<vmem>>, vector<2x8x32xf32>
    tpu.vector_store %arg20[%c0_162, %c0_163, %c0_164], %491 {strides = array<i32>} : memref<2x8x32xf32, #tpu.memory_space<vmem>>, vector<2x8x32xf32>,
    return
  }
  func.func @transform_0(%arg0: i32) -> (i32, i32, i32) {
    %c0_i32 = arith.constant 0 : i32
    %c0_i32_0 = arith.constant 0 : i32
    %c0_i32_1 = arith.constant 0 : i32
    return %arg0, %c0_i32, %c0_i32_0 : i32, i32, i32
  }
  func.func @transform_1(%arg0: i32) -> (i32, i32, i32) {
    %c0_i32 = arith.constant 0 : i32
    %c0_i32_0 = arith.constant 0 : i32
    %c0_i32_1 = arith.constant 0 : i32
    return %arg0, %c0_i32, %c0_i32_0 : i32, i32, i32
  }
  func.func @transform_2(%arg0: i32) -> (i32, i32, i32) {
    %c0_i32 = arith.constant 0 : i32
    %c0_i32_0 = arith.constant 0 : i32
    %c0_i32_1 = arith.constant 0 : i32
    return %arg0, %c0_i32, %c0_i32_0 : i32, i32, i32
  }
  func.func @transform_3(%arg0: i32) -> (i32, i32, i32) {
    %c0_i32 = arith.constant 0 : i32
    %c0_i32_0 = arith.constant 0 : i32
    %c0_i32_1 = arith.constant 0 : i32
    return %arg0, %c0_i32, %c0_i32_0 : i32, i32, i32
  }
  func.func @transform_4(%arg0: i32) -> (i32, i32) {
    %c0_i32 = arith.constant 0 : i32
    %c0_i32_0 = arith.constant 0 : i32
    %c0_i32_1 = arith.constant 0 : i32
    return %c0_i32, %c0_i32_0 : i32, i32
  }
  func.func @transform_5(%arg0: i32) -> (i32, i32) {
    %c0_i32 = arith.constant 0 : i32
    %c0_i32_0 = arith.constant 0 : i32
    %c0_i32_1 = arith.constant 0 : i32
    return %c0_i32, %c0_i32_0 : i32, i32
  }
  func.func @transform_6(%arg0: i32) -> (i32, i32) {
    %c0_i32 = arith.constant 0 : i32
    %c0_i32_0 = arith.constant 0 : i32
    %c0_i32_1 = arith.constant 0 : i32
    return %c0_i32, %c0_i32_0 : i32, i32
  }
  func.func @transform_7(%arg0: i32) -> (i32, i32) {
    %c0_i32 = arith.constant 0 : i32
    %c0_i32_0 = arith.constant 0 : i32
    %c0_i32_1 = arith.constant 0 : i32
    return %c0_i32, %c0_i32_0 : i32, i32
  }
  func.func @transform_8(%arg0: i32) -> (i32, i32) {
    %c0_i32 = arith.constant 0 : i32
    %c0_i32_0 = arith.constant 0 : i32
    %c0_i32_1 = arith.constant 0 : i32
    return %c0_i32, %c0_i32_0 : i32, i32
  }
  func.func @transform_9(%arg0: i32) -> (i32, i32) {
    %c0_i32 = arith.constant 0 : i32
    %c0_i32_0 = arith.constant 0 : i32
    %c0_i32_1 = arith.constant 0 : i32
    return %c0_i32, %c0_i32_0 : i32, i32
  }
  func.func @transform_10(%arg0: i32) -> (i32, i32) {
    %c0_i32 = arith.constant 0 : i32
    %c0_i32_0 = arith.constant 0 : i32
    %c0_i32_1 = arith.constant 0 : i32
    return %c0_i32, %c0_i32_0 : i32, i32
  }
  func.func @transform_11(%arg0: i32) -> (i32, i32) {
    %c0_i32 = arith.constant 0 : i32
    %c0_i32_0 = arith.constant 0 : i32
    %c0_i32_1 = arith.constant 0 : i32
    return %c0_i32, %c0_i32_0 : i32, i32
  }
  func.func @transform_12(%arg0: i32) -> (i32, i32) {
    %c0_i32 = arith.constant 0 : i32
    %c0_i32_0 = arith.constant 0 : i32
    %c0_i32_1 = arith.constant 0 : i32
    return %c0_i32, %c0_i32_0 : i32, i32
  }
  func.func @transform_13(%arg0: i32) -> (i32, i32) {
    %c0_i32 = arith.constant 0 : i32
    %c0_i32_0 = arith.constant 0 : i32
    %c0_i32_1 = arith.constant 0 : i32
    return %c0_i32, %c0_i32_0 : i32, i32
  }
  func.func @transform_14(%arg0: i32) -> (i32, i32) {
    %c0_i32 = arith.constant 0 : i32
    %c0_i32_0 = arith.constant 0 : i32
    %c0_i32_1 = arith.constant 0 : i32
    return %c0_i32, %c0_i32_0 : i32, i32
  }
  func.func @transform_15(%arg0: i32) -> (i32, i32) {
    %c0_i32 = arith.constant 0 : i32
    %c0_i32_0 = arith.constant 0 : i32
    %c0_i32_1 = arith.constant 0 : i32
    return %c0_i32, %c0_i32_0 : i32, i32
  }
  func.func @transform_16(%arg0: i32) -> (i32, i32) {
    %c0_i32 = arith.constant 0 : i32
    %c0_i32_0 = arith.constant 0 : i32
    %c0_i32_1 = arith.constant 0 : i32
    return %c0_i32, %c0_i32_0 : i32, i32
  }
  func.func @transform_17(%arg0: i32) -> (i32, i32) {
    %c0_i32 = arith.constant 0 : i32
    %c0_i32_0 = arith.constant 0 : i32
    %c0_i32_1 = arith.constant 0 : i32
    return %c0_i32, %c0_i32_0 : i32, i32
  }
  func.func @transform_18(%arg0: i32) -> (i32, i32) {
    %c0_i32 = arith.constant 0 : i32
    %c0_i32_0 = arith.constant 0 : i32
    %c0_i32_1 = arith.constant 0 : i32
    return %c0_i32, %c0_i32_0 : i32, i32
  }
  func.func @transform_19(%arg0: i32) -> (i32, i32, i32) {
    %c0_i32 = arith.constant 0 : i32
    %c0_i32_0 = arith.constant 0 : i32
    %c0_i32_1 = arith.constant 0 : i32
    return %arg0, %c0_i32, %c0_i32_0 : i32, i32, i32
  }
}

</mosaic_0001>

<llo_original>
// kernel: tpu_custom_call.1
$region0: #{tpu_custom_call.1}
  #allocation0 [shape = 'u32[]', space=smem, size = 0x4, offset = 0x4, fixed_abs, tag = 'smem constant byte address 0x4 - core index']
  #allocation1 [shape = 'u32[144,128]{1,0:T(1,128)}', space=vmem, size = 0x12000, scoped, tag = 'internal scratch']
  #allocation2 [shape = 'f32[16,32]{1,0:T(8,128)}', space=vmem, size = 0x2000, scoped, tag = 'scratch operand']
  %s0 = inlined_call_operand.vmem [shape: bf16[4,16,32], index: 0, kind: input, shape index: {}]
  %s1 = inlined_call_operand.vmem [shape: f32[4,8,32], index: 1, kind: input, shape index: {}]
  %s2 = inlined_call_operand.vmem [shape: f32[2,8,2], index: 2, kind: input, shape index: {}]
  %s3 = inlined_call_operand.hbm [shape: f32[2,2,24], index: 3, kind: input, shape index: {}]
  %s4 = inlined_call_operand.vmem [shape: f32[1,32], index: 4, kind: input, shape index: {}]
  %s5 = inlined_call_operand.hbm [shape: f32[1,32], index: 5, kind: input, shape index: {}]
  %s6 = inlined_call_operand.hbm [shape: f32[1,32], index: 6, kind: input, shape index: {}]
  %s7 = inlined_call_operand.hbm [shape: f32[1,32], index: 7, kind: input, shape index: {}]
  %s8 = inlined_call_operand.vmem [shape: bf16[32,96], index: 8, kind: input, shape index: {}]
  %s9 = inlined_call_operand.vmem [shape: bf16[32,64], index: 9, kind: input, shape index: {}]
  %s10 = inlined_call_operand.hbm [shape: f32[1,8], index: 10, kind: input, shape index: {}]
  %s11 = inlined_call_operand.hbm [shape: f32[1,8], index: 11, kind: input, shape index: {}]
  %s12 = inlined_call_operand.vmem [shape: bf16[32,32], index: 12, kind: input, shape index: {}]
  %s13 = inlined_call_operand.vmem [shape: f32[1,32], index: 13, kind: input, shape index: {}]
  %s14 = inlined_call_operand.vmem [shape: f32[1,32], index: 14, kind: input, shape index: {}]
  %s15 = inlined_call_operand.vmem [shape: bf16[32,128], index: 15, kind: input, shape index: {}]
  %s16 = inlined_call_operand.vmem [shape: f32[1,128], index: 16, kind: input, shape index: {}]
  %s17 = inlined_call_operand.vmem [shape: bf16[128,32], index: 17, kind: input, shape index: {}]
  %s18 = inlined_call_operand.vmem [shape: f32[1,32], index: 18, kind: input, shape index: {}]
  %s19 = inlined_call_operand.hbm [shape: f32[4,8,32], index: 19, kind: output, shape index: {}]
  %s20 = sld [smem:[#allocation0]]
  $region133: #{tpu_custom_call.1} parent=0
    _
  %s22 = ssub.s32 1, %s20
  %s23 = scalar_select 0, %s22, %s20
  $region1: #{tpu_custom_call.1} parent=0
    #allocation3 [shape = 'u8[2048]{0}', space=vmem, size = 0x800, scoped, tag = 'input window, operand 3']
    #allocation4 [shape = 's32[2]{0}', space=sflag, size = 0x8, scoped, tag = 'scoped memory for tpu_custom_call.1']
    #allocation5 [shape = 's32[2]{0}', space=sflag, size = 0x8, scoped, tag = 'scoped memory for tpu_custom_call.1']
    #allocation6 [shape = 'u8[512]{0}', space=vmem, size = 0x400, scoped, tag = 'input window, operand 5, single buffered']
    #allocation7 [shape = 's32[1]{0}', space=sflag, size = 0x4, scoped, tag = 'scoped memory for tpu_custom_call.1']
    #allocation8 [shape = 'u8[512]{0}', space=vmem, size = 0x400, scoped, tag = 'input window, operand 6, single buffered']
    #allocation9 [shape = 'u8[512]{0}', space=vmem, size = 0x400, scoped, tag = 'input window, operand 7, single buffered']
    #allocation10 [shape = 's32[1]{0}', space=sflag, size = 0x4, scoped, tag = 'scoped memory for tpu_custom_call.1']
    #allocation11 [shape = 'u8[512]{0}', space=vmem, size = 0x400, scoped, tag = 'input window, operand 10, single buffered']
    #allocation12 [shape = 'u8[512]{0}', space=vmem, size = 0x400, scoped, tag = 'input window, operand 11, single buffered']
    #allocation13 [shape = 's32[1]{0}', space=sflag, size = 0x4, scoped, tag = 'scoped memory for tpu_custom_call.1']
    #allocation14 [shape = 'u8[16384]{0}', space=vmem, size = 0x4000, scoped, tag = 'output window, operand 0']
    %24 = vsyncpa [#allocation4], 0
    %s25 = scalar_lea.sflag [#allocation4], 1
    %26 = vsyncpa %s25, 0
    %27 = vsyncpa [#allocation7], 0
    %28 = vsyncpa [#allocation10], 0
    %29 = vsyncpa [#allocation13], 0
    %30 = vsyncpa [#allocation5], 0
    %s31 = scalar_lea.sflag [#allocation5], 1
    %32 = vsyncpa %s31, 0
    loop: start=0, step=1, limit=4
    $region2: #{tpu_custom_call.1} parent=1 // loop_pre_header
      _
    $region3: #{tpu_custom_call.1} parent=1 // loop_header
      %s34 = sphi 0, %s38
      %p35 = scmp.ge.s32.totalorder %s34, 4
      %s44 = sphi 0, %s46
      %s47 = sphi 0, %s44
      %s48 = sphi 0, %s47
      %s64 = sphi 0, %s48
      %s70 = sphi 0, %s72
      %s73 = sphi 0, %s70
      %s74 = sphi 0, %s73
      %s90 = sphi 0, %s74
      %s96 = sphi 0, %s98
      %s99 = sphi 0, %s96
      %s100 = sphi 0, %s99
      %s116 = sphi 0, %s100
      %s122 = sphi 0, %s124
      %s125 = sphi 0, %s122
      %s126 = sphi 0, %s125
      %s142 = sphi 0, %s126
      %s146 = sphi 0, %s146
      %s148 = sphi 0, %s146
      %s149 = sphi 0, %s148
      %s163 = sphi 0, %s149
      %s167 = sphi 0, %s167
      %s169 = sphi 0, %s167
      %s170 = sphi 0, %s169
      %s184 = sphi 0, %s170
      %s188 = sphi 0, %s188
      %s190 = sphi 0, %s188
      %s191 = sphi 0, %s190
      %s205 = sphi 0, %s191
      %s209 = sphi 0, %s209
      %s211 = sphi 0, %s209
      %s212 = sphi 0, %s211
      %s226 = sphi 0, %s212
      %s230 = sphi 0, %s230
      %s232 = sphi 0, %s230
      %s233 = sphi 0, %s232
      %s247 = sphi 0, %s233
      %s251 = sphi 0, %s251
      %s253 = sphi 0, %s251
      %s254 = sphi 0, %s253
      %s268 = sphi 0, %s254
      %s272 = sphi 0, %s272
      %s274 = sphi 0, %s272
      %s275 = sphi 0, %s274
      %s289 = sphi 0, %s275
      %s293 = sphi 0, %s293
      %s295 = sphi 0, %s293
      %s296 = sphi 0, %s295
      %s310 = sphi 0, %s296
      %s314 = sphi 0, %s314
      %s316 = sphi 0, %s314
      %s317 = sphi 0, %s316
      %s331 = sphi 0, %s317
      %s335 = sphi 0, %s335
      %s337 = sphi 0, %s335
      %s338 = sphi 0, %s337
      %s352 = sphi 0, %s338
      %s356 = sphi 0, %s356
      %s358 = sphi 0, %s356
      %s359 = sphi 0, %s358
      %s373 = sphi 0, %s359
      %s377 = sphi 0, %s377
      %s379 = sphi 0, %s377
      %s380 = sphi 0, %s379
      %s394 = sphi 0, %s380
      %s398 = sphi 0, %s398
      %s400 = sphi 0, %s398
      %s401 = sphi 0, %s400
      %s415 = sphi 0, %s401
      %s419 = sphi 0, %s419
      %s421 = sphi 0, %s419
      %s422 = sphi 0, %s421
      %s436 = sphi 0, %s422
      %s440 = sphi 0, %s440
      %s442 = sphi 0, %s440
      %s443 = sphi 0, %s442
      %s457 = sphi 0, %s443
      %s463 = sphi 0, %s465
      %s466 = sphi 0, %s463
      %s467 = sphi 0, %s466
      %s483 = sphi 0, %s467
    $region4: #{tpu_custom_call.1} parent=1 // loop_header_branch
      %37 = sbr.rel (%p35) target = $region8
    $region5: #{tpu_custom_call.1} parent=1 // loop_body
      %s39 = ssub.s32 %s34, 1
      %s40 = ssub.s32 %s34, 2
      %s41 = sadd.s32 %s34, 1
      %s42 = ssub.s32 %s34, %s41
      %p43 = scmp.eq.s32.totalorder %s42, 0
      %s45 = sadd.s32 %s44, 1
      %s46 = scalar_select %p43, %s44, %s45
      %p49 = pneg %p43
      %p50 = scmp.eq.s32.totalorder %s34, 1
      %p51 = por %p49, %p50
      %p52 = scmp.ne.s32.totalorder %s44, %s47
      %p53 = scmp.eq.s32.totalorder %s34, 0
      %p54 = por %p52, %p53
      %p55 = scmp.ne.s32.totalorder %s44, %s47
      %p56 = scmp.eq.s32.totalorder %s39, 1
      %p57 = por %p55, %p56
      %p58 = scmp.ne.s32.totalorder %s47, %s48
      %p59 = scmp.eq.s32.totalorder %s39, 0
      %p60 = por %p58, %p59
      %p61 = scmp.ne.s32.totalorder %s47, %s48
      %p62 = scmp.eq.s32.totalorder %s40, 1
      %p63 = por %p61, %p62
      %p65 = scmp.ne.s32.totalorder %s48, %s64
      %p66 = scmp.eq.s32.totalorder %s40, 0
      %p67 = por %p65, %p66
      %s68 = ssub.s32 %s34, %s41
      %p69 = scmp.eq.s32.totalorder %s68, 0
      %s71 = sadd.s32 %s70, 1
      %s72 = scalar_select %p69, %s70, %s71
      %p75 = pneg %p69
      %p76 = scmp.eq.s32.totalorder %s34, 1
      %p77 = por %p75, %p76
      %p78 = scmp.ne.s32.totalorder %s70, %s73
      %p79 = scmp.eq.s32.totalorder %s34, 0
      %p80 = por %p78, %p79
      %p81 = scmp.ne.s32.totalorder %s70, %s73
      %p82 = scmp.eq.s32.totalorder %s39, 1
      %p83 = por %p81, %p82
      %p84 = scmp.ne.s32.totalorder %s73, %s74
      %p85 = scmp.eq.s32.totalorder %s39, 0
      %p86 = por %p84, %p85
      %p87 = scmp.ne.s32.totalorder %s73, %s74
      %p88 = scmp.eq.s32.totalorder %s40, 1
      %p89 = por %p87, %p88
      %p91 = scmp.ne.s32.totalorder %s74, %s90
      %p92 = scmp.eq.s32.totalorder %s40, 0
      %p93 = por %p91, %p92
      %s94 = ssub.s32 %s34, %s41
      %p95 = scmp.eq.s32.totalorder %s94, 0
      %s97 = sadd.s32 %s96, 1
      %s98 = scalar_select %p95, %s96, %s97
      %p101 = pneg %p95
      %p102 = scmp.eq.s32.totalorder %s34, 1
      %p103 = por %p101, %p102
      %p104 = scmp.ne.s32.totalorder %s96, %s99
      %p105 = scmp.eq.s32.totalorder %s34, 0
      %p106 = por %p104, %p105
      %p107 = scmp.ne.s32.totalorder %s96, %s99
      %p108 = scmp.eq.s32.totalorder %s39, 1
      %p109 = por %p107, %p108
      %p110 = scmp.ne.s32.totalorder %s99, %s100
      %p111 = scmp.eq.s32.totalorder %s39, 0
      %p112 = por %p110, %p111
      %p113 = scmp.ne.s32.totalorder %s99, %s100
      %p114 = scmp.eq.s32.totalorder %s40, 1
      %p115 = por %p113, %p114
      %p117 = scmp.ne.s32.totalorder %s100, %s116
      %p118 = scmp.eq.s32.totalorder %s40, 0
      %p119 = por %p117, %p118
      %s120 = ssub.s32 %s34, %s41
      %p121 = scmp.eq.s32.totalorder %s120, 0
      %s123 = sadd.s32 %s122, 1
      %s124 = scalar_select %p121, %s122, %s123
      %p127 = pneg %p121
      %p128 = scmp.eq.s32.totalorder %s34, 1
      %p129 = por %p127, %p128
      %p130 = scmp.ne.s32.totalorder %s122, %s125
      %p131 = scmp.eq.s32.totalorder %s34, 0
      %p132 = por %p130, %p131
      %p133 = scmp.ne.s32.totalorder %s122, %s125
      %p134 = scmp.eq.s32.totalorder %s39, 1
      %p135 = por %p133, %p134
      %p136 = scmp.ne.s32.totalorder %s125, %s126
      %p137 = scmp.eq.s32.totalorder %s39, 0
      %p138 = por %p136, %p137
      %p139 = scmp.ne.s32.totalorder %s125, %s126
      %p140 = scmp.eq.s32.totalorder %s40, 1
      %p141 = por %p139, %p140
      %p143 = scmp.ne.s32.totalorder %s126, %s142
      %p144 = scmp.eq.s32.totalorder %s40, 0
      %p145 = por %p143, %p144
      %s147 = sadd.s32 %s146, 1
      %p150 = scmp.eq.s32.totalorder %s34, 1
      %p151 = scmp.ne.s32.totalorder %s146, %s148
      %p152 = scmp.eq.s32.totalorder %s34, 0
      %p153 = por %p151, %p152
      %p154 = scmp.ne.s32.totalorder %s146, %s148
      %p155 = scmp.eq.s32.totalorder %s39, 1
      %p156 = por %p154, %p155
      %p157 = scmp.ne.s32.totalorder %s148, %s149
      %p158 = scmp.eq.s32.totalorder %s39, 0
      %p159 = por %p157, %p158
      %p160 = scmp.ne.s32.totalorder %s148, %s149
      %p161 = scmp.eq.s32.totalorder %s40, 1
      %p162 = por %p160, %p161
      %p164 = scmp.ne.s32.totalorder %s149, %s163
      %p165 = scmp.eq.s32.totalorder %s40, 0
      %p166 = por %p164, %p165
      %s168 = sadd.s32 %s167, 1
      %p171 = scmp.eq.s32.totalorder %s34, 1
      %p172 = scmp.ne.s32.totalorder %s167, %s169
      %p173 = scmp.eq.s32.totalorder %s34, 0
      %p174 = por %p172, %p173
      %p175 = scmp.ne.s32.totalorder %s167, %s169
      %p176 = scmp.eq.s32.totalorder %s39, 1
      %p177 = por %p175, %p176
      %p178 = scmp.ne.s32.totalorder %s169, %s170
      %p179 = scmp.eq.s32.totalorder %s39, 0
      %p180 = por %p178, %p179
      %p181 = scmp.ne.s32.totalorder %s169, %s170
      %p182 = scmp.eq.s32.totalorder %s40, 1
      %p183 = por %p181, %p182
      %p185 = scmp.ne.s32.totalorder %s170, %s184
      %p186 = scmp.eq.s32.totalorder %s40, 0
      %p187 = por %p185, %p186
      %s189 = sadd.s32 %s188, 1
      %p192 = scmp.eq.s32.totalorder %s34, 1
      %p193 = scmp.ne.s32.totalorder %s188, %s190
      %p194 = scmp.eq.s32.totalorder %s34, 0
      %p195 = por %p193, %p194
      %p196 = scmp.ne.s32.totalorder %s188, %s190
      %p197 = scmp.eq.s32.totalorder %s39, 1
      %p198 = por %p196, %p197
      %p199 = scmp.ne.s32.totalorder %s190, %s191
      %p200 = scmp.eq.s32.totalorder %s39, 0
      %p201 = por %p199, %p200
      %p202 = scmp.ne.s32.totalorder %s190, %s191
      %p203 = scmp.eq.s32.totalorder %s40, 1
      %p204 = por %p202, %p203
      %p206 = scmp.ne.s32.totalorder %s191, %s205
      %p207 = scmp.eq.s32.totalorder %s40, 0
      %p208 = por %p206, %p207
      %s210 = sadd.s32 %s209, 1
      %p213 = scmp.eq.s32.totalorder %s34, 1
      %p214 = scmp.ne.s32.totalorder %s209, %s211
      %p215 = scmp.eq.s32.totalorder %s34, 0
      %p216 = por %p214, %p215
      %p217 = scmp.ne.s32.totalorder %s209, %s211
      %p218 = scmp.eq.s32.totalorder %s39, 1
      %p219 = por %p217, %p218
      %p220 = scmp.ne.s32.totalorder %s211, %s212
      %p221 = scmp.eq.s32.totalorder %s39, 0
      %p222 = por %p220, %p221
      %p223 = scmp.ne.s32.totalorder %s211, %s212
      %p224 = scmp.eq.s32.totalorder %s40, 1
      %p225 = por %p223, %p224
      %p227 = scmp.ne.s32.totalorder %s212, %s226
      %p228 = scmp.eq.s32.totalorder %s40, 0
      %p229 = por %p227, %p228
      %s231 = sadd.s32 %s230, 1
      %p234 = scmp.eq.s32.totalorder %s34, 1
      %p235 = scmp.ne.s32.totalorder %s230, %s232
      %p236 = scmp.eq.s32.totalorder %s34, 0
      %p237 = por %p235, %p236
      %p238 = scmp.ne.s32.totalorder %s230, %s232
      %p239 = scmp.eq.s32.totalorder %s39, 1
      %p240 = por %p238, %p239
      %p241 = scmp.ne.s32.totalorder %s232, %s233
      %p242 = scmp.eq.s32.totalorder %s39, 0
      %p243 = por %p241, %p242
      %p244 = scmp.ne.s32.totalorder %s232, %s233
      %p245 = scmp.eq.s32.totalorder %s40, 1
      %p246 = por %p244, %p245
      %p248 = scmp.ne.s32.totalorder %s233, %s247
      %p249 = scmp.eq.s32.totalorder %s40, 0
      %p250 = por %p248, %p249
      %s252 = sadd.s32 %s251, 1
      %p255 = scmp.eq.s32.totalorder %s34, 1
      %p256 = scmp.ne.s32.totalorder %s251, %s253
      %p257 = scmp.eq.s32.totalorder %s34, 0
      %p258 = por %p256, %p257
      %p259 = scmp.ne.s32.totalorder %s251, %s253
      %p260 = scmp.eq.s32.totalorder %s39, 1
      %p261 = por %p259, %p260
      %p262 = scmp.ne.s32.totalorder %s253, %s254
      %p263 = scmp.eq.s32.totalorder %s39, 0
      %p264 = por %p262, %p263
      %p265 = scmp.ne.s32.totalorder %s253, %s254
      %p266 = scmp.eq.s32.totalorder %s40, 1
      %p267 = por %p265, %p266
      %p269 = scmp.ne.s32.totalorder %s254, %s268
      %p270 = scmp.eq.s32.totalorder %s40, 0
      %p271 = por %p269, %p270
      %s273 = sadd.s32 %s272, 1
      %p276 = scmp.eq.s32.totalorder %s34, 1
      %p277 = scmp.ne.s32.totalorder %s272, %s274
      %p278 = scmp.eq.s32.totalorder %s34, 0
      %p279 = por %p277, %p278
      %p280 = scmp.ne.s32.totalorder %s272, %s274
      %p281 = scmp.eq.s32.totalorder %s39, 1
      %p282 = por %p280, %p281
      %p283 = scmp.ne.s32.totalorder %s274, %s275
      %p284 = scmp.eq.s32.totalorder %s39, 0
      %p285 = por %p283, %p284
      %p286 = scmp.ne.s32.totalorder %s274, %s275
      %p287 = scmp.eq.s32.totalorder %s40, 1
      %p288 = por %p286, %p287
      %p290 = scmp.ne.s32.totalorder %s275, %s289
      %p291 = scmp.eq.s32.totalorder %s40, 0
      %p292 = por %p290, %p291
      %s294 = sadd.s32 %s293, 1
      %p297 = scmp.eq.s32.totalorder %s34, 1
      %p298 = scmp.ne.s32.totalorder %s293, %s295
      %p299 = scmp.eq.s32.totalorder %s34, 0
      %p300 = por %p298, %p299
      %p301 = scmp.ne.s32.totalorder %s293, %s295
      %p302 = scmp.eq.s32.totalorder %s39, 1
      %p303 = por %p301, %p302
      %p304 = scmp.ne.s32.totalorder %s295, %s296
      %p305 = scmp.eq.s32.totalorder %s39, 0
      %p306 = por %p304, %p305
      %p307 = scmp.ne.s32.totalorder %s295, %s296
      %p308 = scmp.eq.s32.totalorder %s40, 1
      %p309 = por %p307, %p308
      %p311 = scmp.ne.s32.totalorder %s296, %s310
      %p312 = scmp.eq.s32.totalorder %s40, 0
      %p313 = por %p311, %p312
      %s315 = sadd.s32 %s314, 1
      %p318 = scmp.eq.s32.totalorder %s34, 1
      %p319 = scmp.ne.s32.totalorder %s314, %s316
      %p320 = scmp.eq.s32.totalorder %s34, 0
      %p321 = por %p319, %p320
      %p322 = scmp.ne.s32.totalorder %s314, %s316
      %p323 = scmp.eq.s32.totalorder %s39, 1
      %p324 = por %p322, %p323
      %p325 = scmp.ne.s32.totalorder %s316, %s317
      %p326 = scmp.eq.s32.totalorder %s39, 0
      %p327 = por %p325, %p326
      %p328 = scmp.ne.s32.totalorder %s316, %s317
      %p329 = scmp.eq.s32.totalorder %s40, 1
      %p330 = por %p328, %p329
      %p332 = scmp.ne.s32.totalorder %s317, %s331
      %p333 = scmp.eq.s32.totalorder %s40, 0
      %p334 = por %p332, %p333
      %s336 = sadd.s32 %s335, 1
      %p339 = scmp.eq.s32.totalorder %s34, 1
      %p340 = scmp.ne.s32.totalorder %s335, %s337
      %p341 = scmp.eq.s32.totalorder %s34, 0
      %p342 = por %p340, %p341
      %p343 = scmp.ne.s32.totalorder %s335, %s337
      %p344 = scmp.eq.s32.totalorder %s39, 1
      %p345 = por %p343, %p344
      %p346 = scmp.ne.s32.totalorder %s337, %s338
      %p347 = scmp.eq.s32.totalorder %s39, 0
      %p348 = por %p346, %p347
      %p349 = scmp.ne.s32.totalorder %s337, %s338
      %p350 = scmp.eq.s32.totalorder %s40, 1
      %p351 = por %p349, %p350
      %p353 = scmp.ne.s32.totalorder %s338, %s352
      %p354 = scmp.eq.s32.totalorder %s40, 0
      %p355 = por %p353, %p354
      %s357 = sadd.s32 %s356, 1
      %p360 = scmp.eq.s32.totalorder %s34, 1
      %p361 = scmp.ne.s32.totalorder %s356, %s358
      %p362 = scmp.eq.s32.totalorder %s34, 0
      %p363 = por %p361, %p362
      %p364 = scmp.ne.s32.totalorder %s356, %s358
      %p365 = scmp.eq.s32.totalorder %s39, 1
      %p366 = por %p364, %p365
      %p367 = scmp.ne.s32.totalorder %s358, %s359
      %p368 = scmp.eq.s32.totalorder %s39, 0
      %p369 = por %p367, %p368
      %p370 = scmp.ne.s32.totalorder %s358, %s359
      %p371 = scmp.eq.s32.totalorder %s40, 1
      %p372 = por %p370, %p371
      %p374 = scmp.ne.s32.totalorder %s359, %s373
      %p375 = scmp.eq.s32.totalorder %s40, 0
      %p376 = por %p374, %p375
      %s378 = sadd.s32 %s377, 1
      %p381 = scmp.eq.s32.totalorder %s34, 1
      %p382 = scmp.ne.s32.totalorder %s377, %s379
      %p383 = scmp.eq.s32.totalorder %s34, 0
      %p384 = por %p382, %p383
      %p385 = scmp.ne.s32.totalorder %s377, %s379
      %p386 = scmp.eq.s32.totalorder %s39, 1
      %p387 = por %p385, %p386
      %p388 = scmp.ne.s32.totalorder %s379, %s380
      %p389 = scmp.eq.s32.totalorder %s39, 0
      %p390 = por %p388, %p389
      %p391 = scmp.ne.s32.totalorder %s379, %s380
      %p392 = scmp.eq.s32.totalorder %s40, 1
      %p393 = por %p391, %p392
      %p395 = scmp.ne.s32.totalorder %s380, %s394
      %p396 = scmp.eq.s32.totalorder %s40, 0
      %p397 = por %p395, %p396
      %s399 = sadd.s32 %s398, 1
      %p402 = scmp.eq.s32.totalorder %s34, 1
      %p403 = scmp.ne.s32.totalorder %s398, %s400
      %p404 = scmp.eq.s32.totalorder %s34, 0
      %p405 = por %p403, %p404
      %p406 = scmp.ne.s32.totalorder %s398, %s400
      %p407 = scmp.eq.s32.totalorder %s39, 1
      %p408 = por %p406, %p407
      %p409 = scmp.ne.s32.totalorder %s400, %s401
      %p410 = scmp.eq.s32.totalorder %s39, 0
      %p411 = por %p409, %p410
      %p412 = scmp.ne.s32.totalorder %s400, %s401
      %p413 = scmp.eq.s32.totalorder %s40, 1
      %p414 = por %p412, %p413
      %p416 = scmp.ne.s32.totalorder %s401, %s415
      %p417 = scmp.eq.s32.totalorder %s40, 0
      %p418 = por %p416, %p417
      %s420 = sadd.s32 %s419, 1
      %p423 = scmp.eq.s32.totalorder %s34, 1
      %p424 = scmp.ne.s32.totalorder %s419, %s421
      %p425 = scmp.eq.s32.totalorder %s34, 0
      %p426 = por %p424, %p425
      %p427 = scmp.ne.s32.totalorder %s419, %s421
      %p428 = scmp.eq.s32.totalorder %s39, 1
      %p429 = por %p427, %p428
      %p430 = scmp.ne.s32.totalorder %s421, %s422
      %p431 = scmp.eq.s32.totalorder %s39, 0
      %p432 = por %p430, %p431
      %p433 = scmp.ne.s32.totalorder %s421, %s422
      %p434 = scmp.eq.s32.totalorder %s40, 1
      %p435 = por %p433, %p434
      %p437 = scmp.ne.s32.totalorder %s422, %s436
      %p438 = scmp.eq.s32.totalorder %s40, 0
      %p439 = por %p437, %p438
      %s441 = sadd.s32 %s440, 1
      %p444 = scmp.eq.s32.totalorder %s34, 1
      %p445 = scmp.ne.s32.totalorder %s440, %s442
      %p446 = scmp.eq.s32.totalorder %s34, 0
      %p447 = por %p445, %p446
      %p448 = scmp.ne.s32.totalorder %s440, %s442
      %p449 = scmp.eq.s32.totalorder %s39, 1
      %p450 = por %p448, %p449
      %p451 = scmp.ne.s32.totalorder %s442, %s443
      %p452 = scmp.eq.s32.totalorder %s39, 0
      %p453 = por %p451, %p452
      %p454 = scmp.ne.s32.totalorder %s442, %s443
      %p455 = scmp.eq.s32.totalorder %s40, 1
      %p456 = por %p454, %p455
      %p458 = scmp.ne.s32.totalorder %s443, %s457
      %p459 = scmp.eq.s32.totalorder %s40, 0
      %p460 = por %p458, %p459
      %s461 = ssub.s32 %s34, %s41
      %p462 = scmp.eq.s32.totalorder %s461, 0
      %s464 = sadd.s32 %s463, 1
      %s465 = scalar_select %p462, %s463, %s464
      %p468 = pneg %p462
      %p469 = scmp.eq.s32.totalorder %s34, 1
      %p470 = por %p468, %p469
      %p471 = scmp.ne.s32.totalorder %s463, %s466
      %p472 = scmp.eq.s32.totalorder %s34, 0
      %p473 = por %p471, %p472
      %p474 = scmp.ne.s32.totalorder %s463, %s466
      %p475 = scmp.eq.s32.totalorder %s39, 1
      %p476 = por %p474, %p475
      %p477 = scmp.ne.s32.totalorder %s466, %s467
      %p478 = scmp.eq.s32.totalorder %s39, 0
      %p479 = por %p477, %p478
      %p480 = scmp.ne.s32.totalorder %s466, %s467
      %p481 = scmp.eq.s32.totalorder %s40, 1
      %p482 = por %p480, %p481
      %p484 = scmp.ne.s32.totalorder %s467, %s483
      %p485 = scmp.eq.s32.totalorder %s40, 0
      %p486 = por %p484, %p485
      %p487 = scmp.le.s32.totalorder 1, %s34
      %p488 = scmp.lt.s32.totalorder %s34, 3
      %p489 = pnand %p487, %p488
      %p490 = pneg %p489
      // Predicated region
      $region9: #{tpu_custom_call.1} parent=5 // pred_check
        _
      $region10: #{tpu_custom_call.1} parent=5 // pred_check_branch
        %492 = sbr.rel (%p489) target = $region12
      $region11: #{tpu_custom_call.1} parent=5 // pred_region
        %s493 = ssub.s32 %s34, 1
        // Predicated region
        $region13: #{tpu_custom_call.1} parent=11 // pred_check
          %p494 = pneg %p159
        $region14: #{tpu_custom_call.1} parent=11 // pred_check_branch
          %496 = sbr.rel (%p494) target = $region16
        $region15: #{tpu_custom_call.1} parent=11 // pred_region
          _
        $region16: #{tpu_custom_call.1} parent=11 // pred_fallthru
          _
        // Predicated region
        $region17: #{tpu_custom_call.1} parent=11 // pred_check
          %p497 = pneg %p180
        $region18: #{tpu_custom_call.1} parent=11 // pred_check_branch
          %499 = sbr.rel (%p497) target = $region20
        $region19: #{tpu_custom_call.1} parent=11 // pred_region
          %s501 = ssub.s32 16, 16
          %502 = vsyncadd [#allocation7], %s501
          %s504 = sshll.u32 [#allocation6], 4
          %s505 = int_to_ptr.vmem [resolvable:$true] %s504
          %507 = dma.hbm_to_vmem [thread:$0]  %s5, 16, %s505, [#allocation7]
        $region20: #{tpu_custom_call.1} parent=11 // pred_fallthru
          _
        // Predicated region
        $region21: #{tpu_custom_call.1} parent=11 // pred_check
          %p508 = pneg %p201
        $region22: #{tpu_custom_call.1} parent=11 // pred_check_branch
          %510 = sbr.rel (%p508) target = $region24
        $region23: #{tpu_custom_call.1} parent=11 // pred_region
          %s512 = ssub.s32 16, 16
          %513 = vsyncadd [#allocation7], %s512
          %s515 = sshll.u32 [#allocation8], 4
          %s516 = int_to_ptr.vmem [resolvable:$true] %s515
          %518 = dma.hbm_to_vmem [thread:$0]  %s6, 16, %s516, [#allocation7]
        $region24: #{tpu_custom_call.1} parent=11 // pred_fallthru
          _
        // Predicated region
        $region25: #{tpu_custom_call.1} parent=11 // pred_check
          %p519 = pneg %p222
        $region26: #{tpu_custom_call.1} parent=11 // pred_check_branch
          %521 = sbr.rel (%p519) target = $region28
        $region27: #{tpu_custom_call.1} parent=11 // pred_region
          %s523 = ssub.s32 16, 16
          %524 = vsyncadd [#allocation10], %s523
          %s526 = sshll.u32 [#allocation9], 4
          %s527 = int_to_ptr.vmem [resolvable:$true] %s526
          %529 = dma.hbm_to_vmem [thread:$0]  %s7, 16, %s527, [#allocation10]
        $region28: #{tpu_custom_call.1} parent=11 // pred_fallthru
          _
        // Predicated region
        $region29: #{tpu_custom_call.1} parent=11 // pred_check
          %p530 = pneg %p243
        $region30: #{tpu_custom_call.1} parent=11 // pred_check_branch
          %532 = sbr.rel (%p530) target = $region32
        $region31: #{tpu_custom_call.1} parent=11 // pred_region
          _
        $region32: #{tpu_custom_call.1} parent=11 // pred_fallthru
          _
        // Predicated region
        $region33: #{tpu_custom_call.1} parent=11 // pred_check
          %p533 = pneg %p264
        $region34: #{tpu_custom_call.1} parent=11 // pred_check_branch
          %535 = sbr.rel (%p533) target = $region36
        $region35: #{tpu_custom_call.1} parent=11 // pred_region
          _
        $region36: #{tpu_custom_call.1} parent=11 // pred_fallthru
          _
        // Predicated region
        $region37: #{tpu_custom_call.1} parent=11 // pred_check
          %p536 = pneg %p285
        $region38: #{tpu_custom_call.1} parent=11 // pred_check_branch
          %538 = sbr.rel (%p536) target = $region40
        $region39: #{tpu_custom_call.1} parent=11 // pred_region
          %s540 = ssub.s32 16, 16
          %541 = vsyncadd [#allocation10], %s540
          %s543 = sshll.u32 [#allocation11], 4
          %s544 = int_to_ptr.vmem [resolvable:$true] %s543
          %546 = dma.hbm_to_vmem [thread:$0]  %s10, 16, %s544, [#allocation10]
        $region40: #{tpu_custom_call.1} parent=11 // pred_fallthru
          _
        // Predicated region
        $region41: #{tpu_custom_call.1} parent=11 // pred_check
          %p547 = pneg %p306
        $region42: #{tpu_custom_call.1} parent=11 // pred_check_branch
          %549 = sbr.rel (%p547) target = $region44
        $region43: #{tpu_custom_call.1} parent=11 // pred_region
          %s551 = ssub.s32 16, 16
          %552 = vsyncadd [#allocation13], %s551
          %s554 = sshll.u32 [#allocation12], 4
          %s555 = int_to_ptr.vmem [resolvable:$true] %s554
          %557 = dma.hbm_to_vmem [thread:$0]  %s11, 16, %s555, [#allocation13]
        $region44: #{tpu_custom_call.1} parent=11 // pred_fallthru
          _
        // Predicated region
        $region45: #{tpu_custom_call.1} parent=11 // pred_check
          %p558 = pneg %p327
        $region46: #{tpu_custom_call.1} parent=11 // pred_check_branch
          %560 = sbr.rel (%p558) target = $region48
        $region47: #{tpu_custom_call.1} parent=11 // pred_region
          _
        $region48: #{tpu_custom_call.1} parent=11 // pred_fallthru
          _
        // Predicated region
        $region49: #{tpu_custom_call.1} parent=11 // pred_check
          %p561 = pneg %p348
        $region50: #{tpu_custom_call.1} parent=11 // pred_check_branch
          %563 = sbr.rel (%p561) target = $region52
        $region51: #{tpu_custom_call.1} parent=11 // pred_region
          _
        $region52: #{tpu_custom_call.1} parent=11 // pred_fallthru
          _
        // Predicated region
        $region53: #{tpu_custom_call.1} parent=11 // pred_check
          %p564 = pneg %p369
        $region54: #{tpu_custom_call.1} parent=11 // pred_check_branch
          %566 = sbr.rel (%p564) target = $region56
        $region55: #{tpu_custom_call.1} parent=11 // pred_region
          _
        $region56: #{tpu_custom_call.1} parent=11 // pred_fallthru
          _
        // Predicated region
        $region57: #{tpu_custom_call.1} parent=11 // pred_check
          %p567 = pneg %p390
        $region58: #{tpu_custom_call.1} parent=11 // pred_check_branch
          %569 = sbr.rel (%p567) target = $region60
        $region59: #{tpu_custom_call.1} parent=11 // pred_region
          _
        $region60: #{tpu_custom_call.1} parent=11 // pred_fallthru
          _
        // Predicated region
        $region61: #{tpu_custom_call.1} parent=11 // pred_check
          %p570 = pneg %p411
        $region62: #{tpu_custom_call.1} parent=11 // pred_check_branch
          %572 = sbr.rel (%p570) target = $region64
        $region63: #{tpu_custom_call.1} parent=11 // pred_region
          _
        $region64: #{tpu_custom_call.1} parent=11 // pred_fallthru
          _
        // Predicated region
        $region65: #{tpu_custom_call.1} parent=11 // pred_check
          %p573 = pneg %p432
        $region66: #{tpu_custom_call.1} parent=11 // pred_check_branch
          %575 = sbr.rel (%p573) target = $region68
        $region67: #{tpu_custom_call.1} parent=11 // pred_region
          _
        $region68: #{tpu_custom_call.1} parent=11 // pred_fallthru
          _
        // Predicated region
        $region69: #{tpu_custom_call.1} parent=11 // pred_check
          %p576 = pneg %p453
        $region70: #{tpu_custom_call.1} parent=11 // pred_check_branch
          %578 = sbr.rel (%p576) target = $region72
        $region71: #{tpu_custom_call.1} parent=11 // pred_region
          _
        $region72: #{tpu_custom_call.1} parent=11 // pred_fallthru
          _
      $region12: #{tpu_custom_call.1} parent=5 // pred_fallthru
        _
      %p579 = scmp.lt.s32.totalorder %s34, 2
      // Predicated region
      $region73: #{tpu_custom_call.1} parent=5 // pred_check
        %p580 = pneg %p579
      $region74: #{tpu_custom_call.1} parent=5 // pred_check_branch
        %582 = sbr.rel (%p580) target = $region76
      $region75: #{tpu_custom_call.1} parent=5 // pred_region
        // Predicated region
        $region77: #{tpu_custom_call.1} parent=75 // pred_check
          %p583 = pneg %p54
        $region78: #{tpu_custom_call.1} parent=75 // pred_check_branch
          %585 = sbr.rel (%p583) target = $region80
        $region79: #{tpu_custom_call.1} parent=75 // pred_region
          %s586 = smul.u32 2, %s34
          %p587 = scmp.lt.s32.totalorder %s586, 3
          %s588 = scalar_select %p587, %s586, 3
          %s589 = smul.addr %s588, 2
          %s590 = smul.addr %s589, 4
          %s591 = scalar_lea.vmem %s0, %s590
          %s592 = smul.u32 2, %s34
        $region80: #{tpu_custom_call.1} parent=75 // pred_fallthru
          _
        // Predicated region
        $region81: #{tpu_custom_call.1} parent=75 // pred_check
          %p593 = pneg %p80
        $region82: #{tpu_custom_call.1} parent=75 // pred_check_branch
          %595 = sbr.rel (%p593) target = $region84
        $region83: #{tpu_custom_call.1} parent=75 // pred_region
          %s596 = smul.u32 2, %s34
          %p597 = scmp.lt.s32.totalorder %s596, 3
          %s598 = scalar_select %p597, %s596, 3
          %s599 = smul.addr %s598, 8
          %s600 = scalar_lea.vmem %s1, %s599
          %s601 = smul.u32 2, %s34
        $region84: #{tpu_custom_call.1} parent=75 // pred_fallthru
          _
        // Predicated region
        $region85: #{tpu_custom_call.1} parent=75 // pred_check
          %p602 = pneg %p106
        $region86: #{tpu_custom_call.1} parent=75 // pred_check_branch
          %604 = sbr.rel (%p602) target = $region88
        $region87: #{tpu_custom_call.1} parent=75 // pred_region
          %p605 = scmp.lt.s32.totalorder %s34, 1
          %s606 = scalar_select %p605, %s34, 1
          %s607 = smul.addr %s606, 8
          %s608 = scalar_lea.vmem %s2, %s607
        $region88: #{tpu_custom_call.1} parent=75 // pred_fallthru
          _
        // Predicated region
        $region89: #{tpu_custom_call.1} parent=75 // pred_check
          %p609 = pneg %p132
        $region90: #{tpu_custom_call.1} parent=75 // pred_check_branch
          %611 = sbr.rel (%p609) target = $region92
        $region91: #{tpu_custom_call.1} parent=75 // pred_region
          %s612 = sand.u32 %s122, 1
          %s613 = scalar_lea.sflag [#allocation4], %s612
          %s614 = sand.u32 %s122, 1
          %s615 = smul.addr %s614, 2
          %s616 = scalar_lea.vmem [#allocation3], %s615
          %s618 = ssub.s32 32, 32
          %619 = vsyncadd %s613, %s618
          %s620 = smul.addr %s34, 32
          %s621 = scalar_lea.hbm %s3, %s620
          %s623 = sshll.u32 %s616, 4
          %s624 = int_to_ptr.vmem [resolvable:$true] %s623
          %626 = dma.hbm_to_vmem [thread:$0]  %s621, 32, %s624, %s613
        $region92: #{tpu_custom_call.1} parent=75 // pred_fallthru
          _
      $region76: #{tpu_custom_call.1} parent=5 // pred_fallthru
        _
      %p627 = scmp.le.s32.totalorder 1, %s34
      %p628 = scmp.lt.s32.totalorder %s34, 3
      %p629 = pnand %p627, %p628
      %p630 = pneg %p629
      // Predicated region
      $region93: #{tpu_custom_call.1} parent=5 // pred_check
        _
      $region94: #{tpu_custom_call.1} parent=5 // pred_check_branch
        %632 = sbr.rel (%p629) target = $region96
      $region95: #{tpu_custom_call.1} parent=5 // pred_region
        %s633 = ssub.s32 %s34, 1
        %s634 = sand.u32 %s125, 1
        %s635 = scalar_lea.sflag [#allocation4], %s634
        %s636 = sand.u32 %s125, 1
        %s637 = smul.addr %s636, 2
        %s638 = scalar_lea.vmem [#allocation3], %s637
        // Predicated region
        $region97: #{tpu_custom_call.1} parent=95 // pred_check
          %p639 = pneg %p138
        $region98: #{tpu_custom_call.1} parent=95 // pred_check_branch
          %641 = sbr.rel (%p639) target = $region100
        $region99: #{tpu_custom_call.1} parent=95 // pred_region
          %642 = dma.done %s635, 32
        $region100: #{tpu_custom_call.1} parent=95 // pred_fallthru
          _
        // Predicated region
        $region101: #{tpu_custom_call.1} parent=95 // pred_check
          %p643 = pneg %p180
        $region102: #{tpu_custom_call.1} parent=95 // pred_check_branch
          %645 = sbr.rel (%p643) target = $region104
        $region103: #{tpu_custom_call.1} parent=95 // pred_region
          %646 = dma.done [#allocation7], 16
        $region104: #{tpu_custom_call.1} parent=95 // pred_fallthru
          _
        // Predicated region
        $region105: #{tpu_custom_call.1} parent=95 // pred_check
          %p647 = pneg %p201
        $region106: #{tpu_custom_call.1} parent=95 // pred_check_branch
          %649 = sbr.rel (%p647) target = $region108
        $region107: #{tpu_custom_call.1} parent=95 // pred_region
          %650 = dma.done [#allocation7], 16
        $region108: #{tpu_custom_call.1} parent=95 // pred_fallthru
          _
        // Predicated region
        $region109: #{tpu_custom_call.1} parent=95 // pred_check
          %p651 = pneg %p222
        $region110: #{tpu_custom_call.1} parent=95 // pred_check_branch
          %653 = sbr.rel (%p651) target = $region112
        $region111: #{tpu_custom_call.1} parent=95 // pred_region
          %654 = dma.done [#allocation10], 16
        $region112: #{tpu_custom_call.1} parent=95 // pred_fallthru
          _
        // Predicated region
        $region113: #{tpu_custom_call.1} parent=95 // pred_check
          %p655 = pneg %p285
        $region114: #{tpu_custom_call.1} parent=95 // pred_check_branch
          %657 = sbr.rel (%p655) target = $region116
        $region115: #{tpu_custom_call.1} parent=95 // pred_region
          %658 = dma.done [#allocation10], 16
        $region116: #{tpu_custom_call.1} parent=95 // pred_fallthru
          _
        // Predicated region
        $region117: #{tpu_custom_call.1} parent=95 // pred_check
          %p659 = pneg %p306
        $region118: #{tpu_custom_call.1} parent=95 // pred_check_branch
          %661 = sbr.rel (%p659) target = $region120
        $region119: #{tpu_custom_call.1} parent=95 // pred_region
          %662 = dma.done [#allocation13], 16
        $region120: #{tpu_custom_call.1} parent=95 // pred_fallthru
          _
        %s663 = smul.u32 2, %s39
        %p664 = scmp.lt.s32.totalorder %s663, 3
        %s665 = scalar_select %p664, %s663, 3
        %s666 = smul.addr %s665, 2
        %s667 = smul.addr %s666, 4
        %s668 = scalar_lea.vmem %s0, %s667
        %p669 = pneg %p60
        %p670 = pneg %p57
        %s671 = smul.u32 2, %s39
        %p672 = scmp.lt.s32.totalorder %s671, 3
        %s673 = scalar_select %p672, %s671, 3
        %s674 = smul.addr %s673, 8
        %s675 = scalar_lea.vmem %s1, %s674
        %p676 = pneg %p86
        %p677 = pneg %p83
        %p678 = scmp.lt.s32.totalorder %s39, 1
        %s679 = scalar_select %p678, %s39, 1
        %s680 = smul.addr %s679, 8
        %s681 = scalar_lea.vmem %s2, %s680
        %p682 = pneg %p112
        %p683 = pneg %p109
        %s684 = sand.u32 %s125, 1
        %s685 = scalar_lea.sflag [#allocation4], %s684
        %s686 = sand.u32 %s125, 1
        %s687 = smul.addr %s686, 2
        %s688 = scalar_lea.vmem [#allocation3], %s687
        %p689 = pneg %p138
        %p690 = pneg %p135
        %p691 = pneg %p159
        %p692 = pneg %p156
        %p693 = pneg %p180
        %p694 = pneg %p177
        %p695 = pneg %p201
        %p696 = pneg %p198
        %p697 = pneg %p222
        %p698 = pneg %p219
        %p699 = pneg %p243
        %p700 = pneg %p240
        %p701 = pneg %p264
        %p702 = pneg %p261
        %p703 = pneg %p285
        %p704 = pneg %p282
        %p705 = pneg %p306
        %p706 = pneg %p303
        %p707 = pneg %p327
        %p708 = pneg %p324
        %p709 = pneg %p348
        %p710 = pneg %p345
        %p711 = pneg %p369
        %p712 = pneg %p366
        %p713 = pneg %p390
        %p714 = pneg %p387
        %p715 = pneg %p411
        %p716 = pneg %p408
        %p717 = pneg %p432
        %p718 = pneg %p429
        %p719 = pneg %p453
        %p720 = pneg %p450
        %p721 = pneg %p479
        %p722 = pneg %p476
        %s723 = sand.u32 %s466, 1
        %s724 = scalar_lea.sflag [#allocation5], %s723
        %s725 = sand.u32 %s466, 1
        %s726 = smul.addr %s725, 16
        %s727 = scalar_lea.vmem [#allocation14], %s726
        %s728 = smul.u32 2, %s39
        %p729 = scmp.lt.s32.totalorder %s728, 3
        %s730 = scalar_select %p729, %s728, 3
        %s731 = smul.addr %s730, 2
        %s732 = smul.addr %s731, 4
        %s733 = scalar_lea.vmem %s0, %s732
        %s734 = smul.u32 2, %s39
        %s735 = smul.u32 2, %s39
        %p736 = scmp.lt.s32.totalorder %s735, 3
        %s737 = scalar_select %p736, %s735, 3
        %s738 = smul.addr %s737, 8
        %s739 = scalar_lea.vmem %s1, %s738
        %s740 = smul.u32 2, %s39
        %p741 = scmp.lt.s32.totalorder %s39, 1
        %s742 = scalar_select %p741, %s39, 1
        %s743 = smul.addr %s742, 8
        %s744 = scalar_lea.vmem %s2, %s743
        %s745 = smul.u32 2, %s39
        %v747 = vld [vmem:[%s733] sm:$0xf]
        %v748 = vld [vmem:[%s733 + $0x4] sm:$0xf]
        %v749 = vld [vmem:[%s733 + $0x8] sm:$0xf]
        %v750 = vld [vmem:[%s733 + $0xc] sm:$0xf]
        %v751 = vunpack.c.l.bf16 %v747
        %v752 = vunpack.c.l.bf16 %v748
        %v753 = vunpack.c.l.bf16 %v749
        %v754 = vunpack.c.l.bf16 %v750
        %v755 = vld [vmem:[%s739] sm:$0xff]
        %v756 = vld [vmem:[%s739 + $0x8] sm:$0xff]
        %v757 = vld [vmem:[%s4] sm:$0x1]
        %v758 = vld [vmem:[#allocation6] sm:$0x1]
        %vm759 = vcmask 261120
        %v760 = vsel %vm759, %v751, 0.0
        %761 = vadd.xlane.f32.xlu0 %v760
        %v762 = vpop.xlane.xlu0 %761
        %v763 = vsel %vm759, %v752, 0.0
        %764 = vadd.xlane.f32.xlu0 %v763
        %v765 = vpop.xlane.xlu0 %764
        %v766 = vsel %vm759, %v753, 0.0
        %767 = vadd.xlane.f32.xlu0 %v766
        %v768 = vpop.xlane.xlu0 %767
        %v769 = vsel %vm759, %v754, 0.0
        %770 = vadd.xlane.f32.xlu0 %v769
        %v771 = vpop.xlane.xlu0 %770
        %v772 = vrcp.pop 32.0
        %v773 = vmul.f32 %v762, %v772
        %v774 = vmul.f32 %v765, %v772
        %v775 = vmul.f32 %v768, %v772
        %v776 = vmul.f32 %v771, %v772
        %v777 = vsub.f32 %v751, %v773
        %v778 = vsub.f32 %v752, %v774
        %v779 = vsub.f32 %v753, %v775
        %v780 = vsub.f32 %v754, %v776
        %v781 = vmul.f32 %v777, %v777
        %v782 = vmul.f32 %v778, %v778
        %v783 = vmul.f32 %v779, %v779
        %v784 = vmul.f32 %v780, %v780
        %v785 = vsel %vm759, %v781, 0.0
        %786 = vadd.xlane.f32.xlu0 %v785
        %v787 = vpop.xlane.xlu0 %786
        %v788 = vsel %vm759, %v782, 0.0
        %789 = vadd.xlane.f32.xlu0 %v788
        %v790 = vpop.xlane.xlu0 %789
        %v791 = vsel %vm759, %v783, 0.0
        %792 = vadd.xlane.f32.xlu0 %v791
        %v793 = vpop.xlane.xlu0 %792
        %v794 = vsel %vm759, %v784, 0.0
        %795 = vadd.xlane.f32.xlu0 %v794
        %v796 = vpop.xlane.xlu0 %795
        %v797 = vmul.f32 %v787, %v772
        %v798 = vmul.f32 %v790, %v772
        %v799 = vmul.f32 %v793, %v772
        %v800 = vmul.f32 %v796, %v772
        %v801 = vadd.f32 %v797, 1e-05
        %v802 = vadd.f32 %v798, 1e-05
        %v803 = vadd.f32 %v799, 1e-05
        %v804 = vadd.f32 %v800, 1e-05
        %v805 = vrsqrt.pop %v801
        %v806 = vrsqrt.pop %v802
        %v807 = vrsqrt.pop %v803
        %v808 = vrsqrt.pop %v804
        %v809 = vmul.f32 %v777, %v805
        %v810 = vmul.f32 %v778, %v806
        %v811 = vmul.f32 %v779, %v807
        %v812 = vmul.f32 %v780, %v808
        %v814 = vlaneseq
        %v815 = vshrl.u32 %v814, 7
        %v816 = vsub.s32 0, %v815
        %v817 = vrot.slane %v757, %v816
        %v819 = vmul.f32 %v809, %v817
        %v820 = vmul.f32 %v810, %v817
        %v821 = vmul.f32 %v811, %v817
        %v822 = vmul.f32 %v812, %v817
        %v824 = vlaneseq
        %v825 = vshrl.u32 %v824, 7
        %v826 = vsub.s32 0, %v825
        %v827 = vrot.slane %v758, %v826
        %v829 = vadd.f32 %v819, %v827
        %v830 = vadd.f32 %v820, %v827
        %v831 = vadd.f32 %v821, %v827
        %v832 = vadd.f32 %v822, %v827
        %v833 = vpack.c.bf16 %v830, %v829
        %v834 = vpack.c.bf16 %v832, %v831
        %v835 = vld [vmem:[#allocation8] sm:$0x1]
        %v836 = vld [vmem:[#allocation9] sm:$0x1]
        %v837 = vsel %vm759, %v755, 0.0
        %838 = vadd.xlane.f32.xlu0 %v837
        %v839 = vpop.xlane.xlu0 %838
        %v840 = vsel %vm759, %v756, 0.0
        %841 = vadd.xlane.f32.xlu0 %v840
        %v842 = vpop.xlane.xlu0 %841
        %v843 = vmul.f32 %v839, %v772
        %v844 = vmul.f32 %v842, %v772
        %v845 = vsub.f32 %v755, %v843
        %v846 = vsub.f32 %v756, %v844
        %v847 = vmul.f32 %v845, %v845
        %v848 = vmul.f32 %v846, %v846
        %v849 = vsel %vm759, %v847, 0.0
        %850 = vadd.xlane.f32.xlu0 %v849
        %v851 = vpop.xlane.xlu0 %850
        %v852 = vsel %vm759, %v848, 0.0
        %853 = vadd.xlane.f32.xlu0 %v852
        %v854 = vpop.xlane.xlu0 %853
        %v855 = vmul.f32 %v851, %v772
        %v856 = vmul.f32 %v854, %v772
        %v857 = vadd.f32 %v855, 1e-05
        %v858 = vadd.f32 %v856, 1e-05
        %v859 = vrsqrt.pop %v857
        %v860 = vrsqrt.pop %v858
        %v861 = vmul.f32 %v845, %v859
        %v862 = vmul.f32 %v846, %v860
        %v864 = vlaneseq
        %v865 = vshrl.u32 %v864, 7
        %v866 = vsub.s32 0, %v865
        %v867 = vrot.slane %v835, %v866
        %v869 = vmul.f32 %v861, %v867
        %v870 = vmul.f32 %v862, %v867
        %v872 = vlaneseq
        %v873 = vshrl.u32 %v872, 7
        %v874 = vsub.s32 0, %v873
        %v875 = vrot.slane %v836, %v874
        %v877 = vadd.f32 %v869, %v875
        %v878 = vadd.f32 %v870, %v875
        %v879 = vpack.c.bf16 %v878, %v877
        %v880 = vld [vmem:[%s8] sm:$0xf]
        %v881 = vld [vmem:[%s8 + $0x4] sm:$0xf]
        %v882 = vld [vmem:[%s8 + $0x8] sm:$0xf]
        %v883 = vld [vmem:[%s8 + $0xc] sm:$0xf]
        %v888 = vunpack.c.l.b16 %v880
        %v889 = vunpack.c.l.b16 %v881
        %v890 = vunpack.c.l.b16 %v882
        %v891 = vunpack.c.l.b16 %v883
        %v892 = vpack.c.b16 %v889, %v888
        %v893 = vpack.c.b16 %v891, %v890
        %v897 = vsel %vm759, %v879, 0
        %899 = vmatprep.subr.bf16.mxu0 0
        %900 = vmatpush1.bf16.msra.mxu0 %v892
        %901 = vmatprep.subr.bf16.mxu0 0
        %902 = vmatpush1.bf16.msra.mxu0 %v893
        %903 = vmatprep.subr.bf16.mxu0 0
        %904 = vmatpush1.bf16.msra.mxu0 0
        %905 = vmatprep.subr.bf16.mxu0 0
        %906 = vmatpush1.bf16.msra.mxu0 0
        %907 = vmatprep.subr.bf16.mxu0 0
        %908 = vmatpush1.bf16.msra.mxu0 0
        %909 = vmatprep.subr.bf16.mxu0 0
        %910 = vmatpush1.bf16.msra.mxu0 0
        %911 = vmatprep.subr.bf16.mxu0 0
        %912 = vmatpush1.bf16.msra.mxu0 0
        %913 = vmatprep.subr.bf16.mxu0 0
        %914 = vmatpush1.bf16.msra.mxu0 0
        %915 = vmatprep.subr.bf16.mxu0 0
        %916 = vmatpush1.bf16.msra.mxu0 0
        %917 = vmatprep.subr.bf16.mxu0 0
        %918 = vmatpush1.bf16.msra.mxu0 0
        %919 = vmatprep.subr.bf16.mxu0 0
        %920 = vmatpush1.bf16.msra.mxu0 0
        %921 = vmatprep.subr.bf16.mxu0 0
        %922 = vmatpush1.bf16.msra.mxu0 0
        %923 = vmatprep.subr.bf16.mxu0 0
        %924 = vmatpush1.bf16.msra.mxu0 0
        %925 = vmatprep.subr.bf16.mxu0 0
        %926 = vmatpush1.bf16.msra.mxu0 0
        %927 = vmatprep.subr.bf16.mxu0 0
        %928 = vmatpush1.bf16.msra.mxu0 0
        %929 = vmatprep.subr.bf16.mxu0 0
        %930 = vmatpush1.bf16.msra.mxu0 0
        %931 = vmatprep.mubr.bf16.mxu0 0
        %932 = vmatmul.mubr.bf16.gmra.mrb[0].mxu0 %v897
        %v933 = vpop.f32.mrb[0].mxu0
        %v934 = vadd.f32 0.0, %v933
        %v935 = vpop.f32.mrb[0].mxu0
        %v936 = vpop.f32.mrb[0].mxu0
        %v937 = vadd.f32 0.0, %v936
        %v938 = vpop.f32.mrb[0].mxu0
        %939 = vdwg.mxu0
        %v940 = vld [vmem:[%s9] sm:$0xf]
        %v941 = vld [vmem:[%s9 + $0x4] sm:$0xf]
        %v942 = vld [vmem:[%s9 + $0x8] sm:$0xf]
        %v943 = vld [vmem:[%s9 + $0xc] sm:$0xf]
        %v948 = vunpack.c.l.b16 %v940
        %v949 = vunpack.c.l.b16 %v941
        %v950 = vunpack.c.l.b16 %v942
        %v951 = vunpack.c.l.b16 %v943
        %v952 = vpack.c.b16 %v949, %v948
        %v953 = vpack.c.b16 %v951, %v950
        %v957 = vsel %vm759, %v833, 0
        %v960 = vsel %vm759, %v834, 0
        %962 = vmatprep.subr.bf16.mxu0 0
        %963 = vmatpush1.bf16.msra.mxu0 %v952
        %964 = vmatprep.subr.bf16.mxu0 0
        %965 = vmatpush1.bf16.msra.mxu0 %v953
        %966 = vmatprep.subr.bf16.mxu0 0
        %967 = vmatpush1.bf16.msra.mxu0 0
        %968 = vmatprep.subr.bf16.mxu0 0
        %969 = vmatpush1.bf16.msra.mxu0 0
        %970 = vmatprep.subr.bf16.mxu0 0
        %971 = vmatpush1.bf16.msra.mxu0 0
        %972 = vmatprep.subr.bf16.mxu0 0
        %973 = vmatpush1.bf16.msra.mxu0 0
        %974 = vmatprep.subr.bf16.mxu0 0
        %975 = vmatpush1.bf16.msra.mxu0 0
        %976 = vmatprep.subr.bf16.mxu0 0
        %977 = vmatpush1.bf16.msra.mxu0 0
        %978 = vmatprep.subr.bf16.mxu0 0
        %979 = vmatpush1.bf16.msra.mxu0 0
        %980 = vmatprep.subr.bf16.mxu0 0
        %981 = vmatpush1.bf16.msra.mxu0 0
        %982 = vmatprep.subr.bf16.mxu0 0
        %983 = vmatpush1.bf16.msra.mxu0 0
        %984 = vmatprep.subr.bf16.mxu0 0
        %985 = vmatpush1.bf16.msra.mxu0 0
        %986 = vmatprep.subr.bf16.mxu0 0
        %987 = vmatpush1.bf16.msra.mxu0 0
        %988 = vmatprep.subr.bf16.mxu0 0
        %989 = vmatpush1.bf16.msra.mxu0 0
        %990 = vmatprep.subr.bf16.mxu0 0
        %991 = vmatpush1.bf16.msra.mxu0 0
        %992 = vmatprep.subr.bf16.mxu0 0
        %993 = vmatpush1.bf16.msra.mxu0 0
        %994 = vmatprep.mubr.bf16.mxu0 0
        %995 = vmatmul.mubr.bf16.gmra.mrb[0].mxu0 %v957
        %v996 = vpop.f32.mrb[0].mxu0
        %v997 = vadd.f32 0.0, %v996
        %v998 = vpop.f32.mrb[0].mxu0
        %v999 = vpop.f32.mrb[0].mxu0
        %v1000 = vadd.f32 0.0, %v999
        %v1001 = vpop.f32.mrb[0].mxu0
        %1002 = vmatprep.mubr.bf16.mxu0 0
        %1003 = vmatmul.mubr.bf16.gmra.mrb[0].mxu0 %v960
        %v1004 = vpop.f32.mrb[0].mxu0
        %v1005 = vadd.f32 0.0, %v1004
        %v1006 = vpop.f32.mrb[0].mxu0
        %v1007 = vpop.f32.mrb[0].mxu0
        %v1008 = vadd.f32 0.0, %v1007
        %v1009 = vpop.f32.mrb[0].mxu0
        %1010 = vdwg.mxu0
        %v1011 = vld [vmem:[#allocation11] sm:$0x1]
        %v1012 = vld [vmem:[#allocation12] sm:$0x1]
        %v1013 = vld [vmem:[%s744] sm:$0xff]
        %v1014 = vld [vmem:[%s638] sm:$0x3]
        %1016 = vrot.lane.b32.xlu0 %v934, 96
        %v1017 = vpop.permute.xlu0 %1016
        %1020 = vset.pattern.permute.xlu0 0
        %1021 = vperm.xlu0 %1020, %v1013
        %v1022 = vpop.permute.xlu0 %1021
        %v1024 = vlaneseq
        %v1025 = vshrl.u32 %v1024, 7
        %v1026 = vsub.s32 0, %v1025
        %v1027 = vrot.slane %v1014, %v1026
        %v1028 = vmul.f32 %v1022, %v1027
        %v1029 = vsub.f32 1.0, %v1028
        %v1030 = vmul.f32 %v1029, -1e+30
        %v1031 = vmul.f32 %v934, %v934
        %vm1032 = vcmask 64512
        %v1033 = vsel %vm1032, %v1031, 0.0
        %1034 = vadd.xlane.f32.xlu0 %v1033
        %v1035 = vpop.xlane.xlu0 %1034
        %v1036 = vrsqrt.pop %v1035
        %v1037 = vmul.f32 %v1035, %v1036
        %vm1038 = vcmp.eq.f32.partialorder %v1035, inf
        %v1039 = vsel %vm1038, %v1035, %v1037
        %vm1040 = vcmp.eq.f32.partialorder %v1035, 0.0
        %v1041 = vand.u32 %v1035, 2147483648
        %v1042 = vsel %vm1040, %v1041, %v1039
        %v1043 = vmul.f32 %v1042, 0.35355338
        %v1044 = vmax.f32 %v1043, 1e-08
        %v1045 = vrcp.pop %v1044
        %v1046 = vmul.f32 %v934, %v1045
        %v1048 = vlaneseq
        %v1049 = vshrl.u32 %v1048, 7
        %v1050 = vsub.s32 0, %v1049
        %v1051 = vrot.slane %v1011, %v1050
        %v1053 = vmul.f32 %v1046, %v1051
        %v1054 = vmul.f32 %v997, %v997
        %v1055 = vmul.f32 %v1000, %v1000
        %v1056 = vmul.f32 %v1017, %v1017
        %v1057 = vsel %vm1032, %v1054, 0.0
        %1058 = vadd.xlane.f32.xlu0 %v1057
        %v1059 = vpop.xlane.xlu0 %1058
        %v1060 = vsel %vm1032, %v1055, 0.0
        %1061 = vadd.xlane.f32.xlu0 %v1060
        %v1062 = vpop.xlane.xlu0 %1061
        %v1063 = vsel %vm1032, %v1056, 0.0
        %1064 = vadd.xlane.f32.xlu0 %v1063
        %v1065 = vpop.xlane.xlu0 %1064
        %v1066 = vrsqrt.pop %v1059
        %v1067 = vmul.f32 %v1059, %v1066
        %vm1068 = vcmp.eq.f32.partialorder %v1059, inf
        %v1069 = vsel %vm1068, %v1059, %v1067
        %vm1070 = vcmp.eq.f32.partialorder %v1059, 0.0
        %v1071 = vand.u32 %v1059, 2147483648
        %v1072 = vsel %vm1070, %v1071, %v1069
        %v1073 = vrsqrt.pop %v1062
        %v1074 = vmul.f32 %v1062, %v1073
        %vm1075 = vcmp.eq.f32.partialorder %v1062, inf
        %v1076 = vsel %vm1075, %v1062, %v1074
        %vm1077 = vcmp.eq.f32.partialorder %v1062, 0.0
        %v1078 = vand.u32 %v1062, 2147483648
        %v1079 = vsel %vm1077, %v1078, %v1076
        %v1080 = vrsqrt.pop %v1065
        %v1081 = vmul.f32 %v1065, %v1080
        %vm1082 = vcmp.eq.f32.partialorder %v1065, inf
        %v1083 = vsel %vm1082, %v1065, %v1081
        %vm1084 = vcmp.eq.f32.partialorder %v1065, 0.0
        %v1085 = vand.u32 %v1065, 2147483648
        %v1086 = vsel %vm1084, %v1085, %v1083
        %v1087 = vmul.f32 %v1072, 0.35355338
        %v1088 = vmul.f32 %v1079, 0.35355338
        %v1089 = vmul.f32 %v1086, 0.35355338
        %v1090 = vmax.f32 %v1087, 1e-08
        %v1091 = vmax.f32 %v1088, 1e-08
        %v1092 = vmax.f32 %v1089, 1e-08
        %v1093 = vrcp.pop %v1090
        %v1094 = vmul.f32 %v997, %v1093
        %v1095 = vrcp.pop %v1091
        %v1096 = vmul.f32 %v1000, %v1095
        %v1097 = vrcp.pop %v1092
        %v1098 = vmul.f32 %v1017, %v1097
        %v1100 = vlaneseq
        %v1101 = vshrl.u32 %v1100, 7
        %v1102 = vsub.s32 0, %v1101
        %v1103 = vrot.slane %v1012, %v1102
        %v1105 = vmul.f32 %v1094, %v1103
        %v1106 = vmul.f32 %v1096, %v1103
        %v1107 = vmul.f32 %v1098, %v1103
        %v1109 = vsel %vm1032, %v1053, 0
        %v1112 = vsel %vm1032, %v1105, 0
        %v1115 = vsel %vm1032, %v1106, 0
        %v1118 = vsel %vm1032, %v1107, 0
        %1120 = vmatprep.subr.mxu0 0.0
        %1121 = vmatpush1.xpose.msra.mxu0 %v1112
        %1122 = vmatprep.subr.mxu0 0.0
        %1123 = vmatpush1.xpose.msra.mxu0 %v1115
        %1124 = vmatprep.subr.mxu0 0.0
        %1125 = vmatpush1.xpose.msra.mxu0 %v1118
        %1126 = vmatprep.subr.mxu0 0.0
        %1127 = vmatpush1.xpose.msra.mxu0 0.0
        %1128 = vmatprep.subr.mxu0 0.0
        %1129 = vmatpush1.xpose.msra.mxu0 0.0
        %1130 = vmatprep.subr.mxu0 0.0
        %1131 = vmatpush1.xpose.msra.mxu0 0.0
        %1132 = vmatprep.subr.mxu0 0.0
        %1133 = vmatpush1.xpose.msra.mxu0 0.0
        %1134 = vmatprep.subr.mxu0 0.0
        %1135 = vmatpush1.xpose.msra.mxu0 0.0
        %1136 = vmatprep.subr.mxu0 0.0
        %1137 = vmatpush1.xpose.msra.mxu0 0.0
        %1138 = vmatprep.subr.mxu0 0.0
        %1139 = vmatpush1.xpose.msra.mxu0 0.0
        %1140 = vmatprep.subr.mxu0 0.0
        %1141 = vmatpush1.xpose.msra.mxu0 0.0
        %1142 = vmatprep.subr.mxu0 0.0
        %1143 = vmatpush1.xpose.msra.mxu0 0.0
        %1144 = vmatprep.subr.mxu0 0.0
        %1145 = vmatpush1.xpose.msra.mxu0 0.0
        %1146 = vmatprep.subr.mxu0 0.0
        %1147 = vmatpush1.xpose.msra.mxu0 0.0
        %1148 = vmatprep.subr.mxu0 0.0
        %1149 = vmatpush1.xpose.msra.mxu0 0.0
        %1150 = vmatprep.subr.mxu0 0.0
        %1151 = vmatpush1.xpose.msra.mxu0 0.0
        %1152 = vmatprep.subr.mxu0 0.0
        %1153 = vmatpush1.xpose.msra.mxu0 0.0
        %1154 = vmatprep.subr.mxu0 0.0
        %1155 = vmatpush1.xpose.msra.mxu0 0.0
        %1156 = vmatprep.subr.mxu0 0.0
        %1157 = vmatpush1.xpose.msra.mxu0 0.0
        %1158 = vmatprep.subr.mxu0 0.0
        %1159 = vmatpush1.xpose.msra.mxu0 0.0
        %1160 = vmatprep.subr.mxu0 0.0
        %1161 = vmatpush1.xpose.msra.mxu0 0.0
        %1162 = vmatprep.subr.mxu0 0.0
        %1163 = vmatpush1.xpose.msra.mxu0 0.0
        %1164 = vmatprep.subr.mxu0 0.0
        %1165 = vmatpush1.xpose.msra.mxu0 0.0
        %1166 = vmatprep.subr.mxu0 0.0
        %1167 = vmatpush1.xpose.msra.mxu0 0.0
        %1168 = vmatprep.subr.mxu0 0.0
        %1169 = vmatpush1.xpose.msra.mxu0 0.0
        %1170 = vmatprep.subr.mxu0 0.0
        %1171 = vmatpush1.xpose.msra.mxu0 0.0
        %1172 = vmatprep.subr.mxu0 0.0
        %1173 = vmatpush1.xpose.msra.mxu0 0.0
        %1174 = vmatprep.subr.mxu0 0.0
        %1175 = vmatpush1.xpose.msra.mxu0 0.0
        %1176 = vmatprep.subr.mxu0 0.0
        %1177 = vmatpush1.xpose.msra.mxu0 0.0
        %1178 = vmatprep.subr.mxu0 0.0
        %1179 = vmatpush1.xpose.msra.mxu0 0.0
        %1180 = vmatprep.subr.mxu0 0.0
        %1181 = vmatpush1.xpose.msra.mxu0 0.0
        %1182 = vmatprep.subr.mxu0 0.0
        %1183 = vmatpush1.xpose.msra.mxu0 0.0
        %1184 = vmatprep.mubr.f32.mxu0 0.0
        %1185 = vmatmul.mubr.f32.gmra.mrb[0].mxu0 %v1109
        %v1186 = vpop.f32.mrb[0].mxu0
        %v1187 = vadd.f32 %v1030, %v1186
        %v1188 = vpop.f32.mrb[0].mxu0
        %1189 = vdwg.mxu0
        %vm1190 = vcmask 195584
        %v1191 = vsel %vm1190, %v1187, -inf
        %1192 = vmax.xlane.f32.xlu0 %v1191
        %v1193 = vpop.xlane.xlu0 %1192
        %v1194 = vsub.f32 %v1187, %v1193
        %v1195 = vmul.f32 %v1194, 1.442695
        %v1196 = vpow.pop %v1195
        %v1197 = vsel %vm1190, %v1196, 0.0
        %1198 = vadd.xlane.f32.xlu0 %v1197
        %v1199 = vpop.xlane.xlu0 %1198
        %v1200 = vrcp.pop %v1199
        %v1201 = vmul.f32 %v1196, %v1200
        %v1202 = vpack.c.bf16 %v1201, %v1201
        %v1203 = vpack.c.bf16 %v1000, %v997
        %v1204 = vpack.c.bf16 %v1017, %v1017
        %1207 = vrot.lane.b32.xlu0 %v1203, 96
        %v1208 = vpop.permute.xlu0 %1207
        %1209 = vrot.lane.b32.xlu0 %v1204, 96
        %v1210 = vpop.permute.xlu0 %1209
        %v1213 = vsel %vm1190, %v1202, 0
        %vm1215 = vcmask 1043456
        %v1217 = vsel %vm1215, %v1210, 0
        %1219 = vmatprep.subr.bf16.mxu0 0
        %1220 = vmatpush1.bf16.msra.mxu0 %v1208
        %1221 = vmatprep.subr.bf16.mxu0 0
        %1222 = vmatpush1.bf16.msra.mxu0 %v1217
        %1223 = vmatprep.subr.bf16.mxu0 0
        %1224 = vmatpush1.bf16.msra.mxu0 0
        %1225 = vmatprep.subr.bf16.mxu0 0
        %1226 = vmatpush1.bf16.msra.mxu0 0
        %1227 = vmatprep.subr.bf16.mxu0 0
        %1228 = vmatpush1.bf16.msra.mxu0 0
        %1229 = vmatprep.subr.bf16.mxu0 0
        %1230 = vmatpush1.bf16.msra.mxu0 0
        %1231 = vmatprep.subr.bf16.mxu0 0
        %1232 = vmatpush1.bf16.msra.mxu0 0
        %1233 = vmatprep.subr.bf16.mxu0 0
        %1234 = vmatpush1.bf16.msra.mxu0 0
        %1235 = vmatprep.subr.bf16.mxu0 0
        %1236 = vmatpush1.bf16.msra.mxu0 0
        %1237 = vmatprep.subr.bf16.mxu0 0
        %1238 = vmatpush1.bf16.msra.mxu0 0
        %1239 = vmatprep.subr.bf16.mxu0 0
        %1240 = vmatpush1.bf16.msra.mxu0 0
        %1241 = vmatprep.subr.bf16.mxu0 0
        %1242 = vmatpush1.bf16.msra.mxu0 0
        %1243 = vmatprep.subr.bf16.mxu0 0
        %1244 = vmatpush1.bf16.msra.mxu0 0
        %1245 = vmatprep.subr.bf16.mxu0 0
        %1246 = vmatpush1.bf16.msra.mxu0 0
        %1247 = vmatprep.subr.bf16.mxu0 0
        %1248 = vmatpush1.bf16.msra.mxu0 0
        %1249 = vmatprep.subr.bf16.mxu0 0
        %1250 = vmatpush1.bf16.msra.mxu0 0
        %1251 = vmatprep.mubr.bf16.mxu0 0
        %1252 = vmatmul.mubr.bf16.gmra.mrb[0].mxu0 %v1213
        %v1253 = vpop.f32.mrb[0].mxu0
        %v1254 = vadd.f32 0.0, %v1253
        %v1255 = vpop.f32.mrb[0].mxu0
        %v1256 = vpop.f32.mrb[0].mxu0
        %v1257 = vpop.f32.mrb[0].mxu0
        %1258 = vdwg.mxu0
        %1259 = vst.msk [vmem:[#allocation2] sm:$0xff] %vm1032, %v1254
        %1261 = vrot.lane.b32.xlu0 %v1031, 120
        %v1262 = vpop.permute.xlu0 %1261
        %v1264 = vsel %vm1032, %v1262, 0.0
        %1265 = vadd.xlane.f32.xlu0 %v1264
        %v1266 = vpop.xlane.xlu0 %1265
        %v1267 = vrsqrt.pop %v1266
        %v1268 = vmul.f32 %v1266, %v1267
        %vm1269 = vcmp.eq.f32.partialorder %v1266, inf
        %v1270 = vsel %vm1269, %v1266, %v1268
        %vm1271 = vcmp.eq.f32.partialorder %v1266, 0.0
        %v1272 = vand.u32 %v1266, 2147483648
        %v1273 = vsel %vm1271, %v1272, %v1270
        %v1274 = vmul.f32 %v1273, 0.35355338
        %v1275 = vmax.f32 %v1274, 1e-08
        %v1276 = vrcp.pop %v1275
        %v1277 = vmul.f32 %v934, %v1276
        %1278 = vrot.lane.b32.xlu0 %v1051, 8
        %v1279 = vpop.permute.xlu0 %1278
        %v1281 = vmul.f32 %v1277, %v1279
        %1285 = vrot.lane.b32.xlu0 %v1054, 120
        %v1286 = vpop.permute.xlu0 %1285
        %1287 = vrot.lane.b32.xlu0 %v1055, 120
        %v1288 = vpop.permute.xlu0 %1287
        %1289 = vrot.lane.b32.xlu0 %v1056, 120
        %v1290 = vpop.permute.xlu0 %1289
        %v1294 = vsel %vm1032, %v1286, 0.0
        %1295 = vadd.xlane.f32.xlu0 %v1294
        %v1296 = vpop.xlane.xlu0 %1295
        %v1297 = vsel %vm1032, %v1288, 0.0
        %1298 = vadd.xlane.f32.xlu0 %v1297
        %v1299 = vpop.xlane.xlu0 %1298
        %v1300 = vsel %vm1032, %v1290, 0.0
        %1301 = vadd.xlane.f32.xlu0 %v1300
        %v1302 = vpop.xlane.xlu0 %1301
        %v1303 = vrsqrt.pop %v1296
        %v1304 = vmul.f32 %v1296, %v1303
        %vm1305 = vcmp.eq.f32.partialorder %v1296, inf
        %v1306 = vsel %vm1305, %v1296, %v1304
        %vm1307 = vcmp.eq.f32.partialorder %v1296, 0.0
        %v1308 = vand.u32 %v1296, 2147483648
        %v1309 = vsel %vm1307, %v1308, %v1306
        %v1310 = vrsqrt.pop %v1299
        %v1311 = vmul.f32 %v1299, %v1310
        %vm1312 = vcmp.eq.f32.partialorder %v1299, inf
        %v1313 = vsel %vm1312, %v1299, %v1311
        %vm1314 = vcmp.eq.f32.partialorder %v1299, 0.0
        %v1315 = vand.u32 %v1299, 2147483648
        %v1316 = vsel %vm1314, %v1315, %v1313
        %v1317 = vrsqrt.pop %v1302
        %v1318 = vmul.f32 %v1302, %v1317
        %vm1319 = vcmp.eq.f32.partialorder %v1302, inf
        %v1320 = vsel %vm1319, %v1302, %v1318
        %vm1321 = vcmp.eq.f32.partialorder %v1302, 0.0
        %v1322 = vand.u32 %v1302, 2147483648
        %v1323 = vsel %vm1321, %v1322, %v1320
        %v1324 = vmul.f32 %v1309, 0.35355338
        %v1325 = vmul.f32 %v1316, 0.35355338
        %v1326 = vmul.f32 %v1323, 0.35355338
        %v1327 = vmax.f32 %v1324, 1e-08
        %v1328 = vmax.f32 %v1325, 1e-08
        %v1329 = vmax.f32 %v1326, 1e-08
        %v1330 = vrcp.pop %v1327
        %v1331 = vmul.f32 %v997, %v1330
        %v1332 = vrcp.pop %v1328
        %v1333 = vmul.f32 %v1000, %v1332
        %v1334 = vrcp.pop %v1329
        %v1335 = vmul.f32 %v1017, %v1334
        %1336 = vrot.lane.b32.xlu0 %v1103, 8
        %v1337 = vpop.permute.xlu0 %1336
        %v1339 = vmul.f32 %v1331, %v1337
        %v1340 = vmul.f32 %v1333, %v1337
        %v1341 = vmul.f32 %v1335, %v1337
        %1343 = vrot.lane.b32.xlu0 %v1281, 120
        %v1344 = vpop.permute.xlu0 %1343
        %1348 = vrot.lane.b32.xlu0 %v1339, 120
        %v1349 = vpop.permute.xlu0 %1348
        %1350 = vrot.lane.b32.xlu0 %v1340, 120
        %v1351 = vpop.permute.xlu0 %1350
        %1352 = vrot.lane.b32.xlu0 %v1341, 120
        %v1353 = vpop.permute.xlu0 %1352
        %v1354 = vsel %vm1032, %v1344, 0
        %v1356 = vsel %vm1032, %v1349, 0
        %v1358 = vsel %vm1032, %v1351, 0
        %v1360 = vsel %vm1032, %v1353, 0
        %1362 = vmatprep.subr.mxu0 0.0
        %1363 = vmatpush1.xpose.msra.mxu0 %v1356
        %1364 = vmatprep.subr.mxu0 0.0
        %1365 = vmatpush1.xpose.msra.mxu0 %v1358
        %1366 = vmatprep.subr.mxu0 0.0
        %1367 = vmatpush1.xpose.msra.mxu0 %v1360
        %1368 = vmatprep.subr.mxu0 0.0
        %1369 = vmatpush1.xpose.msra.mxu0 0.0
        %1370 = vmatprep.subr.mxu0 0.0
        %1371 = vmatpush1.xpose.msra.mxu0 0.0
        %1372 = vmatprep.subr.mxu0 0.0
        %1373 = vmatpush1.xpose.msra.mxu0 0.0
        %1374 = vmatprep.subr.mxu0 0.0
        %1375 = vmatpush1.xpose.msra.mxu0 0.0
        %1376 = vmatprep.subr.mxu0 0.0
        %1377 = vmatpush1.xpose.msra.mxu0 0.0
        %1378 = vmatprep.subr.mxu0 0.0
        %1379 = vmatpush1.xpose.msra.mxu0 0.0
        %1380 = vmatprep.subr.mxu0 0.0
        %1381 = vmatpush1.xpose.msra.mxu0 0.0
        %1382 = vmatprep.subr.mxu0 0.0
        %1383 = vmatpush1.xpose.msra.mxu0 0.0
        %1384 = vmatprep.subr.mxu0 0.0
        %1385 = vmatpush1.xpose.msra.mxu0 0.0
        %1386 = vmatprep.subr.mxu0 0.0
        %1387 = vmatpush1.xpose.msra.mxu0 0.0
        %1388 = vmatprep.subr.mxu0 0.0
        %1389 = vmatpush1.xpose.msra.mxu0 0.0
        %1390 = vmatprep.subr.mxu0 0.0
        %1391 = vmatpush1.xpose.msra.mxu0 0.0
        %1392 = vmatprep.subr.mxu0 0.0
        %1393 = vmatpush1.xpose.msra.mxu0 0.0
        %1394 = vmatprep.subr.mxu0 0.0
        %1395 = vmatpush1.xpose.msra.mxu0 0.0
        %1396 = vmatprep.subr.mxu0 0.0
        %1397 = vmatpush1.xpose.msra.mxu0 0.0
        %1398 = vmatprep.subr.mxu0 0.0
        %1399 = vmatpush1.xpose.msra.mxu0 0.0
        %1400 = vmatprep.subr.mxu0 0.0
        %1401 = vmatpush1.xpose.msra.mxu0 0.0
        %1402 = vmatprep.subr.mxu0 0.0
        %1403 = vmatpush1.xpose.msra.mxu0 0.0
        %1404 = vmatprep.subr.mxu0 0.0
        %1405 = vmatpush1.xpose.msra.mxu0 0.0
        %1406 = vmatprep.subr.mxu0 0.0
        %1407 = vmatpush1.xpose.msra.mxu0 0.0
        %1408 = vmatprep.subr.mxu0 0.0
        %1409 = vmatpush1.xpose.msra.mxu0 0.0
        %1410 = vmatprep.subr.mxu0 0.0
        %1411 = vmatpush1.xpose.msra.mxu0 0.0
        %1412 = vmatprep.subr.mxu0 0.0
        %1413 = vmatpush1.xpose.msra.mxu0 0.0
        %1414 = vmatprep.subr.mxu0 0.0
        %1415 = vmatpush1.xpose.msra.mxu0 0.0
        %1416 = vmatprep.subr.mxu0 0.0
        %1417 = vmatpush1.xpose.msra.mxu0 0.0
        %1418 = vmatprep.subr.mxu0 0.0
        %1419 = vmatpush1.xpose.msra.mxu0 0.0
        %1420 = vmatprep.subr.mxu0 0.0
        %1421 = vmatpush1.xpose.msra.mxu0 0.0
        %1422 = vmatprep.subr.mxu0 0.0
        %1423 = vmatpush1.xpose.msra.mxu0 0.0
        %1424 = vmatprep.subr.mxu0 0.0
        %1425 = vmatpush1.xpose.msra.mxu0 0.0
        %1426 = vmatprep.mubr.f32.mxu0 0.0
        %1427 = vmatmul.mubr.f32.gmra.mrb[0].mxu0 %v1354
        %v1428 = vpop.f32.mrb[0].mxu0
        %v1429 = vadd.f32 %v1030, %v1428
        %v1430 = vpop.f32.mrb[0].mxu0
        %1431 = vdwg.mxu0
        %v1432 = vsel %vm1190, %v1429, -inf
        %1433 = vmax.xlane.f32.xlu0 %v1432
        %v1434 = vpop.xlane.xlu0 %1433
        %v1435 = vsub.f32 %v1429, %v1434
        %v1436 = vmul.f32 %v1435, 1.442695
        %v1437 = vpow.pop %v1436
        %v1438 = vsel %vm1190, %v1437, 0.0
        %1439 = vadd.xlane.f32.xlu0 %v1438
        %v1440 = vpop.xlane.xlu0 %1439
        %v1441 = vrcp.pop %v1440
        %v1442 = vmul.f32 %v1437, %v1441
        %v1443 = vpack.c.bf16 %v1442, %v1442
        %1444 = vrot.lane.b32.xlu0 %v1203, 88
        %v1445 = vpop.permute.xlu0 %1444
        %1446 = vrot.lane.b32.xlu0 %v1204, 88
        %v1447 = vpop.permute.xlu0 %1446
        %v1450 = vsel %vm1190, %v1443, 0
        %v1453 = vsel %vm1215, %v1447, 0
        %1455 = vmatprep.subr.bf16.mxu0 0
        %1456 = vmatpush1.bf16.msra.mxu0 %v1445
        %1457 = vmatprep.subr.bf16.mxu0 0
        %1458 = vmatpush1.bf16.msra.mxu0 %v1453
        %1459 = vmatprep.subr.bf16.mxu0 0
        %1460 = vmatpush1.bf16.msra.mxu0 0
        %1461 = vmatprep.subr.bf16.mxu0 0
        %1462 = vmatpush1.bf16.msra.mxu0 0
        %1463 = vmatprep.subr.bf16.mxu0 0
        %1464 = vmatpush1.bf16.msra.mxu0 0
        %1465 = vmatprep.subr.bf16.mxu0 0
        %1466 = vmatpush1.bf16.msra.mxu0 0
        %1467 = vmatprep.subr.bf16.mxu0 0
        %1468 = vmatpush1.bf16.msra.mxu0 0
        %1469 = vmatprep.subr.bf16.mxu0 0
        %1470 = vmatpush1.bf16.msra.mxu0 0
        %1471 = vmatprep.subr.bf16.mxu0 0
        %1472 = vmatpush1.bf16.msra.mxu0 0
        %1473 = vmatprep.subr.bf16.mxu0 0
        %1474 = vmatpush1.bf16.msra.mxu0 0
        %1475 = vmatprep.subr.bf16.mxu0 0
        %1476 = vmatpush1.bf16.msra.mxu0 0
        %1477 = vmatprep.subr.bf16.mxu0 0
        %1478 = vmatpush1.bf16.msra.mxu0 0
        %1479 = vmatprep.subr.bf16.mxu0 0
        %1480 = vmatpush1.bf16.msra.mxu0 0
        %1481 = vmatprep.subr.bf16.mxu0 0
        %1482 = vmatpush1.bf16.msra.mxu0 0
        %1483 = vmatprep.subr.bf16.mxu0 0
        %1484 = vmatpush1.bf16.msra.mxu0 0
        %1485 = vmatprep.subr.bf16.mxu0 0
        %1486 = vmatpush1.bf16.msra.mxu0 0
        %1487 = vmatprep.mubr.bf16.mxu0 0
        %1488 = vmatmul.mubr.bf16.gmra.mrb[0].mxu0 %v1450
        %v1489 = vpop.f32.mrb[0].mxu0
        %v1490 = vadd.f32 0.0, %v1489
        %v1491 = vpop.f32.mrb[0].mxu0
        %v1492 = vpop.f32.mrb[0].mxu0
        %v1493 = vpop.f32.mrb[0].mxu0
        %1494 = vdwg.mxu0
        %1496 = vrot.lane.b32.xlu0 %v1490, 8
        %v1497 = vpop.permute.xlu0 %1496
        %vm1499 = vcmask 130112
        %1500 = vst.msk [vmem:[#allocation2] sm:$0xff] %vm1499, %v1497
        %1501 = vrot.lane.b32.xlu0 %v1031, 112
        %v1502 = vpop.permute.xlu0 %1501
        %v1504 = vsel %vm1032, %v1502, 0.0
        %1505 = vadd.xlane.f32.xlu0 %v1504
        %v1506 = vpop.xlane.xlu0 %1505
        %v1507 = vrsqrt.pop %v1506
        %v1508 = vmul.f32 %v1506, %v1507
        %vm1509 = vcmp.eq.f32.partialorder %v1506, inf
        %v1510 = vsel %vm1509, %v1506, %v1508
        %vm1511 = vcmp.eq.f32.partialorder %v1506, 0.0
        %v1512 = vand.u32 %v1506, 2147483648
        %v1513 = vsel %vm1511, %v1512, %v1510
        %v1514 = vmul.f32 %v1513, 0.35355338
        %v1515 = vmax.f32 %v1514, 1e-08
        %v1516 = vrcp.pop %v1515
        %v1517 = vmul.f32 %v934, %v1516
        %1518 = vrot.lane.b32.xlu0 %v1051, 16
        %v1519 = vpop.permute.xlu0 %1518
        %v1521 = vmul.f32 %v1517, %v1519
        %1522 = vrot.lane.b32.xlu0 %v1054, 112
        %v1523 = vpop.permute.xlu0 %1522
        %1524 = vrot.lane.b32.xlu0 %v1055, 112
        %v1525 = vpop.permute.xlu0 %1524
        %1526 = vrot.lane.b32.xlu0 %v1056, 112
        %v1527 = vpop.permute.xlu0 %1526
        %v1531 = vsel %vm1032, %v1523, 0.0
        %1532 = vadd.xlane.f32.xlu0 %v1531
        %v1533 = vpop.xlane.xlu0 %1532
        %v1534 = vsel %vm1032, %v1525, 0.0
        %1535 = vadd.xlane.f32.xlu0 %v1534
        %v1536 = vpop.xlane.xlu0 %1535
        %v1537 = vsel %vm1032, %v1527, 0.0
        %1538 = vadd.xlane.f32.xlu0 %v1537
        %v1539 = vpop.xlane.xlu0 %1538
        %v1540 = vrsqrt.pop %v1533
        %v1541 = vmul.f32 %v1533, %v1540
        %vm1542 = vcmp.eq.f32.partialorder %v1533, inf
        %v1543 = vsel %vm1542, %v1533, %v1541
        %vm1544 = vcmp.eq.f32.partialorder %v1533, 0.0
        %v1545 = vand.u32 %v1533, 2147483648
        %v1546 = vsel %vm1544, %v1545, %v1543
        %v1547 = vrsqrt.pop %v1536
        %v1548 = vmul.f32 %v1536, %v1547
        %vm1549 = vcmp.eq.f32.partialorder %v1536, inf
        %v1550 = vsel %vm1549, %v1536, %v1548
        %vm1551 = vcmp.eq.f32.partialorder %v1536, 0.0
        %v1552 = vand.u32 %v1536, 2147483648
        %v1553 = vsel %vm1551, %v1552, %v1550
        %v1554 = vrsqrt.pop %v1539
        %v1555 = vmul.f32 %v1539, %v1554
        %vm1556 = vcmp.eq.f32.partialorder %v1539, inf
        %v1557 = vsel %vm1556, %v1539, %v1555
        %vm1558 = vcmp.eq.f32.partialorder %v1539, 0.0
        %v1559 = vand.u32 %v1539, 2147483648
        %v1560 = vsel %vm1558, %v1559, %v1557
        %v1561 = vmul.f32 %v1546, 0.35355338
        %v1562 = vmul.f32 %v1553, 0.35355338
        %v1563 = vmul.f32 %v1560, 0.35355338
        %v1564 = vmax.f32 %v1561, 1e-08
        %v1565 = vmax.f32 %v1562, 1e-08
        %v1566 = vmax.f32 %v1563, 1e-08
        %v1567 = vrcp.pop %v1564
        %v1568 = vmul.f32 %v997, %v1567
        %v1569 = vrcp.pop %v1565
        %v1570 = vmul.f32 %v1000, %v1569
        %v1571 = vrcp.pop %v1566
        %v1572 = vmul.f32 %v1017, %v1571
        %1573 = vrot.lane.b32.xlu0 %v1103, 16
        %v1574 = vpop.permute.xlu0 %1573
        %v1576 = vmul.f32 %v1568, %v1574
        %v1577 = vmul.f32 %v1570, %v1574
        %v1578 = vmul.f32 %v1572, %v1574
        %1580 = vrot.lane.b32.xlu0 %v1521, 112
        %v1581 = vpop.permute.xlu0 %1580
        %1585 = vrot.lane.b32.xlu0 %v1576, 112
        %v1586 = vpop.permute.xlu0 %1585
        %1587 = vrot.lane.b32.xlu0 %v1577, 112
        %v1588 = vpop.permute.xlu0 %1587
        %1589 = vrot.lane.b32.xlu0 %v1578, 112
        %v1590 = vpop.permute.xlu0 %1589
        %v1591 = vsel %vm1032, %v1581, 0
        %v1593 = vsel %vm1032, %v1586, 0
        %v1595 = vsel %vm1032, %v1588, 0
        %v1597 = vsel %vm1032, %v1590, 0
        %1599 = vmatprep.subr.mxu0 0.0
        %1600 = vmatpush1.xpose.msra.mxu0 %v1593
        %1601 = vmatprep.subr.mxu0 0.0
        %1602 = vmatpush1.xpose.msra.mxu0 %v1595
        %1603 = vmatprep.subr.mxu0 0.0
        %1604 = vmatpush1.xpose.msra.mxu0 %v1597
        %1605 = vmatprep.subr.mxu0 0.0
        %1606 = vmatpush1.xpose.msra.mxu0 0.0
        %1607 = vmatprep.subr.mxu0 0.0
        %1608 = vmatpush1.xpose.msra.mxu0 0.0
        %1609 = vmatprep.subr.mxu0 0.0
        %1610 = vmatpush1.xpose.msra.mxu0 0.0
        %1611 = vmatprep.subr.mxu0 0.0
        %1612 = vmatpush1.xpose.msra.mxu0 0.0
        %1613 = vmatprep.subr.mxu0 0.0
        %1614 = vmatpush1.xpose.msra.mxu0 0.0
        %1615 = vmatprep.subr.mxu0 0.0
        %1616 = vmatpush1.xpose.msra.mxu0 0.0
        %1617 = vmatprep.subr.mxu0 0.0
        %1618 = vmatpush1.xpose.msra.mxu0 0.0
        %1619 = vmatprep.subr.mxu0 0.0
        %1620 = vmatpush1.xpose.msra.mxu0 0.0
        %1621 = vmatprep.subr.mxu0 0.0
        %1622 = vmatpush1.xpose.msra.mxu0 0.0
        %1623 = vmatprep.subr.mxu0 0.0
        %1624 = vmatpush1.xpose.msra.mxu0 0.0
        %1625 = vmatprep.subr.mxu0 0.0
        %1626 = vmatpush1.xpose.msra.mxu0 0.0
        %1627 = vmatprep.subr.mxu0 0.0
        %1628 = vmatpush1.xpose.msra.mxu0 0.0
        %1629 = vmatprep.subr.mxu0 0.0
        %1630 = vmatpush1.xpose.msra.mxu0 0.0
        %1631 = vmatprep.subr.mxu0 0.0
        %1632 = vmatpush1.xpose.msra.mxu0 0.0
        %1633 = vmatprep.subr.mxu0 0.0
        %1634 = vmatpush1.xpose.msra.mxu0 0.0
        %1635 = vmatprep.subr.mxu0 0.0
        %1636 = vmatpush1.xpose.msra.mxu0 0.0
        %1637 = vmatprep.subr.mxu0 0.0
        %1638 = vmatpush1.xpose.msra.mxu0 0.0
        %1639 = vmatprep.subr.mxu0 0.0
        %1640 = vmatpush1.xpose.msra.mxu0 0.0
        %1641 = vmatprep.subr.mxu0 0.0
        %1642 = vmatpush1.xpose.msra.mxu0 0.0
        %1643 = vmatprep.subr.mxu0 0.0
        %1644 = vmatpush1.xpose.msra.mxu0 0.0
        %1645 = vmatprep.subr.mxu0 0.0
        %1646 = vmatpush1.xpose.msra.mxu0 0.0
        %1647 = vmatprep.subr.mxu0 0.0
        %1648 = vmatpush1.xpose.msra.mxu0 0.0
        %1649 = vmatprep.subr.mxu0 0.0
        %1650 = vmatpush1.xpose.msra.mxu0 0.0
        %1651 = vmatprep.subr.mxu0 0.0
        %1652 = vmatpush1.xpose.msra.mxu0 0.0
        %1653 = vmatprep.subr.mxu0 0.0
        %1654 = vmatpush1.xpose.msra.mxu0 0.0
        %1655 = vmatprep.subr.mxu0 0.0
        %1656 = vmatpush1.xpose.msra.mxu0 0.0
        %1657 = vmatprep.subr.mxu0 0.0
        %1658 = vmatpush1.xpose.msra.mxu0 0.0
        %1659 = vmatprep.subr.mxu0 0.0
        %1660 = vmatpush1.xpose.msra.mxu0 0.0
        %1661 = vmatprep.subr.mxu0 0.0
        %1662 = vmatpush1.xpose.msra.mxu0 0.0
        %1663 = vmatprep.mubr.f32.mxu0 0.0
        %1664 = vmatmul.mubr.f32.gmra.mrb[0].mxu0 %v1591
        %v1665 = vpop.f32.mrb[0].mxu0
        %v1666 = vadd.f32 %v1030, %v1665
        %v1667 = vpop.f32.mrb[0].mxu0
        %1668 = vdwg.mxu0
        %v1669 = vsel %vm1190, %v1666, -inf
        %1670 = vmax.xlane.f32.xlu0 %v1669
        %v1671 = vpop.xlane.xlu0 %1670
        %v1672 = vsub.f32 %v1666, %v1671
        %v1673 = vmul.f32 %v1672, 1.442695
        %v1674 = vpow.pop %v1673
        %v1675 = vsel %vm1190, %v1674, 0.0
        %1676 = vadd.xlane.f32.xlu0 %v1675
        %v1677 = vpop.xlane.xlu0 %1676
        %v1678 = vrcp.pop %v1677
        %v1679 = vmul.f32 %v1674, %v1678
        %v1680 = vpack.c.bf16 %v1679, %v1679
        %1681 = vrot.lane.b32.xlu0 %v1203, 80
        %v1682 = vpop.permute.xlu0 %1681
        %1683 = vrot.lane.b32.xlu0 %v1204, 80
        %v1684 = vpop.permute.xlu0 %1683
        %v1687 = vsel %vm1190, %v1680, 0
        %v1690 = vsel %vm1215, %v1684, 0
        %1692 = vmatprep.subr.bf16.mxu0 0
        %1693 = vmatpush1.bf16.msra.mxu0 %v1682
        %1694 = vmatprep.subr.bf16.mxu0 0
        %1695 = vmatpush1.bf16.msra.mxu0 %v1690
        %1696 = vmatprep.subr.bf16.mxu0 0
        %1697 = vmatpush1.bf16.msra.mxu0 0
        %1698 = vmatprep.subr.bf16.mxu0 0
        %1699 = vmatpush1.bf16.msra.mxu0 0
        %1700 = vmatprep.subr.bf16.mxu0 0
        %1701 = vmatpush1.bf16.msra.mxu0 0
        %1702 = vmatprep.subr.bf16.mxu0 0
        %1703 = vmatpush1.bf16.msra.mxu0 0
        %1704 = vmatprep.subr.bf16.mxu0 0
        %1705 = vmatpush1.bf16.msra.mxu0 0
        %1706 = vmatprep.subr.bf16.mxu0 0
        %1707 = vmatpush1.bf16.msra.mxu0 0
        %1708 = vmatprep.subr.bf16.mxu0 0
        %1709 = vmatpush1.bf16.msra.mxu0 0
        %1710 = vmatprep.subr.bf16.mxu0 0
        %1711 = vmatpush1.bf16.msra.mxu0 0
        %1712 = vmatprep.subr.bf16.mxu0 0
        %1713 = vmatpush1.bf16.msra.mxu0 0
        %1714 = vmatprep.subr.bf16.mxu0 0
        %1715 = vmatpush1.bf16.msra.mxu0 0
        %1716 = vmatprep.subr.bf16.mxu0 0
        %1717 = vmatpush1.bf16.msra.mxu0 0
        %1718 = vmatprep.subr.bf16.mxu0 0
        %1719 = vmatpush1.bf16.msra.mxu0 0
        %1720 = vmatprep.subr.bf16.mxu0 0
        %1721 = vmatpush1.bf16.msra.mxu0 0
        %1722 = vmatprep.subr.bf16.mxu0 0
        %1723 = vmatpush1.bf16.msra.mxu0 0
        %1724 = vmatprep.mubr.bf16.mxu0 0
        %1725 = vmatmul.mubr.bf16.gmra.mrb[0].mxu0 %v1687
        %v1726 = vpop.f32.mrb[0].mxu0
        %v1727 = vadd.f32 0.0, %v1726
        %v1728 = vpop.f32.mrb[0].mxu0
        %v1729 = vpop.f32.mrb[0].mxu0
        %v1730 = vpop.f32.mrb[0].mxu0
        %1731 = vdwg.mxu0
        %1733 = vrot.lane.b32.xlu0 %v1727, 16
        %v1734 = vpop.permute.xlu0 %1733
        %vm1736 = vcmask 195712
        %1737 = vst.msk [vmem:[#allocation2] sm:$0xff] %vm1736, %v1734
        %1738 = vrot.lane.b32.xlu0 %v1031, 104
        %v1739 = vpop.permute.xlu0 %1738
        %v1741 = vsel %vm1032, %v1739, 0.0
        %1742 = vadd.xlane.f32.xlu0 %v1741
        %v1743 = vpop.xlane.xlu0 %1742
        %v1744 = vrsqrt.pop %v1743
        %v1745 = vmul.f32 %v1743, %v1744
        %vm1746 = vcmp.eq.f32.partialorder %v1743, inf
        %v1747 = vsel %vm1746, %v1743, %v1745
        %vm1748 = vcmp.eq.f32.partialorder %v1743, 0.0
        %v1749 = vand.u32 %v1743, 2147483648
        %v1750 = vsel %vm1748, %v1749, %v1747
        %v1751 = vmul.f32 %v1750, 0.35355338
        %v1752 = vmax.f32 %v1751, 1e-08
        %v1753 = vrcp.pop %v1752
        %v1754 = vmul.f32 %v934, %v1753
        %1755 = vrot.lane.b32.xlu0 %v1051, 24
        %v1756 = vpop.permute.xlu0 %1755
        %v1758 = vmul.f32 %v1754, %v1756
        %1759 = vrot.lane.b32.xlu0 %v1054, 104
        %v1760 = vpop.permute.xlu0 %1759
        %1761 = vrot.lane.b32.xlu0 %v1055, 104
        %v1762 = vpop.permute.xlu0 %1761
        %1763 = vrot.lane.b32.xlu0 %v1056, 104
        %v1764 = vpop.permute.xlu0 %1763
        %v1768 = vsel %vm1032, %v1760, 0.0
        %1769 = vadd.xlane.f32.xlu0 %v1768
        %v1770 = vpop.xlane.xlu0 %1769
        %v1771 = vsel %vm1032, %v1762, 0.0
        %1772 = vadd.xlane.f32.xlu0 %v1771
        %v1773 = vpop.xlane.xlu0 %1772
        %v1774 = vsel %vm1032, %v1764, 0.0
        %1775 = vadd.xlane.f32.xlu0 %v1774
        %v1776 = vpop.xlane.xlu0 %1775
        %v1777 = vrsqrt.pop %v1770
        %v1778 = vmul.f32 %v1770, %v1777
        %vm1779 = vcmp.eq.f32.partialorder %v1770, inf
        %v1780 = vsel %vm1779, %v1770, %v1778
        %vm1781 = vcmp.eq.f32.partialorder %v1770, 0.0
        %v1782 = vand.u32 %v1770, 2147483648
        %v1783 = vsel %vm1781, %v1782, %v1780
        %v1784 = vrsqrt.pop %v1773
        %v1785 = vmul.f32 %v1773, %v1784
        %vm1786 = vcmp.eq.f32.partialorder %v1773, inf
        %v1787 = vsel %vm1786, %v1773, %v1785
        %vm1788 = vcmp.eq.f32.partialorder %v1773, 0.0
        %v1789 = vand.u32 %v1773, 2147483648
        %v1790 = vsel %vm1788, %v1789, %v1787
        %v1791 = vrsqrt.pop %v1776
        %v1792 = vmul.f32 %v1776, %v1791
        %vm1793 = vcmp.eq.f32.partialorder %v1776, inf
        %v1794 = vsel %vm1793, %v1776, %v1792
        %vm1795 = vcmp.eq.f32.partialorder %v1776, 0.0
        %v1796 = vand.u32 %v1776, 2147483648
        %v1797 = vsel %vm1795, %v1796, %v1794
        %v1798 = vmul.f32 %v1783, 0.35355338
        %v1799 = vmul.f32 %v1790, 0.35355338
        %v1800 = vmul.f32 %v1797, 0.35355338
        %v1801 = vmax.f32 %v1798, 1e-08
        %v1802 = vmax.f32 %v1799, 1e-08
        %v1803 = vmax.f32 %v1800, 1e-08
        %v1804 = vrcp.pop %v1801
        %v1805 = vmul.f32 %v997, %v1804
        %v1806 = vrcp.pop %v1802
        %v1807 = vmul.f32 %v1000, %v1806
        %v1808 = vrcp.pop %v1803
        %v1809 = vmul.f32 %v1017, %v1808
        %1810 = vrot.lane.b32.xlu0 %v1103, 24
        %v1811 = vpop.permute.xlu0 %1810
        %v1813 = vmul.f32 %v1805, %v1811
        %v1814 = vmul.f32 %v1807, %v1811
        %v1815 = vmul.f32 %v1809, %v1811
        %1817 = vrot.lane.b32.xlu0 %v1758, 104
        %v1818 = vpop.permute.xlu0 %1817
        %1822 = vrot.lane.b32.xlu0 %v1813, 104
        %v1823 = vpop.permute.xlu0 %1822
        %1824 = vrot.lane.b32.xlu0 %v1814, 104
        %v1825 = vpop.permute.xlu0 %1824
        %1826 = vrot.lane.b32.xlu0 %v1815, 104
        %v1827 = vpop.permute.xlu0 %1826
        %v1828 = vsel %vm1032, %v1818, 0
        %v1830 = vsel %vm1032, %v1823, 0
        %v1832 = vsel %vm1032, %v1825, 0
        %v1834 = vsel %vm1032, %v1827, 0
        %1836 = vmatprep.subr.mxu0 0.0
        %1837 = vmatpush1.xpose.msra.mxu0 %v1830
        %1838 = vmatprep.subr.mxu0 0.0
        %1839 = vmatpush1.xpose.msra.mxu0 %v1832
        %1840 = vmatprep.subr.mxu0 0.0
        %1841 = vmatpush1.xpose.msra.mxu0 %v1834
        %1842 = vmatprep.subr.mxu0 0.0
        %1843 = vmatpush1.xpose.msra.mxu0 0.0
        %1844 = vmatprep.subr.mxu0 0.0
        %1845 = vmatpush1.xpose.msra.mxu0 0.0
        %1846 = vmatprep.subr.mxu0 0.0
        %1847 = vmatpush1.xpose.msra.mxu0 0.0
        %1848 = vmatprep.subr.mxu0 0.0
        %1849 = vmatpush1.xpose.msra.mxu0 0.0
        %1850 = vmatprep.subr.mxu0 0.0
        %1851 = vmatpush1.xpose.msra.mxu0 0.0
        %1852 = vmatprep.subr.mxu0 0.0
        %1853 = vmatpush1.xpose.msra.mxu0 0.0
        %1854 = vmatprep.subr.mxu0 0.0
        %1855 = vmatpush1.xpose.msra.mxu0 0.0
        %1856 = vmatprep.subr.mxu0 0.0
        %1857 = vmatpush1.xpose.msra.mxu0 0.0
        %1858 = vmatprep.subr.mxu0 0.0
        %1859 = vmatpush1.xpose.msra.mxu0 0.0
        %1860 = vmatprep.subr.mxu0 0.0
        %1861 = vmatpush1.xpose.msra.mxu0 0.0
        %1862 = vmatprep.subr.mxu0 0.0
        %1863 = vmatpush1.xpose.msra.mxu0 0.0
        %1864 = vmatprep.subr.mxu0 0.0
        %1865 = vmatpush1.xpose.msra.mxu0 0.0
        %1866 = vmatprep.subr.mxu0 0.0
        %1867 = vmatpush1.xpose.msra.mxu0 0.0
        %1868 = vmatprep.subr.mxu0 0.0
        %1869 = vmatpush1.xpose.msra.mxu0 0.0
        %1870 = vmatprep.subr.mxu0 0.0
        %1871 = vmatpush1.xpose.msra.mxu0 0.0
        %1872 = vmatprep.subr.mxu0 0.0
        %1873 = vmatpush1.xpose.msra.mxu0 0.0
        %1874 = vmatprep.subr.mxu0 0.0
        %1875 = vmatpush1.xpose.msra.mxu0 0.0
        %1876 = vmatprep.subr.mxu0 0.0
        %1877 = vmatpush1.xpose.msra.mxu0 0.0
        %1878 = vmatprep.subr.mxu0 0.0
        %1879 = vmatpush1.xpose.msra.mxu0 0.0
        %1880 = vmatprep.subr.mxu0 0.0
        %1881 = vmatpush1.xpose.msra.mxu0 0.0
        %1882 = vmatprep.subr.mxu0 0.0
        %1883 = vmatpush1.xpose.msra.mxu0 0.0
        %1884 = vmatprep.subr.mxu0 0.0
        %1885 = vmatpush1.xpose.msra.mxu0 0.0
        %1886 = vmatprep.subr.mxu0 0.0
        %1887 = vmatpush1.xpose.msra.mxu0 0.0
        %1888 = vmatprep.subr.mxu0 0.0
        %1889 = vmatpush1.xpose.msra.mxu0 0.0
        %1890 = vmatprep.subr.mxu0 0.0
        %1891 = vmatpush1.xpose.msra.mxu0 0.0
        %1892 = vmatprep.subr.mxu0 0.0
        %1893 = vmatpush1.xpose.msra.mxu0 0.0
        %1894 = vmatprep.subr.mxu0 0.0
        %1895 = vmatpush1.xpose.msra.mxu0 0.0
        %1896 = vmatprep.subr.mxu0 0.0
        %1897 = vmatpush1.xpose.msra.mxu0 0.0
        %1898 = vmatprep.subr.mxu0 0.0
        %1899 = vmatpush1.xpose.msra.mxu0 0.0
        %1900 = vmatprep.mubr.f32.mxu0 0.0
        %1901 = vmatmul.mubr.f32.gmra.mrb[0].mxu0 %v1828
        %v1902 = vpop.f32.mrb[0].mxu0
        %v1903 = vadd.f32 %v1030, %v1902
        %v1904 = vpop.f32.mrb[0].mxu0
        %1905 = vdwg.mxu0
        %v1906 = vsel %vm1190, %v1903, -inf
        %1907 = vmax.xlane.f32.xlu0 %v1906
        %v1908 = vpop.xlane.xlu0 %1907
        %v1909 = vsub.f32 %v1903, %v1908
        %v1910 = vmul.f32 %v1909, 1.442695
        %v1911 = vpow.pop %v1910
        %v1912 = vsel %vm1190, %v1911, 0.0
        %1913 = vadd.xlane.f32.xlu0 %v1912
        %v1914 = vpop.xlane.xlu0 %1913
        %v1915 = vrcp.pop %v1914
        %v1916 = vmul.f32 %v1911, %v1915
        %v1917 = vpack.c.bf16 %v1916, %v1916
        %1918 = vrot.lane.b32.xlu0 %v1203, 72
        %v1919 = vpop.permute.xlu0 %1918
        %1920 = vrot.lane.b32.xlu0 %v1204, 72
        %v1921 = vpop.permute.xlu0 %1920
        %v1924 = vsel %vm1190, %v1917, 0
        %v1927 = vsel %vm1215, %v1921, 0
        %1929 = vmatprep.subr.bf16.mxu0 0
        %1930 = vmatpush1.bf16.msra.mxu0 %v1919
        %1931 = vmatprep.subr.bf16.mxu0 0
        %1932 = vmatpush1.bf16.msra.mxu0 %v1927
        %1933 = vmatprep.subr.bf16.mxu0 0
        %1934 = vmatpush1.bf16.msra.mxu0 0
        %1935 = vmatprep.subr.bf16.mxu0 0
        %1936 = vmatpush1.bf16.msra.mxu0 0
        %1937 = vmatprep.subr.bf16.mxu0 0
        %1938 = vmatpush1.bf16.msra.mxu0 0
        %1939 = vmatprep.subr.bf16.mxu0 0
        %1940 = vmatpush1.bf16.msra.mxu0 0
        %1941 = vmatprep.subr.bf16.mxu0 0
        %1942 = vmatpush1.bf16.msra.mxu0 0
        %1943 = vmatprep.subr.bf16.mxu0 0
        %1944 = vmatpush1.bf16.msra.mxu0 0
        %1945 = vmatprep.subr.bf16.mxu0 0
        %1946 = vmatpush1.bf16.msra.mxu0 0
        %1947 = vmatprep.subr.bf16.mxu0 0
        %1948 = vmatpush1.bf16.msra.mxu0 0
        %1949 = vmatprep.subr.bf16.mxu0 0
        %1950 = vmatpush1.bf16.msra.mxu0 0
        %1951 = vmatprep.subr.bf16.mxu0 0
        %1952 = vmatpush1.bf16.msra.mxu0 0
        %1953 = vmatprep.subr.bf16.mxu0 0
        %1954 = vmatpush1.bf16.msra.mxu0 0
        %1955 = vmatprep.subr.bf16.mxu0 0
        %1956 = vmatpush1.bf16.msra.mxu0 0
        %1957 = vmatprep.subr.bf16.mxu0 0
        %1958 = vmatpush1.bf16.msra.mxu0 0
        %1959 = vmatprep.subr.bf16.mxu0 0
        %1960 = vmatpush1.bf16.msra.mxu0 0
        %1961 = vmatprep.mubr.bf16.mxu0 0
        %1962 = vmatmul.mubr.bf16.gmra.mrb[0].mxu0 %v1924
        %v1963 = vpop.f32.mrb[0].mxu0
        %v1964 = vadd.f32 0.0, %v1963
        %v1965 = vpop.f32.mrb[0].mxu0
        %v1966 = vpop.f32.mrb[0].mxu0
        %v1967 = vpop.f32.mrb[0].mxu0
        %1968 = vdwg.mxu0
        %1970 = vrot.lane.b32.xlu0 %v1964, 24
        %v1971 = vpop.permute.xlu0 %1970
        %vm1973 = vcmask 261312
        %1974 = vst.msk [vmem:[#allocation2] sm:$0xff] %vm1973, %v1971
        %1976 = vrot.lane.b32.xlu0 %v937, 96
        %v1977 = vpop.permute.xlu0 %1976
        %1979 = vset.pattern.permute.xlu0 1
        %1980 = vperm.xlu0 %1979, %v1013
        %v1981 = vpop.permute.xlu0 %1980
        %v1983 = vlaneseq
        %v1984 = vshrl.u32 %v1983, 7
        %v1985 = vsub.s32 1, %v1984
        %v1986 = vrot.slane %v1014, %v1985
        %v1987 = vmul.f32 %v1981, %v1986
        %v1988 = vsub.f32 1.0, %v1987
        %v1989 = vmul.f32 %v1988, -1e+30
        %v1990 = vmul.f32 %v937, %v937
        %v1991 = vsel %vm1032, %v1990, 0.0
        %1992 = vadd.xlane.f32.xlu0 %v1991
        %v1993 = vpop.xlane.xlu0 %1992
        %v1994 = vrsqrt.pop %v1993
        %v1995 = vmul.f32 %v1993, %v1994
        %vm1996 = vcmp.eq.f32.partialorder %v1993, inf
        %v1997 = vsel %vm1996, %v1993, %v1995
        %vm1998 = vcmp.eq.f32.partialorder %v1993, 0.0
        %v1999 = vand.u32 %v1993, 2147483648
        %v2000 = vsel %vm1998, %v1999, %v1997
        %v2001 = vmul.f32 %v2000, 0.35355338
        %v2002 = vmax.f32 %v2001, 1e-08
        %v2003 = vrcp.pop %v2002
        %v2004 = vmul.f32 %v937, %v2003
        %v2005 = vmul.f32 %v2004, %v1051
        %v2006 = vmul.f32 %v1005, %v1005
        %v2007 = vmul.f32 %v1008, %v1008
        %v2008 = vmul.f32 %v1977, %v1977
        %v2009 = vsel %vm1032, %v2006, 0.0
        %2010 = vadd.xlane.f32.xlu0 %v2009
        %v2011 = vpop.xlane.xlu0 %2010
        %v2012 = vsel %vm1032, %v2007, 0.0
        %2013 = vadd.xlane.f32.xlu0 %v2012
        %v2014 = vpop.xlane.xlu0 %2013
        %v2015 = vsel %vm1032, %v2008, 0.0
        %2016 = vadd.xlane.f32.xlu0 %v2015
        %v2017 = vpop.xlane.xlu0 %2016
        %v2018 = vrsqrt.pop %v2011
        %v2019 = vmul.f32 %v2011, %v2018
        %vm2020 = vcmp.eq.f32.partialorder %v2011, inf
        %v2021 = vsel %vm2020, %v2011, %v2019
        %vm2022 = vcmp.eq.f32.partialorder %v2011, 0.0
        %v2023 = vand.u32 %v2011, 2147483648
        %v2024 = vsel %vm2022, %v2023, %v2021
        %v2025 = vrsqrt.pop %v2014
        %v2026 = vmul.f32 %v2014, %v2025
        %vm2027 = vcmp.eq.f32.partialorder %v2014, inf
        %v2028 = vsel %vm2027, %v2014, %v2026
        %vm2029 = vcmp.eq.f32.partialorder %v2014, 0.0
        %v2030 = vand.u32 %v2014, 2147483648
        %v2031 = vsel %vm2029, %v2030, %v2028
        %v2032 = vrsqrt.pop %v2017
        %v2033 = vmul.f32 %v2017, %v2032
        %vm2034 = vcmp.eq.f32.partialorder %v2017, inf
        %v2035 = vsel %vm2034, %v2017, %v2033
        %vm2036 = vcmp.eq.f32.partialorder %v2017, 0.0
        %v2037 = vand.u32 %v2017, 2147483648
        %v2038 = vsel %vm2036, %v2037, %v2035
        %v2039 = vmul.f32 %v2024, 0.35355338
        %v2040 = vmul.f32 %v2031, 0.35355338
        %v2041 = vmul.f32 %v2038, 0.35355338
        %v2042 = vmax.f32 %v2039, 1e-08
        %v2043 = vmax.f32 %v2040, 1e-08
        %v2044 = vmax.f32 %v2041, 1e-08
        %v2045 = vrcp.pop %v2042
        %v2046 = vmul.f32 %v1005, %v2045
        %v2047 = vrcp.pop %v2043
        %v2048 = vmul.f32 %v1008, %v2047
        %v2049 = vrcp.pop %v2044
        %v2050 = vmul.f32 %v1977, %v2049
        %v2051 = vmul.f32 %v2046, %v1103
        %v2052 = vmul.f32 %v2048, %v1103
        %v2053 = vmul.f32 %v2050, %v1103
        %v2055 = vsel %vm1032, %v2005, 0
        %v2058 = vsel %vm1032, %v2051, 0
        %v2061 = vsel %vm1032, %v2052, 0
        %v2064 = vsel %vm1032, %v2053, 0
        %2066 = vmatprep.subr.mxu0 0.0
        %2067 = vmatpush1.xpose.msra.mxu0 %v2058
        %2068 = vmatprep.subr.mxu0 0.0
        %2069 = vmatpush1.xpose.msra.mxu0 %v2061
        %2070 = vmatprep.subr.mxu0 0.0
        %2071 = vmatpush1.xpose.msra.mxu0 %v2064
        %2072 = vmatprep.subr.mxu0 0.0
        %2073 = vmatpush1.xpose.msra.mxu0 0.0
        %2074 = vmatprep.subr.mxu0 0.0
        %2075 = vmatpush1.xpose.msra.mxu0 0.0
        %2076 = vmatprep.subr.mxu0 0.0
        %2077 = vmatpush1.xpose.msra.mxu0 0.0
        %2078 = vmatprep.subr.mxu0 0.0
        %2079 = vmatpush1.xpose.msra.mxu0 0.0
        %2080 = vmatprep.subr.mxu0 0.0
        %2081 = vmatpush1.xpose.msra.mxu0 0.0
        %2082 = vmatprep.subr.mxu0 0.0
        %2083 = vmatpush1.xpose.msra.mxu0 0.0
        %2084 = vmatprep.subr.mxu0 0.0
        %2085 = vmatpush1.xpose.msra.mxu0 0.0
        %2086 = vmatprep.subr.mxu0 0.0
        %2087 = vmatpush1.xpose.msra.mxu0 0.0
        %2088 = vmatprep.subr.mxu0 0.0
        %2089 = vmatpush1.xpose.msra.mxu0 0.0
        %2090 = vmatprep.subr.mxu0 0.0
        %2091 = vmatpush1.xpose.msra.mxu0 0.0
        %2092 = vmatprep.subr.mxu0 0.0
        %2093 = vmatpush1.xpose.msra.mxu0 0.0
        %2094 = vmatprep.subr.mxu0 0.0
        %2095 = vmatpush1.xpose.msra.mxu0 0.0
        %2096 = vmatprep.subr.mxu0 0.0
        %2097 = vmatpush1.xpose.msra.mxu0 0.0
        %2098 = vmatprep.subr.mxu0 0.0
        %2099 = vmatpush1.xpose.msra.mxu0 0.0
        %2100 = vmatprep.subr.mxu0 0.0
        %2101 = vmatpush1.xpose.msra.mxu0 0.0
        %2102 = vmatprep.subr.mxu0 0.0
        %2103 = vmatpush1.xpose.msra.mxu0 0.0
        %2104 = vmatprep.subr.mxu0 0.0
        %2105 = vmatpush1.xpose.msra.mxu0 0.0
        %2106 = vmatprep.subr.mxu0 0.0
        %2107 = vmatpush1.xpose.msra.mxu0 0.0
        %2108 = vmatprep.subr.mxu0 0.0
        %2109 = vmatpush1.xpose.msra.mxu0 0.0
        %2110 = vmatprep.subr.mxu0 0.0
        %2111 = vmatpush1.xpose.msra.mxu0 0.0
        %2112 = vmatprep.subr.mxu0 0.0
        %2113 = vmatpush1.xpose.msra.mxu0 0.0
        %2114 = vmatprep.subr.mxu0 0.0
        %2115 = vmatpush1.xpose.msra.mxu0 0.0
        %2116 = vmatprep.subr.mxu0 0.0
        %2117 = vmatpush1.xpose.msra.mxu0 0.0
        %2118 = vmatprep.subr.mxu0 0.0
        %2119 = vmatpush1.xpose.msra.mxu0 0.0
        %2120 = vmatprep.subr.mxu0 0.0
        %2121 = vmatpush1.xpose.msra.mxu0 0.0
        %2122 = vmatprep.subr.mxu0 0.0
        %2123 = vmatpush1.xpose.msra.mxu0 0.0
        %2124 = vmatprep.subr.mxu0 0.0
        %2125 = vmatpush1.xpose.msra.mxu0 0.0
        %2126 = vmatprep.subr.mxu0 0.0
        %2127 = vmatpush1.xpose.msra.mxu0 0.0
        %2128 = vmatprep.subr.mxu0 0.0
        %2129 = vmatpush1.xpose.msra.mxu0 0.0
        %2130 = vmatprep.mubr.f32.mxu0 0.0
        %2131 = vmatmul.mubr.f32.gmra.mrb[0].mxu0 %v2055
        %v2132 = vpop.f32.mrb[0].mxu0
        %v2133 = vadd.f32 %v1989, %v2132
        %v2134 = vpop.f32.mrb[0].mxu0
        %2135 = vdwg.mxu0
        %v2136 = vsel %vm1190, %v2133, -inf
        %2137 = vmax.xlane.f32.xlu0 %v2136
        %v2138 = vpop.xlane.xlu0 %2137
        %v2139 = vsub.f32 %v2133, %v2138
        %v2140 = vmul.f32 %v2139, 1.442695
        %v2141 = vpow.pop %v2140
        %v2142 = vsel %vm1190, %v2141, 0.0
        %2143 = vadd.xlane.f32.xlu0 %v2142
        %v2144 = vpop.xlane.xlu0 %2143
        %v2145 = vrcp.pop %v2144
        %v2146 = vmul.f32 %v2141, %v2145
        %v2147 = vpack.c.bf16 %v2146, %v2146
        %v2148 = vpack.c.bf16 %v1008, %v1005
        %v2149 = vpack.c.bf16 %v1977, %v1977
        %2152 = vrot.lane.b32.xlu0 %v2148, 96
        %v2153 = vpop.permute.xlu0 %2152
        %2154 = vrot.lane.b32.xlu0 %v2149, 96
        %v2155 = vpop.permute.xlu0 %2154
        %v2158 = vsel %vm1190, %v2147, 0
        %v2161 = vsel %vm1215, %v2155, 0
        %2163 = vmatprep.subr.bf16.mxu0 0
        %2164 = vmatpush1.bf16.msra.mxu0 %v2153
        %2165 = vmatprep.subr.bf16.mxu0 0
        %2166 = vmatpush1.bf16.msra.mxu0 %v2161
        %2167 = vmatprep.subr.bf16.mxu0 0
        %2168 = vmatpush1.bf16.msra.mxu0 0
        %2169 = vmatprep.subr.bf16.mxu0 0
        %2170 = vmatpush1.bf16.msra.mxu0 0
        %2171 = vmatprep.subr.bf16.mxu0 0
        %2172 = vmatpush1.bf16.msra.mxu0 0
        %2173 = vmatprep.subr.bf16.mxu0 0
        %2174 = vmatpush1.bf16.msra.mxu0 0
        %2175 = vmatprep.subr.bf16.mxu0 0
        %2176 = vmatpush1.bf16.msra.mxu0 0
        %2177 = vmatprep.subr.bf16.mxu0 0
        %2178 = vmatpush1.bf16.msra.mxu0 0
        %2179 = vmatprep.subr.bf16.mxu0 0
        %2180 = vmatpush1.bf16.msra.mxu0 0
        %2181 = vmatprep.subr.bf16.mxu0 0
        %2182 = vmatpush1.bf16.msra.mxu0 0
        %2183 = vmatprep.subr.bf16.mxu0 0
        %2184 = vmatpush1.bf16.msra.mxu0 0
        %2185 = vmatprep.subr.bf16.mxu0 0
        %2186 = vmatpush1.bf16.msra.mxu0 0
        %2187 = vmatprep.subr.bf16.mxu0 0
        %2188 = vmatpush1.bf16.msra.mxu0 0
        %2189 = vmatprep.subr.bf16.mxu0 0
        %2190 = vmatpush1.bf16.msra.mxu0 0
        %2191 = vmatprep.subr.bf16.mxu0 0
        %2192 = vmatpush1.bf16.msra.mxu0 0
        %2193 = vmatprep.subr.bf16.mxu0 0
        %2194 = vmatpush1.bf16.msra.mxu0 0
        %2195 = vmatprep.mubr.bf16.mxu0 0
        %2196 = vmatmul.mubr.bf16.gmra.mrb[0].mxu0 %v2158
        %v2197 = vpop.f32.mrb[0].mxu0
        %v2198 = vadd.f32 0.0, %v2197
        %v2199 = vpop.f32.mrb[0].mxu0
        %v2200 = vpop.f32.mrb[0].mxu0
        %v2201 = vpop.f32.mrb[0].mxu0
        %2202 = vdwg.mxu0
        %2203 = vst.msk [vmem:[#allocation2 + $0x8] sm:$0xff] %vm1032, %v2198
        %2205 = vrot.lane.b32.xlu0 %v1990, 120
        %v2206 = vpop.permute.xlu0 %2205
        %v2208 = vsel %vm1032, %v2206, 0.0
        %2209 = vadd.xlane.f32.xlu0 %v2208
        %v2210 = vpop.xlane.xlu0 %2209
        %v2211 = vrsqrt.pop %v2210
        %v2212 = vmul.f32 %v2210, %v2211
        %vm2213 = vcmp.eq.f32.partialorder %v2210, inf
        %v2214 = vsel %vm2213, %v2210, %v2212
        %vm2215 = vcmp.eq.f32.partialorder %v2210, 0.0
        %v2216 = vand.u32 %v2210, 2147483648
        %v2217 = vsel %vm2215, %v2216, %v2214
        %v2218 = vmul.f32 %v2217, 0.35355338
        %v2219 = vmax.f32 %v2218, 1e-08
        %v2220 = vrcp.pop %v2219
        %v2221 = vmul.f32 %v937, %v2220
        %v2222 = vmul.f32 %v2221, %v1279
        %2226 = vrot.lane.b32.xlu0 %v2006, 120
        %v2227 = vpop.permute.xlu0 %2226
        %2228 = vrot.lane.b32.xlu0 %v2007, 120
        %v2229 = vpop.permute.xlu0 %2228
        %2230 = vrot.lane.b32.xlu0 %v2008, 120
        %v2231 = vpop.permute.xlu0 %2230
        %v2235 = vsel %vm1032, %v2227, 0.0
        %2236 = vadd.xlane.f32.xlu0 %v2235
        %v2237 = vpop.xlane.xlu0 %2236
        %v2238 = vsel %vm1032, %v2229, 0.0
        %2239 = vadd.xlane.f32.xlu0 %v2238
        %v2240 = vpop.xlane.xlu0 %2239
        %v2241 = vsel %vm1032, %v2231, 0.0
        %2242 = vadd.xlane.f32.xlu0 %v2241
        %v2243 = vpop.xlane.xlu0 %2242
        %v2244 = vrsqrt.pop %v2237
        %v2245 = vmul.f32 %v2237, %v2244
        %vm2246 = vcmp.eq.f32.partialorder %v2237, inf
        %v2247 = vsel %vm2246, %v2237, %v2245
        %vm2248 = vcmp.eq.f32.partialorder %v2237, 0.0
        %v2249 = vand.u32 %v2237, 2147483648
        %v2250 = vsel %vm2248, %v2249, %v2247
        %v2251 = vrsqrt.pop %v2240
        %v2252 = vmul.f32 %v2240, %v2251
        %vm2253 = vcmp.eq.f32.partialorder %v2240, inf
        %v2254 = vsel %vm2253, %v2240, %v2252
        %vm2255 = vcmp.eq.f32.partialorder %v2240, 0.0
        %v2256 = vand.u32 %v2240, 2147483648
        %v2257 = vsel %vm2255, %v2256, %v2254
        %v2258 = vrsqrt.pop %v2243
        %v2259 = vmul.f32 %v2243, %v2258
        %vm2260 = vcmp.eq.f32.partialorder %v2243, inf
        %v2261 = vsel %vm2260, %v2243, %v2259
        %vm2262 = vcmp.eq.f32.partialorder %v2243, 0.0
        %v2263 = vand.u32 %v2243, 2147483648
        %v2264 = vsel %vm2262, %v2263, %v2261
        %v2265 = vmul.f32 %v2250, 0.35355338
        %v2266 = vmul.f32 %v2257, 0.35355338
        %v2267 = vmul.f32 %v2264, 0.35355338
        %v2268 = vmax.f32 %v2265, 1e-08
        %v2269 = vmax.f32 %v2266, 1e-08
        %v2270 = vmax.f32 %v2267, 1e-08
        %v2271 = vrcp.pop %v2268
        %v2272 = vmul.f32 %v1005, %v2271
        %v2273 = vrcp.pop %v2269
        %v2274 = vmul.f32 %v1008, %v2273
        %v2275 = vrcp.pop %v2270
        %v2276 = vmul.f32 %v1977, %v2275
        %v2277 = vmul.f32 %v2272, %v1337
        %v2278 = vmul.f32 %v2274, %v1337
        %v2279 = vmul.f32 %v2276, %v1337
        %2281 = vrot.lane.b32.xlu0 %v2222, 120
        %v2282 = vpop.permute.xlu0 %2281
        %2286 = vrot.lane.b32.xlu0 %v2277, 120
        %v2287 = vpop.permute.xlu0 %2286
        %2288 = vrot.lane.b32.xlu0 %v2278, 120
        %v2289 = vpop.permute.xlu0 %2288
        %2290 = vrot.lane.b32.xlu0 %v2279, 120
        %v2291 = vpop.permute.xlu0 %2290
        %v2292 = vsel %vm1032, %v2282, 0
        %v2294 = vsel %vm1032, %v2287, 0
        %v2296 = vsel %vm1032, %v2289, 0
        %v2298 = vsel %vm1032, %v2291, 0
        %2300 = vmatprep.subr.mxu0 0.0
        %2301 = vmatpush1.xpose.msra.mxu0 %v2294
        %2302 = vmatprep.subr.mxu0 0.0
        %2303 = vmatpush1.xpose.msra.mxu0 %v2296
        %2304 = vmatprep.subr.mxu0 0.0
        %2305 = vmatpush1.xpose.msra.mxu0 %v2298
        %2306 = vmatprep.subr.mxu0 0.0
        %2307 = vmatpush1.xpose.msra.mxu0 0.0
        %2308 = vmatprep.subr.mxu0 0.0
        %2309 = vmatpush1.xpose.msra.mxu0 0.0
        %2310 = vmatprep.subr.mxu0 0.0
        %2311 = vmatpush1.xpose.msra.mxu0 0.0
        %2312 = vmatprep.subr.mxu0 0.0
        %2313 = vmatpush1.xpose.msra.mxu0 0.0
        %2314 = vmatprep.subr.mxu0 0.0
        %2315 = vmatpush1.xpose.msra.mxu0 0.0
        %2316 = vmatprep.subr.mxu0 0.0
        %2317 = vmatpush1.xpose.msra.mxu0 0.0
        %2318 = vmatprep.subr.mxu0 0.0
        %2319 = vmatpush1.xpose.msra.mxu0 0.0
        %2320 = vmatprep.subr.mxu0 0.0
        %2321 = vmatpush1.xpose.msra.mxu0 0.0
        %2322 = vmatprep.subr.mxu0 0.0
        %2323 = vmatpush1.xpose.msra.mxu0 0.0
        %2324 = vmatprep.subr.mxu0 0.0
        %2325 = vmatpush1.xpose.msra.mxu0 0.0
        %2326 = vmatprep.subr.mxu0 0.0
        %2327 = vmatpush1.xpose.msra.mxu0 0.0
        %2328 = vmatprep.subr.mxu0 0.0
        %2329 = vmatpush1.xpose.msra.mxu0 0.0
        %2330 = vmatprep.subr.mxu0 0.0
        %2331 = vmatpush1.xpose.msra.mxu0 0.0
        %2332 = vmatprep.subr.mxu0 0.0
        %2333 = vmatpush1.xpose.msra.mxu0 0.0
        %2334 = vmatprep.subr.mxu0 0.0
        %2335 = vmatpush1.xpose.msra.mxu0 0.0
        %2336 = vmatprep.subr.mxu0 0.0
        %2337 = vmatpush1.xpose.msra.mxu0 0.0
        %2338 = vmatprep.subr.mxu0 0.0
        %2339 = vmatpush1.xpose.msra.mxu0 0.0
        %2340 = vmatprep.subr.mxu0 0.0
        %2341 = vmatpush1.xpose.msra.mxu0 0.0
        %2342 = vmatprep.subr.mxu0 0.0
        %2343 = vmatpush1.xpose.msra.mxu0 0.0
        %2344 = vmatprep.subr.mxu0 0.0
        %2345 = vmatpush1.xpose.msra.mxu0 0.0
        %2346 = vmatprep.subr.mxu0 0.0
        %2347 = vmatpush1.xpose.msra.mxu0 0.0
        %2348 = vmatprep.subr.mxu0 0.0
        %2349 = vmatpush1.xpose.msra.mxu0 0.0
        %2350 = vmatprep.subr.mxu0 0.0
        %2351 = vmatpush1.xpose.msra.mxu0 0.0
        %2352 = vmatprep.subr.mxu0 0.0
        %2353 = vmatpush1.xpose.msra.mxu0 0.0
        %2354 = vmatprep.subr.mxu0 0.0
        %2355 = vmatpush1.xpose.msra.mxu0 0.0
        %2356 = vmatprep.subr.mxu0 0.0
        %2357 = vmatpush1.xpose.msra.mxu0 0.0
        %2358 = vmatprep.subr.mxu0 0.0
        %2359 = vmatpush1.xpose.msra.mxu0 0.0
        %2360 = vmatprep.subr.mxu0 0.0
        %2361 = vmatpush1.xpose.msra.mxu0 0.0
        %2362 = vmatprep.subr.mxu0 0.0
        %2363 = vmatpush1.xpose.msra.mxu0 0.0
        %2364 = vmatprep.mubr.f32.mxu0 0.0
        %2365 = vmatmul.mubr.f32.gmra.mrb[0].mxu0 %v2292
        %v2366 = vpop.f32.mrb[0].mxu0
        %v2367 = vadd.f32 %v1989, %v2366
        %v2368 = vpop.f32.mrb[0].mxu0
        %2369 = vdwg.mxu0
        %v2370 = vsel %vm1190, %v2367, -inf
        %2371 = vmax.xlane.f32.xlu0 %v2370
        %v2372 = vpop.xlane.xlu0 %2371
        %v2373 = vsub.f32 %v2367, %v2372
        %v2374 = vmul.f32 %v2373, 1.442695
        %v2375 = vpow.pop %v2374
        %v2376 = vsel %vm1190, %v2375, 0.0
        %2377 = vadd.xlane.f32.xlu0 %v2376
        %v2378 = vpop.xlane.xlu0 %2377
        %v2379 = vrcp.pop %v2378
        %v2380 = vmul.f32 %v2375, %v2379
        %v2381 = vpack.c.bf16 %v2380, %v2380
        %2382 = vrot.lane.b32.xlu0 %v2148, 88
        %v2383 = vpop.permute.xlu0 %2382
        %2384 = vrot.lane.b32.xlu0 %v2149, 88
        %v2385 = vpop.permute.xlu0 %2384
        %v2388 = vsel %vm1190, %v2381, 0
        %v2391 = vsel %vm1215, %v2385, 0
        %2393 = vmatprep.subr.bf16.mxu0 0
        %2394 = vmatpush1.bf16.msra.mxu0 %v2383
        %2395 = vmatprep.subr.bf16.mxu0 0
        %2396 = vmatpush1.bf16.msra.mxu0 %v2391
        %2397 = vmatprep.subr.bf16.mxu0 0
        %2398 = vmatpush1.bf16.msra.mxu0 0
        %2399 = vmatprep.subr.bf16.mxu0 0
        %2400 = vmatpush1.bf16.msra.mxu0 0
        %2401 = vmatprep.subr.bf16.mxu0 0
        %2402 = vmatpush1.bf16.msra.mxu0 0
        %2403 = vmatprep.subr.bf16.mxu0 0
        %2404 = vmatpush1.bf16.msra.mxu0 0
        %2405 = vmatprep.subr.bf16.mxu0 0
        %2406 = vmatpush1.bf16.msra.mxu0 0
        %2407 = vmatprep.subr.bf16.mxu0 0
        %2408 = vmatpush1.bf16.msra.mxu0 0
        %2409 = vmatprep.subr.bf16.mxu0 0
        %2410 = vmatpush1.bf16.msra.mxu0 0
        %2411 = vmatprep.subr.bf16.mxu0 0
        %2412 = vmatpush1.bf16.msra.mxu0 0
        %2413 = vmatprep.subr.bf16.mxu0 0
        %2414 = vmatpush1.bf16.msra.mxu0 0
        %2415 = vmatprep.subr.bf16.mxu0 0
        %2416 = vmatpush1.bf16.msra.mxu0 0
        %2417 = vmatprep.subr.bf16.mxu0 0
        %2418 = vmatpush1.bf16.msra.mxu0 0
        %2419 = vmatprep.subr.bf16.mxu0 0
        %2420 = vmatpush1.bf16.msra.mxu0 0
        %2421 = vmatprep.subr.bf16.mxu0 0
        %2422 = vmatpush1.bf16.msra.mxu0 0
        %2423 = vmatprep.subr.bf16.mxu0 0
        %2424 = vmatpush1.bf16.msra.mxu0 0
        %2425 = vmatprep.mubr.bf16.mxu0 0
        %2426 = vmatmul.mubr.bf16.gmra.mrb[0].mxu0 %v2388
        %v2427 = vpop.f32.mrb[0].mxu0
        %v2428 = vadd.f32 0.0, %v2427
        %v2429 = vpop.f32.mrb[0].mxu0
        %v2430 = vpop.f32.mrb[0].mxu0
        %v2431 = vpop.f32.mrb[0].mxu0
        %2432 = vdwg.mxu0
        %2434 = vrot.lane.b32.xlu0 %v2428, 8
        %v2435 = vpop.permute.xlu0 %2434
        %2437 = vst.msk [vmem:[#allocation2 + $0x8] sm:$0xff] %vm1499, %v2435
        %2438 = vrot.lane.b32.xlu0 %v1990, 112
        %v2439 = vpop.permute.xlu0 %2438
        %v2441 = vsel %vm1032, %v2439, 0.0
        %2442 = vadd.xlane.f32.xlu0 %v2441
        %v2443 = vpop.xlane.xlu0 %2442
        %v2444 = vrsqrt.pop %v2443
        %v2445 = vmul.f32 %v2443, %v2444
        %vm2446 = vcmp.eq.f32.partialorder %v2443, inf
        %v2447 = vsel %vm2446, %v2443, %v2445
        %vm2448 = vcmp.eq.f32.partialorder %v2443, 0.0
        %v2449 = vand.u32 %v2443, 2147483648
        %v2450 = vsel %vm2448, %v2449, %v2447
        %v2451 = vmul.f32 %v2450, 0.35355338
        %v2452 = vmax.f32 %v2451, 1e-08
        %v2453 = vrcp.pop %v2452
        %v2454 = vmul.f32 %v937, %v2453
        %v2455 = vmul.f32 %v2454, %v1519
        %2456 = vrot.lane.b32.xlu0 %v2006, 112
        %v2457 = vpop.permute.xlu0 %2456
        %2458 = vrot.lane.b32.xlu0 %v2007, 112
        %v2459 = vpop.permute.xlu0 %2458
        %2460 = vrot.lane.b32.xlu0 %v2008, 112
        %v2461 = vpop.permute.xlu0 %2460
        %v2465 = vsel %vm1032, %v2457, 0.0
        %2466 = vadd.xlane.f32.xlu0 %v2465
        %v2467 = vpop.xlane.xlu0 %2466
        %v2468 = vsel %vm1032, %v2459, 0.0
        %2469 = vadd.xlane.f32.xlu0 %v2468
        %v2470 = vpop.xlane.xlu0 %2469
        %v2471 = vsel %vm1032, %v2461, 0.0
        %2472 = vadd.xlane.f32.xlu0 %v2471
        %v2473 = vpop.xlane.xlu0 %2472
        %v2474 = vrsqrt.pop %v2467
        %v2475 = vmul.f32 %v2467, %v2474
        %vm2476 = vcmp.eq.f32.partialorder %v2467, inf
        %v2477 = vsel %vm2476, %v2467, %v2475
        %vm2478 = vcmp.eq.f32.partialorder %v2467, 0.0
        %v2479 = vand.u32 %v2467, 2147483648
        %v2480 = vsel %vm2478, %v2479, %v2477
        %v2481 = vrsqrt.pop %v2470
        %v2482 = vmul.f32 %v2470, %v2481
        %vm2483 = vcmp.eq.f32.partialorder %v2470, inf
        %v2484 = vsel %vm2483, %v2470, %v2482
        %vm2485 = vcmp.eq.f32.partialorder %v2470, 0.0
        %v2486 = vand.u32 %v2470, 2147483648
        %v2487 = vsel %vm2485, %v2486, %v2484
        %v2488 = vrsqrt.pop %v2473
        %v2489 = vmul.f32 %v2473, %v2488
        %vm2490 = vcmp.eq.f32.partialorder %v2473, inf
        %v2491 = vsel %vm2490, %v2473, %v2489
        %vm2492 = vcmp.eq.f32.partialorder %v2473, 0.0
        %v2493 = vand.u32 %v2473, 2147483648
        %v2494 = vsel %vm2492, %v2493, %v2491
        %v2495 = vmul.f32 %v2480, 0.35355338
        %v2496 = vmul.f32 %v2487, 0.35355338
        %v2497 = vmul.f32 %v2494, 0.35355338
        %v2498 = vmax.f32 %v2495, 1e-08
        %v2499 = vmax.f32 %v2496, 1e-08
        %v2500 = vmax.f32 %v2497, 1e-08
        %v2501 = vrcp.pop %v2498
        %v2502 = vmul.f32 %v1005, %v2501
        %v2503 = vrcp.pop %v2499
        %v2504 = vmul.f32 %v1008, %v2503
        %v2505 = vrcp.pop %v2500
        %v2506 = vmul.f32 %v1977, %v2505
        %v2507 = vmul.f32 %v2502, %v1574
        %v2508 = vmul.f32 %v2504, %v1574
        %v2509 = vmul.f32 %v2506, %v1574
        %2511 = vrot.lane.b32.xlu0 %v2455, 112
        %v2512 = vpop.permute.xlu0 %2511
        %2516 = vrot.lane.b32.xlu0 %v2507, 112
        %v2517 = vpop.permute.xlu0 %2516
        %2518 = vrot.lane.b32.xlu0 %v2508, 112
        %v2519 = vpop.permute.xlu0 %2518
        %2520 = vrot.lane.b32.xlu0 %v2509, 112
        %v2521 = vpop.permute.xlu0 %2520
        %v2522 = vsel %vm1032, %v2512, 0
        %v2524 = vsel %vm1032, %v2517, 0
        %v2526 = vsel %vm1032, %v2519, 0
        %v2528 = vsel %vm1032, %v2521, 0
        %2530 = vmatprep.subr.mxu0 0.0
        %2531 = vmatpush1.xpose.msra.mxu0 %v2524
        %2532 = vmatprep.subr.mxu0 0.0
        %2533 = vmatpush1.xpose.msra.mxu0 %v2526
        %2534 = vmatprep.subr.mxu0 0.0
        %2535 = vmatpush1.xpose.msra.mxu0 %v2528
        %2536 = vmatprep.subr.mxu0 0.0
        %2537 = vmatpush1.xpose.msra.mxu0 0.0
        %2538 = vmatprep.subr.mxu0 0.0
        %2539 = vmatpush1.xpose.msra.mxu0 0.0
        %2540 = vmatprep.subr.mxu0 0.0
        %2541 = vmatpush1.xpose.msra.mxu0 0.0
        %2542 = vmatprep.subr.mxu0 0.0
        %2543 = vmatpush1.xpose.msra.mxu0 0.0
        %2544 = vmatprep.subr.mxu0 0.0
        %2545 = vmatpush1.xpose.msra.mxu0 0.0
        %2546 = vmatprep.subr.mxu0 0.0
        %2547 = vmatpush1.xpose.msra.mxu0 0.0
        %2548 = vmatprep.subr.mxu0 0.0
        %2549 = vmatpush1.xpose.msra.mxu0 0.0
        %2550 = vmatprep.subr.mxu0 0.0
        %2551 = vmatpush1.xpose.msra.mxu0 0.0
        %2552 = vmatprep.subr.mxu0 0.0
        %2553 = vmatpush1.xpose.msra.mxu0 0.0
        %2554 = vmatprep.subr.mxu0 0.0
        %2555 = vmatpush1.xpose.msra.mxu0 0.0
        %2556 = vmatprep.subr.mxu0 0.0
        %2557 = vmatpush1.xpose.msra.mxu0 0.0
        %2558 = vmatprep.subr.mxu0 0.0
        %2559 = vmatpush1.xpose.msra.mxu0 0.0
        %2560 = vmatprep.subr.mxu0 0.0
        %2561 = vmatpush1.xpose.msra.mxu0 0.0
        %2562 = vmatprep.subr.mxu0 0.0
        %2563 = vmatpush1.xpose.msra.mxu0 0.0
        %2564 = vmatprep.subr.mxu0 0.0
        %2565 = vmatpush1.xpose.msra.mxu0 0.0
        %2566 = vmatprep.subr.mxu0 0.0
        %2567 = vmatpush1.xpose.msra.mxu0 0.0
        %2568 = vmatprep.subr.mxu0 0.0
        %2569 = vmatpush1.xpose.msra.mxu0 0.0
        %2570 = vmatprep.subr.mxu0 0.0
        %2571 = vmatpush1.xpose.msra.mxu0 0.0
        %2572 = vmatprep.subr.mxu0 0.0
        %2573 = vmatpush1.xpose.msra.mxu0 0.0
        %2574 = vmatprep.subr.mxu0 0.0
        %2575 = vmatpush1.xpose.msra.mxu0 0.0
        %2576 = vmatprep.subr.mxu0 0.0
        %2577 = vmatpush1.xpose.msra.mxu0 0.0
        %2578 = vmatprep.subr.mxu0 0.0
        %2579 = vmatpush1.xpose.msra.mxu0 0.0
        %2580 = vmatprep.subr.mxu0 0.0
        %2581 = vmatpush1.xpose.msra.mxu0 0.0
        %2582 = vmatprep.subr.mxu0 0.0
        %2583 = vmatpush1.xpose.msra.mxu0 0.0
        %2584 = vmatprep.subr.mxu0 0.0
        %2585 = vmatpush1.xpose.msra.mxu0 0.0
        %2586 = vmatprep.subr.mxu0 0.0
        %2587 = vmatpush1.xpose.msra.mxu0 0.0
        %2588 = vmatprep.subr.mxu0 0.0
        %2589 = vmatpush1.xpose.msra.mxu0 0.0
        %2590 = vmatprep.subr.mxu0 0.0
        %2591 = vmatpush1.xpose.msra.mxu0 0.0
        %2592 = vmatprep.subr.mxu0 0.0
        %2593 = vmatpush1.xpose.msra.mxu0 0.0
        %2594 = vmatprep.mubr.f32.mxu0 0.0
        %2595 = vmatmul.mubr.f32.gmra.mrb[0].mxu0 %v2522
        %v2596 = vpop.f32.mrb[0].mxu0
        %v2597 = vadd.f32 %v1989, %v2596
        %v2598 = vpop.f32.mrb[0].mxu0
        %2599 = vdwg.mxu0
        %v2600 = vsel %vm1190, %v2597, -inf
        %2601 = vmax.xlane.f32.xlu0 %v2600
        %v2602 = vpop.xlane.xlu0 %2601
        %v2603 = vsub.f32 %v2597, %v2602
        %v2604 = vmul.f32 %v2603, 1.442695
        %v2605 = vpow.pop %v2604
        %v2606 = vsel %vm1190, %v2605, 0.0
        %2607 = vadd.xlane.f32.xlu0 %v2606
        %v2608 = vpop.xlane.xlu0 %2607
        %v2609 = vrcp.pop %v2608
        %v2610 = vmul.f32 %v2605, %v2609
        %v2611 = vpack.c.bf16 %v2610, %v2610
        %2612 = vrot.lane.b32.xlu0 %v2148, 80
        %v2613 = vpop.permute.xlu0 %2612
        %2614 = vrot.lane.b32.xlu0 %v2149, 80
        %v2615 = vpop.permute.xlu0 %2614
        %v2618 = vsel %vm1190, %v2611, 0
        %v2621 = vsel %vm1215, %v2615, 0
        %2623 = vmatprep.subr.bf16.mxu0 0
        %2624 = vmatpush1.bf16.msra.mxu0 %v2613
        %2625 = vmatprep.subr.bf16.mxu0 0
        %2626 = vmatpush1.bf16.msra.mxu0 %v2621
        %2627 = vmatprep.subr.bf16.mxu0 0
        %2628 = vmatpush1.bf16.msra.mxu0 0
        %2629 = vmatprep.subr.bf16.mxu0 0
        %2630 = vmatpush1.bf16.msra.mxu0 0
        %2631 = vmatprep.subr.bf16.mxu0 0
        %2632 = vmatpush1.bf16.msra.mxu0 0
        %2633 = vmatprep.subr.bf16.mxu0 0
        %2634 = vmatpush1.bf16.msra.mxu0 0
        %2635 = vmatprep.subr.bf16.mxu0 0
        %2636 = vmatpush1.bf16.msra.mxu0 0
        %2637 = vmatprep.subr.bf16.mxu0 0
        %2638 = vmatpush1.bf16.msra.mxu0 0
        %2639 = vmatprep.subr.bf16.mxu0 0
        %2640 = vmatpush1.bf16.msra.mxu0 0
        %2641 = vmatprep.subr.bf16.mxu0 0
        %2642 = vmatpush1.bf16.msra.mxu0 0
        %2643 = vmatprep.subr.bf16.mxu0 0
        %2644 = vmatpush1.bf16.msra.mxu0 0
        %2645 = vmatprep.subr.bf16.mxu0 0
        %2646 = vmatpush1.bf16.msra.mxu0 0
        %2647 = vmatprep.subr.bf16.mxu0 0
        %2648 = vmatpush1.bf16.msra.mxu0 0
        %2649 = vmatprep.subr.bf16.mxu0 0
        %2650 = vmatpush1.bf16.msra.mxu0 0
        %2651 = vmatprep.subr.bf16.mxu0 0
        %2652 = vmatpush1.bf16.msra.mxu0 0
        %2653 = vmatprep.subr.bf16.mxu0 0
        %2654 = vmatpush1.bf16.msra.mxu0 0
        %2655 = vmatprep.mubr.bf16.mxu0 0
        %2656 = vmatmul.mubr.bf16.gmra.mrb[0].mxu0 %v2618
        %v2657 = vpop.f32.mrb[0].mxu0
        %v2658 = vadd.f32 0.0, %v2657
        %v2659 = vpop.f32.mrb[0].mxu0
        %v2660 = vpop.f32.mrb[0].mxu0
        %v2661 = vpop.f32.mrb[0].mxu0
        %2662 = vdwg.mxu0
        %2664 = vrot.lane.b32.xlu0 %v2658, 16
        %v2665 = vpop.permute.xlu0 %2664
        %2667 = vst.msk [vmem:[#allocation2 + $0x8] sm:$0xff] %vm1736, %v2665
        %2668 = vrot.lane.b32.xlu0 %v1990, 104
        %v2669 = vpop.permute.xlu0 %2668
        %v2671 = vsel %vm1032, %v2669, 0.0
        %2672 = vadd.xlane.f32.xlu0 %v2671
        %v2673 = vpop.xlane.xlu0 %2672
        %v2674 = vrsqrt.pop %v2673
        %v2675 = vmul.f32 %v2673, %v2674
        %vm2676 = vcmp.eq.f32.partialorder %v2673, inf
        %v2677 = vsel %vm2676, %v2673, %v2675
        %vm2678 = vcmp.eq.f32.partialorder %v2673, 0.0
        %v2679 = vand.u32 %v2673, 2147483648
        %v2680 = vsel %vm2678, %v2679, %v2677
        %v2681 = vmul.f32 %v2680, 0.35355338
        %v2682 = vmax.f32 %v2681, 1e-08
        %v2683 = vrcp.pop %v2682
        %v2684 = vmul.f32 %v937, %v2683
        %v2685 = vmul.f32 %v2684, %v1756
        %2686 = vrot.lane.b32.xlu0 %v2006, 104
        %v2687 = vpop.permute.xlu0 %2686
        %2688 = vrot.lane.b32.xlu0 %v2007, 104
        %v2689 = vpop.permute.xlu0 %2688
        %2690 = vrot.lane.b32.xlu0 %v2008, 104
        %v2691 = vpop.permute.xlu0 %2690
        %v2695 = vsel %vm1032, %v2687, 0.0
        %2696 = vadd.xlane.f32.xlu0 %v2695
        %v2697 = vpop.xlane.xlu0 %2696
        %v2698 = vsel %vm1032, %v2689, 0.0
        %2699 = vadd.xlane.f32.xlu0 %v2698
        %v2700 = vpop.xlane.xlu0 %2699
        %v2701 = vsel %vm1032, %v2691, 0.0
        %2702 = vadd.xlane.f32.xlu0 %v2701
        %v2703 = vpop.xlane.xlu0 %2702
        %v2704 = vrsqrt.pop %v2697
        %v2705 = vmul.f32 %v2697, %v2704
        %vm2706 = vcmp.eq.f32.partialorder %v2697, inf
        %v2707 = vsel %vm2706, %v2697, %v2705
        %vm2708 = vcmp.eq.f32.partialorder %v2697, 0.0
        %v2709 = vand.u32 %v2697, 2147483648
        %v2710 = vsel %vm2708, %v2709, %v2707
        %v2711 = vrsqrt.pop %v2700
        %v2712 = vmul.f32 %v2700, %v2711
        %vm2713 = vcmp.eq.f32.partialorder %v2700, inf
        %v2714 = vsel %vm2713, %v2700, %v2712
        %vm2715 = vcmp.eq.f32.partialorder %v2700, 0.0
        %v2716 = vand.u32 %v2700, 2147483648
        %v2717 = vsel %vm2715, %v2716, %v2714
        %v2718 = vrsqrt.pop %v2703
        %v2719 = vmul.f32 %v2703, %v2718
        %vm2720 = vcmp.eq.f32.partialorder %v2703, inf
        %v2721 = vsel %vm2720, %v2703, %v2719
        %vm2722 = vcmp.eq.f32.partialorder %v2703, 0.0
        %v2723 = vand.u32 %v2703, 2147483648
        %v2724 = vsel %vm2722, %v2723, %v2721
        %v2725 = vmul.f32 %v2710, 0.35355338
        %v2726 = vmul.f32 %v2717, 0.35355338
        %v2727 = vmul.f32 %v2724, 0.35355338
        %v2728 = vmax.f32 %v2725, 1e-08
        %v2729 = vmax.f32 %v2726, 1e-08
        %v2730 = vmax.f32 %v2727, 1e-08
        %v2731 = vrcp.pop %v2728
        %v2732 = vmul.f32 %v1005, %v2731
        %v2733 = vrcp.pop %v2729
        %v2734 = vmul.f32 %v1008, %v2733
        %v2735 = vrcp.pop %v2730
        %v2736 = vmul.f32 %v1977, %v2735
        %v2737 = vmul.f32 %v2732, %v1811
        %v2738 = vmul.f32 %v2734, %v1811
        %v2739 = vmul.f32 %v2736, %v1811
        %2741 = vrot.lane.b32.xlu0 %v2685, 104
        %v2742 = vpop.permute.xlu0 %2741
        %2746 = vrot.lane.b32.xlu0 %v2737, 104
        %v2747 = vpop.permute.xlu0 %2746
        %2748 = vrot.lane.b32.xlu0 %v2738, 104
        %v2749 = vpop.permute.xlu0 %2748
        %2750 = vrot.lane.b32.xlu0 %v2739, 104
        %v2751 = vpop.permute.xlu0 %2750
        %v2752 = vsel %vm1032, %v2742, 0
        %v2754 = vsel %vm1032, %v2747, 0
        %v2756 = vsel %vm1032, %v2749, 0
        %v2758 = vsel %vm1032, %v2751, 0
        %2760 = vmatprep.subr.mxu0 0.0
        %2761 = vmatpush1.xpose.msra.mxu0 %v2754
        %2762 = vmatprep.subr.mxu0 0.0
        %2763 = vmatpush1.xpose.msra.mxu0 %v2756
        %2764 = vmatprep.subr.mxu0 0.0
        %2765 = vmatpush1.xpose.msra.mxu0 %v2758
        %2766 = vmatprep.subr.mxu0 0.0
        %2767 = vmatpush1.xpose.msra.mxu0 0.0
        %2768 = vmatprep.subr.mxu0 0.0
        %2769 = vmatpush1.xpose.msra.mxu0 0.0
        %2770 = vmatprep.subr.mxu0 0.0
        %2771 = vmatpush1.xpose.msra.mxu0 0.0
        %2772 = vmatprep.subr.mxu0 0.0
        %2773 = vmatpush1.xpose.msra.mxu0 0.0
        %2774 = vmatprep.subr.mxu0 0.0
        %2775 = vmatpush1.xpose.msra.mxu0 0.0
        %2776 = vmatprep.subr.mxu0 0.0
        %2777 = vmatpush1.xpose.msra.mxu0 0.0
        %2778 = vmatprep.subr.mxu0 0.0
        %2779 = vmatpush1.xpose.msra.mxu0 0.0
        %2780 = vmatprep.subr.mxu0 0.0
        %2781 = vmatpush1.xpose.msra.mxu0 0.0
        %2782 = vmatprep.subr.mxu0 0.0
        %2783 = vmatpush1.xpose.msra.mxu0 0.0
        %2784 = vmatprep.subr.mxu0 0.0
        %2785 = vmatpush1.xpose.msra.mxu0 0.0
        %2786 = vmatprep.subr.mxu0 0.0
        %2787 = vmatpush1.xpose.msra.mxu0 0.0
        %2788 = vmatprep.subr.mxu0 0.0
        %2789 = vmatpush1.xpose.msra.mxu0 0.0
        %2790 = vmatprep.subr.mxu0 0.0
        %2791 = vmatpush1.xpose.msra.mxu0 0.0
        %2792 = vmatprep.subr.mxu0 0.0
        %2793 = vmatpush1.xpose.msra.mxu0 0.0
        %2794 = vmatprep.subr.mxu0 0.0
        %2795 = vmatpush1.xpose.msra.mxu0 0.0
        %2796 = vmatprep.subr.mxu0 0.0
        %2797 = vmatpush1.xpose.msra.mxu0 0.0
        %2798 = vmatprep.subr.mxu0 0.0
        %2799 = vmatpush1.xpose.msra.mxu0 0.0
        %2800 = vmatprep.subr.mxu0 0.0
        %2801 = vmatpush1.xpose.msra.mxu0 0.0
        %2802 = vmatprep.subr.mxu0 0.0
        %2803 = vmatpush1.xpose.msra.mxu0 0.0
        %2804 = vmatprep.subr.mxu0 0.0
        %2805 = vmatpush1.xpose.msra.mxu0 0.0
        %2806 = vmatprep.subr.mxu0 0.0
        %2807 = vmatpush1.xpose.msra.mxu0 0.0
        %2808 = vmatprep.subr.mxu0 0.0
        %2809 = vmatpush1.xpose.msra.mxu0 0.0
        %2810 = vmatprep.subr.mxu0 0.0
        %2811 = vmatpush1.xpose.msra.mxu0 0.0
        %2812 = vmatprep.subr.mxu0 0.0
        %2813 = vmatpush1.xpose.msra.mxu0 0.0
        %2814 = vmatprep.subr.mxu0 0.0
        %2815 = vmatpush1.xpose.msra.mxu0 0.0
        %2816 = vmatprep.subr.mxu0 0.0
        %2817 = vmatpush1.xpose.msra.mxu0 0.0
        %2818 = vmatprep.subr.mxu0 0.0
        %2819 = vmatpush1.xpose.msra.mxu0 0.0
        %2820 = vmatprep.subr.mxu0 0.0
        %2821 = vmatpush1.xpose.msra.mxu0 0.0
        %2822 = vmatprep.subr.mxu0 0.0
        %2823 = vmatpush1.xpose.msra.mxu0 0.0
        %2824 = vmatprep.mubr.f32.mxu0 0.0
        %2825 = vmatmul.mubr.f32.gmra.mrb[0].mxu0 %v2752
        %v2826 = vpop.f32.mrb[0].mxu0
        %v2827 = vadd.f32 %v1989, %v2826
        %v2828 = vpop.f32.mrb[0].mxu0
        %2829 = vdwg.mxu0
        %v2830 = vsel %vm1190, %v2827, -inf
        %2831 = vmax.xlane.f32.xlu0 %v2830
        %v2832 = vpop.xlane.xlu0 %2831
        %v2833 = vsub.f32 %v2827, %v2832
        %v2834 = vmul.f32 %v2833, 1.442695
        %v2835 = vpow.pop %v2834
        %v2836 = vsel %vm1190, %v2835, 0.0
        %2837 = vadd.xlane.f32.xlu0 %v2836
        %v2838 = vpop.xlane.xlu0 %2837
        %v2839 = vrcp.pop %v2838
        %v2840 = vmul.f32 %v2835, %v2839
        %v2841 = vpack.c.bf16 %v2840, %v2840
        %2842 = vrot.lane.b32.xlu0 %v2148, 72
        %v2843 = vpop.permute.xlu0 %2842
        %2844 = vrot.lane.b32.xlu0 %v2149, 72
        %v2845 = vpop.permute.xlu0 %2844
        %v2848 = vsel %vm1190, %v2841, 0
        %v2851 = vsel %vm1215, %v2845, 0
        %2853 = vmatprep.subr.bf16.mxu0 0
        %2854 = vmatpush1.bf16.msra.mxu0 %v2843
        %2855 = vmatprep.subr.bf16.mxu0 0
        %2856 = vmatpush1.bf16.msra.mxu0 %v2851
        %2857 = vmatprep.subr.bf16.mxu0 0
        %2858 = vmatpush1.bf16.msra.mxu0 0
        %2859 = vmatprep.subr.bf16.mxu0 0
        %2860 = vmatpush1.bf16.msra.mxu0 0
        %2861 = vmatprep.subr.bf16.mxu0 0
        %2862 = vmatpush1.bf16.msra.mxu0 0
        %2863 = vmatprep.subr.bf16.mxu0 0
        %2864 = vmatpush1.bf16.msra.mxu0 0
        %2865 = vmatprep.subr.bf16.mxu0 0
        %2866 = vmatpush1.bf16.msra.mxu0 0
        %2867 = vmatprep.subr.bf16.mxu0 0
        %2868 = vmatpush1.bf16.msra.mxu0 0
        %2869 = vmatprep.subr.bf16.mxu0 0
        %2870 = vmatpush1.bf16.msra.mxu0 0
        %2871 = vmatprep.subr.bf16.mxu0 0
        %2872 = vmatpush1.bf16.msra.mxu0 0
        %2873 = vmatprep.subr.bf16.mxu0 0
        %2874 = vmatpush1.bf16.msra.mxu0 0
        %2875 = vmatprep.subr.bf16.mxu0 0
        %2876 = vmatpush1.bf16.msra.mxu0 0
        %2877 = vmatprep.subr.bf16.mxu0 0
        %2878 = vmatpush1.bf16.msra.mxu0 0
        %2879 = vmatprep.subr.bf16.mxu0 0
        %2880 = vmatpush1.bf16.msra.mxu0 0
        %2881 = vmatprep.subr.bf16.mxu0 0
        %2882 = vmatpush1.bf16.msra.mxu0 0
        %2883 = vmatprep.subr.bf16.mxu0 0
        %2884 = vmatpush1.bf16.msra.mxu0 0
        %2885 = vmatprep.mubr.bf16.mxu0 0
        %2886 = vmatmul.mubr.bf16.gmra.mrb[0].mxu0 %v2848
        %v2887 = vpop.f32.mrb[0].mxu0
        %v2888 = vadd.f32 0.0, %v2887
        %v2889 = vpop.f32.mrb[0].mxu0
        %v2890 = vpop.f32.mrb[0].mxu0
        %v2891 = vpop.f32.mrb[0].mxu0
        %2892 = vdwg.mxu0
        %2894 = vrot.lane.b32.xlu0 %v2888, 24
        %v2895 = vpop.permute.xlu0 %2894
        %2897 = vst.msk [vmem:[#allocation2 + $0x8] sm:$0xff] %vm1973, %v2895
        %v2898 = vld [vmem:[#allocation2] sm:$0xff]
        %v2899 = vld [vmem:[#allocation2 + $0x8] sm:$0xff]
        %v2900 = vpack.c.bf16 %v2899, %v2898
        %v2901 = vld [vmem:[%s12] sm:$0xf]
        %v2902 = vld [vmem:[%s12 + $0x4] sm:$0xf]
        %v2903 = vld [vmem:[%s12 + $0x8] sm:$0xf]
        %v2904 = vld [vmem:[%s12 + $0xc] sm:$0xf]
        %v2909 = vunpack.c.l.b16 %v2901
        %v2910 = vunpack.c.l.b16 %v2902
        %v2911 = vunpack.c.l.b16 %v2903
        %v2912 = vunpack.c.l.b16 %v2904
        %v2913 = vpack.c.b16 %v2910, %v2909
        %v2914 = vpack.c.b16 %v2912, %v2911
        %v2918 = vsel %vm759, %v2900, 0
        %2920 = vmatprep.subr.bf16.mxu0 0
        %2921 = vmatpush1.bf16.msra.mxu0 %v2913
        %2922 = vmatprep.subr.bf16.mxu0 0
        %2923 = vmatpush1.bf16.msra.mxu0 %v2914
        %2924 = vmatprep.subr.bf16.mxu0 0
        %2925 = vmatpush1.bf16.msra.mxu0 0
        %2926 = vmatprep.subr.bf16.mxu0 0
        %2927 = vmatpush1.bf16.msra.mxu0 0
        %2928 = vmatprep.subr.bf16.mxu0 0
        %2929 = vmatpush1.bf16.msra.mxu0 0
        %2930 = vmatprep.subr.bf16.mxu0 0
        %2931 = vmatpush1.bf16.msra.mxu0 0
        %2932 = vmatprep.subr.bf16.mxu0 0
        %2933 = vmatpush1.bf16.msra.mxu0 0
        %2934 = vmatprep.subr.bf16.mxu0 0
        %2935 = vmatpush1.bf16.msra.mxu0 0
        %2936 = vmatprep.subr.bf16.mxu0 0
        %2937 = vmatpush1.bf16.msra.mxu0 0
        %2938 = vmatprep.subr.bf16.mxu0 0
        %2939 = vmatpush1.bf16.msra.mxu0 0
        %2940 = vmatprep.subr.bf16.mxu0 0
        %2941 = vmatpush1.bf16.msra.mxu0 0
        %2942 = vmatprep.subr.bf16.mxu0 0
        %2943 = vmatpush1.bf16.msra.mxu0 0
        %2944 = vmatprep.subr.bf16.mxu0 0
        %2945 = vmatpush1.bf16.msra.mxu0 0
        %2946 = vmatprep.subr.bf16.mxu0 0
        %2947 = vmatpush1.bf16.msra.mxu0 0
        %2948 = vmatprep.subr.bf16.mxu0 0
        %2949 = vmatpush1.bf16.msra.mxu0 0
        %2950 = vmatprep.subr.bf16.mxu0 0
        %2951 = vmatpush1.bf16.msra.mxu0 0
        %2952 = vmatprep.mubr.bf16.mxu0 0
        %2953 = vmatmul.mubr.bf16.gmra.mrb[0].mxu0 %v2918
        %v2954 = vpop.f32.mrb[0].mxu0
        %v2955 = vadd.f32 0.0, %v2954
        %v2956 = vpop.f32.mrb[0].mxu0
        %v2957 = vpop.f32.mrb[0].mxu0
        %v2958 = vadd.f32 0.0, %v2957
        %v2959 = vpop.f32.mrb[0].mxu0
        %2960 = vdwg.mxu0
        %v2961 = vadd.f32 %v755, %v2955
        %v2962 = vadd.f32 %v756, %v2958
        %v2963 = vld [vmem:[%s13] sm:$0x1]
        %v2964 = vld [vmem:[%s14] sm:$0x1]
        %v2965 = vsel %vm759, %v2961, 0.0
        %2966 = vadd.xlane.f32.xlu0 %v2965
        %v2967 = vpop.xlane.xlu0 %2966
        %v2968 = vsel %vm759, %v2962, 0.0
        %2969 = vadd.xlane.f32.xlu0 %v2968
        %v2970 = vpop.xlane.xlu0 %2969
        %v2971 = vmul.f32 %v2967, %v772
        %v2972 = vmul.f32 %v2970, %v772
        %v2973 = vsub.f32 %v2961, %v2971
        %v2974 = vsub.f32 %v2962, %v2972
        %v2975 = vmul.f32 %v2973, %v2973
        %v2976 = vmul.f32 %v2974, %v2974
        %v2977 = vsel %vm759, %v2975, 0.0
        %2978 = vadd.xlane.f32.xlu0 %v2977
        %v2979 = vpop.xlane.xlu0 %2978
        %v2980 = vsel %vm759, %v2976, 0.0
        %2981 = vadd.xlane.f32.xlu0 %v2980
        %v2982 = vpop.xlane.xlu0 %2981
        %v2983 = vmul.f32 %v2979, %v772
        %v2984 = vmul.f32 %v2982, %v772
        %v2985 = vadd.f32 %v2983, 1e-05
        %v2986 = vadd.f32 %v2984, 1e-05
        %v2987 = vrsqrt.pop %v2985
        %v2988 = vrsqrt.pop %v2986
        %v2989 = vmul.f32 %v2973, %v2987
        %v2990 = vmul.f32 %v2974, %v2988
        %v2992 = vlaneseq
        %v2993 = vshrl.u32 %v2992, 7
        %v2994 = vsub.s32 0, %v2993
        %v2995 = vrot.slane %v2963, %v2994
        %v2997 = vmul.f32 %v2989, %v2995
        %v2998 = vmul.f32 %v2990, %v2995
        %v3000 = vlaneseq
        %v3001 = vshrl.u32 %v3000, 7
        %v3002 = vsub.s32 0, %v3001
        %v3003 = vrot.slane %v2964, %v3002
        %v3005 = vadd.f32 %v2997, %v3003
        %v3006 = vadd.f32 %v2998, %v3003
        %v3007 = vpack.c.bf16 %v3006, %v3005
        %v3008 = vld [vmem:[%s15] sm:$0xf]
        %v3009 = vld [vmem:[%s15 + $0x4] sm:$0xf]
        %v3010 = vld [vmem:[%s15 + $0x8] sm:$0xf]
        %v3011 = vld [vmem:[%s15 + $0xc] sm:$0xf]
        %v3012 = vld [vmem:[%s16] sm:$0x1]
        %v3014 = vlaneseq
        %v3015 = vshrl.u32 %v3014, 7
        %v3016 = vsub.s32 0, %v3015
        %v3017 = vrot.slane %v3012, %v3016
        %v3023 = vunpack.c.l.b16 %v3008
        %v3024 = vunpack.c.l.b16 %v3009
        %v3025 = vunpack.c.l.b16 %v3010
        %v3026 = vunpack.c.l.b16 %v3011
        %v3027 = vpack.c.b16 %v3024, %v3023
        %v3028 = vpack.c.b16 %v3026, %v3025
        %v3032 = vsel %vm759, %v3007, 0
        %3034 = vmatprep.subr.bf16.mxu0 0
        %3035 = vmatpush1.bf16.msra.mxu0 %v3027
        %3036 = vmatprep.subr.bf16.mxu0 0
        %3037 = vmatpush1.bf16.msra.mxu0 %v3028
        %3038 = vmatprep.subr.bf16.mxu0 0
        %3039 = vmatpush1.bf16.msra.mxu0 0
        %3040 = vmatprep.subr.bf16.mxu0 0
        %3041 = vmatpush1.bf16.msra.mxu0 0
        %3042 = vmatprep.subr.bf16.mxu0 0
        %3043 = vmatpush1.bf16.msra.mxu0 0
        %3044 = vmatprep.subr.bf16.mxu0 0
        %3045 = vmatpush1.bf16.msra.mxu0 0
        %3046 = vmatprep.subr.bf16.mxu0 0
        %3047 = vmatpush1.bf16.msra.mxu0 0
        %3048 = vmatprep.subr.bf16.mxu0 0
        %3049 = vmatpush1.bf16.msra.mxu0 0
        %3050 = vmatprep.subr.bf16.mxu0 0
        %3051 = vmatpush1.bf16.msra.mxu0 0
        %3052 = vmatprep.subr.bf16.mxu0 0
        %3053 = vmatpush1.bf16.msra.mxu0 0
        %3054 = vmatprep.subr.bf16.mxu0 0
        %3055 = vmatpush1.bf16.msra.mxu0 0
        %3056 = vmatprep.subr.bf16.mxu0 0
        %3057 = vmatpush1.bf16.msra.mxu0 0
        %3058 = vmatprep.subr.bf16.mxu0 0
        %3059 = vmatpush1.bf16.msra.mxu0 0
        %3060 = vmatprep.subr.bf16.mxu0 0
        %3061 = vmatpush1.bf16.msra.mxu0 0
        %3062 = vmatprep.subr.bf16.mxu0 0
        %3063 = vmatpush1.bf16.msra.mxu0 0
        %3064 = vmatprep.subr.bf16.mxu0 0
        %3065 = vmatpush1.bf16.msra.mxu0 0
        %3066 = vmatprep.mubr.bf16.mxu0 0
        %3067 = vmatmul.mubr.bf16.gmra.mrb[0].mxu0 %v3032
        %v3068 = vpop.f32.mrb[0].mxu0
        %v3069 = vadd.f32 %v3017, %v3068
        %v3070 = vpop.f32.mrb[0].mxu0
        %v3071 = vpop.f32.mrb[0].mxu0
        %v3072 = vadd.f32 %v3017, %v3071
        %v3073 = vpop.f32.mrb[0].mxu0
        %3074 = vdwg.mxu0
        %v3075 = vmul.f32 %v3069, 0.5
        %v3076 = vmul.f32 %v3072, 0.5
        %v3077 = vmul.f32 %v3069, 0.70710677
        %v3078 = vmul.f32 %v3072, 0.70710677
        %v3079 = verf.f32.pop %v3077
        %v3080 = verf.f32.pop %v3078
        %v3081 = vadd.f32 %v3079, 1.0
        %v3082 = vadd.f32 %v3080, 1.0
        %v3083 = vmul.f32 %v3075, %v3081
        %v3084 = vmul.f32 %v3076, %v3082
        %v3085 = vpack.c.bf16 %v3084, %v3083
        %v3086 = vld [vmem:[%s17] sm:$0xf]
        %v3087 = vld [vmem:[%s17 + $0x4] sm:$0xf]
        %v3088 = vld [vmem:[%s17 + $0x8] sm:$0xf]
        %v3089 = vld [vmem:[%s17 + $0xc] sm:$0xf]
        %v3090 = vld [vmem:[%s17 + $0x10] sm:$0xf]
        %v3091 = vld [vmem:[%s17 + $0x14] sm:$0xf]
        %v3092 = vld [vmem:[%s17 + $0x18] sm:$0xf]
        %v3093 = vld [vmem:[%s17 + $0x1c] sm:$0xf]
        %v3094 = vld [vmem:[%s17 + $0x20] sm:$0xf]
        %v3095 = vld [vmem:[%s17 + $0x24] sm:$0xf]
        %v3096 = vld [vmem:[%s17 + $0x28] sm:$0xf]
        %v3097 = vld [vmem:[%s17 + $0x2c] sm:$0xf]
        %v3098 = vld [vmem:[%s17 + $0x30] sm:$0xf]
        %v3099 = vld [vmem:[%s17 + $0x34] sm:$0xf]
        %v3100 = vld [vmem:[%s17 + $0x38] sm:$0xf]
        %v3101 = vld [vmem:[%s17 + $0x3c] sm:$0xf]
        %v3102 = vld [vmem:[%s18] sm:$0x1]
        %v3104 = vlaneseq
        %v3105 = vshrl.u32 %v3104, 7
        %v3106 = vsub.s32 0, %v3105
        %v3107 = vrot.slane %v3102, %v3106
        %v3125 = vunpack.c.l.b16 %v3086
        %v3126 = vunpack.c.l.b16 %v3087
        %v3127 = vunpack.c.l.b16 %v3088
        %v3128 = vunpack.c.l.b16 %v3089
        %v3129 = vunpack.c.l.b16 %v3090
        %v3130 = vunpack.c.l.b16 %v3091
        %v3131 = vunpack.c.l.b16 %v3092
        %v3132 = vunpack.c.l.b16 %v3093
        %v3133 = vunpack.c.l.b16 %v3094
        %v3134 = vunpack.c.l.b16 %v3095
        %v3135 = vunpack.c.l.b16 %v3096
        %v3136 = vunpack.c.l.b16 %v3097
        %v3137 = vunpack.c.l.b16 %v3098
        %v3138 = vunpack.c.l.b16 %v3099
        %v3139 = vunpack.c.l.b16 %v3100
        %v3140 = vunpack.c.l.b16 %v3101
        %v3141 = vpack.c.b16 %v3126, %v3125
        %v3142 = vpack.c.b16 %v3128, %v3127
        %v3143 = vpack.c.b16 %v3130, %v3129
        %v3144 = vpack.c.b16 %v3132, %v3131
        %v3145 = vpack.c.b16 %v3134, %v3133
        %v3146 = vpack.c.b16 %v3136, %v3135
        %v3147 = vpack.c.b16 %v3138, %v3137
        %v3148 = vpack.c.b16 %v3140, %v3139
        %3157 = vmatprep.subr.bf16.mxu0 0
        %3158 = vmatpush1.bf16.msra.mxu0 %v3141
        %3159 = vmatprep.subr.bf16.mxu0 0
        %3160 = vmatpush1.bf16.msra.mxu0 %v3142
        %3161 = vmatprep.subr.bf16.mxu0 0
        %3162 = vmatpush1.bf16.msra.mxu0 %v3143
        %3163 = vmatprep.subr.bf16.mxu0 0
        %3164 = vmatpush1.bf16.msra.mxu0 %v3144
        %3165 = vmatprep.subr.bf16.mxu0 0
        %3166 = vmatpush1.bf16.msra.mxu0 %v3145
        %3167 = vmatprep.subr.bf16.mxu0 0
        %3168 = vmatpush1.bf16.msra.mxu0 %v3146
        %3169 = vmatprep.subr.bf16.mxu0 0
        %3170 = vmatpush1.bf16.msra.mxu0 %v3147
        %3171 = vmatprep.subr.bf16.mxu0 0
        %3172 = vmatpush1.bf16.msra.mxu0 %v3148
        %3173 = vmatprep.subr.bf16.mxu0 0
        %3174 = vmatpush1.bf16.msra.mxu0 0
        %3175 = vmatprep.subr.bf16.mxu0 0
        %3176 = vmatpush1.bf16.msra.mxu0 0
        %3177 = vmatprep.subr.bf16.mxu0 0
        %3178 = vmatpush1.bf16.msra.mxu0 0
        %3179 = vmatprep.subr.bf16.mxu0 0
        %3180 = vmatpush1.bf16.msra.mxu0 0
        %3181 = vmatprep.subr.bf16.mxu0 0
        %3182 = vmatpush1.bf16.msra.mxu0 0
        %3183 = vmatprep.subr.bf16.mxu0 0
        %3184 = vmatpush1.bf16.msra.mxu0 0
        %3185 = vmatprep.subr.bf16.mxu0 0
        %3186 = vmatpush1.bf16.msra.mxu0 0
        %3187 = vmatprep.subr.bf16.mxu0 0
        %3188 = vmatpush1.bf16.msra.mxu0 0
        %3189 = vmatprep.mubr.bf16.mxu0 0
        %3190 = vmatmul.mubr.bf16.gmra.mrb[0].mxu0 %v3085
        %v3191 = vpop.f32.mrb[0].mxu0
        %v3192 = vadd.f32 %v3107, %v3191
        %v3193 = vpop.f32.mrb[0].mxu0
        %v3194 = vpop.f32.mrb[0].mxu0
        %v3195 = vadd.f32 %v3107, %v3194
        %v3196 = vpop.f32.mrb[0].mxu0
        %3197 = vdwg.mxu0
        %v3198 = vadd.f32 %v2961, %v3192
        %v3199 = vadd.f32 %v2962, %v3195
        %3200 = vst.msk [vmem:[%s727] sm:$0xff] %vm759, %v3198
        %3201 = vst.msk [vmem:[%s727 + $0x8] sm:$0xff] %vm759, %v3199
        %s3202 = sand.u32 %s466, 1
        %s3203 = scalar_lea.sflag [#allocation5], %s3202
        %s3204 = sand.u32 %s466, 1
        %s3205 = smul.addr %s3204, 16
        %s3206 = scalar_lea.vmem [#allocation14], %s3205
        // Predicated region
        $region121: #{tpu_custom_call.1} parent=95 // pred_check
          %p3207 = pneg %p476
        $region122: #{tpu_custom_call.1} parent=95 // pred_check_branch
          %3209 = sbr.rel (%p3207) target = $region124
        $region123: #{tpu_custom_call.1} parent=95 // pred_region
          %s3210 = smul.u32 2, %s39
          %s3212 = ssub.s32 256, 256
          %3213 = vsyncadd %s3203, %s3212
          %s3214 = smul.addr %s3210, 128
          %s3215 = scalar_lea.hbm %s19, %s3214
          %s3216 = sshll.u32 %s3206, 4
          %s3217 = int_to_ptr.vmem [resolvable:$true] %s3216
          %3222 = dma.vmem_to_hbm [thread:$0]  %s3217, 256, %s3215, %s3203, 128, 128, 8
        $region124: #{tpu_custom_call.1} parent=95 // pred_fallthru
          _
      $region96: #{tpu_custom_call.1} parent=5 // pred_fallthru
        _
      %p3223 = scmp.le.s32.totalorder 2, %s34
      // Predicated region
      $region125: #{tpu_custom_call.1} parent=5 // pred_check
        %p3224 = pneg %p3223
      $region126: #{tpu_custom_call.1} parent=5 // pred_check_branch
        %3226 = sbr.rel (%p3224) target = $region128
      $region127: #{tpu_custom_call.1} parent=5 // pred_region
        %s3227 = ssub.s32 %s34, 2
        // Predicated region
        $region129: #{tpu_custom_call.1} parent=127 // pred_check
          %p3228 = pneg %p482
        $region130: #{tpu_custom_call.1} parent=127 // pred_check_branch
          %3230 = sbr.rel (%p3228) target = $region132
        $region131: #{tpu_custom_call.1} parent=127 // pred_region
          %s3231 = sand.u32 %s467, 1
          %s3232 = scalar_lea.sflag [#allocation5], %s3231
          %s3233 = sand.u32 %s467, 1
          %s3234 = smul.addr %s3233, 16
          %s3235 = scalar_lea.vmem [#allocation14], %s3234
          %3236 = dma.done %s3232, 256
        $region132: #{tpu_custom_call.1} parent=127 // pred_fallthru
          _
      $region128: #{tpu_custom_call.1} parent=5 // pred_fallthru
        _
    $region6: #{tpu_custom_call.1} parent=1 // loop_footer
      %s38 = sadd.s32 1, %s34
    $region7: #{tpu_custom_call.1} parent=1 // loop_footer_branch
      %33 = sbr.rel target = $region3
    $region8: #{tpu_custom_call.1} parent=1 // loop_exit
      _
    %3237 = vsyncpa [#allocation4], 1
    %s3238 = scalar_lea.sflag [#allocation4], 1
    %3239 = vsyncpa %s3238, 1
    %3240 = vsyncpa [#allocation7], 1
    %3241 = vsyncpa [#allocation10], 1
    %3242 = vsyncpa [#allocation13], 1
    %3243 = vsyncpa [#allocation5], 1
    %s3244 = scalar_lea.sflag [#allocation5], 1
    %3245 = vsyncpa %s3244, 1

// kernel: tpu_custom_call.1
$region0: #{tpu_custom_call.1}
  #allocation0 [shape = 'u32[]', space=smem, size = 0x4, offset = 0x4, fixed_abs, tag = 'smem constant byte address 0x4 - core index']
  #allocation1 [shape = 'u32[144,128]{1,0:T(1,128)}', space=vmem, size = 0x12000, scoped, tag = 'internal scratch']
  #allocation2 [shape = 'f32[16,32]{1,0:T(8,128)}', space=vmem, size = 0x2000, scoped, tag = 'scratch operand']
  %s0 = inlined_call_operand.vmem [shape: bf16[4,16,32], index: 0, kind: input, shape index: {}]
  %s1 = inlined_call_operand.vmem [shape: f32[4,8,32], index: 1, kind: input, shape index: {}]
  %s2 = inlined_call_operand.vmem [shape: f32[2,8,2], index: 2, kind: input, shape index: {}]
  %s3 = inlined_call_operand.hbm [shape: f32[2,2,24], index: 3, kind: input, shape index: {}]
  %s4 = inlined_call_operand.vmem [shape: f32[1,32], index: 4, kind: input, shape index: {}]
  %s5 = inlined_call_operand.hbm [shape: f32[1,32], index: 5, kind: input, shape index: {}]
  %s6 = inlined_call_operand.hbm [shape: f32[1,32], index: 6, kind: input, shape index: {}]
  %s7 = inlined_call_operand.hbm [shape: f32[1,32], index: 7, kind: input, shape index: {}]
  %s8 = inlined_call_operand.vmem [shape: bf16[32,96], index: 8, kind: input, shape index: {}]
  %s9 = inlined_call_operand.vmem [shape: bf16[32,64], index: 9, kind: input, shape index: {}]
  %s10 = inlined_call_operand.hbm [shape: f32[1,8], index: 10, kind: input, shape index: {}]
  %s11 = inlined_call_operand.hbm [shape: f32[1,8], index: 11, kind: input, shape index: {}]
  %s12 = inlined_call_operand.vmem [shape: bf16[32,32], index: 12, kind: input, shape index: {}]
  %s13 = inlined_call_operand.vmem [shape: f32[1,32], index: 13, kind: input, shape index: {}]
  %s14 = inlined_call_operand.vmem [shape: f32[1,32], index: 14, kind: input, shape index: {}]
  %s15 = inlined_call_operand.vmem [shape: bf16[32,128], index: 15, kind: input, shape index: {}]
  %s16 = inlined_call_operand.vmem [shape: f32[1,128], index: 16, kind: input, shape index: {}]
  %s17 = inlined_call_operand.vmem [shape: bf16[128,32], index: 17, kind: input, shape index: {}]
  %s18 = inlined_call_operand.vmem [shape: f32[1,32], index: 18, kind: input, shape index: {}]
  %s19 = inlined_call_operand.hbm [shape: f32[4,8,32], index: 19, kind: output, shape index: {}]
  %s20 = sld [smem:[#allocation0]]
  $region133: #{tpu_custom_call.1} parent=0
    _
  %s22 = ssub.s32 1, %s20
  %s23 = scalar_select 0, %s22, %s20
  $region1: #{tpu_custom_call.1} parent=0
    #allocation3 [shape = 'u8[2048]{0}', space=vmem, size = 0x800, scoped, tag = 'input window, operand 3']
    #allocation4 [shape = 's32[2]{0}', space=sflag, size = 0x8, scoped, tag = 'scoped memory for tpu_custom_call.1']
    #allocation5 [shape = 's32[2]{0}', space=sflag, size = 0x8, scoped, tag = 'scoped memory for tpu_custom_call.1']
    #allocation6 [shape = 'u8[512]{0}', space=vmem, size = 0x400, scoped, tag = 'input window, operand 5, single buffered']
    #allocation7 [shape = 's32[1]{0}', space=sflag, size = 0x4, scoped, tag = 'scoped memory for tpu_custom_call.1']
    #allocation8 [shape = 'u8[512]{0}', space=vmem, size = 0x400, scoped, tag = 'input window, operand 6, single buffered']
    #allocation9 [shape = 'u8[512]{0}', space=vmem, size = 0x400, scoped, tag = 'input window, operand 7, single buffered']
    #allocation10 [shape = 's32[1]{0}', space=sflag, size = 0x4, scoped, tag = 'scoped memory for tpu_custom_call.1']
    #allocation11 [shape = 'u8[512]{0}', space=vmem, size = 0x400, scoped, tag = 'input window, operand 10, single buffered']
    #allocation12 [shape = 'u8[512]{0}', space=vmem, size = 0x400, scoped, tag = 'input window, operand 11, single buffered']
    #allocation13 [shape = 's32[1]{0}', space=sflag, size = 0x4, scoped, tag = 'scoped memory for tpu_custom_call.1']
    #allocation14 [shape = 'u8[16384]{0}', space=vmem, size = 0x4000, scoped, tag = 'output window, operand 0']
    %24 = vsyncpa [#allocation4], 0
    %s25 = scalar_lea.sflag [#allocation4], 1
    %26 = vsyncpa %s25, 0
    %27 = vsyncpa [#allocation7], 0
    %28 = vsyncpa [#allocation10], 0
    %29 = vsyncpa [#allocation13], 0
    %30 = vsyncpa [#allocation5], 0
    %s31 = scalar_lea.sflag [#allocation5], 1
    %32 = vsyncpa %s31, 0
    loop: start=0, step=1, limit=4
    $region2: #{tpu_custom_call.1} parent=1 // loop_pre_header
      _
    $region3: #{tpu_custom_call.1} parent=1 // loop_header
      %s34 = sphi 0, %s38
      %p35 = scmp.ge.s32.totalorder %s34, 4
      %s44 = sphi 0, %s46
      %s47 = sphi 0, %s44
      %s48 = sphi 0, %s47
      %s64 = sphi 0, %s48
      %s70 = sphi 0, %s72
      %s73 = sphi 0, %s70
      %s74 = sphi 0, %s73
      %s90 = sphi 0, %s74
      %s96 = sphi 0, %s98
      %s99 = sphi 0, %s96
      %s100 = sphi 0, %s99
      %s116 = sphi 0, %s100
      %s122 = sphi 0, %s124
      %s125 = sphi 0, %s122
      %s126 = sphi 0, %s125
      %s142 = sphi 0, %s126
      %s146 = sphi 0, %s146
      %s148 = sphi 0, %s146
      %s149 = sphi 0, %s148
      %s163 = sphi 0, %s149
      %s167 = sphi 0, %s167
      %s169 = sphi 0, %s167
      %s170 = sphi 0, %s169
      %s184 = sphi 0, %s170
      %s188 = sphi 0, %s188
      %s190 = sphi 0, %s188
      %s191 = sphi 0, %s190
      %s205 = sphi 0, %s191
      %s209 = sphi 0, %s209
      %s211 = sphi 0, %s209
      %s212 = sphi 0, %s211
      %s226 = sphi 0, %s212
      %s230 = sphi 0, %s230
      %s232 = sphi 0, %s230
      %s233 = sphi 0, %s232
      %s247 = sphi 0, %s233
      %s251 = sphi 0, %s251
      %s253 = sphi 0, %s251
      %s254 = sphi 0, %s253
      %s268 = sphi 0, %s254
      %s272 = sphi 0, %s272
      %s274 = sphi 0, %s272
      %s275 = sphi 0, %s274
      %s289 = sphi 0, %s275
      %s293 = sphi 0, %s293
      %s295 = sphi 0, %s293
      %s296 = sphi 0, %s295
      %s310 = sphi 0, %s296
      %s314 = sphi 0, %s314
      %s316 = sphi 0, %s314
      %s317 = sphi 0, %s316
      %s331 = sphi 0, %s317
      %s335 = sphi 0, %s335
      %s337 = sphi 0, %s335
      %s338 = sphi 0, %s337
      %s352 = sphi 0, %s338
      %s356 = sphi 0, %s356
      %s358 = sphi 0, %s356
      %s359 = sphi 0, %s358
      %s373 = sphi 0, %s359
      %s377 = sphi 0, %s377
      %s379 = sphi 0, %s377
      %s380 = sphi 0, %s379
      %s394 = sphi 0, %s380
      %s398 = sphi 0, %s398
      %s400 = sphi 0, %s398
      %s401 = sphi 0, %s400
      %s415 = sphi 0, %s401
      %s419 = sphi 0, %s419
      %s421 = sphi 0, %s419
      %s422 = sphi 0, %s421
      %s436 = sphi 0, %s422
      %s440 = sphi 0, %s440
      %s442 = sphi 0, %s440
      %s443 = sphi 0, %s442
      %s457 = sphi 0, %s443
      %s463 = sphi 0, %s465
      %s466 = sphi 0, %s463
      %s467 = sphi 0, %s466
      %s483 = sphi 0, %s467
    $region4: #{tpu_custom_call.1} parent=1 // loop_header_branch
      %37 = sbr.rel (%p35) target = $region8
    $region5: #{tpu_custom_call.1} parent=1 // loop_body
      %s39 = ssub.s32 %s34, 1
      %s40 = ssub.s32 %s34, 2
      %s41 = sadd.s32 %s34, 1
      %s42 = ssub.s32 %s34, %s41
      %p43 = scmp.eq.s32.totalorder %s42, 0
      %s45 = sadd.s32 %s44, 1
      %s46 = scalar_select %p43, %s44, %s45
      %p49 = pneg %p43
      %p50 = scmp.eq.s32.totalorder %s34, 1
      %p51 = por %p49, %p50
      %p52 = scmp.ne.s32.totalorder %s44, %s47
      %p53 = scmp.eq.s32.totalorder %s34, 0
      %p54 = por %p52, %p53
      %p55 = scmp.ne.s32.totalorder %s44, %s47
      %p56 = scmp.eq.s32.totalorder %s39, 1
      %p57 = por %p55, %p56
      %p58 = scmp.ne.s32.totalorder %s47, %s48
      %p59 = scmp.eq.s32.totalorder %s39, 0
      %p60 = por %p58, %p59
      %p61 = scmp.ne.s32.totalorder %s47, %s48
      %p62 = scmp.eq.s32.totalorder %s40, 1
      %p63 = por %p61, %p62
      %p65 = scmp.ne.s32.totalorder %s48, %s64
      %p66 = scmp.eq.s32.totalorder %s40, 0
      %p67 = por %p65, %p66
      %s68 = ssub.s32 %s34, %s41
      %p69 = scmp.eq.s32.totalorder %s68, 0
      %s71 = sadd.s32 %s70, 1
      %s72 = scalar_select %p69, %s70, %s71
      %p75 = pneg %p69
      %p76 = scmp.eq.s32.totalorder %s34, 1
      %p77 = por %p75, %p76
      %p78 = scmp.ne.s32.totalorder %s70, %s73
      %p79 = scmp.eq.s32.totalorder %s34, 0
      %p80 = por %p78, %p79
      %p81 = scmp.ne.s32.totalorder %s70, %s73
      %p82 = scmp.eq.s32.totalorder %s39, 1
      %p83 = por %p81, %p82
      %p84 = scmp.ne.s32.totalorder %s73, %s74
      %p85 = scmp.eq.s32.totalorder %s39, 0
      %p86 = por %p84, %p85
      %p87 = scmp.ne.s32.totalorder %s73, %s74
      %p88 = scmp.eq.s32.totalorder %s40, 1
      %p89 = por %p87, %p88
      %p91 = scmp.ne.s32.totalorder %s74, %s90
      %p92 = scmp.eq.s32.totalorder %s40, 0
      %p93 = por %p91, %p92
      %s94 = ssub.s32 %s34, %s41
      %p95 = scmp.eq.s32.totalorder %s94, 0
      %s97 = sadd.s32 %s96, 1
      %s98 = scalar_select %p95, %s96, %s97
      %p101 = pneg %p95
      %p102 = scmp.eq.s32.totalorder %s34, 1
      %p103 = por %p101, %p102
      %p104 = scmp.ne.s32.totalorder %s96, %s99
      %p105 = scmp.eq.s32.totalorder %s34, 0
      %p106 = por %p104, %p105
      %p107 = scmp.ne.s32.totalorder %s96, %s99
      %p108 = scmp.eq.s32.totalorder %s39, 1
      %p109 = por %p107, %p108
      %p110 = scmp.ne.s32.totalorder %s99, %s100
      %p111 = scmp.eq.s32.totalorder %s39, 0
      %p112 = por %p110, %p111
      %p113 = scmp.ne.s32.totalorder %s99, %s100
      %p114 = scmp.eq.s32.totalorder %s40, 1
      %p115 = por %p113, %p114
      %p117 = scmp.ne.s32.totalorder %s100, %s116
      %p118 = scmp.eq.s32.totalorder %s40, 0
      %p119 = por %p117, %p118
      %s120 = ssub.s32 %s34, %s41
      %p121 = scmp.eq.s32.totalorder %s120, 0
      %s123 = sadd.s32 %s122, 1
      %s124 = scalar_select %p121, %s122, %s123
      %p127 = pneg %p121
      %p128 = scmp.eq.s32.totalorder %s34, 1
      %p129 = por %p127, %p128
      %p130 = scmp.ne.s32.totalorder %s122, %s125
      %p131 = scmp.eq.s32.totalorder %s34, 0
      %p132 = por %p130, %p131
      %p133 = scmp.ne.s32.totalorder %s122, %s125
      %p134 = scmp.eq.s32.totalorder %s39, 1
      %p135 = por %p133, %p134
      %p136 = scmp.ne.s32.totalorder %s125, %s126
      %p137 = scmp.eq.s32.totalorder %s39, 0
      %p138 = por %p136, %p137
      %p139 = scmp.ne.s32.totalorder %s125, %s126
      %p140 = scmp.eq.s32.totalorder %s40, 1
      %p141 = por %p139, %p140
      %p143 = scmp.ne.s32.totalorder %s126, %s142
      %p144 = scmp.eq.s32.totalorder %s40, 0
      %p145 = por %p143, %p144
      %s147 = sadd.s32 %s146, 1
      %p150 = scmp.eq.s32.totalorder %s34, 1
      %p151 = scmp.ne.s32.totalorder %s146, %s148
      %p152 = scmp.eq.s32.totalorder %s34, 0
      %p153 = por %p151, %p152
      %p154 = scmp.ne.s32.totalorder %s146, %s148
      %p155 = scmp.eq.s32.totalorder %s39, 1
      %p156 = por %p154, %p155
      %p157 = scmp.ne.s32.totalorder %s148, %s149
      %p158 = scmp.eq.s32.totalorder %s39, 0
      %p159 = por %p157, %p158
      %p160 = scmp.ne.s32.totalorder %s148, %s149
      %p161 = scmp.eq.s32.totalorder %s40, 1
      %p162 = por %p160, %p161
      %p164 = scmp.ne.s32.totalorder %s149, %s163
      %p165 = scmp.eq.s32.totalorder %s40, 0
      %p166 = por %p164, %p165
      %s168 = sadd.s32 %s167, 1
      %p171 = scmp.eq.s32.totalorder %s34, 1
      %p172 = scmp.ne.s32.totalorder %s167, %s169
      %p173 = scmp.eq.s32.totalorder %s34, 0
      %p174 = por %p172, %p173
      %p175 = scmp.ne.s32.totalorder %s167, %s169
      %p176 = scmp.eq.s32.totalorder %s39, 1
      %p177 = por %p175, %p176
      %p178 = scmp.ne.s32.totalorder %s169, %s170
      %p179 = scmp.eq.s32.totalorder %s39, 0
      %p180 = por %p178, %p179
      %p181 = scmp.ne.s32.totalorder %s169, %s170
      %p182 = scmp.eq.s32.totalorder %s40, 1
      %p183 = por %p181, %p182
      %p185 = scmp.ne.s32.totalorder %s170, %s184
      %p186 = scmp.eq.s32.totalorder %s40, 0
      %p187 = por %p185, %p186
      %s189 = sadd.s32 %s188, 1
      %p192 = scmp.eq.s32.totalorder %s34, 1
      %p193 = scmp.ne.s32.totalorder %s188, %s190
      %p194 = scmp.eq.s32.totalorder %s34, 0
      %p195 = por %p193, %p194
      %p196 = scmp.ne.s32.totalorder %s188, %s190
      %p197 = scmp.eq.s32.totalorder %s39, 1
      %p198 = por %p196, %p197
      %p199 = scmp.ne.s32.totalorder %s190, %s191
      %p200 = scmp.eq.s32.totalorder %s39, 0
      %p201 = por %p199, %p200
      %p202 = scmp.ne.s32.totalorder %s190, %s191
      %p203 = scmp.eq.s32.totalorder %s40, 1
      %p204 = por %p202, %p203
      %p206 = scmp.ne.s32.totalorder %s191, %s205
      %p207 = scmp.eq.s32.totalorder %s40, 0
      %p208 = por %p206, %p207
      %s210 = sadd.s32 %s209, 1
      %p213 = scmp.eq.s32.totalorder %s34, 1
      %p214 = scmp.ne.s32.totalorder %s209, %s211
      %p215 = scmp.eq.s32.totalorder %s34, 0
      %p216 = por %p214, %p215
      %p217 = scmp.ne.s32.totalorder %s209, %s211
      %p218 = scmp.eq.s32.totalorder %s39, 1
      %p219 = por %p217, %p218
      %p220 = scmp.ne.s32.totalorder %s211, %s212
      %p221 = scmp.eq.s32.totalorder %s39, 0
      %p222 = por %p220, %p221
      %p223 = scmp.ne.s32.totalorder %s211, %s212
      %p224 = scmp.eq.s32.totalorder %s40, 1
      %p225 = por %p223, %p224
      %p227 = scmp.ne.s32.totalorder %s212, %s226
      %p228 = scmp.eq.s32.totalorder %s40, 0
      %p229 = por %p227, %p228
      %s231 = sadd.s32 %s230, 1
      %p234 = scmp.eq.s32.totalorder %s34, 1
      %p235 = scmp.ne.s32.totalorder %s230, %s232
      %p236 = scmp.eq.s32.totalorder %s34, 0
      %p237 = por %p235, %p236
      %p238 = scmp.ne.s32.totalorder %s230, %s232
      %p239 = scmp.eq.s32.totalorder %s39, 1
      %p240 = por %p238, %p239
      %p241 = scmp.ne.s32.totalorder %s232, %s233
      %p242 = scmp.eq.s32.totalorder %s39, 0
      %p243 = por %p241, %p242
      %p244 = scmp.ne.s32.totalorder %s232, %s233
      %p245 = scmp.eq.s32.totalorder %s40, 1
      %p246 = por %p244, %p245
      %p248 = scmp.ne.s32.totalorder %s233, %s247
      %p249 = scmp.eq.s32.totalorder %s40, 0
      %p250 = por %p248, %p249
      %s252 = sadd.s32 %s251, 1
      %p255 = scmp.eq.s32.totalorder %s34, 1
      %p256 = scmp.ne.s32.totalorder %s251, %s253
      %p257 = scmp.eq.s32.totalorder %s34, 0
      %p258 = por %p256, %p257
      %p259 = scmp.ne.s32.totalorder %s251, %s253
      %p260 = scmp.eq.s32.totalorder %s39, 1
      %p261 = por %p259, %p260
      %p262 = scmp.ne.s32.totalorder %s253, %s254
      %p263 = scmp.eq.s32.totalorder %s39, 0
      %p264 = por %p262, %p263
      %p265 = scmp.ne.s32.totalorder %s253, %s254
      %p266 = scmp.eq.s32.totalorder %s40, 1
      %p267 = por %p265, %p266
      %p269 = scmp.ne.s32.totalorder %s254, %s268
      %p270 = scmp.eq.s32.totalorder %s40, 0
      %p271 = por %p269, %p270
      %s273 = sadd.s32 %s272, 1
      %p276 = scmp.eq.s32.totalorder %s34, 1
      %p277 = scmp.ne.s32.totalorder %s272, %s274
      %p278 = scmp.eq.s32.totalorder %s34, 0
      %p279 = por %p277, %p278
      %p280 = scmp.ne.s32.totalorder %s272, %s274
      %p281 = scmp.eq.s32.totalorder %s39, 1
      %p282 = por %p280, %p281
      %p283 = scmp.ne.s32.totalorder %s274, %s275
      %p284 = scmp.eq.s32.totalorder %s39, 0
      %p285 = por %p283, %p284
      %p286 = scmp.ne.s32.totalorder %s274, %s275
      %p287 = scmp.eq.s32.totalorder %s40, 1
      %p288 = por %p286, %p287
      %p290 = scmp.ne.s32.totalorder %s275, %s289
      %p291 = scmp.eq.s32.totalorder %s40, 0
      %p292 = por %p290, %p291
      %s294 = sadd.s32 %s293, 1
      %p297 = scmp.eq.s32.totalorder %s34, 1
      %p298 = scmp.ne.s32.totalorder %s293, %s295
      %p299 = scmp.eq.s32.totalorder %s34, 0
      %p300 = por %p298, %p299
      %p301 = scmp.ne.s32.totalorder %s293, %s295
      %p302 = scmp.eq.s32.totalorder %s39, 1
      %p303 = por %p301, %p302
      %p304 = scmp.ne.s32.totalorder %s295, %s296
      %p305 = scmp.eq.s32.totalorder %s39, 0
      %p306 = por %p304, %p305
      %p307 = scmp.ne.s32.totalorder %s295, %s296
      %p308 = scmp.eq.s32.totalorder %s40, 1
      %p309 = por %p307, %p308
      %p311 = scmp.ne.s32.totalorder %s296, %s310
      %p312 = scmp.eq.s32.totalorder %s40, 0
      %p313 = por %p311, %p312
      %s315 = sadd.s32 %s314, 1
      %p318 = scmp.eq.s32.totalorder %s34, 1
      %p319 = scmp.ne.s32.totalorder %s314, %s316
      %p320 = scmp.eq.s32.totalorder %s34, 0
      %p321 = por %p319, %p320
      %p322 = scmp.ne.s32.totalorder %s314, %s316
      %p323 = scmp.eq.s32.totalorder %s39, 1
      %p324 = por %p322, %p323
      %p325 = scmp.ne.s32.totalorder %s316, %s317
      %p326 = scmp.eq.s32.totalorder %s39, 0
      %p327 = por %p325, %p326
      %p328 = scmp.ne.s32.totalorder %s316, %s317
      %p329 = scmp.eq.s32.totalorder %s40, 1
      %p330 = por %p328, %p329
      %p332 = scmp.ne.s32.totalorder %s317, %s331
      %p333 = scmp.eq.s32.totalorder %s40, 0
      %p334 = por %p332, %p333
      %s336 = sadd.s32 %s335, 1
      %p339 = scmp.eq.s32.totalorder %s34, 1
      %p340 = scmp.ne.s32.totalorder %s335, %s337
      %p341 = scmp.eq.s32.totalorder %s34, 0
      %p342 = por %p340, %p341
      %p343 = scmp.ne.s32.totalorder %s335, %s337
      %p344 = scmp.eq.s32.totalorder %s39, 1
      %p345 = por %p343, %p344
      %p346 = scmp.ne.s32.totalorder %s337, %s338
      %p347 = scmp.eq.s32.totalorder %s39, 0
      %p348 = por %p346, %p347
      %p349 = scmp.ne.s32.totalorder %s337, %s338
      %p350 = scmp.eq.s32.totalorder %s40, 1
      %p351 = por %p349, %p350
      %p353 = scmp.ne.s32.totalorder %s338, %s352
      %p354 = scmp.eq.s32.totalorder %s40, 0
      %p355 = por %p353, %p354
      %s357 = sadd.s32 %s356, 1
      %p360 = scmp.eq.s32.totalorder %s34, 1
      %p361 = scmp.ne.s32.totalorder %s356, %s358
      %p362 = scmp.eq.s32.totalorder %s34, 0
      %p363 = por %p361, %p362
      %p364 = scmp.ne.s32.totalorder %s356, %s358
      %p365 = scmp.eq.s32.totalorder %s39, 1
      %p366 = por %p364, %p365
      %p367 = scmp.ne.s32.totalorder %s358, %s359
      %p368 = scmp.eq.s32.totalorder %s39, 0
      %p369 = por %p367, %p368
      %p370 = scmp.ne.s32.totalorder %s358, %s359
      %p371 = scmp.eq.s32.totalorder %s40, 1
      %p372 = por %p370, %p371
      %p374 = scmp.ne.s32.totalorder %s359, %s373
      %p375 = scmp.eq.s32.totalorder %s40, 0
      %p376 = por %p374, %p375
      %s378 = sadd.s32 %s377, 1
      %p381 = scmp.eq.s32.totalorder %s34, 1
      %p382 = scmp.ne.s32.totalorder %s377, %s379
      %p383 = scmp.eq.s32.totalorder %s34, 0
      %p384 = por %p382, %p383
      %p385 = scmp.ne.s32.totalorder %s377, %s379
      %p386 = scmp.eq.s32.totalorder %s39, 1
      %p387 = por %p385, %p386
      %p388 = scmp.ne.s32.totalorder %s379, %s380
      %p389 = scmp.eq.s32.totalorder %s39, 0
      %p390 = por %p388, %p389
      %p391 = scmp.ne.s32.totalorder %s379, %s380
      %p392 = scmp.eq.s32.totalorder %s40, 1
      %p393 = por %p391, %p392
      %p395 = scmp.ne.s32.totalorder %s380, %s394
      %p396 = scmp.eq.s32.totalorder %s40, 0
      %p397 = por %p395, %p396
      %s399 = sadd.s32 %s398, 1
      %p402 = scmp.eq.s32.totalorder %s34, 1
      %p403 = scmp.ne.s32.totalorder %s398, %s400
      %p404 = scmp.eq.s32.totalorder %s34, 0
      %p405 = por %p403, %p404
      %p406 = scmp.ne.s32.totalorder %s398, %s400
      %p407 = scmp.eq.s32.totalorder %s39, 1
      %p408 = por %p406, %p407
      %p409 = scmp.ne.s32.totalorder %s400, %s401
      %p410 = scmp.eq.s32.totalorder %s39, 0
      %p411 = por %p409, %p410
      %p412 = scmp.ne.s32.totalorder %s400, %s401
      %p413 = scmp.eq.s32.totalorder %s40, 1
      %p414 = por %p412, %p413
      %p416 = scmp.ne.s32.totalorder %s401, %s415
      %p417 = scmp.eq.s32.totalorder %s40, 0
      %p418 = por %p416, %p417
      %s420 = sadd.s32 %s419, 1
      %p423 = scmp.eq.s32.totalorder %s34, 1
      %p424 = scmp.ne.s32.totalorder %s419, %s421
      %p425 = scmp.eq.s32.totalorder %s34, 0
      %p426 = por %p424, %p425
      %p427 = scmp.ne.s32.totalorder %s419, %s421
      %p428 = scmp.eq.s32.totalorder %s39, 1
      %p429 = por %p427, %p428
      %p430 = scmp.ne.s32.totalorder %s421, %s422
      %p431 = scmp.eq.s32.totalorder %s39, 0
      %p432 = por %p430, %p431
      %p433 = scmp.ne.s32.totalorder %s421, %s422
      %p434 = scmp.eq.s32.totalorder %s40, 1
      %p435 = por %p433, %p434
      %p437 = scmp.ne.s32.totalorder %s422, %s436
      %p438 = scmp.eq.s32.totalorder %s40, 0
      %p439 = por %p437, %p438
      %s441 = sadd.s32 %s440, 1
      %p444 = scmp.eq.s32.totalorder %s34, 1
      %p445 = scmp.ne.s32.totalorder %s440, %s442
      %p446 = scmp.eq.s32.totalorder %s34, 0
      %p447 = por %p445, %p446
      %p448 = scmp.ne.s32.totalorder %s440, %s442
      %p449 = scmp.eq.s32.totalorder %s39, 1
      %p450 = por %p448, %p449
      %p451 = scmp.ne.s32.totalorder %s442, %s443
      %p452 = scmp.eq.s32.totalorder %s39, 0
      %p453 = por %p451, %p452
      %p454 = scmp.ne.s32.totalorder %s442, %s443
      %p455 = scmp.eq.s32.totalorder %s40, 1
      %p456 = por %p454, %p455
      %p458 = scmp.ne.s32.totalorder %s443, %s457
      %p459 = scmp.eq.s32.totalorder %s40, 0
      %p460 = por %p458, %p459
      %s461 = ssub.s32 %s34, %s41
      %p462 = scmp.eq.s32.totalorder %s461, 0
      %s464 = sadd.s32 %s463, 1
      %s465 = scalar_select %p462, %s463, %s464
      %p468 = pneg %p462
      %p469 = scmp.eq.s32.totalorder %s34, 1
      %p470 = por %p468, %p469
      %p471 = scmp.ne.s32.totalorder %s463, %s466
      %p472 = scmp.eq.s32.totalorder %s34, 0
      %p473 = por %p471, %p472
      %p474 = scmp.ne.s32.totalorder %s463, %s466
      %p475 = scmp.eq.s32.totalorder %s39, 1
      %p476 = por %p474, %p475
      %p477 = scmp.ne.s32.totalorder %s466, %s467
      %p478 = scmp.eq.s32.totalorder %s39, 0
      %p479 = por %p477, %p478
      %p480 = scmp.ne.s32.totalorder %s466, %s467
      %p481 = scmp.eq.s32.totalorder %s40, 1
      %p482 = por %p480, %p481
      %p484 = scmp.ne.s32.totalorder %s467, %s483
      %p485 = scmp.eq.s32.totalorder %s40, 0
      %p486 = por %p484, %p485
      %p487 = scmp.le.s32.totalorder 1, %s34
      %p488 = scmp.lt.s32.totalorder %s34, 3
      %p489 = pnand %p487, %p488
      %p490 = pneg %p489
      // Predicated region
      $region9: #{tpu_custom_call.1} parent=5 // pred_check
        _
      $region10: #{tpu_custom_call.1} parent=5 // pred_check_branch
        %492 = sbr.rel (%p489) target = $region12
      $region11: #{tpu_custom_call.1} parent=5 // pred_region
        %s493 = ssub.s32 %s34, 1
        // Predicated region
        $region13: #{tpu_custom_call.1} parent=11 // pred_check
          %p494 = pneg %p159
        $region14: #{tpu_custom_call.1} parent=11 // pred_check_branch
          %496 = sbr.rel (%p494) target = $region16
        $region15: #{tpu_custom_call.1} parent=11 // pred_region
          _
        $region16: #{tpu_custom_call.1} parent=11 // pred_fallthru
          _
        // Predicated region
        $region17: #{tpu_custom_call.1} parent=11 // pred_check
          %p497 = pneg %p180
        $region18: #{tpu_custom_call.1} parent=11 // pred_check_branch
          %499 = sbr.rel (%p497) target = $region20
        $region19: #{tpu_custom_call.1} parent=11 // pred_region
          %s501 = ssub.s32 16, 16
          %502 = vsyncadd [#allocation7], %s501
          %s504 = sshll.u32 [#allocation6], 4
          %s505 = int_to_ptr.vmem [resolvable:$true] %s504
          %507 = dma.hbm_to_vmem [thread:$0]  %s5, 16, %s505, [#allocation7]
        $region20: #{tpu_custom_call.1} parent=11 // pred_fallthru
          _
        // Predicated region
        $region21: #{tpu_custom_call.1} parent=11 // pred_check
          %p508 = pneg %p201
        $region22: #{tpu_custom_call.1} parent=11 // pred_check_branch
          %510 = sbr.rel (%p508) target = $region24
        $region23: #{tpu_custom_call.1} parent=11 // pred_region
          %s512 = ssub.s32 16, 16
          %513 = vsyncadd [#allocation7], %s512
          %s515 = sshll.u32 [#allocation8], 4
          %s516 = int_to_ptr.vmem [resolvable:$true] %s515
          %518 = dma.hbm_to_vmem [thread:$0]  %s6, 16, %s516, [#allocation7]
        $region24: #{tpu_custom_call.1} parent=11 // pred_fallthru
          _
        // Predicated region
        $region25: #{tpu_custom_call.1} parent=11 // pred_check
          %p519 = pneg %p222
        $region26: #{tpu_custom_call.1} parent=11 // pred_check_branch
          %521 = sbr.rel (%p519) target = $region28
        $region27: #{tpu_custom_call.1} parent=11 // pred_region
          %s523 = ssub.s32 16, 16
          %524 = vsyncadd [#allocation10], %s523
          %s526 = sshll.u32 [#allocation9], 4
          %s527 = int_to_ptr.vmem [resolvable:$true] %s526
          %529 = dma.hbm_to_vmem [thread:$0]  %s7, 16, %s527, [#allocation10]
        $region28: #{tpu_custom_call.1} parent=11 // pred_fallthru
          _
        // Predicated region
        $region29: #{tpu_custom_call.1} parent=11 // pred_check
          %p530 = pneg %p243
        $region30: #{tpu_custom_call.1} parent=11 // pred_check_branch
          %532 = sbr.rel (%p530) target = $region32
        $region31: #{tpu_custom_call.1} parent=11 // pred_region
          _
        $region32: #{tpu_custom_call.1} parent=11 // pred_fallthru
          _
        // Predicated region
        $region33: #{tpu_custom_call.1} parent=11 // pred_check
          %p533 = pneg %p264
        $region34: #{tpu_custom_call.1} parent=11 // pred_check_branch
          %535 = sbr.rel (%p533) target = $region36
        $region35: #{tpu_custom_call.1} parent=11 // pred_region
          _
        $region36: #{tpu_custom_call.1} parent=11 // pred_fallthru
          _
        // Predicated region
        $region37: #{tpu_custom_call.1} parent=11 // pred_check
          %p536 = pneg %p285
        $region38: #{tpu_custom_call.1} parent=11 // pred_check_branch
          %538 = sbr.rel (%p536) target = $region40
        $region39: #{tpu_custom_call.1} parent=11 // pred_region
          %s540 = ssub.s32 16, 16
          %541 = vsyncadd [#allocation10], %s540
          %s543 = sshll.u32 [#allocation11], 4
          %s544 = int_to_ptr.vmem [resolvable:$true] %s543
          %546 = dma.hbm_to_vmem [thread:$0]  %s10, 16, %s544, [#allocation10]
        $region40: #{tpu_custom_call.1} parent=11 // pred_fallthru
          _
        // Predicated region
        $region41: #{tpu_custom_call.1} parent=11 // pred_check
          %p547 = pneg %p306
        $region42: #{tpu_custom_call.1} parent=11 // pred_check_branch
          %549 = sbr.rel (%p547) target = $region44
        $region43: #{tpu_custom_call.1} parent=11 // pred_region
          %s551 = ssub.s32 16, 16
          %552 = vsyncadd [#allocation13], %s551
          %s554 = sshll.u32 [#allocation12], 4
          %s555 = int_to_ptr.vmem [resolvable:$true] %s554
          %557 = dma.hbm_to_vmem [thread:$0]  %s11, 16, %s555, [#allocation13]
        $region44: #{tpu_custom_call.1} parent=11 // pred_fallthru
          _
        // Predicated region
        $region45: #{tpu_custom_call.1} parent=11 // pred_check
          %p558 = pneg %p327
        $region46: #{tpu_custom_call.1} parent=11 // pred_check_branch
          %560 = sbr.rel (%p558) target = $region48
        $region47: #{tpu_custom_call.1} parent=11 // pred_region
          _
        $region48: #{tpu_custom_call.1} parent=11 // pred_fallthru
          _
        // Predicated region
        $region49: #{tpu_custom_call.1} parent=11 // pred_check
          %p561 = pneg %p348
        $region50: #{tpu_custom_call.1} parent=11 // pred_check_branch
          %563 = sbr.rel (%p561) target = $region52
        $region51: #{tpu_custom_call.1} parent=11 // pred_region
          _
        $region52: #{tpu_custom_call.1} parent=11 // pred_fallthru
          _
        // Predicated region
        $region53: #{tpu_custom_call.1} parent=11 // pred_check
          %p564 = pneg %p369
        $region54: #{tpu_custom_call.1} parent=11 // pred_check_branch
          %566 = sbr.rel (%p564) target = $region56
        $region55: #{tpu_custom_call.1} parent=11 // pred_region
          _
        $region56: #{tpu_custom_call.1} parent=11 // pred_fallthru
          _
        // Predicated region
        $region57: #{tpu_custom_call.1} parent=11 // pred_check
          %p567 = pneg %p390
        $region58: #{tpu_custom_call.1} parent=11 // pred_check_branch
          %569 = sbr.rel (%p567) target = $region60
        $region59: #{tpu_custom_call.1} parent=11 // pred_region
          _
        $region60: #{tpu_custom_call.1} parent=11 // pred_fallthru
          _
        // Predicated region
        $region61: #{tpu_custom_call.1} parent=11 // pred_check
          %p570 = pneg %p411
        $region62: #{tpu_custom_call.1} parent=11 // pred_check_branch
          %572 = sbr.rel (%p570) target = $region64
        $region63: #{tpu_custom_call.1} parent=11 // pred_region
          _
        $region64: #{tpu_custom_call.1} parent=11 // pred_fallthru
          _
        // Predicated region
        $region65: #{tpu_custom_call.1} parent=11 // pred_check
          %p573 = pneg %p432
        $region66: #{tpu_custom_call.1} parent=11 // pred_check_branch
          %575 = sbr.rel (%p573) target = $region68
        $region67: #{tpu_custom_call.1} parent=11 // pred_region
          _
        $region68: #{tpu_custom_call.1} parent=11 // pred_fallthru
          _
        // Predicated region
        $region69: #{tpu_custom_call.1} parent=11 // pred_check
          %p576 = pneg %p453
        $region70: #{tpu_custom_call.1} parent=11 // pred_check_branch
          %578 = sbr.rel (%p576) target = $region72
        $region71: #{tpu_custom_call.1} parent=11 // pred_region
          _
        $region72: #{tpu_custom_call.1} parent=11 // pred_fallthru
          _
      $region12: #{tpu_custom_call.1} parent=5 // pred_fallthru
        _
      %p579 = scmp.lt.s32.totalorder %s34, 2
      // Predicated region
      $region73: #{tpu_custom_call.1} parent=5 // pred_check
        %p580 = pneg %p579
      $region74: #{tpu_custom_call.1} parent=5 // pred_check_branch
        %582 = sbr.rel (%p580) target = $region76
      $region75: #{tpu_custom_call.1} parent=5 // pred_region
        // Predicated region
        $region77: #{tpu_custom_call.1} parent=75 // pred_check
          %p583 = pneg %p54
        $region78: #{tpu_custom_call.1} parent=75 // pred_check_branch
          %585 = sbr.rel (%p583) target = $region80
        $region79: #{tpu_custom_call.1} parent=75 // pred_region
          %s586 = smul.u32 2, %s34
          %p587 = scmp.lt.s32.totalorder %s586, 3
          %s588 = scalar_select %p587, %s586, 3
          %s589 = smul.addr %s588, 2
          %s590 = smul.addr %s589, 4
          %s591 = scalar_lea.vmem %s0, %s590
          %s592 = smul.u32 2, %s34
        $region80: #{tpu_custom_call.1} parent=75 // pred_fallthru
          _
        // Predicated region
        $region81: #{tpu_custom_call.1} parent=75 // pred_check
          %p593 = pneg %p80
        $region82: #{tpu_custom_call.1} parent=75 // pred_check_branch
          %595 = sbr.rel (%p593) target = $region84
        $region83: #{tpu_custom_call.1} parent=75 // pred_region
          %s596 = smul.u32 2, %s34
          %p597 = scmp.lt.s32.totalorder %s596, 3
          %s598 = scalar_select %p597, %s596, 3
          %s599 = smul.addr %s598, 8
          %s600 = scalar_lea.vmem %s1, %s599
          %s601 = smul.u32 2, %s34
        $region84: #{tpu_custom_call.1} parent=75 // pred_fallthru
          _
        // Predicated region
        $region85: #{tpu_custom_call.1} parent=75 // pred_check
          %p602 = pneg %p106
        $region86: #{tpu_custom_call.1} parent=75 // pred_check_branch
          %604 = sbr.rel (%p602) target = $region88
        $region87: #{tpu_custom_call.1} parent=75 // pred_region
          %p605 = scmp.lt.s32.totalorder %s34, 1
          %s606 = scalar_select %p605, %s34, 1
          %s607 = smul.addr %s606, 8
          %s608 = scalar_lea.vmem %s2, %s607
        $region88: #{tpu_custom_call.1} parent=75 // pred_fallthru
          _
        // Predicated region
        $region89: #{tpu_custom_call.1} parent=75 // pred_check
          %p609 = pneg %p132
        $region90: #{tpu_custom_call.1} parent=75 // pred_check_branch
          %611 = sbr.rel (%p609) target = $region92
        $region91: #{tpu_custom_call.1} parent=75 // pred_region
          %s612 = sand.u32 %s122, 1
          %s613 = scalar_lea.sflag [#allocation4], %s612
          %s614 = sand.u32 %s122, 1
          %s615 = smul.addr %s614, 2
          %s616 = scalar_lea.vmem [#allocation3], %s615
          %s618 = ssub.s32 32, 32
          %619 = vsyncadd %s613, %s618
          %s620 = smul.addr %s34, 32
          %s621 = scalar_lea.hbm %s3, %s620
          %s623 = sshll.u32 %s616, 4
          %s624 = int_to_ptr.vmem [resolvable:$true] %s623
          %626 = dma.hbm_to_vmem [thread:$0]  %s621, 32, %s624, %s613
        $region92: #{tpu_custom_call.1} parent=75 // pred_fallthru
          _
      $region76: #{tpu_custom_call.1} parent=5 // pred_fallthru
        _
      %p627 = scmp.le.s32.totalorder 1, %s34
      %p628 = scmp.lt.s32.totalorder %s34, 3
      %p629 = pnand %p627, %p628
      %p630 = pneg %p629
      // Predicated region
      $region93: #{tpu_custom_call.1} parent=5 // pred_check
        _
      $region94: #{tpu_custom_call.1} parent=5 // pred_check_branch
        %632 = sbr.rel (%p629) target = $region96
      $region95: #{tpu_custom_call.1} parent=5 // pred_region
        %s633 = ssub.s32 %s34, 1
        %s634 = sand.u32 %s125, 1
        %s635 = scalar_lea.sflag [#allocation4], %s634
        %s636 = sand.u32 %s125, 1
        %s637 = smul.addr %s636, 2
        %s638 = scalar_lea.vmem [#allocation3], %s637
        // Predicated region
        $region97: #{tpu_custom_call.1} parent=95 // pred_check
          %p639 = pneg %p138
        $region98: #{tpu_custom_call.1} parent=95 // pred_check_branch
          %641 = sbr.rel (%p639) target = $region100
        $region99: #{tpu_custom_call.1} parent=95 // pred_region
          %642 = dma.done %s635, 32
        $region100: #{tpu_custom_call.1} parent=95 // pred_fallthru
          _
        // Predicated region
        $region101: #{tpu_custom_call.1} parent=95 // pred_check
          %p643 = pneg %p180
        $region102: #{tpu_custom_call.1} parent=95 // pred_check_branch
          %645 = sbr.rel (%p643) target = $region104
        $region103: #{tpu_custom_call.1} parent=95 // pred_region
          %646 = dma.done [#allocation7], 16
        $region104: #{tpu_custom_call.1} parent=95 // pred_fallthru
          _
        // Predicated region
        $region105: #{tpu_custom_call.1} parent=95 // pred_check
          %p647 = pneg %p201
        $region106: #{tpu_custom_call.1} parent=95 // pred_check_branch
          %649 = sbr.rel (%p647) target = $region108
        $region107: #{tpu_custom_call.1} parent=95 // pred_region
          %650 = dma.done [#allocation7], 16
        $region108: #{tpu_custom_call.1} parent=95 // pred_fallthru
          _
        // Predicated region
        $region109: #{tpu_custom_call.1} parent=95 // pred_check
          %p651 = pneg %p222
        $region110: #{tpu_custom_call.1} parent=95 // pred_check_branch
          %653 = sbr.rel (%p651) target = $region112
        $region111: #{tpu_custom_call.1} parent=95 // pred_region
          %654 = dma.done [#allocation10], 16
        $region112: #{tpu_custom_call.1} parent=95 // pred_fallthru
          _
        // Predicated region
        $region113: #{tpu_custom_call.1} parent=95 // pred_check
          %p655 = pneg %p285
        $region114: #{tpu_custom_call.1} parent=95 // pred_check_branch
          %657 = sbr.rel (%p655) target = $region116
        $region115: #{tpu_custom_call.1} parent=95 // pred_region
          %658 = dma.done [#allocation10], 16
        $region116: #{tpu_custom_call.1} parent=95 // pred_fallthru
          _
        // Predicated region
        $region117: #{tpu_custom_call.1} parent=95 // pred_check
          %p659 = pneg %p306
        $region118: #{tpu_custom_call.1} parent=95 // pred_check_branch
          %661 = sbr.rel (%p659) target = $region120
        $region119: #{tpu_custom_call.1} parent=95 // pred_region
          %662 = dma.done [#allocation13], 16
        $region120: #{tpu_custom_call.1} parent=95 // pred_fallthru
          _
        %s663 = smul.u32 2, %s39
        %p664 = scmp.lt.s32.totalorder %s663, 3
        %s665 = scalar_select %p664, %s663, 3
        %s666 = smul.addr %s665, 2
        %s667 = smul.addr %s666, 4
        %s668 = scalar_lea.vmem %s0, %s667
        %p669 = pneg %p60
        %p670 = pneg %p57
        %s671 = smul.u32 2, %s39
        %p672 = scmp.lt.s32.totalorder %s671, 3
        %s673 = scalar_select %p672, %s671, 3
        %s674 = smul.addr %s673, 8
        %s675 = scalar_lea.vmem %s1, %s674
        %p676 = pneg %p86
        %p677 = pneg %p83
        %p678 = scmp.lt.s32.totalorder %s39, 1
        %s679 = scalar_select %p678, %s39, 1
        %s680 = smul.addr %s679, 8
        %s681 = scalar_lea.vmem %s2, %s680
        %p682 = pneg %p112
        %p683 = pneg %p109
        %s684 = sand.u32 %s125, 1
        %s685 = scalar_lea.sflag [#allocation4], %s684
        %s686 = sand.u32 %s125, 1
        %s687 = smul.addr %s686, 2
        %s688 = scalar_lea.vmem [#allocation3], %s687
        %p689 = pneg %p138
        %p690 = pneg %p135
        %p691 = pneg %p159
        %p692 = pneg %p156
        %p693 = pneg %p180
        %p694 = pneg %p177
        %p695 = pneg %p201
        %p696 = pneg %p198
        %p697 = pneg %p222
        %p698 = pneg %p219
        %p699 = pneg %p243
        %p700 = pneg %p240
        %p701 = pneg %p264
        %p702 = pneg %p261
        %p703 = pneg %p285
        %p704 = pneg %p282
        %p705 = pneg %p306
        %p706 = pneg %p303
        %p707 = pneg %p327
        %p708 = pneg %p324
        %p709 = pneg %p348
        %p710 = pneg %p345
        %p711 = pneg %p369
        %p712 = pneg %p366
        %p713 = pneg %p390
        %p714 = pneg %p387
        %p715 = pneg %p411
        %p716 = pneg %p408
        %p717 = pneg %p432
        %p718 = pneg %p429
        %p719 = pneg %p453
        %p720 = pneg %p450
        %p721 = pneg %p479
        %p722 = pneg %p476
        %s723 = sand.u32 %s466, 1
        %s724 = scalar_lea.sflag [#allocation5], %s723
        %s725 = sand.u32 %s466, 1
        %s726 = smul.addr %s725, 16
        %s727 = scalar_lea.vmem [#allocation14], %s726
        %s728 = smul.u32 2, %s39
        %p729 = scmp.lt.s32.totalorder %s728, 3
        %s730 = scalar_select %p729, %s728, 3
        %s731 = smul.addr %s730, 2
        %s732 = smul.addr %s731, 4
        %s733 = scalar_lea.vmem %s0, %s732
        %s734 = smul.u32 2, %s39
        %s735 = smul.u32 2, %s39
        %p736 = scmp.lt.s32.totalorder %s735, 3
        %s737 = scalar_select %p736, %s735, 3
        %s738 = smul.addr %s737, 8
        %s739 = scalar_lea.vmem %s1, %s738
        %s740 = smul.u32 2, %s39
        %p741 = scmp.lt.s32.totalorder %s39, 1
        %s742 = scalar_select %p741, %s39, 1
        %s743 = smul.addr %s742, 8
        %s744 = scalar_lea.vmem %s2, %s743
        %s745 = smul.u32 2, %s39
        %v747 = vld [vmem:[%s733] sm:$0xf]
        %v748 = vld [vmem:[%s733 + $0x4] sm:$0xf]
        %v749 = vld [vmem:[%s733 + $0x8] sm:$0xf]
        %v750 = vld [vmem:[%s733 + $0xc] sm:$0xf]
        %v751 = vunpack.c.l.bf16 %v747
        %v752 = vunpack.c.l.bf16 %v748
        %v753 = vunpack.c.l.bf16 %v749
        %v754 = vunpack.c.l.bf16 %v750
        %v755 = vld [vmem:[%s739] sm:$0xff]
        %v756 = vld [vmem:[%s739 + $0x8] sm:$0xff]
        %v757 = vld [vmem:[%s4] sm:$0x1]
        %v758 = vld [vmem:[#allocation6] sm:$0x1]
        %vm759 = vcmask 261120
        %v760 = vsel %vm759, %v751, 0.0
        %761 = vadd.xlane.f32.xlu0 %v760
        %v762 = vpop.xlane.xlu0 %761
        %v763 = vsel %vm759, %v752, 0.0
        %764 = vadd.xlane.f32.xlu0 %v763
        %v765 = vpop.xlane.xlu0 %764
        %v766 = vsel %vm759, %v753, 0.0
        %767 = vadd.xlane.f32.xlu0 %v766
        %v768 = vpop.xlane.xlu0 %767
        %v769 = vsel %vm759, %v754, 0.0
        %770 = vadd.xlane.f32.xlu0 %v769
        %v771 = vpop.xlane.xlu0 %770
        %v772 = vrcp.pop 32.0
        %v773 = vmul.f32 %v762, %v772
        %v774 = vmul.f32 %v765, %v772
        %v775 = vmul.f32 %v768, %v772
        %v776 = vmul.f32 %v771, %v772
        %v777 = vsub.f32 %v751, %v773
        %v778 = vsub.f32 %v752, %v774
        %v779 = vsub.f32 %v753, %v775
        %v780 = vsub.f32 %v754, %v776
        %v781 = vmul.f32 %v777, %v777
        %v782 = vmul.f32 %v778, %v778
        %v783 = vmul.f32 %v779, %v779
        %v784 = vmul.f32 %v780, %v780
        %v785 = vsel %vm759, %v781, 0.0
        %786 = vadd.xlane.f32.xlu0 %v785
        %v787 = vpop.xlane.xlu0 %786
        %v788 = vsel %vm759, %v782, 0.0
        %789 = vadd.xlane.f32.xlu0 %v788
        %v790 = vpop.xlane.xlu0 %789
        %v791 = vsel %vm759, %v783, 0.0
        %792 = vadd.xlane.f32.xlu0 %v791
        %v793 = vpop.xlane.xlu0 %792
        %v794 = vsel %vm759, %v784, 0.0
        %795 = vadd.xlane.f32.xlu0 %v794
        %v796 = vpop.xlane.xlu0 %795
        %v797 = vmul.f32 %v787, %v772
        %v798 = vmul.f32 %v790, %v772
        %v799 = vmul.f32 %v793, %v772
        %v800 = vmul.f32 %v796, %v772
        %v801 = vadd.f32 %v797, 1e-05
        %v802 = vadd.f32 %v798, 1e-05
        %v803 = vadd.f32 %v799, 1e-05
        %v804 = vadd.f32 %v800, 1e-05
        %v805 = vrsqrt.pop %v801
        %v806 = vrsqrt.pop %v802
        %v807 = vrsqrt.pop %v803
        %v808 = vrsqrt.pop %v804
        %v809 = vmul.f32 %v777, %v805
        %v810 = vmul.f32 %v778, %v806
        %v811 = vmul.f32 %v779, %v807
        %v812 = vmul.f32 %v780, %v808
        %v814 = vlaneseq
        %v815 = vshrl.u32 %v814, 7
        %v816 = vsub.s32 0, %v815
        %v817 = vrot.slane %v757, %v816
        %v819 = vmul.f32 %v809, %v817
        %v820 = vmul.f32 %v810, %v817
        %v821 = vmul.f32 %v811, %v817
        %v822 = vmul.f32 %v812, %v817
        %v824 = vlaneseq
        %v825 = vshrl.u32 %v824, 7
        %v826 = vsub.s32 0, %v825
        %v827 = vrot.slane %v758, %v826
        %v829 = vadd.f32 %v819, %v827
        %v830 = vadd.f32 %v820, %v827
        %v831 = vadd.f32 %v821, %v827
        %v832 = vadd.f32 %v822, %v827
        %v833 = vpack.c.bf16 %v830, %v829
        %v834 = vpack.c.bf16 %v832, %v831
        %v835 = vld [vmem:[#allocation8] sm:$0x1]
        %v836 = vld [vmem:[#allocation9] sm:$0x1]
        %v837 = vsel %vm759, %v755, 0.0
        %838 = vadd.xlane.f32.xlu0 %v837
        %v839 = vpop.xlane.xlu0 %838
        %v840 = vsel %vm759, %v756, 0.0
        %841 = vadd.xlane.f32.xlu0 %v840
        %v842 = vpop.xlane.xlu0 %841
        %v843 = vmul.f32 %v839, %v772
        %v844 = vmul.f32 %v842, %v772
        %v845 = vsub.f32 %v755, %v843
        %v846 = vsub.f32 %v756, %v844
        %v847 = vmul.f32 %v845, %v845
        %v848 = vmul.f32 %v846, %v846
        %v849 = vsel %vm759, %v847, 0.0
        %850 = vadd.xlane.f32.xlu0 %v849
        %v851 = vpop.xlane.xlu0 %850
        %v852 = vsel %vm759, %v848, 0.0
        %853 = vadd.xlane.f32.xlu0 %v852
        %v854 = vpop.xlane.xlu0 %853
        %v855 = vmul.f32 %v851, %v772
        %v856 = vmul.f32 %v854, %v772
        %v857 = vadd.f32 %v855, 1e-05
        %v858 = vadd.f32 %v856, 1e-05
        %v859 = vrsqrt.pop %v857
        %v860 = vrsqrt.pop %v858
        %v861 = vmul.f32 %v845, %v859
        %v862 = vmul.f32 %v846, %v860
        %v864 = vlaneseq
        %v865 = vshrl.u32 %v864, 7
        %v866 = vsub.s32 0, %v865
        %v867 = vrot.slane %v835, %v866
        %v869 = vmul.f32 %v861, %v867
        %v870 = vmul.f32 %v862, %v867
        %v872 = vlaneseq
        %v873 = vshrl.u32 %v872, 7
        %v874 = vsub.s32 0, %v873
        %v875 = vrot.slane %v836, %v874
        %v877 = vadd.f32 %v869, %v875
        %v878 = vadd.f32 %v870, %v875
        %v879 = vpack.c.bf16 %v878, %v877
        %v880 = vld [vmem:[%s8] sm:$0xf]
        %v881 = vld [vmem:[%s8 + $0x4] sm:$0xf]
        %v882 = vld [vmem:[%s8 + $0x8] sm:$0xf]
        %v883 = vld [vmem:[%s8 + $0xc] sm:$0xf]
        %v888 = vunpack.c.l.b16 %v880
        %v889 = vunpack.c.l.b16 %v881
        %v890 = vunpack.c.l.b16 %v882
        %v891 = vunpack.c.l.b16 %v883
        %v892 = vpack.c.b16 %v889, %v888
        %v893 = vpack.c.b16 %v891, %v890
        %v897 = vsel %vm759, %v879, 0
        %899 = vmatprep.subr.bf16.mxu0 0
        %900 = vmatpush1.bf16.msra.mxu0 %v892
        %901 = vmatprep.subr.bf16.mxu0 0
        %902 = vmatpush1.bf16.msra.mxu0 %v893
        %903 = vmatprep.subr.bf16.mxu0 0
        %904 = vmatpush1.bf16.msra.mxu0 0
        %905 = vmatprep.subr.bf16.mxu0 0
        %906 = vmatpush1.bf16.msra.mxu0 0
        %907 = vmatprep.subr.bf16.mxu0 0
        %908 = vmatpush1.bf16.msra.mxu0 0
        %909 = vmatprep.subr.bf16.mxu0 0
        %910 = vmatpush1.bf16.msra.mxu0 0
        %911 = vmatprep.subr.bf16.mxu0 0
        %912 = vmatpush1.bf16.msra.mxu0 0
        %913 = vmatprep.subr.bf16.mxu0 0
        %914 = vmatpush1.bf16.msra.mxu0 0
        %915 = vmatprep.subr.bf16.mxu0 0
        %916 = vmatpush1.bf16.msra.mxu0 0
        %917 = vmatprep.subr.bf16.mxu0 0
        %918 = vmatpush1.bf16.msra.mxu0 0
        %919 = vmatprep.subr.bf16.mxu0 0
        %920 = vmatpush1.bf16.msra.mxu0 0
        %921 = vmatprep.subr.bf16.mxu0 0
        %922 = vmatpush1.bf16.msra.mxu0 0
        %923 = vmatprep.subr.bf16.mxu0 0
        %924 = vmatpush1.bf16.msra.mxu0 0
        %925 = vmatprep.subr.bf16.mxu0 0
        %926 = vmatpush1.bf16.msra.mxu0 0
        %927 = vmatprep.subr.bf16.mxu0 0
        %928 = vmatpush1.bf16.msra.mxu0 0
        %929 = vmatprep.subr.bf16.mxu0 0
        %930 = vmatpush1.bf16.msra.mxu0 0
        %931 = vmatprep.mubr.bf16.mxu0 0
        %932 = vmatmul.mubr.bf16.gmra.mrb[0].mxu0 %v897
        %v933 = vpop.f32.mrb[0].mxu0
        %v934 = vadd.f32 0.0, %v933
        %v935 = vpop.f32.mrb[0].mxu0
        %v936 = vpop.f32.mrb[0].mxu0
        %v937 = vadd.f32 0.0, %v936
        %v938 = vpop.f32.mrb[0].mxu0
        %939 = vdwg.mxu0
        %v940 = vld [vmem:[%s9] sm:$0xf]
        %v941 = vld [vmem:[%s9 + $0x4] sm:$0xf]
        %v942 = vld [vmem:[%s9 + $0x8] sm:$0xf]
        %v943 = vld [vmem:[%s9 + $0xc] sm:$0xf]
        %v948 = vunpack.c.l.b16 %v940
        %v949 = vunpack.c.l.b16 %v941
        %v950 = vunpack.c.l.b16 %v942
        %v951 = vunpack.c.l.b16 %v943
        %v952 = vpack.c.b16 %v949, %v948
        %v953 = vpack.c.b16 %v951, %v950
        %v957 = vsel %vm759, %v833, 0
        %v960 = vsel %vm759, %v834, 0
        %962 = vmatprep.subr.bf16.mxu0 0
        %963 = vmatpush1.bf16.msra.mxu0 %v952
        %964 = vmatprep.subr.bf16.mxu0 0
        %965 = vmatpush1.bf16.msra.mxu0 %v953
        %966 = vmatprep.subr.bf16.mxu0 0
        %967 = vmatpush1.bf16.msra.mxu0 0
        %968 = vmatprep.subr.bf16.mxu0 0
        %969 = vmatpush1.bf16.msra.mxu0 0
        %970 = vmatprep.subr.bf16.mxu0 0
        %971 = vmatpush1.bf16.msra.mxu0 0
        %972 = vmatprep.subr.bf16.mxu0 0
        %973 = vmatpush1.bf16.msra.mxu0 0
        %974 = vmatprep.subr.bf16.mxu0 0
        %975 = vmatpush1.bf16.msra.mxu0 0
        %976 = vmatprep.subr.bf16.mxu0 0
        %977 = vmatpush1.bf16.msra.mxu0 0
        %978 = vmatprep.subr.bf16.mxu0 0
        %979 = vmatpush1.bf16.msra.mxu0 0
        %980 = vmatprep.subr.bf16.mxu0 0
        %981 = vmatpush1.bf16.msra.mxu0 0
        %982 = vmatprep.subr.bf16.mxu0 0
        %983 = vmatpush1.bf16.msra.mxu0 0
        %984 = vmatprep.subr.bf16.mxu0 0
        %985 = vmatpush1.bf16.msra.mxu0 0
        %986 = vmatprep.subr.bf16.mxu0 0
        %987 = vmatpush1.bf16.msra.mxu0 0
        %988 = vmatprep.subr.bf16.mxu0 0
        %989 = vmatpush1.bf16.msra.mxu0 0
        %990 = vmatprep.subr.bf16.mxu0 0
        %991 = vmatpush1.bf16.msra.mxu0 0
        %992 = vmatprep.subr.bf16.mxu0 0
        %993 = vmatpush1.bf16.msra.mxu0 0
        %994 = vmatprep.mubr.bf16.mxu0 0
        %995 = vmatmul.mubr.bf16.gmra.mrb[0].mxu0 %v957
        %v996 = vpop.f32.mrb[0].mxu0
        %v997 = vadd.f32 0.0, %v996
        %v998 = vpop.f32.mrb[0].mxu0
        %v999 = vpop.f32.mrb[0].mxu0
        %v1000 = vadd.f32 0.0, %v999
        %v1001 = vpop.f32.mrb[0].mxu0
        %1002 = vmatprep.mubr.bf16.mxu0 0
        %1003 = vmatmul.mubr.bf16.gmra.mrb[0].mxu0 %v960
        %v1004 = vpop.f32.mrb[0].mxu0
        %v1005 = vadd.f32 0.0, %v1004
        %v1006 = vpop.f32.mrb[0].mxu0
        %v1007 = vpop.f32.mrb[0].mxu0
        %v1008 = vadd.f32 0.0, %v1007
        %v1009 = vpop.f32.mrb[0].mxu0
        %1010 = vdwg.mxu0
        %v1011 = vld [vmem:[#allocation11] sm:$0x1]
        %v1012 = vld [vmem:[#allocation12] sm:$0x1]
        %v1013 = vld [vmem:[%s744] sm:$0xff]
        %v1014 = vld [vmem:[%s638] sm:$0x3]
        %1016 = vrot.lane.b32.xlu0 %v934, 96
        %v1017 = vpop.permute.xlu0 %1016
        %1020 = vset.pattern.permute.xlu0 0
        %1021 = vperm.xlu0 %1020, %v1013
        %v1022 = vpop.permute.xlu0 %1021
        %v1024 = vlaneseq
        %v1025 = vshrl.u32 %v1024, 7
        %v1026 = vsub.s32 0, %v1025
        %v1027 = vrot.slane %v1014, %v1026
        %v1028 = vmul.f32 %v1022, %v1027
        %v1029 = vsub.f32 1.0, %v1028
        %v1030 = vmul.f32 %v1029, -1e+30
        %v1031 = vmul.f32 %v934, %v934
        %vm1032 = vcmask 64512
        %v1033 = vsel %vm1032, %v1031, 0.0
        %1034 = vadd.xlane.f32.xlu0 %v1033
        %v1035 = vpop.xlane.xlu0 %1034
        %v1036 = vrsqrt.pop %v1035
        %v1037 = vmul.f32 %v1035, %v1036
        %vm1038 = vcmp.eq.f32.partialorder %v1035, inf
        %v1039 = vsel %vm1038, %v1035, %v1037
        %vm1040 = vcmp.eq.f32.partialorder %v1035, 0.0
        %v1041 = vand.u32 %v1035, 2147483648
        %v1042 = vsel %vm1040, %v1041, %v1039
        %v1043 = vmul.f32 %v1042, 0.35355338
        %v1044 = vmax.f32 %v1043, 1e-08
        %v1045 = vrcp.pop %v1044
        %v1046 = vmul.f32 %v934, %v1045
        %v1048 = vlaneseq
        %v1049 = vshrl.u32 %v1048, 7
        %v1050 = vsub.s32 0, %v1049
        %v1051 = vrot.slane %v1011, %v1050
        %v1053 = vmul.f32 %v1046, %v1051
        %v1054 = vmul.f32 %v997, %v997
        %v1055 = vmul.f32 %v1000, %v1000
        %v1056 = vmul.f32 %v1017, %v1017
        %v1057 = vsel %vm1032, %v1054, 0.0
        %1058 = vadd.xlane.f32.xlu0 %v1057
        %v1059 = vpop.xlane.xlu0 %1058
        %v1060 = vsel %vm1032, %v1055, 0.0
        %1061 = vadd.xlane.f32.xlu0 %v1060
        %v1062 = vpop.xlane.xlu0 %1061
        %v1063 = vsel %vm1032, %v1056, 0.0
        %1064 = vadd.xlane.f32.xlu0 %v1063
        %v1065 = vpop.xlane.xlu0 %1064
        %v1066 = vrsqrt.pop %v1059
        %v1067 = vmul.f32 %v1059, %v1066
        %vm1068 = vcmp.eq.f32.partialorder %v1059, inf
        %v1069 = vsel %vm1068, %v1059, %v1067
        %vm1070 = vcmp.eq.f32.partialorder %v1059, 0.0
        %v1071 = vand.u32 %v1059, 2147483648
        %v1072 = vsel %vm1070, %v1071, %v1069
        %v1073 = vrsqrt.pop %v1062
        %v1074 = vmul.f32 %v1062, %v1073
        %vm1075 = vcmp.eq.f32.partialorder %v1062, inf
        %v1076 = vsel %vm1075, %v1062, %v1074
        %vm1077 = vcmp.eq.f32.partialorder %v1062, 0.0
        %v1078 = vand.u32 %v1062, 2147483648
        %v1079 = vsel %vm1077, %v1078, %v1076
        %v1080 = vrsqrt.pop %v1065
        %v1081 = vmul.f32 %v1065, %v1080
        %vm1082 = vcmp.eq.f32.partialorder %v1065, inf
        %v1083 = vsel %vm1082, %v1065, %v1081
        %vm1084 = vcmp.eq.f32.partialorder %v1065, 0.0
        %v1085 = vand.u32 %v1065, 2147483648
        %v1086 = vsel %vm1084, %v1085, %v1083
        %v1087 = vmul.f32 %v1072, 0.35355338
        %v1088 = vmul.f32 %v1079, 0.35355338
        %v1089 = vmul.f32 %v1086, 0.35355338
        %v1090 = vmax.f32 %v1087, 1e-08
        %v1091 = vmax.f32 %v1088, 1e-08
        %v1092 = vmax.f32 %v1089, 1e-08
        %v1093 = vrcp.pop %v1090
        %v1094 = vmul.f32 %v997, %v1093
        %v1095 = vrcp.pop %v1091
        %v1096 = vmul.f32 %v1000, %v1095
        %v1097 = vrcp.pop %v1092
        %v1098 = vmul.f32 %v1017, %v1097
        %v1100 = vlaneseq
        %v1101 = vshrl.u32 %v1100, 7
        %v1102 = vsub.s32 0, %v1101
        %v1103 = vrot.slane %v1012, %v1102
        %v1105 = vmul.f32 %v1094, %v1103
        %v1106 = vmul.f32 %v1096, %v1103
        %v1107 = vmul.f32 %v1098, %v1103
        %v1109 = vsel %vm1032, %v1053, 0
        %v1112 = vsel %vm1032, %v1105, 0
        %v1115 = vsel %vm1032, %v1106, 0
        %v1118 = vsel %vm1032, %v1107, 0
        %1120 = vmatprep.subr.mxu0 0.0
        %1121 = vmatpush1.xpose.msra.mxu0 %v1112
        %1122 = vmatprep.subr.mxu0 0.0
        %1123 = vmatpush1.xpose.msra.mxu0 %v1115
        %1124 = vmatprep.subr.mxu0 0.0
        %1125 = vmatpush1.xpose.msra.mxu0 %v1118
        %1126 = vmatprep.subr.mxu0 0.0
        %1127 = vmatpush1.xpose.msra.mxu0 0.0
        %1128 = vmatprep.subr.mxu0 0.0
        %1129 = vmatpush1.xpose.msra.mxu0 0.0
        %1130 = vmatprep.subr.mxu0 0.0
        %1131 = vmatpush1.xpose.msra.mxu0 0.0
        %1132 = vmatprep.subr.mxu0 0.0
        %1133 = vmatpush1.xpose.msra.mxu0 0.0
        %1134 = vmatprep.subr.mxu0 0.0
        %1135 = vmatpush1.xpose.msra.mxu0 0.0
        %1136 = vmatprep.subr.mxu0 0.0
        %1137 = vmatpush1.xpose.msra.mxu0 0.0
        %1138 = vmatprep.subr.mxu0 0.0
        %1139 = vmatpush1.xpose.msra.mxu0 0.0
        %1140 = vmatprep.subr.mxu0 0.0
        %1141 = vmatpush1.xpose.msra.mxu0 0.0
        %1142 = vmatprep.subr.mxu0 0.0
        %1143 = vmatpush1.xpose.msra.mxu0 0.0
        %1144 = vmatprep.subr.mxu0 0.0
        %1145 = vmatpush1.xpose.msra.mxu0 0.0
        %1146 = vmatprep.subr.mxu0 0.0
        %1147 = vmatpush1.xpose.msra.mxu0 0.0
        %1148 = vmatprep.subr.mxu0 0.0
        %1149 = vmatpush1.xpose.msra.mxu0 0.0
        %1150 = vmatprep.subr.mxu0 0.0
        %1151 = vmatpush1.xpose.msra.mxu0 0.0
        %1152 = vmatprep.subr.mxu0 0.0
        %1153 = vmatpush1.xpose.msra.mxu0 0.0
        %1154 = vmatprep.subr.mxu0 0.0
        %1155 = vmatpush1.xpose.msra.mxu0 0.0
        %1156 = vmatprep.subr.mxu0 0.0
        %1157 = vmatpush1.xpose.msra.mxu0 0.0
        %1158 = vmatprep.subr.mxu0 0.0
        %1159 = vmatpush1.xpose.msra.mxu0 0.0
        %1160 = vmatprep.subr.mxu0 0.0
        %1161 = vmatpush1.xpose.msra.mxu0 0.0
        %1162 = vmatprep.subr.mxu0 0.0
        %1163 = vmatpush1.xpose.msra.mxu0 0.0
        %1164 = vmatprep.subr.mxu0 0.0
        %1165 = vmatpush1.xpose.msra.mxu0 0.0
        %1166 = vmatprep.subr.mxu0 0.0
        %1167 = vmatpush1.xpose.msra.mxu0 0.0
        %1168 = vmatprep.subr.mxu0 0.0
        %1169 = vmatpush1.xpose.msra.mxu0 0.0
        %1170 = vmatprep.subr.mxu0 0.0
        %1171 = vmatpush1.xpose.msra.mxu0 0.0
        %1172 = vmatprep.subr.mxu0 0.0
        %1173 = vmatpush1.xpose.msra.mxu0 0.0
        %1174 = vmatprep.subr.mxu0 0.0
        %1175 = vmatpush1.xpose.msra.mxu0 0.0
        %1176 = vmatprep.subr.mxu0 0.0
        %1177 = vmatpush1.xpose.msra.mxu0 0.0
        %1178 = vmatprep.subr.mxu0 0.0
        %1179 = vmatpush1.xpose.msra.mxu0 0.0
        %1180 = vmatprep.subr.mxu0 0.0
        %1181 = vmatpush1.xpose.msra.mxu0 0.0
        %1182 = vmatprep.subr.mxu0 0.0
        %1183 = vmatpush1.xpose.msra.mxu0 0.0
        %1184 = vmatprep.mubr.f32.mxu0 0.0
        %1185 = vmatmul.mubr.f32.gmra.mrb[0].mxu0 %v1109
        %v1186 = vpop.f32.mrb[0].mxu0
        %v1187 = vadd.f32 %v1030, %v1186
        %v1188 = vpop.f32.mrb[0].mxu0
        %1189 = vdwg.mxu0
        %vm1190 = vcmask 195584
        %v1191 = vsel %vm1190, %v1187, -inf
        %1192 = vmax.xlane.f32.xlu0 %v1191
        %v1193 = vpop.xlane.xlu0 %1192
        %v1194 = vsub.f32 %v1187, %v1193
        %v1195 = vmul.f32 %v1194, 1.442695
        %v1196 = vpow.pop %v1195
        %v1197 = vsel %vm1190, %v1196, 0.0
        %1198 = vadd.xlane.f32.xlu0 %v1197
        %v1199 = vpop.xlane.xlu0 %1198
        %v1200 = vrcp.pop %v1199
        %v1201 = vmul.f32 %v1196, %v1200
        %v1202 = vpack.c.bf16 %v1201, %v1201
        %v1203 = vpack.c.bf16 %v1000, %v997
        %v1204 = vpack.c.bf16 %v1017, %v1017
        %1207 = vrot.lane.b32.xlu0 %v1203, 96
        %v1208 = vpop.permute.xlu0 %1207
        %1209 = vrot.lane.b32.xlu0 %v1204, 96
        %v1210 = vpop.permute.xlu0 %1209
        %v1213 = vsel %vm1190, %v1202, 0
        %vm1215 = vcmask 1043456
        %v1217 = vsel %vm1215, %v1210, 0
        %1219 = vmatprep.subr.bf16.mxu0 0
        %1220 = vmatpush1.bf16.msra.mxu0 %v1208
        %1221 = vmatprep.subr.bf16.mxu0 0
        %1222 = vmatpush1.bf16.msra.mxu0 %v1217
        %1223 = vmatprep.subr.bf16.mxu0 0
        %1224 = vmatpush1.bf16.msra.mxu0 0
        %1225 = vmatprep.subr.bf16.mxu0 0
        %1226 = vmatpush1.bf16.msra.mxu0 0
        %1227 = vmatprep.subr.bf16.mxu0 0
        %1228 = vmatpush1.bf16.msra.mxu0 0
        %1229 = vmatprep.subr.bf16.mxu0 0
        %1230 = vmatpush1.bf16.msra.mxu0 0
        %1231 = vmatprep.subr.bf16.mxu0 0
        %1232 = vmatpush1.bf16.msra.mxu0 0
        %1233 = vmatprep.subr.bf16.mxu0 0
        %1234 = vmatpush1.bf16.msra.mxu0 0
        %1235 = vmatprep.subr.bf16.mxu0 0
        %1236 = vmatpush1.bf16.msra.mxu0 0
        %1237 = vmatprep.subr.bf16.mxu0 0
        %1238 = vmatpush1.bf16.msra.mxu0 0
        %1239 = vmatprep.subr.bf16.mxu0 0
        %1240 = vmatpush1.bf16.msra.mxu0 0
        %1241 = vmatprep.subr.bf16.mxu0 0
        %1242 = vmatpush1.bf16.msra.mxu0 0
        %1243 = vmatprep.subr.bf16.mxu0 0
        %1244 = vmatpush1.bf16.msra.mxu0 0
        %1245 = vmatprep.subr.bf16.mxu0 0
        %1246 = vmatpush1.bf16.msra.mxu0 0
        %1247 = vmatprep.subr.bf16.mxu0 0
        %1248 = vmatpush1.bf16.msra.mxu0 0
        %1249 = vmatprep.subr.bf16.mxu0 0
        %1250 = vmatpush1.bf16.msra.mxu0 0
        %1251 = vmatprep.mubr.bf16.mxu0 0
        %1252 = vmatmul.mubr.bf16.gmra.mrb[0].mxu0 %v1213
        %v1253 = vpop.f32.mrb[0].mxu0
        %v1254 = vadd.f32 0.0, %v1253
        %v1255 = vpop.f32.mrb[0].mxu0
        %v1256 = vpop.f32.mrb[0].mxu0
        %v1257 = vpop.f32.mrb[0].mxu0
        %1258 = vdwg.mxu0
        %1259 = vst.msk [vmem:[#allocation2] sm:$0xff] %vm1032, %v1254
        %1261 = vrot.lane.b32.xlu0 %v1031, 120
        %v1262 = vpop.permute.xlu0 %1261
        %v1264 = vsel %vm1032, %v1262, 0.0
        %1265 = vadd.xlane.f32.xlu0 %v1264
        %v1266 = vpop.xlane.xlu0 %1265
        %v1267 = vrsqrt.pop %v1266
        %v1268 = vmul.f32 %v1266, %v1267
        %vm1269 = vcmp.eq.f32.partialorder %v1266, inf
        %v1270 = vsel %vm1269, %v1266, %v1268
        %vm1271 = vcmp.eq.f32.partialorder %v1266, 0.0
        %v1272 = vand.u32 %v1266, 2147483648
        %v1273 = vsel %vm1271, %v1272, %v1270
        %v1274 = vmul.f32 %v1273, 0.35355338
        %v1275 = vmax.f32 %v1274, 1e-08
        %v1276 = vrcp.pop %v1275
        %v1277 = vmul.f32 %v934, %v1276
        %1278 = vrot.lane.b32.xlu0 %v1051, 8
        %v1279 = vpop.permute.xlu0 %1278
        %v1281 = vmul.f32 %v1277, %v1279
        %1285 = vrot.lane.b32.xlu0 %v1054, 120
        %v1286 = vpop.permute.xlu0 %1285
        %1287 = vrot.lane.b32.xlu0 %v1055, 120
        %v1288 = vpop.permute.xlu0 %1287
        %1289 = vrot.lane.b32.xlu0 %v1056, 120
        %v1290 = vpop.permute.xlu0 %1289
        %v1294 = vsel %vm1032, %v1286, 0.0
        %1295 = vadd.xlane.f32.xlu0 %v1294
        %v1296 = vpop.xlane.xlu0 %1295
        %v1297 = vsel %vm1032, %v1288, 0.0
        %1298 = vadd.xlane.f32.xlu0 %v1297
        %v1299 = vpop.xlane.xlu0 %1298
        %v1300 = vsel %vm1032, %v1290, 0.0
        %1301 = vadd.xlane.f32.xlu0 %v1300
        %v1302 = vpop.xlane.xlu0 %1301
        %v1303 = vrsqrt.pop %v1296
        %v1304 = vmul.f32 %v1296, %v1303
        %vm1305 = vcmp.eq.f32.partialorder %v1296, inf
        %v1306 = vsel %vm1305, %v1296, %v1304
        %vm1307 = vcmp.eq.f32.partialorder %v1296, 0.0
        %v1308 = vand.u32 %v1296, 2147483648
        %v1309 = vsel %vm1307, %v1308, %v1306
        %v1310 = vrsqrt.pop %v1299
        %v1311 = vmul.f32 %v1299, %v1310
        %vm1312 = vcmp.eq.f32.partialorder %v1299, inf
        %v1313 = vsel %vm1312, %v1299, %v1311
        %vm1314 = vcmp.eq.f32.partialorder %v1299, 0.0
        %v1315 = vand.u32 %v1299, 2147483648
        %v1316 = vsel %vm1314, %v1315, %v1313
        %v1317 = vrsqrt.pop %v1302
        %v1318 = vmul.f32 %v1302, %v1317
        %vm1319 = vcmp.eq.f32.partialorder %v1302, inf
        %v1320 = vsel %vm1319, %v1302, %v1318
        %vm1321 = vcmp.eq.f32.partialorder %v1302, 0.0
        %v1322 = vand.u32 %v1302, 2147483648
        %v1323 = vsel %vm1321, %v1322, %v1320
        %v1324 = vmul.f32 %v1309, 0.35355338
        %v1325 = vmul.f32 %v1316, 0.35355338
        %v1326 = vmul.f32 %v1323, 0.35355338
        %v1327 = vmax.f32 %v1324, 1e-08
        %v1328 = vmax.f32 %v1325, 1e-08
        %v1329 = vmax.f32 %v1326, 1e-08
        %v1330 = vrcp.pop %v1327
        %v1331 = vmul.f32 %v997, %v1330
        %v1332 = vrcp.pop %v1328
        %v1333 = vmul.f32 %v1000, %v1332
        %v1334 = vrcp.pop %v1329
        %v1335 = vmul.f32 %v1017, %v1334
        %1336 = vrot.lane.b32.xlu0 %v1103, 8
        %v1337 = vpop.permute.xlu0 %1336
        %v1339 = vmul.f32 %v1331, %v1337
        %v1340 = vmul.f32 %v1333, %v1337
        %v1341 = vmul.f32 %v1335, %v1337
        %1343 = vrot.lane.b32.xlu0 %v1281, 120
        %v1344 = vpop.permute.xlu0 %1343
        %1348 = vrot.lane.b32.xlu0 %v1339, 120
        %v1349 = vpop.permute.xlu0 %1348
        %1350 = vrot.lane.b32.xlu0 %v1340, 120
        %v1351 = vpop.permute.xlu0 %1350
        %1352 = vrot.lane.b32.xlu0 %v1341, 120
        %v1353 = vpop.permute.xlu0 %1352
        %v1354 = vsel %vm1032, %v1344, 0
        %v1356 = vsel %vm1032, %v1349, 0
        %v1358 = vsel %vm1032, %v1351, 0
        %v1360 = vsel %vm1032, %v1353, 0
        %1362 = vmatprep.subr.mxu0 0.0
        %1363 = vmatpush1.xpose.msra.mxu0 %v1356
        %1364 = vmatprep.subr.mxu0 0.0
        %1365 = vmatpush1.xpose.msra.mxu0 %v1358
        %1366 = vmatprep.subr.mxu0 0.0
        %1367 = vmatpush1.xpose.msra.mxu0 %v1360
        %1368 = vmatprep.subr.mxu0 0.0
        %1369 = vmatpush1.xpose.msra.mxu0 0.0
        %1370 = vmatprep.subr.mxu0 0.0
        %1371 = vmatpush1.xpose.msra.mxu0 0.0
        %1372 = vmatprep.subr.mxu0 0.0
        %1373 = vmatpush1.xpose.msra.mxu0 0.0
        %1374 = vmatprep.subr.mxu0 0.0
        %1375 = vmatpush1.xpose.msra.mxu0 0.0
        %1376 = vmatprep.subr.mxu0 0.0
        %1377 = vmatpush1.xpose.msra.mxu0 0.0
        %1378 = vmatprep.subr.mxu0 0.0
        %1379 = vmatpush1.xpose.msra.mxu0 0.0
        %1380 = vmatprep.subr.mxu0 0.0
        %1381 = vmatpush1.xpose.msra.mxu0 0.0
        %1382 = vmatprep.subr.mxu0 0.0
        %1383 = vmatpush1.xpose.msra.mxu0 0.0
        %1384 = vmatprep.subr.mxu0 0.0
        %1385 = vmatpush1.xpose.msra.mxu0 0.0
        %1386 = vmatprep.subr.mxu0 0.0
        %1387 = vmatpush1.xpose.msra.mxu0 0.0
        %1388 = vmatprep.subr.mxu0 0.0
        %1389 = vmatpush1.xpose.msra.mxu0 0.0
        %1390 = vmatprep.subr.mxu0 0.0
        %1391 = vmatpush1.xpose.msra.mxu0 0.0
        %1392 = vmatprep.subr.mxu0 0.0
        %1393 = vmatpush1.xpose.msra.mxu0 0.0
        %1394 = vmatprep.subr.mxu0 0.0
        %1395 = vmatpush1.xpose.msra.mxu0 0.0
        %1396 = vmatprep.subr.mxu0 0.0
        %1397 = vmatpush1.xpose.msra.mxu0 0.0
        %1398 = vmatprep.subr.mxu0 0.0
        %1399 = vmatpush1.xpose.msra.mxu0 0.0
        %1400 = vmatprep.subr.mxu0 0.0
        %1401 = vmatpush1.xpose.msra.mxu0 0.0
        %1402 = vmatprep.subr.mxu0 0.0
        %1403 = vmatpush1.xpose.msra.mxu0 0.0
        %1404 = vmatprep.subr.mxu0 0.0
        %1405 = vmatpush1.xpose.msra.mxu0 0.0
        %1406 = vmatprep.subr.mxu0 0.0
        %1407 = vmatpush1.xpose.msra.mxu0 0.0
        %1408 = vmatprep.subr.mxu0 0.0
        %1409 = vmatpush1.xpose.msra.mxu0 0.0
        %1410 = vmatprep.subr.mxu0 0.0
        %1411 = vmatpush1.xpose.msra.mxu0 0.0
        %1412 = vmatprep.subr.mxu0 0.0
        %1413 = vmatpush1.xpose.msra.mxu0 0.0
        %1414 = vmatprep.subr.mxu0 0.0
        %1415 = vmatpush1.xpose.msra.mxu0 0.0
        %1416 = vmatprep.subr.mxu0 0.0
        %1417 = vmatpush1.xpose.msra.mxu0 0.0
        %1418 = vmatprep.subr.mxu0 0.0
        %1419 = vmatpush1.xpose.msra.mxu0 0.0
        %1420 = vmatprep.subr.mxu0 0.0
        %1421 = vmatpush1.xpose.msra.mxu0 0.0
        %1422 = vmatprep.subr.mxu0 0.0
        %1423 = vmatpush1.xpose.msra.mxu0 0.0
        %1424 = vmatprep.subr.mxu0 0.0
        %1425 = vmatpush1.xpose.msra.mxu0 0.0
        %1426 = vmatprep.mubr.f32.mxu0 0.0
        %1427 = vmatmul.mubr.f32.gmra.mrb[0].mxu0 %v1354
        %v1428 = vpop.f32.mrb[0].mxu0
        %v1429 = vadd.f32 %v1030, %v1428
        %v1430 = vpop.f32.mrb[0].mxu0
        %1431 = vdwg.mxu0
        %v1432 = vsel %vm1190, %v1429, -inf
        %1433 = vmax.xlane.f32.xlu0 %v1432
        %v1434 = vpop.xlane.xlu0 %1433
        %v1435 = vsub.f32 %v1429, %v1434
        %v1436 = vmul.f32 %v1435, 1.442695
        %v1437 = vpow.pop %v1436
        %v1438 = vsel %vm1190, %v1437, 0.0
        %1439 = vadd.xlane.f32.xlu0 %v1438
        %v1440 = vpop.xlane.xlu0 %1439
        %v1441 = vrcp.pop %v1440
        %v1442 = vmul.f32 %v1437, %v1441
        %v1443 = vpack.c.bf16 %v1442, %v1442
        %1444 = vrot.lane.b32.xlu0 %v1203, 88
        %v1445 = vpop.permute.xlu0 %1444
        %1446 = vrot.lane.b32.xlu0 %v1204, 88
        %v1447 = vpop.permute.xlu0 %1446
        %v1450 = vsel %vm1190, %v1443, 0
        %v1453 = vsel %vm1215, %v1447, 0
        %1455 = vmatprep.subr.bf16.mxu0 0
        %1456 = vmatpush1.bf16.msra.mxu0 %v1445
        %1457 = vmatprep.subr.bf16.mxu0 0
        %1458 = vmatpush1.bf16.msra.mxu0 %v1453
        %1459 = vmatprep.subr.bf16.mxu0 0
        %1460 = vmatpush1.bf16.msra.mxu0 0
        %1461 = vmatprep.subr.bf16.mxu0 0
        %1462 = vmatpush1.bf16.msra.mxu0 0
        %1463 = vmatprep.subr.bf16.mxu0 0
        %1464 = vmatpush1.bf16.msra.mxu0 0
        %1465 = vmatprep.subr.bf16.mxu0 0
        %1466 = vmatpush1.bf16.msra.mxu0 0
        %1467 = vmatprep.subr.bf16.mxu0 0
        %1468 = vmatpush1.bf16.msra.mxu0 0
        %1469 = vmatprep.subr.bf16.mxu0 0
        %1470 = vmatpush1.bf16.msra.mxu0 0
        %1471 = vmatprep.subr.bf16.mxu0 0
        %1472 = vmatpush1.bf16.msra.mxu0 0
        %1473 = vmatprep.subr.bf16.mxu0 0
        %1474 = vmatpush1.bf16.msra.mxu0 0
        %1475 = vmatprep.subr.bf16.mxu0 0
        %1476 = vmatpush1.bf16.msra.mxu0 0
        %1477 = vmatprep.subr.bf16.mxu0 0
        %1478 = vmatpush1.bf16.msra.mxu0 0
        %1479 = vmatprep.subr.bf16.mxu0 0
        %1480 = vmatpush1.bf16.msra.mxu0 0
        %1481 = vmatprep.subr.bf16.mxu0 0
        %1482 = vmatpush1.bf16.msra.mxu0 0
        %1483 = vmatprep.subr.bf16.mxu0 0
        %1484 = vmatpush1.bf16.msra.mxu0 0
        %1485 = vmatprep.subr.bf16.mxu0 0
        %1486 = vmatpush1.bf16.msra.mxu0 0
        %1487 = vmatprep.mubr.bf16.mxu0 0
        %1488 = vmatmul.mubr.bf16.gmra.mrb[0].mxu0 %v1450
        %v1489 = vpop.f32.mrb[0].mxu0
        %v1490 = vadd.f32 0.0, %v1489
        %v1491 = vpop.f32.mrb[0].mxu0
        %v1492 = vpop.f32.mrb[0].mxu0
        %v1493 = vpop.f32.mrb[0].mxu0
        %1494 = vdwg.mxu0
        %1496 = vrot.lane.b32.xlu0 %v1490, 8
        %v1497 = vpop.permute.xlu0 %1496
        %vm1499 = vcmask 130112
        %1500 = vst.msk [vmem:[#allocation2] sm:$0xff] %vm1499, %v1497
        %1501 = vrot.lane.b32.xlu0 %v1031, 112
        %v1502 = vpop.permute.xlu0 %1501
        %v1504 = vsel %vm1032, %v1502, 0.0
        %1505 = vadd.xlane.f32.xlu0 %v1504
        %v1506 = vpop.xlane.xlu0 %1505
        %v1507 = vrsqrt.pop %v1506
        %v1508 = vmul.f32 %v1506, %v1507
        %vm1509 = vcmp.eq.f32.partialorder %v1506, inf
        %v1510 = vsel %vm1509, %v1506, %v1508
        %vm1511 = vcmp.eq.f32.partialorder %v1506, 0.0
        %v1512 = vand.u32 %v1506, 2147483648
        %v1513 = vsel %vm1511, %v1512, %v1510
        %v1514 = vmul.f32 %v1513, 0.35355338
        %v1515 = vmax.f32 %v1514, 1e-08
        %v1516 = vrcp.pop %v1515
        %v1517 = vmul.f32 %v934, %v1516
        %1518 = vrot.lane.b32.xlu0 %v1051, 16
        %v1519 = vpop.permute.xlu0 %1518
        %v1521 = vmul.f32 %v1517, %v1519
        %1522 = vrot.lane.b32.xlu0 %v1054, 112
        %v1523 = vpop.permute.xlu0 %1522
        %1524 = vrot.lane.b32.xlu0 %v1055, 112
        %v1525 = vpop.permute.xlu0 %1524
        %1526 = vrot.lane.b32.xlu0 %v1056, 112
        %v1527 = vpop.permute.xlu0 %1526
        %v1531 = vsel %vm1032, %v1523, 0.0
        %1532 = vadd.xlane.f32.xlu0 %v1531
        %v1533 = vpop.xlane.xlu0 %1532
        %v1534 = vsel %vm1032, %v1525, 0.0
        %1535 = vadd.xlane.f32.xlu0 %v1534
        %v1536 = vpop.xlane.xlu0 %1535
        %v1537 = vsel %vm1032, %v1527, 0.0
        %1538 = vadd.xlane.f32.xlu0 %v1537
        %v1539 = vpop.xlane.xlu0 %1538
        %v1540 = vrsqrt.pop %v1533
        %v1541 = vmul.f32 %v1533, %v1540
        %vm1542 = vcmp.eq.f32.partialorder %v1533, inf
        %v1543 = vsel %vm1542, %v1533, %v1541
        %vm1544 = vcmp.eq.f32.partialorder %v1533, 0.0
        %v1545 = vand.u32 %v1533, 2147483648
        %v1546 = vsel %vm1544, %v1545, %v1543
        %v1547 = vrsqrt.pop %v1536
        %v1548 = vmul.f32 %v1536, %v1547
        %vm1549 = vcmp.eq.f32.partialorder %v1536, inf
        %v1550 = vsel %vm1549, %v1536, %v1548
        %vm1551 = vcmp.eq.f32.partialorder %v1536, 0.0
        %v1552 = vand.u32 %v1536, 2147483648
        %v1553 = vsel %vm1551, %v1552, %v1550
        %v1554 = vrsqrt.pop %v1539
        %v1555 = vmul.f32 %v1539, %v1554
        %vm1556 = vcmp.eq.f32.partialorder %v1539, inf
        %v1557 = vsel %vm1556, %v1539, %v1555
        %vm1558 = vcmp.eq.f32.partialorder %v1539, 0.0
        %v1559 = vand.u32 %v1539, 2147483648
        %v1560 = vsel %vm1558, %v1559, %v1557
        %v1561 = vmul.f32 %v1546, 0.35355338
        %v1562 = vmul.f32 %v1553, 0.35355338
        %v1563 = vmul.f32 %v1560, 0.35355338
        %v1564 = vmax.f32 %v1561, 1e-08
        %v1565 = vmax.f32 %v1562, 1e-08
        %v1566 = vmax.f32 %v1563, 1e-08
        %v1567 = vrcp.pop %v1564
        %v1568 = vmul.f32 %v997, %v1567
        %v1569 = vrcp.pop %v1565
        %v1570 = vmul.f32 %v1000, %v1569
        %v1571 = vrcp.pop %v1566
        %v1572 = vmul.f32 %v1017, %v1571
        %1573 = vrot.lane.b32.xlu0 %v1103, 16
        %v1574 = vpop.permute.xlu0 %1573
        %v1576 = vmul.f32 %v1568, %v1574
        %v1577 = vmul.f32 %v1570, %v1574
        %v1578 = vmul.f32 %v1572, %v1574
        %1580 = vrot.lane.b32.xlu0 %v1521, 112
        %v1581 = vpop.permute.xlu0 %1580
        %1585 = vrot.lane.b32.xlu0 %v1576, 112
        %v1586 = vpop.permute.xlu0 %1585
        %1587 = vrot.lane.b32.xlu0 %v1577, 112
        %v1588 = vpop.permute.xlu0 %1587
        %1589 = vrot.lane.b32.xlu0 %v1578, 112
        %v1590 = vpop.permute.xlu0 %1589
        %v1591 = vsel %vm1032, %v1581, 0
        %v1593 = vsel %vm1032, %v1586, 0
        %v1595 = vsel %vm1032, %v1588, 0
        %v1597 = vsel %vm1032, %v1590, 0
        %1599 = vmatprep.subr.mxu0 0.0
        %1600 = vmatpush1.xpose.msra.mxu0 %v1593
        %1601 = vmatprep.subr.mxu0 0.0
        %1602 = vmatpush1.xpose.msra.mxu0 %v1595
        %1603 = vmatprep.subr.mxu0 0.0
        %1604 = vmatpush1.xpose.msra.mxu0 %v1597
        %1605 = vmatprep.subr.mxu0 0.0
        %1606 = vmatpush1.xpose.msra.mxu0 0.0
        %1607 = vmatprep.subr.mxu0 0.0
        %1608 = vmatpush1.xpose.msra.mxu0 0.0
        %1609 = vmatprep.subr.mxu0 0.0
        %1610 = vmatpush1.xpose.msra.mxu0 0.0
        %1611 = vmatprep.subr.mxu0 0.0
        %1612 = vmatpush1.xpose.msra.mxu0 0.0
        %1613 = vmatprep.subr.mxu0 0.0
        %1614 = vmatpush1.xpose.msra.mxu0 0.0
        %1615 = vmatprep.subr.mxu0 0.0
        %1616 = vmatpush1.xpose.msra.mxu0 0.0
        %1617 = vmatprep.subr.mxu0 0.0
        %1618 = vmatpush1.xpose.msra.mxu0 0.0
        %1619 = vmatprep.subr.mxu0 0.0
        %1620 = vmatpush1.xpose.msra.mxu0 0.0
        %1621 = vmatprep.subr.mxu0 0.0
        %1622 = vmatpush1.xpose.msra.mxu0 0.0
        %1623 = vmatprep.subr.mxu0 0.0
        %1624 = vmatpush1.xpose.msra.mxu0 0.0
        %1625 = vmatprep.subr.mxu0 0.0
        %1626 = vmatpush1.xpose.msra.mxu0 0.0
        %1627 = vmatprep.subr.mxu0 0.0
        %1628 = vmatpush1.xpose.msra.mxu0 0.0
        %1629 = vmatprep.subr.mxu0 0.0
        %1630 = vmatpush1.xpose.msra.mxu0 0.0
        %1631 = vmatprep.subr.mxu0 0.0
        %1632 = vmatpush1.xpose.msra.mxu0 0.0
        %1633 = vmatprep.subr.mxu0 0.0
        %1634 = vmatpush1.xpose.msra.mxu0 0.0
        %1635 = vmatprep.subr.mxu0 0.0
        %1636 = vmatpush1.xpose.msra.mxu0 0.0
        %1637 = vmatprep.subr.mxu0 0.0
        %1638 = vmatpush1.xpose.msra.mxu0 0.0
        %1639 = vmatprep.subr.mxu0 0.0
        %1640 = vmatpush1.xpose.msra.mxu0 0.0
        %1641 = vmatprep.subr.mxu0 0.0
        %1642 = vmatpush1.xpose.msra.mxu0 0.0
        %1643 = vmatprep.subr.mxu0 0.0
        %1644 = vmatpush1.xpose.msra.mxu0 0.0
        %1645 = vmatprep.subr.mxu0 0.0
        %1646 = vmatpush1.xpose.msra.mxu0 0.0
        %1647 = vmatprep.subr.mxu0 0.0
        %1648 = vmatpush1.xpose.msra.mxu0 0.0
        %1649 = vmatprep.subr.mxu0 0.0
        %1650 = vmatpush1.xpose.msra.mxu0 0.0
        %1651 = vmatprep.subr.mxu0 0.0
        %1652 = vmatpush1.xpose.msra.mxu0 0.0
        %1653 = vmatprep.subr.mxu0 0.0
        %1654 = vmatpush1.xpose.msra.mxu0 0.0
        %1655 = vmatprep.subr.mxu0 0.0
        %1656 = vmatpush1.xpose.msra.mxu0 0.0
        %1657 = vmatprep.subr.mxu0 0.0
        %1658 = vmatpush1.xpose.msra.mxu0 0.0
        %1659 = vmatprep.subr.mxu0 0.0
        %1660 = vmatpush1.xpose.msra.mxu0 0.0
        %1661 = vmatprep.subr.mxu0 0.0
        %1662 = vmatpush1.xpose.msra.mxu0 0.0
        %1663 = vmatprep.mubr.f32.mxu0 0.0
        %1664 = vmatmul.mubr.f32.gmra.mrb[0].mxu0 %v1591
        %v1665 = vpop.f32.mrb[0].mxu0
        %v1666 = vadd.f32 %v1030, %v1665
        %v1667 = vpop.f32.mrb[0].mxu0
        %1668 = vdwg.mxu0
        %v1669 = vsel %vm1190, %v1666, -inf
        %1670 = vmax.xlane.f32.xlu0 %v1669
        %v1671 = vpop.xlane.xlu0 %1670
        %v1672 = vsub.f32 %v1666, %v1671
        %v1673 = vmul.f32 %v1672, 1.442695
        %v1674 = vpow.pop %v1673
        %v1675 = vsel %vm1190, %v1674, 0.0
        %1676 = vadd.xlane.f32.xlu0 %v1675
        %v1677 = vpop.xlane.xlu0 %1676
        %v1678 = vrcp.pop %v1677
        %v1679 = vmul.f32 %v1674, %v1678
        %v1680 = vpack.c.bf16 %v1679, %v1679
        %1681 = vrot.lane.b32.xlu0 %v1203, 80
        %v1682 = vpop.permute.xlu0 %1681
        %1683 = vrot.lane.b32.xlu0 %v1204, 80
        %v1684 = vpop.permute.xlu0 %1683
        %v1687 = vsel %vm1190, %v1680, 0
        %v1690 = vsel %vm1215, %v1684, 0
        %1692 = vmatprep.subr.bf16.mxu0 0
        %1693 = vmatpush1.bf16.msra.mxu0 %v1682
        %1694 = vmatprep.subr.bf16.mxu0 0
        %1695 = vmatpush1.bf16.msra.mxu0 %v1690
        %1696 = vmatprep.subr.bf16.mxu0 0
        %1697 = vmatpush1.bf16.msra.mxu0 0
        %1698 = vmatprep.subr.bf16.mxu0 0
        %1699 = vmatpush1.bf16.msra.mxu0 0
        %1700 = vmatprep.subr.bf16.mxu0 0
        %1701 = vmatpush1.bf16.msra.mxu0 0
        %1702 = vmatprep.subr.bf16.mxu0 0
        %1703 = vmatpush1.bf16.msra.mxu0 0
        %1704 = vmatprep.subr.bf16.mxu0 0
        %1705 = vmatpush1.bf16.msra.mxu0 0
        %1706 = vmatprep.subr.bf16.mxu0 0
        %1707 = vmatpush1.bf16.msra.mxu0 0
        %1708 = vmatprep.subr.bf16.mxu0 0
        %1709 = vmatpush1.bf16.msra.mxu0 0
        %1710 = vmatprep.subr.bf16.mxu0 0
        %1711 = vmatpush1.bf16.msra.mxu0 0
        %1712 = vmatprep.subr.bf16.mxu0 0
        %1713 = vmatpush1.bf16.msra.mxu0 0
        %1714 = vmatprep.subr.bf16.mxu0 0
        %1715 = vmatpush1.bf16.msra.mxu0 0
        %1716 = vmatprep.subr.bf16.mxu0 0
        %1717 = vmatpush1.bf16.msra.mxu0 0
        %1718 = vmatprep.subr.bf16.mxu0 0
        %1719 = vmatpush1.bf16.msra.mxu0 0
        %1720 = vmatprep.subr.bf16.mxu0 0
        %1721 = vmatpush1.bf16.msra.mxu0 0
        %1722 = vmatprep.subr.bf16.mxu0 0
        %1723 = vmatpush1.bf16.msra.mxu0 0
        %1724 = vmatprep.mubr.bf16.mxu0 0
        %1725 = vmatmul.mubr.bf16.gmra.mrb[0].mxu0 %v1687
        %v1726 = vpop.f32.mrb[0].mxu0
        %v1727 = vadd.f32 0.0, %v1726
        %v1728 = vpop.f32.mrb[0].mxu0
        %v1729 = vpop.f32.mrb[0].mxu0
        %v1730 = vpop.f32.mrb[0].mxu0
        %1731 = vdwg.mxu0
        %1733 = vrot.lane.b32.xlu0 %v1727, 16
        %v1734 = vpop.permute.xlu0 %1733
        %vm1736 = vcmask 195712
        %1737 = vst.msk [vmem:[#allocation2] sm:$0xff] %vm1736, %v1734
        %1738 = vrot.lane.b32.xlu0 %v1031, 104
        %v1739 = vpop.permute.xlu0 %1738
        %v1741 = vsel %vm1032, %v1739, 0.0
        %1742 = vadd.xlane.f32.xlu0 %v1741
        %v1743 = vpop.xlane.xlu0 %1742
        %v1744 = vrsqrt.pop %v1743
        %v1745 = vmul.f32 %v1743, %v1744
        %vm1746 = vcmp.eq.f32.partialorder %v1743, inf
        %v1747 = vsel %vm1746, %v1743, %v1745
        %vm1748 = vcmp.eq.f32.partialorder %v1743, 0.0
        %v1749 = vand.u32 %v1743, 2147483648
        %v1750 = vsel %vm1748, %v1749, %v1747
        %v1751 = vmul.f32 %v1750, 0.35355338
        %v1752 = vmax.f32 %v1751, 1e-08
        %v1753 = vrcp.pop %v1752
        %v1754 = vmul.f32 %v934, %v1753
        %1755 = vrot.lane.b32.xlu0 %v1051, 24
        %v1756 = vpop.permute.xlu0 %1755
        %v1758 = vmul.f32 %v1754, %v1756
        %1759 = vrot.lane.b32.xlu0 %v1054, 104
        %v1760 = vpop.permute.xlu0 %1759
        %1761 = vrot.lane.b32.xlu0 %v1055, 104
        %v1762 = vpop.permute.xlu0 %1761
        %1763 = vrot.lane.b32.xlu0 %v1056, 104
        %v1764 = vpop.permute.xlu0 %1763
        %v1768 = vsel %vm1032, %v1760, 0.0
        %1769 = vadd.xlane.f32.xlu0 %v1768
        %v1770 = vpop.xlane.xlu0 %1769
        %v1771 = vsel %vm1032, %v1762, 0.0
        %1772 = vadd.xlane.f32.xlu0 %v1771
        %v1773 = vpop.xlane.xlu0 %1772
        %v1774 = vsel %vm1032, %v1764, 0.0
        %1775 = vadd.xlane.f32.xlu0 %v1774
        %v1776 = vpop.xlane.xlu0 %1775
        %v1777 = vrsqrt.pop %v1770
        %v1778 = vmul.f32 %v1770, %v1777
        %vm1779 = vcmp.eq.f32.partialorder %v1770, inf
        %v1780 = vsel %vm1779, %v1770, %v1778
        %vm1781 = vcmp.eq.f32.partialorder %v1770, 0.0
        %v1782 = vand.u32 %v1770, 2147483648
        %v1783 = vsel %vm1781, %v1782, %v1780
        %v1784 = vrsqrt.pop %v1773
        %v1785 = vmul.f32 %v1773, %v1784
        %vm1786 = vcmp.eq.f32.partialorder %v1773, inf
        %v1787 = vsel %vm1786, %v1773, %v1785
        %vm1788 = vcmp.eq.f32.partialorder %v1773, 0.0
        %v1789 = vand.u32 %v1773, 2147483648
        %v1790 = vsel %vm1788, %v1789, %v1787
        %v1791 = vrsqrt.pop %v1776
        %v1792 = vmul.f32 %v1776, %v1791
        %vm1793 = vcmp.eq.f32.partialorder %v1776, inf
        %v1794 = vsel %vm1793, %v1776, %v1792
        %vm1795 = vcmp.eq.f32.partialorder %v1776, 0.0
        %v1796 = vand.u32 %v1776, 2147483648
        %v1797 = vsel %vm1795, %v1796, %v1794
        %v1798 = vmul.f32 %v1783, 0.35355338
        %v1799 = vmul.f32 %v1790, 0.35355338
        %v1800 = vmul.f32 %v1797, 0.35355338
        %v1801 = vmax.f32 %v1798, 1e-08
        %v1802 = vmax.f32 %v1799, 1e-08
        %v1803 = vmax.f32 %v1800, 1e-08
        %v1804 = vrcp.pop %v1801
        %v1805 = vmul.f32 %v997, %v1804
        %v1806 = vrcp.pop %v1802
        %v1807 = vmul.f32 %v1000, %v1806
        %v1808 = vrcp.pop %v1803
        %v1809 = vmul.f32 %v1017, %v1808
        %1810 = vrot.lane.b32.xlu0 %v1103, 24
        %v1811 = vpop.permute.xlu0 %1810
        %v1813 = vmul.f32 %v1805, %v1811
        %v1814 = vmul.f32 %v1807, %v1811
        %v1815 = vmul.f32 %v1809, %v1811
        %1817 = vrot.lane.b32.xlu0 %v1758, 104
        %v1818 = vpop.permute.xlu0 %1817
        %1822 = vrot.lane.b32.xlu0 %v1813, 104
        %v1823 = vpop.permute.xlu0 %1822
        %1824 = vrot.lane.b32.xlu0 %v1814, 104
        %v1825 = vpop.permute.xlu0 %1824
        %1826 = vrot.lane.b32.xlu0 %v1815, 104
        %v1827 = vpop.permute.xlu0 %1826
        %v1828 = vsel %vm1032, %v1818, 0
        %v1830 = vsel %vm1032, %v1823, 0
        %v1832 = vsel %vm1032, %v1825, 0
        %v1834 = vsel %vm1032, %v1827, 0
        %1836 = vmatprep.subr.mxu0 0.0
        %1837 = vmatpush1.xpose.msra.mxu0 %v1830
        %1838 = vmatprep.subr.mxu0 0.0
        %1839 = vmatpush1.xpose.msra.mxu0 %v1832
        %1840 = vmatprep.subr.mxu0 0.0
        %1841 = vmatpush1.xpose.msra.mxu0 %v1834
        %1842 = vmatprep.subr.mxu0 0.0
        %1843 = vmatpush1.xpose.msra.mxu0 0.0
        %1844 = vmatprep.subr.mxu0 0.0
        %1845 = vmatpush1.xpose.msra.mxu0 0.0
        %1846 = vmatprep.subr.mxu0 0.0
        %1847 = vmatpush1.xpose.msra.mxu0 0.0
        %1848 = vmatprep.subr.mxu0 0.0
        %1849 = vmatpush1.xpose.msra.mxu0 0.0
        %1850 = vmatprep.subr.mxu0 0.0
        %1851 = vmatpush1.xpose.msra.mxu0 0.0
        %1852 = vmatprep.subr.mxu0 0.0
        %1853 = vmatpush1.xpose.msra.mxu0 0.0
        %1854 = vmatprep.subr.mxu0 0.0
        %1855 = vmatpush1.xpose.msra.mxu0 0.0
        %1856 = vmatprep.subr.mxu0 0.0
        %1857 = vmatpush1.xpose.msra.mxu0 0.0
        %1858 = vmatprep.subr.mxu0 0.0
        %1859 = vmatpush1.xpose.msra.mxu0 0.0
        %1860 = vmatprep.subr.mxu0 0.0
        %1861 = vmatpush1.xpose.msra.mxu0 0.0
        %1862 = vmatprep.subr.mxu0 0.0
        %1863 = vmatpush1.xpose.msra.mxu0 0.0
        %1864 = vmatprep.subr.mxu0 0.0
        %1865 = vmatpush1.xpose.msra.mxu0 0.0
        %1866 = vmatprep.subr.mxu0 0.0
        %1867 = vmatpush1.xpose.msra.mxu0 0.0
        %1868 = vmatprep.subr.mxu0 0.0
        %1869 = vmatpush1.xpose.msra.mxu0 0.0
        %1870 = vmatprep.subr.mxu0 0.0
        %1871 = vmatpush1.xpose.msra.mxu0 0.0
        %1872 = vmatprep.subr.mxu0 0.0
        %1873 = vmatpush1.xpose.msra.mxu0 0.0
        %1874 = vmatprep.subr.mxu0 0.0
        %1875 = vmatpush1.xpose.msra.mxu0 0.0
        %1876 = vmatprep.subr.mxu0 0.0
        %1877 = vmatpush1.xpose.msra.mxu0 0.0
        %1878 = vmatprep.subr.mxu0 0.0
        %1879 = vmatpush1.xpose.msra.mxu0 0.0
        %1880 = vmatprep.subr.mxu0 0.0
        %1881 = vmatpush1.xpose.msra.mxu0 0.0
        %1882 = vmatprep.subr.mxu0 0.0
        %1883 = vmatpush1.xpose.msra.mxu0 0.0
        %1884 = vmatprep.subr.mxu0 0.0
        %1885 = vmatpush1.xpose.msra.mxu0 0.0
        %1886 = vmatprep.subr.mxu0 0.0
        %1887 = vmatpush1.xpose.msra.mxu0 0.0
        %1888 = vmatprep.subr.mxu0 0.0
        %1889 = vmatpush1.xpose.msra.mxu0 0.0
        %1890 = vmatprep.subr.mxu0 0.0
        %1891 = vmatpush1.xpose.msra.mxu0 0.0
        %1892 = vmatprep.subr.mxu0 0.0
        %1893 = vmatpush1.xpose.msra.mxu0 0.0
        %1894 = vmatprep.subr.mxu0 0.0
        %1895 = vmatpush1.xpose.msra.mxu0 0.0
        %1896 = vmatprep.subr.mxu0 0.0
        %1897 = vmatpush1.xpose.msra.mxu0 0.0
        %1898 = vmatprep.subr.mxu0 0.0
        %1899 = vmatpush1.xpose.msra.mxu0 0.0
        %1900 = vmatprep.mubr.f32.mxu0 0.0
        %1901 = vmatmul.mubr.f32.gmra.mrb[0].mxu0 %v1828
        %v1902 = vpop.f32.mrb[0].mxu0
        %v1903 = vadd.f32 %v1030, %v1902
        %v1904 = vpop.f32.mrb[0].mxu0
        %1905 = vdwg.mxu0
        %v1906 = vsel %vm1190, %v1903, -inf
        %1907 = vmax.xlane.f32.xlu0 %v1906
        %v1908 = vpop.xlane.xlu0 %1907
        %v1909 = vsub.f32 %v1903, %v1908
        %v1910 = vmul.f32 %v1909, 1.442695
        %v1911 = vpow.pop %v1910
        %v1912 = vsel %vm1190, %v1911, 0.0
        %1913 = vadd.xlane.f32.xlu0 %v1912
        %v1914 = vpop.xlane.xlu0 %1913
        %v1915 = vrcp.pop %v1914
        %v1916 = vmul.f32 %v1911, %v1915
        %v1917 = vpack.c.bf16 %v1916, %v1916
        %1918 = vrot.lane.b32.xlu0 %v1203, 72
        %v1919 = vpop.permute.xlu0 %1918
        %1920 = vrot.lane.b32.xlu0 %v1204, 72
        %v1921 = vpop.permute.xlu0 %1920
        %v1924 = vsel %vm1190, %v1917, 0
        %v1927 = vsel %vm1215, %v1921, 0
        %1929 = vmatprep.subr.bf16.mxu0 0
        %1930 = vmatpush1.bf16.msra.mxu0 %v1919
        %1931 = vmatprep.subr.bf16.mxu0 0
        %1932 = vmatpush1.bf16.msra.mxu0 %v1927
        %1933 = vmatprep.subr.bf16.mxu0 0
        %1934 = vmatpush1.bf16.msra.mxu0 0
        %1935 = vmatprep.subr.bf16.mxu0 0
        %1936 = vmatpush1.bf16.msra.mxu0 0
        %1937 = vmatprep.subr.bf16.mxu0 0
        %1938 = vmatpush1.bf16.msra.mxu0 0
        %1939 = vmatprep.subr.bf16.mxu0 0
        %1940 = vmatpush1.bf16.msra.mxu0 0
        %1941 = vmatprep.subr.bf16.mxu0 0
        %1942 = vmatpush1.bf16.msra.mxu0 0
        %1943 = vmatprep.subr.bf16.mxu0 0
        %1944 = vmatpush1.bf16.msra.mxu0 0
        %1945 = vmatprep.subr.bf16.mxu0 0
        %1946 = vmatpush1.bf16.msra.mxu0 0
        %1947 = vmatprep.subr.bf16.mxu0 0
        %1948 = vmatpush1.bf16.msra.mxu0 0
        %1949 = vmatprep.subr.bf16.mxu0 0
        %1950 = vmatpush1.bf16.msra.mxu0 0
        %1951 = vmatprep.subr.bf16.mxu0 0
        %1952 = vmatpush1.bf16.msra.mxu0 0
        %1953 = vmatprep.subr.bf16.mxu0 0
        %1954 = vmatpush1.bf16.msra.mxu0 0
        %1955 = vmatprep.subr.bf16.mxu0 0
        %1956 = vmatpush1.bf16.msra.mxu0 0
        %1957 = vmatprep.subr.bf16.mxu0 0
        %1958 = vmatpush1.bf16.msra.mxu0 0
        %1959 = vmatprep.subr.bf16.mxu0 0
        %1960 = vmatpush1.bf16.msra.mxu0 0
        %1961 = vmatprep.mubr.bf16.mxu0 0
        %1962 = vmatmul.mubr.bf16.gmra.mrb[0].mxu0 %v1924
        %v1963 = vpop.f32.mrb[0].mxu0
        %v1964 = vadd.f32 0.0, %v1963
        %v1965 = vpop.f32.mrb[0].mxu0
        %v1966 = vpop.f32.mrb[0].mxu0
        %v1967 = vpop.f32.mrb[0].mxu0
        %1968 = vdwg.mxu0
        %1970 = vrot.lane.b32.xlu0 %v1964, 24
        %v1971 = vpop.permute.xlu0 %1970
        %vm1973 = vcmask 261312
        %1974 = vst.msk [vmem:[#allocation2] sm:$0xff] %vm1973, %v1971
        %1976 = vrot.lane.b32.xlu0 %v937, 96
        %v1977 = vpop.permute.xlu0 %1976
        %1979 = vset.pattern.permute.xlu0 1
        %1980 = vperm.xlu0 %1979, %v1013
        %v1981 = vpop.permute.xlu0 %1980
        %v1983 = vlaneseq
        %v1984 = vshrl.u32 %v1983, 7
        %v1985 = vsub.s32 1, %v1984
        %v1986 = vrot.slane %v1014, %v1985
        %v1987 = vmul.f32 %v1981, %v1986
        %v1988 = vsub.f32 1.0, %v1987
        %v1989 = vmul.f32 %v1988, -1e+30
        %v1990 = vmul.f32 %v937, %v937
        %v1991 = vsel %vm1032, %v1990, 0.0
        %1992 = vadd.xlane.f32.xlu0 %v1991
        %v1993 = vpop.xlane.xlu0 %1992
        %v1994 = vrsqrt.pop %v1993
        %v1995 = vmul.f32 %v1993, %v1994
        %vm1996 = vcmp.eq.f32.partialorder %v1993, inf
        %v1997 = vsel %vm1996, %v1993, %v1995
        %vm1998 = vcmp.eq.f32.partialorder %v1993, 0.0
        %v1999 = vand.u32 %v1993, 2147483648
        %v2000 = vsel %vm1998, %v1999, %v1997
        %v2001 = vmul.f32 %v2000, 0.35355338
        %v2002 = vmax.f32 %v2001, 1e-08
        %v2003 = vrcp.pop %v2002
        %v2004 = vmul.f32 %v937, %v2003
        %v2005 = vmul.f32 %v2004, %v1051
        %v2006 = vmul.f32 %v1005, %v1005
        %v2007 = vmul.f32 %v1008, %v1008
        %v2008 = vmul.f32 %v1977, %v1977
        %v2009 = vsel %vm1032, %v2006, 0.0
        %2010 = vadd.xlane.f32.xlu0 %v2009
        %v2011 = vpop.xlane.xlu0 %2010
        %v2012 = vsel %vm1032, %v2007, 0.0
        %2013 = vadd.xlane.f32.xlu0 %v2012
        %v2014 = vpop.xlane.xlu0 %2013
        %v2015 = vsel %vm1032, %v2008, 0.0
        %2016 = vadd.xlane.f32.xlu0 %v2015
        %v2017 = vpop.xlane.xlu0 %2016
        %v2018 = vrsqrt.pop %v2011
        %v2019 = vmul.f32 %v2011, %v2018
        %vm2020 = vcmp.eq.f32.partialorder %v2011, inf
        %v2021 = vsel %vm2020, %v2011, %v2019
        %vm2022 = vcmp.eq.f32.partialorder %v2011, 0.0
        %v2023 = vand.u32 %v2011, 2147483648
        %v2024 = vsel %vm2022, %v2023, %v2021
        %v2025 = vrsqrt.pop %v2014
        %v2026 = vmul.f32 %v2014, %v2025
        %vm2027 = vcmp.eq.f32.partialorder %v2014, inf
        %v2028 = vsel %vm2027, %v2014, %v2026
        %vm2029 = vcmp.eq.f32.partialorder %v2014, 0.0
        %v2030 = vand.u32 %v2014, 2147483648
        %v2031 = vsel %vm2029, %v2030, %v2028
        %v2032 = vrsqrt.pop %v2017
        %v2033 = vmul.f32 %v2017, %v2032
        %vm2034 = vcmp.eq.f32.partialorder %v2017, inf
        %v2035 = vsel %vm2034, %v2017, %v2033
        %vm2036 = vcmp.eq.f32.partialorder %v2017, 0.0
        %v2037 = vand.u32 %v2017, 2147483648
        %v2038 = vsel %vm2036, %v2037, %v2035
        %v2039 = vmul.f32 %v2024, 0.35355338
        %v2040 = vmul.f32 %v2031, 0.35355338
        %v2041 = vmul.f32 %v2038, 0.35355338
        %v2042 = vmax.f32 %v2039, 1e-08
        %v2043 = vmax.f32 %v2040, 1e-08
        %v2044 = vmax.f32 %v2041, 1e-08
        %v2045 = vrcp.pop %v2042
        %v2046 = vmul.f32 %v1005, %v2045
        %v2047 = vrcp.pop %v2043
        %v2048 = vmul.f32 %v1008, %v2047
        %v2049 = vrcp.pop %v2044
        %v2050 = vmul.f32 %v1977, %v2049
        %v2051 = vmul.f32 %v2046, %v1103
        %v2052 = vmul.f32 %v2048, %v1103
        %v2053 = vmul.f32 %v2050, %v1103
        %v2055 = vsel %vm1032, %v2005, 0
        %v2058 = vsel %vm1032, %v2051, 0
        %v2061 = vsel %vm1032, %v2052, 0
        %v2064 = vsel %vm1032, %v2053, 0
        %2066 = vmatprep.subr.mxu0 0.0
        %2067 = vmatpush1.xpose.msra.mxu0 %v2058
        %2068 = vmatprep.subr.mxu0 0.0
        %2069 = vmatpush1.xpose.msra.mxu0 %v2061
        %2070 = vmatprep.subr.mxu0 0.0
        %2071 = vmatpush1.xpose.msra.mxu0 %v2064
        %2072 = vmatprep.subr.mxu0 0.0
        %2073 = vmatpush1.xpose.msra.mxu0 0.0
        %2074 = vmatprep.subr.mxu0 0.0
        %2075 = vmatpush1.xpose.msra.mxu0 0.0
        %2076 = vmatprep.subr.mxu0 0.0
        %2077 = vmatpush1.xpose.msra.mxu0 0.0
        %2078 = vmatprep.subr.mxu0 0.0
        %2079 = vmatpush1.xpose.msra.mxu0 0.0
        %2080 = vmatprep.subr.mxu0 0.0
        %2081 = vmatpush1.xpose.msra.mxu0 0.0
        %2082 = vmatprep.subr.mxu0 0.0
        %2083 = vmatpush1.xpose.msra.mxu0 0.0
        %2084 = vmatprep.subr.mxu0 0.0
        %2085 = vmatpush1.xpose.msra.mxu0 0.0
        %2086 = vmatprep.subr.mxu0 0.0
        %2087 = vmatpush1.xpose.msra.mxu0 0.0
        %2088 = vmatprep.subr.mxu0 0.0
        %2089 = vmatpush1.xpose.msra.mxu0 0.0
        %2090 = vmatprep.subr.mxu0 0.0
        %2091 = vmatpush1.xpose.msra.mxu0 0.0
        %2092 = vmatprep.subr.mxu0 0.0
        %2093 = vmatpush1.xpose.msra.mxu0 0.0
        %2094 = vmatprep.subr.mxu0 0.0
        %2095 = vmatpush1.xpose.msra.mxu0 0.0
        %2096 = vmatprep.subr.mxu0 0.0
        %2097 = vmatpush1.xpose.msra.mxu0 0.0
        %2098 = vmatprep.subr.mxu0 0.0
        %2099 = vmatpush1.xpose.msra.mxu0 0.0
        %2100 = vmatprep.subr.mxu0 0.0
        %2101 = vmatpush1.xpose.msra.mxu0 0.0
        %2102 = vmatprep.subr.mxu0 0.0
        %2103 = vmatpush1.xpose.msra.mxu0 0.0
        %2104 = vmatprep.subr.mxu0 0.0
        %2105 = vmatpush1.xpose.msra.mxu0 0.0
        %2106 = vmatprep.subr.mxu0 0.0
        %2107 = vmatpush1.xpose.msra.mxu0 0.0
        %2108 = vmatprep.subr.mxu0 0.0
        %2109 = vmatpush1.xpose.msra.mxu0 0.0
        %2110 = vmatprep.subr.mxu0 0.0
        %2111 = vmatpush1.xpose.msra.mxu0 0.0
        %2112 = vmatprep.subr.mxu0 0.0
        %2113 = vmatpush1.xpose.msra.mxu0 0.0
        %2114 = vmatprep.subr.mxu0 0.0
        %2115 = vmatpush1.xpose.msra.mxu0 0.0
        %2116 = vmatprep.subr.mxu0 0.0
        %2117 = vmatpush1.xpose.msra.mxu0 0.0
        %2118 = vmatprep.subr.mxu0 0.0
        %2119 = vmatpush1.xpose.msra.mxu0 0.0
        %2120 = vmatprep.subr.mxu0 0.0
        %2121 = vmatpush1.xpose.msra.mxu0 0.0
        %2122 = vmatprep.subr.mxu0 0.0
        %2123 = vmatpush1.xpose.msra.mxu0 0.0
        %2124 = vmatprep.subr.mxu0 0.0
        %2125 = vmatpush1.xpose.msra.mxu0 0.0
        %2126 = vmatprep.subr.mxu0 0.0
        %2127 = vmatpush1.xpose.msra.mxu0 0.0
        %2128 = vmatprep.subr.mxu0 0.0
        %2129 = vmatpush1.xpose.msra.mxu0 0.0
        %2130 = vmatprep.mubr.f32.mxu0 0.0
        %2131 = vmatmul.mubr.f32.gmra.mrb[0].mxu0 %v2055
        %v2132 = vpop.f32.mrb[0].mxu0
        %v2133 = vadd.f32 %v1989, %v2132
        %v2134 = vpop.f32.mrb[0].mxu0
        %2135 = vdwg.mxu0
        %v2136 = vsel %vm1190, %v2133, -inf
        %2137 = vmax.xlane.f32.xlu0 %v2136
        %v2138 = vpop.xlane.xlu0 %2137
        %v2139 = vsub.f32 %v2133, %v2138
        %v2140 = vmul.f32 %v2139, 1.442695
        %v2141 = vpow.pop %v2140
        %v2142 = vsel %vm1190, %v2141, 0.0
        %2143 = vadd.xlane.f32.xlu0 %v2142
        %v2144 = vpop.xlane.xlu0 %2143
        %v2145 = vrcp.pop %v2144
        %v2146 = vmul.f32 %v2141, %v2145
        %v2147 = vpack.c.bf16 %v2146, %v2146
        %v2148 = vpack.c.bf16 %v1008, %v1005
        %v2149 = vpack.c.bf16 %v1977, %v1977
        %2152 = vrot.lane.b32.xlu0 %v2148, 96
        %v2153 = vpop.permute.xlu0 %2152
        %2154 = vrot.lane.b32.xlu0 %v2149, 96
        %v2155 = vpop.permute.xlu0 %2154
        %v2158 = vsel %vm1190, %v2147, 0
        %v2161 = vsel %vm1215, %v2155, 0
        %2163 = vmatprep.subr.bf16.mxu0 0
        %2164 = vmatpush1.bf16.msra.mxu0 %v2153
        %2165 = vmatprep.subr.bf16.mxu0 0
        %2166 = vmatpush1.bf16.msra.mxu0 %v2161
        %2167 = vmatprep.subr.bf16.mxu0 0
        %2168 = vmatpush1.bf16.msra.mxu0 0
        %2169 = vmatprep.subr.bf16.mxu0 0
        %2170 = vmatpush1.bf16.msra.mxu0 0
        %2171 = vmatprep.subr.bf16.mxu0 0
        %2172 = vmatpush1.bf16.msra.mxu0 0
        %2173 = vmatprep.subr.bf16.mxu0 0
        %2174 = vmatpush1.bf16.msra.mxu0 0
        %2175 = vmatprep.subr.bf16.mxu0 0
        %2176 = vmatpush1.bf16.msra.mxu0 0
        %2177 = vmatprep.subr.bf16.mxu0 0
        %2178 = vmatpush1.bf16.msra.mxu0 0
        %2179 = vmatprep.subr.bf16.mxu0 0
        %2180 = vmatpush1.bf16.msra.mxu0 0
        %2181 = vmatprep.subr.bf16.mxu0 0
        %2182 = vmatpush1.bf16.msra.mxu0 0
        %2183 = vmatprep.subr.bf16.mxu0 0
        %2184 = vmatpush1.bf16.msra.mxu0 0
        %2185 = vmatprep.subr.bf16.mxu0 0
        %2186 = vmatpush1.bf16.msra.mxu0 0
        %2187 = vmatprep.subr.bf16.mxu0 0
        %2188 = vmatpush1.bf16.msra.mxu0 0
        %2189 = vmatprep.subr.bf16.mxu0 0
        %2190 = vmatpush1.bf16.msra.mxu0 0
        %2191 = vmatprep.subr.bf16.mxu0 0
        %2192 = vmatpush1.bf16.msra.mxu0 0
        %2193 = vmatprep.subr.bf16.mxu0 0
        %2194 = vmatpush1.bf16.msra.mxu0 0
        %2195 = vmatprep.mubr.bf16.mxu0 0
        %2196 = vmatmul.mubr.bf16.gmra.mrb[0].mxu0 %v2158
        %v2197 = vpop.f32.mrb[0].mxu0
        %v2198 = vadd.f32 0.0, %v2197
        %v2199 = vpop.f32.mrb[0].mxu0
        %v2200 = vpop.f32.mrb[0].mxu0
        %v2201 = vpop.f32.mrb[0].mxu0
        %2202 = vdwg.mxu0
        %2203 = vst.msk [vmem:[#allocation2 + $0x8] sm:$0xff] %vm1032, %v2198
        %2205 = vrot.lane.b32.xlu0 %v1990, 120
        %v2206 = vpop.permute.xlu0 %2205
        %v2208 = vsel %vm1032, %v2206, 0.0
        %2209 = vadd.xlane.f32.xlu0 %v2208
        %v2210 = vpop.xlane.xlu0 %2209
        %v2211 = vrsqrt.pop %v2210
        %v2212 = vmul.f32 %v2210, %v2211
        %vm2213 = vcmp.eq.f32.partialorder %v2210, inf
        %v2214 = vsel %vm2213, %v2210, %v2212
        %vm2215 = vcmp.eq.f32.partialorder %v2210, 0.0
        %v2216 = vand.u32 %v2210, 2147483648
        %v2217 = vsel %vm2215, %v2216, %v2214
        %v2218 = vmul.f32 %v2217, 0.35355338
        %v2219 = vmax.f32 %v2218, 1e-08
        %v2220 = vrcp.pop %v2219
        %v2221 = vmul.f32 %v937, %v2220
        %v2222 = vmul.f32 %v2221, %v1279
        %2226 = vrot.lane.b32.xlu0 %v2006, 120
        %v2227 = vpop.permute.xlu0 %2226
        %2228 = vrot.lane.b32.xlu0 %v2007, 120
        %v2229 = vpop.permute.xlu0 %2228
        %2230 = vrot.lane.b32.xlu0 %v2008, 120
        %v2231 = vpop.permute.xlu0 %2230
        %v2235 = vsel %vm1032, %v2227, 0.0
        %2236 = vadd.xlane.f32.xlu0 %v2235
        %v2237 = vpop.xlane.xlu0 %2236
        %v2238 = vsel %vm1032, %v2229, 0.0
        %2239 = vadd.xlane.f32.xlu0 %v2238
        %v2240 = vpop.xlane.xlu0 %2239
        %v2241 = vsel %vm1032, %v2231, 0.0
        %2242 = vadd.xlane.f32.xlu0 %v2241
        %v2243 = vpop.xlane.xlu0 %2242
        %v2244 = vrsqrt.pop %v2237
        %v2245 = vmul.f32 %v2237, %v2244
        %vm2246 = vcmp.eq.f32.partialorder %v2237, inf
        %v2247 = vsel %vm2246, %v2237, %v2245
        %vm2248 = vcmp.eq.f32.partialorder %v2237, 0.0
        %v2249 = vand.u32 %v2237, 2147483648
        %v2250 = vsel %vm2248, %v2249, %v2247
        %v2251 = vrsqrt.pop %v2240
        %v2252 = vmul.f32 %v2240, %v2251
        %vm2253 = vcmp.eq.f32.partialorder %v2240, inf
        %v2254 = vsel %vm2253, %v2240, %v2252
        %vm2255 = vcmp.eq.f32.partialorder %v2240, 0.0
        %v2256 = vand.u32 %v2240, 2147483648
        %v2257 = vsel %vm2255, %v2256, %v2254
        %v2258 = vrsqrt.pop %v2243
        %v2259 = vmul.f32 %v2243, %v2258
        %vm2260 = vcmp.eq.f32.partialorder %v2243, inf
        %v2261 = vsel %vm2260, %v2243, %v2259
        %vm2262 = vcmp.eq.f32.partialorder %v2243, 0.0
        %v2263 = vand.u32 %v2243, 2147483648
        %v2264 = vsel %vm2262, %v2263, %v2261
        %v2265 = vmul.f32 %v2250, 0.35355338
        %v2266 = vmul.f32 %v2257, 0.35355338
        %v2267 = vmul.f32 %v2264, 0.35355338
        %v2268 = vmax.f32 %v2265, 1e-08
        %v2269 = vmax.f32 %v2266, 1e-08
        %v2270 = vmax.f32 %v2267, 1e-08
        %v2271 = vrcp.pop %v2268
        %v2272 = vmul.f32 %v1005, %v2271
        %v2273 = vrcp.pop %v2269
        %v2274 = vmul.f32 %v1008, %v2273
        %v2275 = vrcp.pop %v2270
        %v2276 = vmul.f32 %v1977, %v2275
        %v2277 = vmul.f32 %v2272, %v1337
        %v2278 = vmul.f32 %v2274, %v1337
        %v2279 = vmul.f32 %v2276, %v1337
        %2281 = vrot.lane.b32.xlu0 %v2222, 120
        %v2282 = vpop.permute.xlu0 %2281
        %2286 = vrot.lane.b32.xlu0 %v2277, 120
        %v2287 = vpop.permute.xlu0 %2286
        %2288 = vrot.lane.b32.xlu0 %v2278, 120
        %v2289 = vpop.permute.xlu0 %2288
        %2290 = vrot.lane.b32.xlu0 %v2279, 120
        %v2291 = vpop.permute.xlu0 %2290
        %v2292 = vsel %vm1032, %v2282, 0
        %v2294 = vsel %vm1032, %v2287, 0
        %v2296 = vsel %vm1032, %v2289, 0
        %v2298 = vsel %vm1032, %v2291, 0
        %2300 = vmatprep.subr.mxu0 0.0
        %2301 = vmatpush1.xpose.msra.mxu0 %v2294
        %2302 = vmatprep.subr.mxu0 0.0
        %2303 = vmatpush1.xpose.msra.mxu0 %v2296
        %2304 = vmatprep.subr.mxu0 0.0
        %2305 = vmatpush1.xpose.msra.mxu0 %v2298
        %2306 = vmatprep.subr.mxu0 0.0
        %2307 = vmatpush1.xpose.msra.mxu0 0.0
        %2308 = vmatprep.subr.mxu0 0.0
        %2309 = vmatpush1.xpose.msra.mxu0 0.0
        %2310 = vmatprep.subr.mxu0 0.0
        %2311 = vmatpush1.xpose.msra.mxu0 0.0
        %2312 = vmatprep.subr.mxu0 0.0
        %2313 = vmatpush1.xpose.msra.mxu0 0.0
        %2314 = vmatprep.subr.mxu0 0.0
        %2315 = vmatpush1.xpose.msra.mxu0 0.0
        %2316 = vmatprep.subr.mxu0 0.0
        %2317 = vmatpush1.xpose.msra.mxu0 0.0
        %2318 = vmatprep.subr.mxu0 0.0
        %2319 = vmatpush1.xpose.msra.mxu0 0.0
        %2320 = vmatprep.subr.mxu0 0.0
        %2321 = vmatpush1.xpose.msra.mxu0 0.0
        %2322 = vmatprep.subr.mxu0 0.0
        %2323 = vmatpush1.xpose.msra.mxu0 0.0
        %2324 = vmatprep.subr.mxu0 0.0
        %2325 = vmatpush1.xpose.msra.mxu0 0.0
        %2326 = vmatprep.subr.mxu0 0.0
        %2327 = vmatpush1.xpose.msra.mxu0 0.0
        %2328 = vmatprep.subr.mxu0 0.0
        %2329 = vmatpush1.xpose.msra.mxu0 0.0
        %2330 = vmatprep.subr.mxu0 0.0
        %2331 = vmatpush1.xpose.msra.mxu0 0.0
        %2332 = vmatprep.subr.mxu0 0.0
        %2333 = vmatpush1.xpose.msra.mxu0 0.0
        %2334 = vmatprep.subr.mxu0 0.0
        %2335 = vmatpush1.xpose.msra.mxu0 0.0
        %2336 = vmatprep.subr.mxu0 0.0
        %2337 = vmatpush1.xpose.msra.mxu0 0.0
        %2338 = vmatprep.subr.mxu0 0.0
        %2339 = vmatpush1.xpose.msra.mxu0 0.0
        %2340 = vmatprep.subr.mxu0 0.0
        %2341 = vmatpush1.xpose.msra.mxu0 0.0
        %2342 = vmatprep.subr.mxu0 0.0
        %2343 = vmatpush1.xpose.msra.mxu0 0.0
        %2344 = vmatprep.subr.mxu0 0.0
        %2345 = vmatpush1.xpose.msra.mxu0 0.0
        %2346 = vmatprep.subr.mxu0 0.0
        %2347 = vmatpush1.xpose.msra.mxu0 0.0
        %2348 = vmatprep.subr.mxu0 0.0
        %2349 = vmatpush1.xpose.msra.mxu0 0.0
        %2350 = vmatprep.subr.mxu0 0.0
        %2351 = vmatpush1.xpose.msra.mxu0 0.0
        %2352 = vmatprep.subr.mxu0 0.0
        %2353 = vmatpush1.xpose.msra.mxu0 0.0
        %2354 = vmatprep.subr.mxu0 0.0
        %2355 = vmatpush1.xpose.msra.mxu0 0.0
        %2356 = vmatprep.subr.mxu0 0.0
        %2357 = vmatpush1.xpose.msra.mxu0 0.0
        %2358 = vmatprep.subr.mxu0 0.0
        %2359 = vmatpush1.xpose.msra.mxu0 0.0
        %2360 = vmatprep.subr.mxu0 0.0
        %2361 = vmatpush1.xpose.msra.mxu0 0.0
        %2362 = vmatprep.subr.mxu0 0.0
        %2363 = vmatpush1.xpose.msra.mxu0 0.0
        %2364 = vmatprep.mubr.f32.mxu0 0.0
        %2365 = vmatmul.mubr.f32.gmra.mrb[0].mxu0 %v2292
        %v2366 = vpop.f32.mrb[0].mxu0
        %v2367 = vadd.f32 %v1989, %v2366
        %v2368 = vpop.f32.mrb[0].mxu0
        %2369 = vdwg.mxu0
        %v2370 = vsel %vm1190, %v2367, -inf
        %2371 = vmax.xlane.f32.xlu0 %v2370
        %v2372 = vpop.xlane.xlu0 %2371
        %v2373 = vsub.f32 %v2367, %v2372
        %v2374 = vmul.f32 %v2373, 1.442695
        %v2375 = vpow.pop %v2374
        %v2376 = vsel %vm1190, %v2375, 0.0
        %2377 = vadd.xlane.f32.xlu0 %v2376
        %v2378 = vpop.xlane.xlu0 %2377
        %v2379 = vrcp.pop %v2378
        %v2380 = vmul.f32 %v2375, %v2379
        %v2381 = vpack.c.bf16 %v2380, %v2380
        %2382 = vrot.lane.b32.xlu0 %v2148, 88
        %v2383 = vpop.permute.xlu0 %2382
        %2384 = vrot.lane.b32.xlu0 %v2149, 88
        %v2385 = vpop.permute.xlu0 %2384
        %v2388 = vsel %vm1190, %v2381, 0
        %v2391 = vsel %vm1215, %v2385, 0
        %2393 = vmatprep.subr.bf16.mxu0 0
        %2394 = vmatpush1.bf16.msra.mxu0 %v2383
        %2395 = vmatprep.subr.bf16.mxu0 0
        %2396 = vmatpush1.bf16.msra.mxu0 %v2391
        %2397 = vmatprep.subr.bf16.mxu0 0
        %2398 = vmatpush1.bf16.msra.mxu0 0
        %2399 = vmatprep.subr.bf16.mxu0 0
        %2400 = vmatpush1.bf16.msra.mxu0 0
        %2401 = vmatprep.subr.bf16.mxu0 0
        %2402 = vmatpush1.bf16.msra.mxu0 0
        %2403 = vmatprep.subr.bf16.mxu0 0
        %2404 = vmatpush1.bf16.msra.mxu0 0
        %2405 = vmatprep.subr.bf16.mxu0 0
        %2406 = vmatpush1.bf16.msra.mxu0 0
        %2407 = vmatprep.subr.bf16.mxu0 0
        %2408 = vmatpush1.bf16.msra.mxu0 0
        %2409 = vmatprep.subr.bf16.mxu0 0
        %2410 = vmatpush1.bf16.msra.mxu0 0
        %2411 = vmatprep.subr.bf16.mxu0 0
        %2412 = vmatpush1.bf16.msra.mxu0 0
        %2413 = vmatprep.subr.bf16.mxu0 0
        %2414 = vmatpush1.bf16.msra.mxu0 0
        %2415 = vmatprep.subr.bf16.mxu0 0
        %2416 = vmatpush1.bf16.msra.mxu0 0
        %2417 = vmatprep.subr.bf16.mxu0 0
        %2418 = vmatpush1.bf16.msra.mxu0 0
        %2419 = vmatprep.subr.bf16.mxu0 0
        %2420 = vmatpush1.bf16.msra.mxu0 0
        %2421 = vmatprep.subr.bf16.mxu0 0
        %2422 = vmatpush1.bf16.msra.mxu0 0
        %2423 = vmatprep.subr.bf16.mxu0 0
        %2424 = vmatpush1.bf16.msra.mxu0 0
        %2425 = vmatprep.mubr.bf16.mxu0 0
        %2426 = vmatmul.mubr.bf16.gmra.mrb[0].mxu0 %v2388
        %v2427 = vpop.f32.mrb[0].mxu0
        %v2428 = vadd.f32 0.0, %v2427
        %v2429 = vpop.f32.mrb[0].mxu0
        %v2430 = vpop.f32.mrb[0].mxu0
        %v2431 = vpop.f32.mrb[0].mxu0
        %2432 = vdwg.mxu0
        %2434 = vrot.lane.b32.xlu0 %v2428, 8
        %v2435 = vpop.permute.xlu0 %2434
        %2437 = vst.msk [vmem:[#allocation2 + $0x8] sm:$0xff] %vm1499, %v2435
        %2438 = vrot.lane.b32.xlu0 %v1990, 112
        %v2439 = vpop.permute.xlu0 %2438
        %v2441 = vsel %vm1032, %v2439, 0.0
        %2442 = vadd.xlane.f32.xlu0 %v2441
        %v2443 = vpop.xlane.xlu0 %2442
        %v2444 = vrsqrt.pop %v2443
        %v2445 = vmul.f32 %v2443, %v2444
        %vm2446 = vcmp.eq.f32.partialorder %v2443, inf
        %v2447 = vsel %vm2446, %v2443, %v2445
        %vm2448 = vcmp.eq.f32.partialorder %v2443, 0.0
        %v2449 = vand.u32 %v2443, 2147483648
        %v2450 = vsel %vm2448, %v2449, %v2447
        %v2451 = vmul.f32 %v2450, 0.35355338
        %v2452 = vmax.f32 %v2451, 1e-08
        %v2453 = vrcp.pop %v2452
        %v2454 = vmul.f32 %v937, %v2453
        %v2455 = vmul.f32 %v2454, %v1519
        %2456 = vrot.lane.b32.xlu0 %v2006, 112
        %v2457 = vpop.permute.xlu0 %2456
        %2458 = vrot.lane.b32.xlu0 %v2007, 112
        %v2459 = vpop.permute.xlu0 %2458
        %2460 = vrot.lane.b32.xlu0 %v2008, 112
        %v2461 = vpop.permute.xlu0 %2460
        %v2465 = vsel %vm1032, %v2457, 0.0
        %2466 = vadd.xlane.f32.xlu0 %v2465
        %v2467 = vpop.xlane.xlu0 %2466
        %v2468 = vsel %vm1032, %v2459, 0.0
        %2469 = vadd.xlane.f32.xlu0 %v2468
        %v2470 = vpop.xlane.xlu0 %2469
        %v2471 = vsel %vm1032, %v2461, 0.0
        %2472 = vadd.xlane.f32.xlu0 %v2471
        %v2473 = vpop.xlane.xlu0 %2472
        %v2474 = vrsqrt.pop %v2467
        %v2475 = vmul.f32 %v2467, %v2474
        %vm2476 = vcmp.eq.f32.partialorder %v2467, inf
        %v2477 = vsel %vm2476, %v2467, %v2475
        %vm2478 = vcmp.eq.f32.partialorder %v2467, 0.0
        %v2479 = vand.u32 %v2467, 2147483648
        %v2480 = vsel %vm2478, %v2479, %v2477
        %v2481 = vrsqrt.pop %v2470
        %v2482 = vmul.f32 %v2470, %v2481
        %vm2483 = vcmp.eq.f32.partialorder %v2470, inf
        %v2484 = vsel %vm2483, %v2470, %v2482
        %vm2485 = vcmp.eq.f32.partialorder %v2470, 0.0
        %v2486 = vand.u32 %v2470, 2147483648
        %v2487 = vsel %vm2485, %v2486, %v2484
        %v2488 = vrsqrt.pop %v2473
        %v2489 = vmul.f32 %v2473, %v2488
        %vm2490 = vcmp.eq.f32.partialorder %v2473, inf
        %v2491 = vsel %vm2490, %v2473, %v2489
        %vm2492 = vcmp.eq.f32.partialorder %v2473, 0.0
        %v2493 = vand.u32 %v2473, 2147483648
        %v2494 = vsel %vm2492, %v2493, %v2491
        %v2495 = vmul.f32 %v2480, 0.35355338
        %v2496 = vmul.f32 %v2487, 0.35355338
        %v2497 = vmul.f32 %v2494, 0.35355338
        %v2498 = vmax.f32 %v2495, 1e-08
        %v2499 = vmax.f32 %v2496, 1e-08
        %v2500 = vmax.f32 %v2497, 1e-08
        %v2501 = vrcp.pop %v2498
        %v2502 = vmul.f32 %v1005, %v2501
        %v2503 = vrcp.pop %v2499
        %v2504 = vmul.f32 %v1008, %v2503
        %v2505 = vrcp.pop %v2500
        %v2506 = vmul.f32 %v1977, %v2505
        %v2507 = vmul.f32 %v2502, %v1574
        %v2508 = vmul.f32 %v2504, %v1574
        %v2509 = vmul.f32 %v2506, %v1574
        %2511 = vrot.lane.b32.xlu0 %v2455, 112
        %v2512 = vpop.permute.xlu0 %2511
        %2516 = vrot.lane.b32.xlu0 %v2507, 112
        %v2517 = vpop.permute.xlu0 %2516
        %2518 = vrot.lane.b32.xlu0 %v2508, 112
        %v2519 = vpop.permute.xlu0 %2518
        %2520 = vrot.lane.b32.xlu0 %v2509, 112
        %v2521 = vpop.permute.xlu0 %2520
        %v2522 = vsel %vm1032, %v2512, 0
        %v2524 = vsel %vm1032, %v2517, 0
        %v2526 = vsel %vm1032, %v2519, 0
        %v2528 = vsel %vm1032, %v2521, 0
        %2530 = vmatprep.subr.mxu0 0.0
        %2531 = vmatpush1.xpose.msra.mxu0 %v2524
        %2532 = vmatprep.subr.mxu0 0.0
        %2533 = vmatpush1.xpose.msra.mxu0 %v2526
        %2534 = vmatprep.subr.mxu0 0.0
        %2535 = vmatpush1.xpose.msra.mxu0 %v2528
        %2536 = vmatprep.subr.mxu0 0.0
        %2537 = vmatpush1.xpose.msra.mxu0 0.0
        %2538 = vmatprep.subr.mxu0 0.0
        %2539 = vmatpush1.xpose.msra.mxu0 0.0
        %2540 = vmatprep.subr.mxu0 0.0
        %2541 = vmatpush1.xpose.msra.mxu0 0.0
        %2542 = vmatprep.subr.mxu0 0.0
        %2543 = vmatpush1.xpose.msra.mxu0 0.0
        %2544 = vmatprep.subr.mxu0 0.0
        %2545 = vmatpush1.xpose.msra.mxu0 0.0
        %2546 = vmatprep.subr.mxu0 0.0
        %2547 = vmatpush1.xpose.msra.mxu0 0.0
        %2548 = vmatprep.subr.mxu0 0.0
        %2549 = vmatpush1.xpose.msra.mxu0 0.0
        %2550 = vmatprep.subr.mxu0 0.0
        %2551 = vmatpush1.xpose.msra.mxu0 0.0
        %2552 = vmatprep.subr.mxu0 0.0
        %2553 = vmatpush1.xpose.msra.mxu0 0.0
        %2554 = vmatprep.subr.mxu0 0.0
        %2555 = vmatpush1.xpose.msra.mxu0 0.0
        %2556 = vmatprep.subr.mxu0 0.0
        %2557 = vmatpush1.xpose.msra.mxu0 0.0
        %2558 = vmatprep.subr.mxu0 0.0
        %2559 = vmatpush1.xpose.msra.mxu0 0.0
        %2560 = vmatprep.subr.mxu0 0.0
        %2561 = vmatpush1.xpose.msra.mxu0 0.0
        %2562 = vmatprep.subr.mxu0 0.0
        %2563 = vmatpush1.xpose.msra.mxu0 0.0
        %2564 = vmatprep.subr.mxu0 0.0
        %2565 = vmatpush1.xpose.msra.mxu0 0.0
        %2566 = vmatprep.subr.mxu0 0.0
        %2567 = vmatpush1.xpose.msra.mxu0 0.0
        %2568 = vmatprep.subr.mxu0 0.0
        %2569 = vmatpush1.xpose.msra.mxu0 0.0
        %2570 = vmatprep.subr.mxu0 0.0
        %2571 = vmatpush1.xpose.msra.mxu0 0.0
        %2572 = vmatprep.subr.mxu0 0.0
        %2573 = vmatpush1.xpose.msra.mxu0 0.0
        %2574 = vmatprep.subr.mxu0 0.0
        %2575 = vmatpush1.xpose.msra.mxu0 0.0
        %2576 = vmatprep.subr.mxu0 0.0
        %2577 = vmatpush1.xpose.msra.mxu0 0.0
        %2578 = vmatprep.subr.mxu0 0.0
        %2579 = vmatpush1.xpose.msra.mxu0 0.0
        %2580 = vmatprep.subr.mxu0 0.0
        %2581 = vmatpush1.xpose.msra.mxu0 0.0
        %2582 = vmatprep.subr.mxu0 0.0
        %2583 = vmatpush1.xpose.msra.mxu0 0.0
        %2584 = vmatprep.subr.mxu0 0.0
        %2585 = vmatpush1.xpose.msra.mxu0 0.0
        %2586 = vmatprep.subr.mxu0 0.0
        %2587 = vmatpush1.xpose.msra.mxu0 0.0
        %2588 = vmatprep.subr.mxu0 0.0
        %2589 = vmatpush1.xpose.msra.mxu0 0.0
        %2590 = vmatprep.subr.mxu0 0.0
        %2591 = vmatpush1.xpose.msra.mxu0 0.0
        %2592 = vmatprep.subr.mxu0 0.0
        %2593 = vmatpush1.xpose.msra.mxu0 0.0
        %2594 = vmatprep.mubr.f32.mxu0 0.0
        %2595 = vmatmul.mubr.f32.gmra.mrb[0].mxu0 %v2522
        %v2596 = vpop.f32.mrb[0].mxu0
        %v2597 = vadd.f32 %v1989, %v2596
        %v2598 = vpop.f32.mrb[0].mxu0
        %2599 = vdwg.mxu0
        %v2600 = vsel %vm1190, %v2597, -inf
        %2601 = vmax.xlane.f32.xlu0 %v2600
        %v2602 = vpop.xlane.xlu0 %2601
        %v2603 = vsub.f32 %v2597, %v2602
        %v2604 = vmul.f32 %v2603, 1.442695
        %v2605 = vpow.pop %v2604
        %v2606 = vsel %vm1190, %v2605, 0.0
        %2607 = vadd.xlane.f32.xlu0 %v2606
        %v2608 = vpop.xlane.xlu0 %2607
        %v2609 = vrcp.pop %v2608
        %v2610 = vmul.f32 %v2605, %v2609
        %v2611 = vpack.c.bf16 %v2610, %v2610
        %2612 = vrot.lane.b32.xlu0 %v2148, 80
        %v2613 = vpop.permute.xlu0 %2612
        %2614 = vrot.lane.b32.xlu0 %v2149, 80
        %v2615 = vpop.permute.xlu0 %2614
        %v2618 = vsel %vm1190, %v2611, 0
        %v2621 = vsel %vm1215, %v2615, 0
        %2623 = vmatprep.subr.bf16.mxu0 0
        %2624 = vmatpush1.bf16.msra.mxu0 %v2613
        %2625 = vmatprep.subr.bf16.mxu0 0
        %2626 = vmatpush1.bf16.msra.mxu0 %v2621
        %2627 = vmatprep.subr.bf16.mxu0 0
        %2628 = vmatpush1.bf16.msra.mxu0 0
        %2629 = vmatprep.subr.bf16.mxu0 0
        %2630 = vmatpush1.bf16.msra.mxu0 0
        %2631 = vmatprep.subr.bf16.mxu0 0
        %2632 = vmatpush1.bf16.msra.mxu0 0
        %2633 = vmatprep.subr.bf16.mxu0 0
        %2634 = vmatpush1.bf16.msra.mxu0 0
        %2635 = vmatprep.subr.bf16.mxu0 0
        %2636 = vmatpush1.bf16.msra.mxu0 0
        %2637 = vmatprep.subr.bf16.mxu0 0
        %2638 = vmatpush1.bf16.msra.mxu0 0
        %2639 = vmatprep.subr.bf16.mxu0 0
        %2640 = vmatpush1.bf16.msra.mxu0 0
        %2641 = vmatprep.subr.bf16.mxu0 0
        %2642 = vmatpush1.bf16.msra.mxu0 0
        %2643 = vmatprep.subr.bf16.mxu0 0
        %2644 = vmatpush1.bf16.msra.mxu0 0
        %2645 = vmatprep.subr.bf16.mxu0 0
        %2646 = vmatpush1.bf16.msra.mxu0 0
        %2647 = vmatprep.subr.bf16.mxu0 0
        %2648 = vmatpush1.bf16.msra.mxu0 0
        %2649 = vmatprep.subr.bf16.mxu0 0
        %2650 = vmatpush1.bf16.msra.mxu0 0
        %2651 = vmatprep.subr.bf16.mxu0 0
        %2652 = vmatpush1.bf16.msra.mxu0 0
        %2653 = vmatprep.subr.bf16.mxu0 0
        %2654 = vmatpush1.bf16.msra.mxu0 0
        %2655 = vmatprep.mubr.bf16.mxu0 0
        %2656 = vmatmul.mubr.bf16.gmra.mrb[0].mxu0 %v2618
        %v2657 = vpop.f32.mrb[0].mxu0
        %v2658 = vadd.f32 0.0, %v2657
        %v2659 = vpop.f32.mrb[0].mxu0
        %v2660 = vpop.f32.mrb[0].mxu0
        %v2661 = vpop.f32.mrb[0].mxu0
        %2662 = vdwg.mxu0
        %2664 = vrot.lane.b32.xlu0 %v2658, 16
        %v2665 = vpop.permute.xlu0 %2664
        %2667 = vst.msk [vmem:[#allocation2 + $0x8] sm:$0xff] %vm1736, %v2665
        %2668 = vrot.lane.b32.xlu0 %v1990, 104
        %v2669 = vpop.permute.xlu0 %2668
        %v2671 = vsel %vm1032, %v2669, 0.0
        %2672 = vadd.xlane.f32.xlu0 %v2671
        %v2673 = vpop.xlane.xlu0 %2672
        %v2674 = vrsqrt.pop %v2673
        %v2675 = vmul.f32 %v2673, %v2674
        %vm2676 = vcmp.eq.f32.partialorder %v2673, inf
        %v2677 = vsel %vm2676, %v2673, %v2675
        %vm2678 = vcmp.eq.f32.partialorder %v2673, 0.0
        %v2679 = vand.u32 %v2673, 2147483648
        %v2680 = vsel %vm2678, %v2679, %v2677
        %v2681 = vmul.f32 %v2680, 0.35355338
        %v2682 = vmax.f32 %v2681, 1e-08
        %v2683 = vrcp.pop %v2682
        %v2684 = vmul.f32 %v937, %v2683
        %v2685 = vmul.f32 %v2684, %v1756
        %2686 = vrot.lane.b32.xlu0 %v2006, 104
        %v2687 = vpop.permute.xlu0 %2686
        %2688 = vrot.lane.b32.xlu0 %v2007, 104
        %v2689 = vpop.permute.xlu0 %2688
        %2690 = vrot.lane.b32.xlu0 %v2008, 104
        %v2691 = vpop.permute.xlu0 %2690
        %v2695 = vsel %vm1032, %v2687, 0.0
        %2696 = vadd.xlane.f32.xlu0 %v2695
        %v2697 = vpop.xlane.xlu0 %2696
        %v2698 = vsel %vm1032, %v2689, 0.0
        %2699 = vadd.xlane.f32.xlu0 %v2698
        %v2700 = vpop.xlane.xlu0 %2699
        %v2701 = vsel %vm1032, %v2691, 0.0
        %2702 = vadd.xlane.f32.xlu0 %v2701
        %v2703 = vpop.xlane.xlu0 %2702
        %v2704 = vrsqrt.pop %v2697
        %v2705 = vmul.f32 %v2697, %v2704
        %vm2706 = vcmp.eq.f32.partialorder %v2697, inf
        %v2707 = vsel %vm2706, %v2697, %v2705
        %vm2708 = vcmp.eq.f32.partialorder %v2697, 0.0
        %v2709 = vand.u32 %v2697, 2147483648
        %v2710 = vsel %vm2708, %v2709, %v2707
        %v2711 = vrsqrt.pop %v2700
        %v2712 = vmul.f32 %v2700, %v2711
        %vm2713 = vcmp.eq.f32.partialorder %v2700, inf
        %v2714 = vsel %vm2713, %v2700, %v2712
        %vm2715 = vcmp.eq.f32.partialorder %v2700, 0.0
        %v2716 = vand.u32 %v2700, 2147483648
        %v2717 = vsel %vm2715, %v2716, %v2714
        %v2718 = vrsqrt.pop %v2703
        %v2719 = vmul.f32 %v2703, %v2718
        %vm2720 = vcmp.eq.f32.partialorder %v2703, inf
        %v2721 = vsel %vm2720, %v2703, %v2719
        %vm2722 = vcmp.eq.f32.partialorder %v2703, 0.0
        %v2723 = vand.u32 %v2703, 2147483648
        %v2724 = vsel %vm2722, %v2723, %v2721
        %v2725 = vmul.f32 %v2710, 0.35355338
        %v2726 = vmul.f32 %v2717, 0.35355338
        %v2727 = vmul.f32 %v2724, 0.35355338
        %v2728 = vmax.f32 %v2725, 1e-08
        %v2729 = vmax.f32 %v2726, 1e-08
        %v2730 = vmax.f32 %v2727, 1e-08
        %v2731 = vrcp.pop %v2728
        %v2732 = vmul.f32 %v1005, %v2731
        %v2733 = vrcp.pop %v2729
        %v2734 = vmul.f32 %v1008, %v2733
        %v2735 = vrcp.pop %v2730
        %v2736 = vmul.f32 %v1977, %v2735
        %v2737 = vmul.f32 %v2732, %v1811
        %v2738 = vmul.f32 %v2734, %v1811
        %v2739 = vmul.f32 %v2736, %v1811
        %2741 = vrot.lane.b32.xlu0 %v2685, 104
        %v2742 = vpop.permute.xlu0 %2741
        %2746 = vrot.lane.b32.xlu0 %v2737, 104
        %v2747 = vpop.permute.xlu0 %2746
        %2748 = vrot.lane.b32.xlu0 %v2738, 104
        %v2749 = vpop.permute.xlu0 %2748
        %2750 = vrot.lane.b32.xlu0 %v2739, 104
        %v2751 = vpop.permute.xlu0 %2750
        %v2752 = vsel %vm1032, %v2742, 0
        %v2754 = vsel %vm1032, %v2747, 0
        %v2756 = vsel %vm1032, %v2749, 0
        %v2758 = vsel %vm1032, %v2751, 0
        %2760 = vmatprep.subr.mxu0 0.0
        %2761 = vmatpush1.xpose.msra.mxu0 %v2754
        %2762 = vmatprep.subr.mxu0 0.0
        %2763 = vmatpush1.xpose.msra.mxu0 %v2756
        %2764 = vmatprep.subr.mxu0 0.0
        %2765 = vmatpush1.xpose.msra.mxu0 %v2758
        %2766 = vmatprep.subr.mxu0 0.0
        %2767 = vmatpush1.xpose.msra.mxu0 0.0
        %2768 = vmatprep.subr.mxu0 0.0
        %2769 = vmatpush1.xpose.msra.mxu0 0.0
        %2770 = vmatprep.subr.mxu0 0.0
        %2771 = vmatpush1.xpose.msra.mxu0 0.0
        %2772 = vmatprep.subr.mxu0 0.0
        %2773 = vmatpush1.xpose.msra.mxu0 0.0
        %2774 = vmatprep.subr.mxu0 0.0
        %2775 = vmatpush1.xpose.msra.mxu0 0.0
        %2776 = vmatprep.subr.mxu0 0.0
        %2777 = vmatpush1.xpose.msra.mxu0 0.0
        %2778 = vmatprep.subr.mxu0 0.0
        %2779 = vmatpush1.xpose.msra.mxu0 0.0
        %2780 = vmatprep.subr.mxu0 0.0
        %2781 = vmatpush1.xpose.msra.mxu0 0.0
        %2782 = vmatprep.subr.mxu0 0.0
        %2783 = vmatpush1.xpose.msra.mxu0 0.0
        %2784 = vmatprep.subr.mxu0 0.0
        %2785 = vmatpush1.xpose.msra.mxu0 0.0
        %2786 = vmatprep.subr.mxu0 0.0
        %2787 = vmatpush1.xpose.msra.mxu0 0.0
        %2788 = vmatprep.subr.mxu0 0.0
        %2789 = vmatpush1.xpose.msra.mxu0 0.0
        %2790 = vmatprep.subr.mxu0 0.0
        %2791 = vmatpush1.xpose.msra.mxu0 0.0
        %2792 = vmatprep.subr.mxu0 0.0
        %2793 = vmatpush1.xpose.msra.mxu0 0.0
        %2794 = vmatprep.subr.mxu0 0.0
        %2795 = vmatpush1.xpose.msra.mxu0 0.0
        %2796 = vmatprep.subr.mxu0 0.0
        %2797 = vmatpush1.xpose.msra.mxu0 0.0
        %2798 = vmatprep.subr.mxu0 0.0
        %2799 = vmatpush1.xpose.msra.mxu0 0.0
        %2800 = vmatprep.subr.mxu0 0.0
        %2801 = vmatpush1.xpose.msra.mxu0 0.0
        %2802 = vmatprep.subr.mxu0 0.0
        %2803 = vmatpush1.xpose.msra.mxu0 0.0
        %2804 = vmatprep.subr.mxu0 0.0
        %2805 = vmatpush1.xpose.msra.mxu0 0.0
        %2806 = vmatprep.subr.mxu0 0.0
        %2807 = vmatpush1.xpose.msra.mxu0 0.0
        %2808 = vmatprep.subr.mxu0 0.0
        %2809 = vmatpush1.xpose.msra.mxu0 0.0
        %2810 = vmatprep.subr.mxu0 0.0
        %2811 = vmatpush1.xpose.msra.mxu0 0.0
        %2812 = vmatprep.subr.mxu0 0.0
        %2813 = vmatpush1.xpose.msra.mxu0 0.0
        %2814 = vmatprep.subr.mxu0 0.0
        %2815 = vmatpush1.xpose.msra.mxu0 0.0
        %2816 = vmatprep.subr.mxu0 0.0
        %2817 = vmatpush1.xpose.msra.mxu0 0.0
        %2818 = vmatprep.subr.mxu0 0.0
        %2819 = vmatpush1.xpose.msra.mxu0 0.0
        %2820 = vmatprep.subr.mxu0 0.0
        %2821 = vmatpush1.xpose.msra.mxu0 0.0
        %2822 = vmatprep.subr.mxu0 0.0
        %2823 = vmatpush1.xpose.msra.mxu0 0.0
        %2824 = vmatprep.mubr.f32.mxu0 0.0
        %2825 = vmatmul.mubr.f32.gmra.mrb[0].mxu0 %v2752
        %v2826 = vpop.f32.mrb[0].mxu0
        %v2827 = vadd.f32 %v1989, %v2826
        %v2828 = vpop.f32.mrb[0].mxu0
        %2829 = vdwg.mxu0
        %v2830 = vsel %vm1190, %v2827, -inf
        %2831 = vmax.xlane.f32.xlu0 %v2830
        %v2832 = vpop.xlane.xlu0 %2831
        %v2833 = vsub.f32 %v2827, %v2832
        %v2834 = vmul.f32 %v2833, 1.442695
        %v2835 = vpow.pop %v2834
        %v2836 = vsel %vm1190, %v2835, 0.0
        %2837 = vadd.xlane.f32.xlu0 %v2836
        %v2838 = vpop.xlane.xlu0 %2837
        %v2839 = vrcp.pop %v2838
        %v2840 = vmul.f32 %v2835, %v2839
        %v2841 = vpack.c.bf16 %v2840, %v2840
        %2842 = vrot.lane.b32.xlu0 %v2148, 72
        %v2843 = vpop.permute.xlu0 %2842
        %2844 = vrot.lane.b32.xlu0 %v2149, 72
        %v2845 = vpop.permute.xlu0 %2844
        %v2848 = vsel %vm1190, %v2841, 0
        %v2851 = vsel %vm1215, %v2845, 0
        %2853 = vmatprep.subr.bf16.mxu0 0
        %2854 = vmatpush1.bf16.msra.mxu0 %v2843
        %2855 = vmatprep.subr.bf16.mxu0 0
        %2856 = vmatpush1.bf16.msra.mxu0 %v2851
        %2857 = vmatprep.subr.bf16.mxu0 0
        %2858 = vmatpush1.bf16.msra.mxu0 0
        %2859 = vmatprep.subr.bf16.mxu0 0
        %2860 = vmatpush1.bf16.msra.mxu0 0
        %2861 = vmatprep.subr.bf16.mxu0 0
        %2862 = vmatpush1.bf16.msra.mxu0 0
        %2863 = vmatprep.subr.bf16.mxu0 0
        %2864 = vmatpush1.bf16.msra.mxu0 0
        %2865 = vmatprep.subr.bf16.mxu0 0
        %2866 = vmatpush1.bf16.msra.mxu0 0
        %2867 = vmatprep.subr.bf16.mxu0 0
        %2868 = vmatpush1.bf16.msra.mxu0 0
        %2869 = vmatprep.subr.bf16.mxu0 0
        %2870 = vmatpush1.bf16.msra.mxu0 0
        %2871 = vmatprep.subr.bf16.mxu0 0
        %2872 = vmatpush1.bf16.msra.mxu0 0
        %2873 = vmatprep.subr.bf16.mxu0 0
        %2874 = vmatpush1.bf16.msra.mxu0 0
        %2875 = vmatprep.subr.bf16.mxu0 0
        %2876 = vmatpush1.bf16.msra.mxu0 0
        %2877 = vmatprep.subr.bf16.mxu0 0
        %2878 = vmatpush1.bf16.msra.mxu0 0
        %2879 = vmatprep.subr.bf16.mxu0 0
        %2880 = vmatpush1.bf16.msra.mxu0 0
        %2881 = vmatprep.subr.bf16.mxu0 0
        %2882 = vmatpush1.bf16.msra.mxu0 0
        %2883 = vmatprep.subr.bf16.mxu0 0
        %2884 = vmatpush1.bf16.msra.mxu0 0
        %2885 = vmatprep.mubr.bf16.mxu0 0
        %2886 = vmatmul.mubr.bf16.gmra.mrb[0].mxu0 %v2848
        %v2887 = vpop.f32.mrb[0].mxu0
        %v2888 = vadd.f32 0.0, %v2887
        %v2889 = vpop.f32.mrb[0].mxu0
        %v2890 = vpop.f32.mrb[0].mxu0
        %v2891 = vpop.f32.mrb[0].mxu0
        %2892 = vdwg.mxu0
        %2894 = vrot.lane.b32.xlu0 %v2888, 24
        %v2895 = vpop.permute.xlu0 %2894
        %2897 = vst.msk [vmem:[#allocation2 + $0x8] sm:$0xff] %vm1973, %v2895
        %v2898 = vld [vmem:[#allocation2] sm:$0xff]
        %v2899 = vld [vmem:[#allocation2 + $0x8] sm:$0xff]
        %v2900 = vpack.c.bf16 %v2899, %v2898
        %v2901 = vld [vmem:[%s12] sm:$0xf]
        %v2902 = vld [vmem:[%s12 + $0x4] sm:$0xf]
        %v2903 = vld [vmem:[%s12 + $0x8] sm:$0xf]
        %v2904 = vld [vmem:[%s12 + $0xc] sm:$0xf]
        %v2909 = vunpack.c.l.b16 %v2901
        %v2910 = vunpack.c.l.b16 %v2902
        %v2911 = vunpack.c.l.b16 %v2903
        %v2912 = vunpack.c.l.b16 %v2904
        %v2913 = vpack.c.b16 %v2910, %v2909
        %v2914 = vpack.c.b16 %v2912, %v2911
        %v2918 = vsel %vm759, %v2900, 0
        %2920 = vmatprep.subr.bf16.mxu0 0
        %2921 = vmatpush1.bf16.msra.mxu0 %v2913
        %2922 = vmatprep.subr.bf16.mxu0 0
        %2923 = vmatpush1.bf16.msra.mxu0 %v2914
        %2924 = vmatprep.subr.bf16.mxu0 0
        %2925 = vmatpush1.bf16.msra.mxu0 0
        %2926 = vmatprep.subr.bf16.mxu0 0
        %2927 = vmatpush1.bf16.msra.mxu0 0
        %2928 = vmatprep.subr.bf16.mxu0 0
        %2929 = vmatpush1.bf16.msra.mxu0 0
        %2930 = vmatprep.subr.bf16.mxu0 0
        %2931 = vmatpush1.bf16.msra.mxu0 0
        %2932 = vmatprep.subr.bf16.mxu0 0
        %2933 = vmatpush1.bf16.msra.mxu0 0
        %2934 = vmatprep.subr.bf16.mxu0 0
        %2935 = vmatpush1.bf16.msra.mxu0 0
        %2936 = vmatprep.subr.bf16.mxu0 0
        %2937 = vmatpush1.bf16.msra.mxu0 0
        %2938 = vmatprep.subr.bf16.mxu0 0
        %2939 = vmatpush1.bf16.msra.mxu0 0
        %2940 = vmatprep.subr.bf16.mxu0 0
        %2941 = vmatpush1.bf16.msra.mxu0 0
        %2942 = vmatprep.subr.bf16.mxu0 0
        %2943 = vmatpush1.bf16.msra.mxu0 0
        %2944 = vmatprep.subr.bf16.mxu0 0
        %2945 = vmatpush1.bf16.msra.mxu0 0
        %2946 = vmatprep.subr.bf16.mxu0 0
        %2947 = vmatpush1.bf16.msra.mxu0 0
        %2948 = vmatprep.subr.bf16.mxu0 0
        %2949 = vmatpush1.bf16.msra.mxu0 0
        %2950 = vmatprep.subr.bf16.mxu0 0
        %2951 = vmatpush1.bf16.msra.mxu0 0
        %2952 = vmatprep.mubr.bf16.mxu0 0
        %2953 = vmatmul.mubr.bf16.gmra.mrb[0].mxu0 %v2918
        %v2954 = vpop.f32.mrb[0].mxu0
        %v2955 = vadd.f32 0.0, %v2954
        %v2956 = vpop.f32.mrb[0].mxu0
        %v2957 = vpop.f32.mrb[0].mxu0
        %v2958 = vadd.f32 0.0, %v2957
        %v2959 = vpop.f32.mrb[0].mxu0
        %2960 = vdwg.mxu0
        %v2961 = vadd.f32 %v755, %v2955
        %v2962 = vadd.f32 %v756, %v2958
        %v2963 = vld [vmem:[%s13] sm:$0x1]
        %v2964 = vld [vmem:[%s14] sm:$0x1]
        %v2965 = vsel %vm759, %v2961, 0.0
        %2966 = vadd.xlane.f32.xlu0 %v2965
        %v2967 = vpop.xlane.xlu0 %2966
        %v2968 = vsel %vm759, %v2962, 0.0
        %2969 = vadd.xlane.f32.xlu0 %v2968
        %v2970 = vpop.xlane.xlu0 %2969
        %v2971 = vmul.f32 %v2967, %v772
        %v2972 = vmul.f32 %v2970, %v772
        %v2973 = vsub.f32 %v2961, %v2971
        %v2974 = vsub.f32 %v2962, %v2972
        %v2975 = vmul.f32 %v2973, %v2973
        %v2976 = vmul.f32 %v2974, %v2974
        %v2977 = vsel %vm759, %v2975, 0.0
        %2978 = vadd.xlane.f32.xlu0 %v2977
        %v2979 = vpop.xlane.xlu0 %2978
        %v2980 = vsel %vm759, %v2976, 0.0
        %2981 = vadd.xlane.f32.xlu0 %v2980
        %v2982 = vpop.xlane.xlu0 %2981
        %v2983 = vmul.f32 %v2979, %v772
        %v2984 = vmul.f32 %v2982, %v772
        %v2985 = vadd.f32 %v2983, 1e-05
        %v2986 = vadd.f32 %v2984, 1e-05
        %v2987 = vrsqrt.pop %v2985
        %v2988 = vrsqrt.pop %v2986
        %v2989 = vmul.f32 %v2973, %v2987
        %v2990 = vmul.f32 %v2974, %v2988
        %v2992 = vlaneseq
        %v2993 = vshrl.u32 %v2992, 7
        %v2994 = vsub.s32 0, %v2993
        %v2995 = vrot.slane %v2963, %v2994
        %v2997 = vmul.f32 %v2989, %v2995
        %v2998 = vmul.f32 %v2990, %v2995
        %v3000 = vlaneseq
        %v3001 = vshrl.u32 %v3000, 7
        %v3002 = vsub.s32 0, %v3001
        %v3003 = vrot.slane %v2964, %v3002
        %v3005 = vadd.f32 %v2997, %v3003
        %v3006 = vadd.f32 %v2998, %v3003
        %v3007 = vpack.c.bf16 %v3006, %v3005
        %v3008 = vld [vmem:[%s15] sm:$0xf]
        %v3009 = vld [vmem:[%s15 + $0x4] sm:$0xf]
        %v3010 = vld [vmem:[%s15 + $0x8] sm:$0xf]
        %v3011 = vld [vmem:[%s15 + $0xc] sm:$0xf]
        %v3012 = vld [vmem:[%s16] sm:$0x1]
        %v3014 = vlaneseq
        %v3015 = vshrl.u32 %v3014, 7
        %v3016 = vsub.s32 0, %v3015
        %v3017 = vrot.slane %v3012, %v3016
        %v3023 = vunpack.c.l.b16 %v3008
        %v3024 = vunpack.c.l.b16 %v3009
        %v3025 = vunpack.c.l.b16 %v3010
        %v3026 = vunpack.c.l.b16 %v3011
        %v3027 = vpack.c.b16 %v3024, %v3023
        %v3028 = vpack.c.b16 %v3026, %v3025
        %v3032 = vsel %vm759, %v3007, 0
        %3034 = vmatprep.subr.bf16.mxu0 0
        %3035 = vmatpush1.bf16.msra.mxu0 %v3027
        %3036 = vmatprep.subr.bf16.mxu0 0
        %3037 = vmatpush1.bf16.msra.mxu0 %v3028
        %3038 = vmatprep.subr.bf16.mxu0 0
        %3039 = vmatpush1.bf16.msra.mxu0 0
        %3040 = vmatprep.subr.bf16.mxu0 0
        %3041 = vmatpush1.bf16.msra.mxu0 0
        %3042 = vmatprep.subr.bf16.mxu0 0
        %3043 = vmatpush1.bf16.msra.mxu0 0
        %3044 = vmatprep.subr.bf16.mxu0 0
        %3045 = vmatpush1.bf16.msra.mxu0 0
        %3046 = vmatprep.subr.bf16.mxu0 0
        %3047 = vmatpush1.bf16.msra.mxu0 0
        %3048 = vmatprep.subr.bf16.mxu0 0
        %3049 = vmatpush1.bf16.msra.mxu0 0
        %3050 = vmatprep.subr.bf16.mxu0 0
        %3051 = vmatpush1.bf16.msra.mxu0 0
        %3052 = vmatprep.subr.bf16.mxu0 0
        %3053 = vmatpush1.bf16.msra.mxu0 0
        %3054 = vmatprep.subr.bf16.mxu0 0
        %3055 = vmatpush1.bf16.msra.mxu0 0
        %3056 = vmatprep.subr.bf16.mxu0 0
        %3057 = vmatpush1.bf16.msra.mxu0 0
        %3058 = vmatprep.subr.bf16.mxu0 0
        %3059 = vmatpush1.bf16.msra.mxu0 0
        %3060 = vmatprep.subr.bf16.mxu0 0
        %3061 = vmatpush1.bf16.msra.mxu0 0
        %3062 = vmatprep.subr.bf16.mxu0 0
        %3063 = vmatpush1.bf16.msra.mxu0 0
        %3064 = vmatprep.subr.bf16.mxu0 0
        %3065 = vmatpush1.bf16.msra.mxu0 0
        %3066 = vmatprep.mubr.bf16.mxu0 0
        %3067 = vmatmul.mubr.bf16.gmra.mrb[0].mxu0 %v3032
        %v3068 = vpop.f32.mrb[0].mxu0
        %v3069 = vadd.f32 %v3017, %v3068
        %v3070 = vpop.f32.mrb[0].mxu0
        %v3071 = vpop.f32.mrb[0].mxu0
        %v3072 = vadd.f32 %v3017, %v3071
        %v3073 = vpop.f32.mrb[0].mxu0
        %3074 = vdwg.mxu0
        %v3075 = vmul.f32 %v3069, 0.5
        %v3076 = vmul.f32 %v3072, 0.5
        %v3077 = vmul.f32 %v3069, 0.70710677
        %v3078 = vmul.f32 %v3072, 0.70710677
        %v3079 = verf.f32.pop %v3077
        %v3080 = verf.f32.pop %v3078
        %v3081 = vadd.f32 %v3079, 1.0
        %v3082 = vadd.f32 %v3080, 1.0
        %v3083 = vmul.f32 %v3075, %v3081
        %v3084 = vmul.f32 %v3076, %v3082
        %v3085 = vpack.c.bf16 %v3084, %v3083
        %v3086 = vld [vmem:[%s17] sm:$0xf]
        %v3087 = vld [vmem:[%s17 + $0x4] sm:$0xf]
        %v3088 = vld [vmem:[%s17 + $0x8] sm:$0xf]
        %v3089 = vld [vmem:[%s17 + $0xc] sm:$0xf]
        %v3090 = vld [vmem:[%s17 + $0x10] sm:$0xf]
        %v3091 = vld [vmem:[%s17 + $0x14] sm:$0xf]
        %v3092 = vld [vmem:[%s17 + $0x18] sm:$0xf]
        %v3093 = vld [vmem:[%s17 + $0x1c] sm:$0xf]
        %v3094 = vld [vmem:[%s17 + $0x20] sm:$0xf]
        %v3095 = vld [vmem:[%s17 + $0x24] sm:$0xf]
        %v3096 = vld [vmem:[%s17 + $0x28] sm:$0xf]
        %v3097 = vld [vmem:[%s17 + $0x2c] sm:$0xf]
        %v3098 = vld [vmem:[%s17 + $0x30] sm:$0xf]
        %v3099 = vld [vmem:[%s17 + $0x34] sm:$0xf]
        %v3100 = vld [vmem:[%s17 + $0x38] sm:$0xf]
        %v3101 = vld [vmem:[%s17 + $0x3c] sm:$0xf]
        %v3102 = vld [vmem:[%s18] sm:$0x1]
        %v3104 = vlaneseq
        %v3105 = vshrl.u32 %v3104, 7
        %v3106 = vsub.s32 0, %v3105
        %v3107 = vrot.slane %v3102, %v3106
        %v3125 = vunpack.c.l.b16 %v3086
        %v3126 = vunpack.c.l.b16 %v3087
        %v3127 = vunpack.c.l.b16 %v3088
        %v3128 = vunpack.c.l.b16 %v3089
        %v3129 = vunpack.c.l.b16 %v3090
        %v3130 = vunpack.c.l.b16 %v3091
        %v3131 = vunpack.c.l.b16 %v3092
        %v3132 = vunpack.c.l.b16 %v3093
        %v3133 = vunpack.c.l.b16 %v3094
        %v3134 = vunpack.c.l.b16 %v3095
        %v3135 = vunpack.c.l.b16 %v3096
        %v3136 = vunpack.c.l.b16 %v3097
        %v3137 = vunpack.c.l.b16 %v3098
        %v3138 = vunpack.c.l.b16 %v3099
        %v3139 = vunpack.c.l.b16 %v3100
        %v3140 = vunpack.c.l.b16 %v3101
        %v3141 = vpack.c.b16 %v3126, %v3125
        %v3142 = vpack.c.b16 %v3128, %v3127
        %v3143 = vpack.c.b16 %v3130, %v3129
        %v3144 = vpack.c.b16 %v3132, %v3131
        %v3145 = vpack.c.b16 %v3134, %v3133
        %v3146 = vpack.c.b16 %v3136, %v3135
        %v3147 = vpack.c.b16 %v3138, %v3137
        %v3148 = vpack.c.b16 %v3140, %v3139
        %3157 = vmatprep.subr.bf16.mxu0 0
        %3158 = vmatpush1.bf16.msra.mxu0 %v3141
        %3159 = vmatprep.subr.bf16.mxu0 0
        %3160 = vmatpush1.bf16.msra.mxu0 %v3142
        %3161 = vmatprep.subr.bf16.mxu0 0
        %3162 = vmatpush1.bf16.msra.mxu0 %v3143
        %3163 = vmatprep.subr.bf16.mxu0 0
        %3164 = vmatpush1.bf16.msra.mxu0 %v3144
        %3165 = vmatprep.subr.bf16.mxu0 0
        %3166 = vmatpush1.bf16.msra.mxu0 %v3145
        %3167 = vmatprep.subr.bf16.mxu0 0
        %3168 = vmatpush1.bf16.msra.mxu0 %v3146
        %3169 = vmatprep.subr.bf16.mxu0 0
        %3170 = vmatpush1.bf16.msra.mxu0 %v3147
        %3171 = vmatprep.subr.bf16.mxu0 0
        %3172 = vmatpush1.bf16.msra.mxu0 %v3148
        %3173 = vmatprep.subr.bf16.mxu0 0
        %3174 = vmatpush1.bf16.msra.mxu0 0
        %3175 = vmatprep.subr.bf16.mxu0 0
        %3176 = vmatpush1.bf16.msra.mxu0 0
        %3177 = vmatprep.subr.bf16.mxu0 0
        %3178 = vmatpush1.bf16.msra.mxu0 0
        %3179 = vmatprep.subr.bf16.mxu0 0
        %3180 = vmatpush1.bf16.msra.mxu0 0
        %3181 = vmatprep.subr.bf16.mxu0 0
        %3182 = vmatpush1.bf16.msra.mxu0 0
        %3183 = vmatprep.subr.bf16.mxu0 0
        %3184 = vmatpush1.bf16.msra.mxu0 0
        %3185 = vmatprep.subr.bf16.mxu0 0
        %3186 = vmatpush1.bf16.msra.mxu0 0
        %3187 = vmatprep.subr.bf16.mxu0 0
        %3188 = vmatpush1.bf16.msra.mxu0 0
        %3189 = vmatprep.mubr.bf16.mxu0 0
        %3190 = vmatmul.mubr.bf16.gmra.mrb[0].mxu0 %v3085
        %v3191 = vpop.f32.mrb[0].mxu0
        %v3192 = vadd.f32 %v3107, %v3191
        %v3193 = vpop.f32.mrb[0].mxu0
        %v3194 = vpop.f32.mrb[0].mxu0
        %v3195 = vadd.f32 %v3107, %v3194
        %v3196 = vpop.f32.mrb[0].mxu0
        %3197 = vdwg.mxu0
        %v3198 = vadd.f32 %v2961, %v3192
        %v3199 = vadd.f32 %v2962, %v3195
        %3200 = vst.msk [vmem:[%s727] sm:$0xff] %vm759, %v3198
        %3201 = vst.msk [vmem:[%s727 + $0x8] sm:$0xff] %vm759, %v3199
        %s3202 = sand.u32 %s466, 1
        %s3203 = scalar_lea.sflag [#allocation5], %s3202
        %s3204 = sand.u32 %s466, 1
        %s3205 = smul.addr %s3204, 16
        %s3206 = scalar_lea.vmem [#allocation14], %s3205
        // Predicated region
        $region121: #{tpu_custom_call.1} parent=95 // pred_check
          %p3207 = pneg %p476
        $region122: #{tpu_custom_call.1} parent=95 // pred_check_branch
          %3209 = sbr.rel (%p3207) target = $region124
        $region123: #{tpu_custom_call.1} parent=95 // pred_region
          %s3210 = smul.u32 2, %s39
          %s3212 = ssub.s32 256, 256
          %3213 = vsyncadd %s3203, %s3212
          %s3214 = smul.addr %s3210, 128
          %s3215 = scalar_lea.hbm %s19, %s3214
          %s3216 = sshll.u32 %s3206, 4
          %s3217 = int_to_ptr.vmem [resolvable:$true] %s3216
          %3222 = dma.vmem_to_hbm [thread:$0]  %s3217, 256, %s3215, %s3203, 128, 128, 8
        $region124: #{tpu_custom_call.1} parent=95 // pred_fallthru
          _
      $region96: #{tpu_custom_call.1} parent=5 // pred_fallthru
        _
      %p3223 = scmp.le.s32.totalorder 2, %s34
      // Predicated region
      $region125: #{tpu_custom_call.1} parent=5 // pred_check
        %p3224 = pneg %p3223
      $region126: #{tpu_custom_call.1} parent=5 // pred_check_branch
        %3226 = sbr.rel (%p3224) target = $region128
      $region127: #{tpu_custom_call.1} parent=5 // pred_region
        %s3227 = ssub.s32 %s34, 2
        // Predicated region
        $region129: #{tpu_custom_call.1} parent=127 // pred_check
          %p3228 = pneg %p482
        $region130: #{tpu_custom_call.1} parent=127 // pred_check_branch
          %3230 = sbr.rel (%p3228) target = $region132
        $region131: #{tpu_custom_call.1} parent=127 // pred_region
          %s3231 = sand.u32 %s467, 1
          %s3232 = scalar_lea.sflag [#allocation5], %s3231
          %s3233 = sand.u32 %s467, 1
          %s3234 = smul.addr %s3233, 16
          %s3235 = scalar_lea.vmem [#allocation14], %s3234
          %3236 = dma.done %s3232, 256
        $region132: #{tpu_custom_call.1} parent=127 // pred_fallthru
          _
      $region128: #{tpu_custom_call.1} parent=5 // pred_fallthru
        _
    $region6: #{tpu_custom_call.1} parent=1 // loop_footer
      %s38 = sadd.s32 1, %s34
    $region7: #{tpu_custom_call.1} parent=1 // loop_footer_branch
      %33 = sbr.rel target = $region3
    $region8: #{tpu_custom_call.1} parent=1 // loop_exit
      _
    %3237 = vsyncpa [#allocation4], 1
    %s3238 = scalar_lea.sflag [#allocation4], 1
    %3239 = vsyncpa %s3238, 1
    %3240 = vsyncpa [#allocation7], 1
    %3241 = vsyncpa [#allocation10], 1
    %3242 = vsyncpa [#allocation13], 1
    %3243 = vsyncpa [#allocation5], 1
    %s3244 = scalar_lea.sflag [#allocation5], 1
    %3245 = vsyncpa %s3244, 1

</llo_original>
